<compile_context>
chip_gen: v7x
topology: tpu7x:2x2x1
jax: 0.10.0
libtpu: 0.0.40
codegen_flags: <defaults>
</compile_context>

<pallas_src>
import math
from functools import partial

import numpy as np
import jax
import jax.numpy as jnp
from jax import lax
from jax.experimental import pallas as pl
from jax.experimental.pallas import tpu as pltpu  # noqa: F401  (TPU backend assumed)

SLAB_WIDTH = 128


# ----------------------------------------------------------------------------
# Host-side slab packer: each entry padded to a multiple of 8 rows so that the
# in-kernel static slices are sublane-aligned.
# ----------------------------------------------------------------------------
class SlabBuilder:
    def __init__(self, width=SLAB_WIDTH):
        self.width = width
        self.entries = []
        self.offsets = {}
        self.row = 0

    def add(self, name, arr):
        arr = np.asarray(arr, np.float32)
        if arr.ndim == 1:
            arr = arr.reshape(1, -1)
        r, c = arr.shape
        assert c <= self.width, (name, arr.shape)
        self.offsets[name] = (self.row, r, c)
        self.entries.append((self.row, arr))
        self.row += ((r + 7) // 8) * 8

    def finalize(self):
        slab = np.zeros((max(self.row, 8), self.width), np.float32)
        for off, arr in self.entries:
            slab[off:off + arr.shape[0], :arr.shape[1]] = arr
        return jnp.asarray(slab), self.offsets


# ----------------------------------------------------------------------------
# Fused forward kernel.  refs = (x_ref, slab_ref, o_ref).
# Layout: activations are (B*C, L) with batch-major rows (PyTorch NCL order,
# batch block-stacked along channels).  The MHA treats channels as the
# sequence axis and length as the embedding axis (matching the module).
# ----------------------------------------------------------------------------
def _fused_kernel(cfg, offs, x_ref, slab_ref, o_ref):
    f32 = jnp.float32
    B = cfg["B"]
    n_enc = cfg["n_enc"]
    s = cfg["s"]
    k = cfg["k"]
    heads = cfg["heads"]

    def g(name):
        r0, r, c = offs[name]
        return slab_ref[r0:r0 + r, :c]          # static, 8-row-aligned slice

    def mm(a, b):
        return jnp.dot(a, b, preferred_element_type=f32)

    # ---------------- encoders: Conv1d(k, stride 2, pad k//2) -> ReLU -> 1x1 -> GLU
    act = x_ref[...]                             # (B*s[0], L0)
    skips = [act]
    for i in range(n_enc):
        h = g(f"enc{i}_b1")                      # (B*C_out, 1), broadcasts over lanes
        for t in range(k[i]):
            # in-VMEM im2col via host-precomputed 0/1 selection, then per-tap weight
            patch = mm(act, g(f"enc{i}_sel{t}"))             # (B*C_in, Lh)
            h = h + mm(g(f"enc{i}_w1_{t}"), patch)           # (B*C_out, Lh)
        h = jnp.maximum(h, 0.0)                               # ReLU
        vg = mm(g(f"enc{i}_wvg"), h) + g(f"enc{i}_bvg")       # [value; gate] stacked rows
        n = B * s[i + 1]
        act = vg[:n] * jax.nn.sigmoid(vg[n:])                 # GLU
        skips.append(act)

    # ---------------- MultiheadAttBlock (seq = channels, embed = length) ----------
    x1 = mm(act, g("mha_wi")) + g("mha_bi")                   # linear_input -> (B*S, E)
    mask = g("mha_mask")                                      # block-diag additive mask
    att = g("mha_bo")                                         # out-proj bias, broadcast
    for hd in range(heads):
        q = mm(x1, g(f"mha_wq{hd}")) + g(f"mha_bq{hd}")       # (B*S, dh), 1/sqrt(dh) folded
        kk = mm(x1, g(f"mha_wk{hd}")) + g(f"mha_bk{hd}")
        vo = mm(x1, g(f"mha_wvo{hd}")) + g(f"mha_bvo{hd}")    # V with out-proj folded in
        sc = lax.dot_general(q, kk, (((1,), (1,)), ((), ())),
                             preferred_element_type=f32) + mask
        sc = sc - jnp.max(sc, axis=-1, keepdims=True)
        p = jnp.exp(sc)
        p = p * pl.reciprocal(jnp.sum(p, axis=-1, keepdims=True), approx=True)
        att = att + mm(p, vo)

    def layer_norm(y, gname, bname):
        mu = jnp.mean(y, axis=-1, keepdims=True)
        var = jnp.mean(jnp.square(y - mu), axis=-1, keepdims=True)
        return (y - mu) * lax.rsqrt(var + 1e-5) * g(gname) + g(bname)

    y1 = layer_norm(x1 + att, "mha_ln1_g", "mha_ln1_b")
    ffn = mm(jnp.maximum(mm(y1, g("mha_wf1")) + g("mha_bf1"), 0.0),
             g("mha_wf2")) + g("mha_bf2")
    y2 = layer_norm(y1 + ffn, "mha_ln2_g", "mha_ln2_b")       # dropouts: identity (eval)
    act = mm(y2, g("mha_wout")) + g("mha_bout")               # linear_output -> (B*S, org)

    # ---------------- decoders: 1x1 -> GLU -> ConvT(k=3, s=2, p=1, op=1) -> ReLU ---
    for j in range(n_enc):
        i = n_enc - j
        skip = skips[i]                                       # (B*s[i], L)
        # split 1x1 weight into skip / act column halves -> no channel concat
        vg = (mm(g(f"dec{j}_wvg_s"), skip) + mm(g(f"dec{j}_wvg_x"), act)
              + g(f"dec{j}_bvg"))
        n = B * 2 * s[i]
        h = vg[:n] * jax.nn.sigmoid(vg[n:])                   # GLU -> (B*C2, L)
        h_next = mm(h, g(f"dec{j}_shift"))                    # h[:, m+1] (in-block shift)
        bt = g(f"dec{j}_bt")                                  # (B*C_out, 1)
        y_even = jnp.maximum(mm(g(f"dec{j}_wt1"), h) + bt, 0.0)
        y_odd = jnp.maximum(mm(g(f"dec{j}_wt2"), h)
                            + mm(g(f"dec{j}_wt0"), h_next) + bt, 0.0)
        # stride-2 scatter: even / odd lanes interleaved via 0/1 permutation matmuls
        act = mm(y_even, g(f"dec{j}_pe")) + mm(y_odd, g(f"dec{j}_po"))   # (B*C_out, 2L)

    # ---------------- output: Conv1d(2, 4, 1) -> GLU -> ConvT(2, 1, k=3, s=1, p=1) --
    skip0 = skips[0]
    val = mm(g("out_wv_s"), skip0) + mm(g("out_wv_x"), act) + g("out_bv")
    gate = mm(g("out_wg_s"), skip0) + mm(g("out_wg_x"), act) + g("out_bg")
    h = val * jax.nn.sigmoid(gate)                            # (B*2, L0)
    zc = jnp.zeros((h.shape[0], 1), f32)
    h_l = jnp.concatenate([h[:, 1:], zc], axis=1)             # h[:, n+1]
    h_r = jnp.concatenate([zc, h[:, :-1]], axis=1)            # h[:, n-1]
    o_ref[...] = (mm(g("out_wt0"), h_l) + mm(g("out_wt1"), h)
                  + mm(g("out_wt2"), h_r) + g("out_bt"))      # (B, L0), lane-dense


# ----------------------------------------------------------------------------
# Wrapper: one gridless pallas_call, whole slab + input in VMEM.
# ----------------------------------------------------------------------------
def cicada_forward(x, slab, offsets, cfg):
    B, s0, L0 = cfg["B"], cfg["s"][0], cfg["Ls"][0]
    x2d = x.reshape(B * s0, L0)                 # batch-stacked rows, lane-dense
    ce = pl.CostEstimate(
        flops=3_000_000,
        transcendentals=25_000,
        bytes_accessed=int(slab.size * 4 + x2d.size * 4 + B * L0 * 4),
    )
    out2d = pl.pallas_call(
        partial(_fused_kernel, cfg, offsets),
        out_shape=jax.ShapeDtypeStruct((B, L0), jnp.float32),
        cost_estimate=ce,
    )(x2d, slab)
    return out2d.reshape(B, 1, L0)


# ----------------------------------------------------------------------------
# Deterministic synthetic parameters, folded into kernel layout and packed
# into a single VMEM slab (weights are block-diagonal over the batch so one
# matmul serves both batch elements).
# ----------------------------------------------------------------------------
def build_params(key, cfg):
    B, n_enc, s, k = cfg["B"], cfg["n_enc"], cfg["s"], cfg["k"]
    heads, Ls, E, dh, hidden = cfg["heads"], cfg["Ls"], cfg["E"], cfg["dh"], cfg["hidden"]
    org = Ls[n_enc]

    keys = iter(jax.random.split(key, 256))

    def rnd(shape, scale):
        return np.asarray(jax.random.normal(next(keys), shape, dtype=jnp.float32)) * scale

    def bdiag(m):                               # (r, c) -> (B*r, B*c) block-diag
        r, c = m.shape
        out = np.zeros((B * r, B * c), np.float32)
        for b in range(B):
            out[b * r:(b + 1) * r, b * c:(b + 1) * c] = m
        return out

    def brows(v):                               # bias column, replicated per batch block
        return np.tile(np.asarray(v, np.float32).reshape(-1, 1), (B, 1))

    sb = SlabBuilder()

    # ----- encoders
    for i in range(n_enc):
        c_in, c_out, kk = s[i], s[i + 1], k[i]
        L, Lh, pad = Ls[i], Ls[i + 1], k[i] // 2
        w1 = rnd((c_out, c_in, kk), 1.0 / math.sqrt(c_in * kk))   # Conv1d weight
        b1 = rnd((c_out,), 0.05)
        w2 = rnd((2 * c_out, c_out), 1.0 / math.sqrt(c_out))      # 1x1 conv [value; gate]
        b2 = rnd((2 * c_out,), 0.05)
        for t in range(kk):
            sel = np.zeros((L, Lh), np.float32)                   # im2col selection
            src = 2 * np.arange(Lh) + t - pad
            ok = (src >= 0) & (src < L)
            sel[src[ok], np.arange(Lh)[ok]] = 1.0
            sb.add(f"enc{i}_sel{t}", sel)
            sb.add(f"enc{i}_w1_{t}", bdiag(w1[:, :, t]))
        sb.add(f"enc{i}_b1", brows(b1))
        sb.add(f"enc{i}_wvg", np.concatenate([bdiag(w2[:c_out]), bdiag(w2[c_out:])], 0))
        sb.add(f"enc{i}_bvg", np.concatenate([brows(b2[:c_out]), brows(b2[c_out:])], 0))

    # ----- MultiheadAttBlock
    S = s[n_enc]
    sb.add("mha_wi", rnd((org, E), 1.0 / math.sqrt(org)))
    sb.add("mha_bi", rnd((1, E), 0.05))
    wq = rnd((E, E), 1.0 / math.sqrt(E)); bq = rnd((E,), 0.05)
    wk = rnd((E, E), 1.0 / math.sqrt(E)); bk = rnd((E,), 0.05)
    wv = rnd((E, E), 1.0 / math.sqrt(E)); bv = rnd((E,), 0.05)
    wo = rnd((E, E), 1.0 / math.sqrt(E)); bo = rnd((1, E), 0.05)
    scale = 1.0 / math.sqrt(dh)
    for hd in range(heads):
        sl = slice(hd * dh, (hd + 1) * dh)
        sb.add(f"mha_wq{hd}", wq[:, sl] * scale)                  # 1/sqrt(dh) pre-folded
        sb.add(f"mha_bq{hd}", (bq[sl] * scale).reshape(1, dh))
        sb.add(f"mha_wk{hd}", wk[:, sl])
        sb.add(f"mha_bk{hd}", bk[sl].reshape(1, dh))
        sb.add(f"mha_wvo{hd}", wv[:, sl] @ wo[sl, :])             # out-proj folded into V
        sb.add(f"mha_bvo{hd}", bv[sl].reshape(1, dh) @ wo[sl, :])
    sb.add("mha_bo", bo)
    mask = np.full((B * S, B * S), -1e9, np.float32)              # finite neg, not -inf
    for b in range(B):
        mask[b * S:(b + 1) * S, b * S:(b + 1) * S] = 0.0
    sb.add("mha_mask", mask)
    sb.add("mha_ln1_g", np.ones((1, E), np.float32))
    sb.add("mha_ln1_b", np.zeros((1, E), np.float32))
    sb.add("mha_wf1", rnd((E, hidden), 1.0 / math.sqrt(E)))
    sb.add("mha_bf1", rnd((1, hidden), 0.05))
    sb.add("mha_wf2", rnd((hidden, E), 1.0 / math.sqrt(hidden)))
    sb.add("mha_bf2", rnd((1, E), 0.05))
    sb.add("mha_ln2_g", np.ones((1, E), np.float32))
    sb.add("mha_ln2_b", np.zeros((1, E), np.float32))
    sb.add("mha_wout", rnd((E, org), 1.0 / math.sqrt(E)))
    sb.add("mha_bout", rnd((1, org), 0.05))

    # ----- decoders (ConvT k=3, stride 2, pad 1, output_pad 1)
    for j in range(n_enc):
        i = n_enc - j
        c, c2, c_out, L = s[i], 2 * s[i], s[i - 1], Ls[i]
        wd = rnd((2 * c2, c2), 1.0 / math.sqrt(c2))               # 1x1 conv [value; gate]
        bd_b = rnd((2 * c2,), 0.05)
        wt = rnd((c2, c_out, 3), 1.0 / math.sqrt(3 * c2))         # ConvT weight (Cin,Cout,3)
        bt = rnd((c_out,), 0.05)
        wvv, wgg = wd[:c2], wd[c2:]
        sb.add(f"dec{j}_wvg_s", np.concatenate([bdiag(wvv[:, :c]), bdiag(wgg[:, :c])], 0))
        sb.add(f"dec{j}_wvg_x", np.concatenate([bdiag(wvv[:, c:]), bdiag(wgg[:, c:])], 0))
        sb.add(f"dec{j}_bvg", np.concatenate([brows(bd_b[:c2]), brows(bd_b[c2:])], 0))
        for t in range(3):
            sb.add(f"dec{j}_wt{t}", bdiag(wt[:, :, t].T))         # (C_out, C2) per tap
        sb.add(f"dec{j}_bt", brows(bt))
        sb.add(f"dec{j}_shift", np.eye(L, k=-1, dtype=np.float32))    # h[:, m+1]
        pe = np.zeros((L, 2 * L), np.float32)
        po = np.zeros((L, 2 * L), np.float32)
        pe[np.arange(L), 2 * np.arange(L)] = 1.0
        po[np.arange(L), 2 * np.arange(L) + 1] = 1.0
        sb.add(f"dec{j}_pe", pe)
        sb.add(f"dec{j}_po", po)

    # ----- output block: Conv1d(2,4,1) -> GLU -> ConvT(2,1,k=3,s=1,p=1)
    wo1 = rnd((4, 2), 0.5); bo1 = rnd((4,), 0.05)
    wto = rnd((2, 1, 3), 0.5); bto = rnd((1,), 0.05)
    sb.add("out_wv_s", bdiag(wo1[:2, :1])); sb.add("out_wv_x", bdiag(wo1[:2, 1:]))
    sb.add("out_bv", brows(bo1[:2]))
    sb.add("out_wg_s", bdiag(wo1[2:, :1])); sb.add("out_wg_x", bdiag(wo1[2:, 1:]))
    sb.add("out_bg", brows(bo1[2:]))
    for t in range(3):
        sb.add(f"out_wt{t}", bdiag(wto[:, :, t].T))               # (1, 2) -> (B, 2B)
    sb.add("out_bt", brows(bto))

    return sb.finalize()


if __name__ == "__main__":
    # Small configuration consistent with the module:
    #   n_encoders=3, s=[1,4,8,16], k=[3,3,3], heads=4, waveform length 128.
    B = 2
    n_enc = 3
    s = [1, 4, 8, 16]
    k = [3, 3, 3]
    num_heads = 4
    hidden_channels = 0.5
    L0 = 128                                    # "embed_dims" analogue (input length)

    Ls = [L0 // (2 ** i) for i in range(n_enc + 1)]
    org = Ls[-1]
    E = org if org % num_heads == 0 else (org + num_heads - 1) // num_heads * num_heads
    hidden = int(E * 0.5) if (not hidden_channels or hidden_channels >= E) \
        else int(E * hidden_channels)
    cfg = dict(B=B, n_enc=n_enc, s=s, k=k, heads=num_heads, Ls=Ls,
               E=E, dh=E // num_heads, hidden=hidden)

    key = jax.random.PRNGKey(0)
    pkey, xkey = jax.random.split(key)
    slab, offsets = build_params(pkey, cfg)
    x = jax.random.normal(xkey, (B, s[0], L0), dtype=jnp.float32)

    fwd = jax.jit(lambda x_, slab_: cicada_forward(x_, slab_, offsets, cfg))
    y = fwd(x, slab)
    jax.block_until_ready(y)
    assert y.shape == (B, 1, L0), y.shape
    print("KERNEL_OK")
</pallas_src>

<mosaic_0001>
module attributes {stable_mosaic.version = 11 : i64} {
  func.func @_fused_kernel(%arg0: memref<2x128xf32, #tpu.memory_space<vmem>>, %arg1: memref<2784x128xf32, #tpu.memory_space<vmem>>, %arg2: memref<2x128xf32, #tpu.memory_space<vmem>>) attributes {dimension_semantics = [], scalar_prefetch = 0 : i64, scratch_operands = 0 : i64, tpu.core_type = #tpu.core_type<tc>} {
    %c0 = arith.constant 0 : index
    %c0_0 = arith.constant 0 : index
    %0 = vector.load %arg0[%c0, %c0_0] : memref<2x128xf32, #tpu.memory_space<vmem>>, vector<2x128xf32>
    %c408 = arith.constant 408 : index
    %c0_1 = arith.constant 0 : index
    %1 = vector.load %arg1[%c408, %c0_1] : memref<2784x128xf32, #tpu.memory_space<vmem>>, vector<8x1xf32>
    %c0_2 = arith.constant 0 : index
    %c0_3 = arith.constant 0 : index
    %2 = vector.load %arg1[%c0_2, %c0_3] : memref<2784x128xf32, #tpu.memory_space<vmem>>, vector<128x64xf32>
    %cst = arith.constant dense<0.000000e+00> : vector<2x64xf32>
    %3 = tpu.matmul %0, %2, %cst {dimension_numbers = #tpu.dot_dimension_numbers<[1], [0], [0], [1], [0, 0, 1, 1], [], []>} : vector<2x128xf32>, vector<128x64xf32>, vector<2x64xf32> -> vector<2x64xf32>
    %c128 = arith.constant 128 : index
    %c0_4 = arith.constant 0 : index
    %4 = vector.load %arg1[%c128, %c0_4] : memref<2784x128xf32, #tpu.memory_space<vmem>>, vector<8x2xf32>
    %cst_5 = arith.constant dense<0.000000e+00> : vector<8x64xf32>
    %5 = tpu.matmul %4, %3, %cst_5 {dimension_numbers = #tpu.dot_dimension_numbers<[1], [0], [0], [1], [0, 0, 1, 1], [], []>} : vector<8x2xf32>, vector<2x64xf32>, vector<8x64xf32> -> vector<8x64xf32>
    %6 = vector.broadcast %1 : vector<8x1xf32> to vector<8x64xf32>
    %7 = arith.addf %6, %5 : vector<8x64xf32>
    %c136 = arith.constant 136 : index
    %c0_6 = arith.constant 0 : index
    %8 = vector.load %arg1[%c136, %c0_6] : memref<2784x128xf32, #tpu.memory_space<vmem>>, vector<128x64xf32>
    %cst_7 = arith.constant dense<0.000000e+00> : vector<2x64xf32>
    %9 = tpu.matmul %0, %8, %cst_7 {dimension_numbers = #tpu.dot_dimension_numbers<[1], [0], [0], [1], [0, 0, 1, 1], [], []>} : vector<2x128xf32>, vector<128x64xf32>, vector<2x64xf32> -> vector<2x64xf32>
    %c264 = arith.constant 264 : index
    %c0_8 = arith.constant 0 : index
    %10 = vector.load %arg1[%c264, %c0_8] : memref<2784x128xf32, #tpu.memory_space<vmem>>, vector<8x2xf32>
    %cst_9 = arith.constant dense<0.000000e+00> : vector<8x64xf32>
    %11 = tpu.matmul %10, %9, %cst_9 {dimension_numbers = #tpu.dot_dimension_numbers<[1], [0], [0], [1], [0, 0, 1, 1], [], []>} : vector<8x2xf32>, vector<2x64xf32>, vector<8x64xf32> -> vector<8x64xf32>
    %12 = arith.addf %7, %11 : vector<8x64xf32>
    %c272 = arith.constant 272 : index
    %c0_10 = arith.constant 0 : index
    %13 = vector.load %arg1[%c272, %c0_10] : memref<2784x128xf32, #tpu.memory_space<vmem>>, vector<128x64xf32>
    %cst_11 = arith.constant dense<0.000000e+00> : vector<2x64xf32>
    %14 = tpu.matmul %0, %13, %cst_11 {dimension_numbers = #tpu.dot_dimension_numbers<[1], [0], [0], [1], [0, 0, 1, 1], [], []>} : vector<2x128xf32>, vector<128x64xf32>, vector<2x64xf32> -> vector<2x64xf32>
    %c400 = arith.constant 400 : index
    %c0_12 = arith.constant 0 : index
    %15 = vector.load %arg1[%c400, %c0_12] : memref<2784x128xf32, #tpu.memory_space<vmem>>, vector<8x2xf32>
    %cst_13 = arith.constant dense<0.000000e+00> : vector<8x64xf32>
    %16 = tpu.matmul %15, %14, %cst_13 {dimension_numbers = #tpu.dot_dimension_numbers<[1], [0], [0], [1], [0, 0, 1, 1], [], []>} : vector<8x2xf32>, vector<2x64xf32>, vector<8x64xf32> -> vector<8x64xf32>
    %17 = arith.addf %12, %16 : vector<8x64xf32>
    %cst_14 = arith.constant 0.000000e+00 : f32
    %18 = vector.broadcast %cst_14 : f32 to vector<8x64xf32>
    %19 = arith.maximumf %17, %18 : vector<8x64xf32>
    %c416 = arith.constant 416 : index
    %c0_15 = arith.constant 0 : index
    %20 = vector.load %arg1[%c416, %c0_15] : memref<2784x128xf32, #tpu.memory_space<vmem>>, vector<16x8xf32>
    %cst_16 = arith.constant dense<0.000000e+00> : vector<16x64xf32>
    %21 = tpu.matmul %20, %19, %cst_16 {dimension_numbers = #tpu.dot_dimension_numbers<[1], [0], [0], [1], [0, 0, 1, 1], [], []>} : vector<16x8xf32>, vector<8x64xf32>, vector<16x64xf32> -> vector<16x64xf32>
    %c432 = arith.constant 432 : index
    %c0_17 = arith.constant 0 : index
    %22 = vector.load %arg1[%c432, %c0_17] : memref<2784x128xf32, #tpu.memory_space<vmem>>, vector<16x1xf32>
    %23 = vector.broadcast %22 : vector<16x1xf32> to vector<16x64xf32>
    %24 = arith.addf %21, %23 : vector<16x64xf32>
    %25 = vector.extract_strided_slice %24 {offsets = [0, 0], sizes = [8, 64], strides = [1, 1]} : vector<16x64xf32> to vector<8x64xf32>
    %26 = vector.extract_strided_slice %24 {offsets = [8, 0], sizes = [8, 64], strides = [1, 1]} : vector<16x64xf32> to vector<8x64xf32>
    %27 = arith.negf %26 : vector<8x64xf32>
    %28 = math.exp %27 : vector<8x64xf32>
    %cst_18 = arith.constant 1.000000e+00 : f32
    %29 = vector.broadcast %cst_18 : f32 to vector<8x64xf32>
    %30 = arith.addf %29, %28 : vector<8x64xf32>
    %31 = arith.divf %29, %30 : vector<8x64xf32>
    %32 = arith.mulf %25, %31 : vector<8x64xf32>
    %c688 = arith.constant 688 : index
    %c0_19 = arith.constant 0 : index
    %33 = vector.load %arg1[%c688, %c0_19] : memref<2784x128xf32, #tpu.memory_space<vmem>>, vector<16x1xf32>
    %c448 = arith.constant 448 : index
    %c0_20 = arith.constant 0 : index
    %34 = vector.load %arg1[%c448, %c0_20] : memref<2784x128xf32, #tpu.memory_space<vmem>>, vector<64x32xf32>
    %cst_21 = arith.constant dense<0.000000e+00> : vector<8x32xf32>
    %35 = tpu.matmul %32, %34, %cst_21 {dimension_numbers = #tpu.dot_dimension_numbers<[1], [0], [0], [1], [0, 0, 1, 1], [], []>} : vector<8x64xf32>, vector<64x32xf32>, vector<8x32xf32> -> vector<8x32xf32>
    %c512 = arith.constant 512 : index
    %c0_22 = arith.constant 0 : index
    %36 = vector.load %arg1[%c512, %c0_22] : memref<2784x128xf32, #tpu.memory_space<vmem>>, vector<16x8xf32>
    %cst_23 = arith.constant dense<0.000000e+00> : vector<16x32xf32>
    %37 = tpu.matmul %36, %35, %cst_23 {dimension_numbers = #tpu.dot_dimension_numbers<[1], [0], [0], [1], [0, 0, 1, 1], [], []>} : vector<16x8xf32>, vector<8x32xf32>, vector<16x32xf32> -> vector<16x32xf32>
    %38 = vector.broadcast %33 : vector<16x1xf32> to vector<16x32xf32>
    %39 = arith.addf %38, %37 : vector<16x32xf32>
    %c528 = arith.constant 528 : index
    %c0_24 = arith.constant 0 : index
    %40 = vector.load %arg1[%c528, %c0_24] : memref<2784x128xf32, #tpu.memory_space<vmem>>, vector<64x32xf32>
    %cst_25 = arith.constant dense<0.000000e+00> : vector<8x32xf32>
    %41 = tpu.matmul %32, %40, %cst_25 {dimension_numbers = #tpu.dot_dimension_numbers<[1], [0], [0], [1], [0, 0, 1, 1], [], []>} : vector<8x64xf32>, vector<64x32xf32>, vector<8x32xf32> -> vector<8x32xf32>
    %c592 = arith.constant 592 : index
    %c0_26 = arith.constant 0 : index
    %42 = vector.load %arg1[%c592, %c0_26] : memref<2784x128xf32, #tpu.memory_space<vmem>>, vector<16x8xf32>
    %cst_27 = arith.constant dense<0.000000e+00> : vector<16x32xf32>
    %43 = tpu.matmul %42, %41, %cst_27 {dimension_numbers = #tpu.dot_dimension_numbers<[1], [0], [0], [1], [0, 0, 1, 1], [], []>} : vector<16x8xf32>, vector<8x32xf32>, vector<16x32xf32> -> vector<16x32xf32>
    %44 = arith.addf %39, %43 : vector<16x32xf32>
    %c608 = arith.constant 608 : index
    %c0_28 = arith.constant 0 : index
    %45 = vector.load %arg1[%c608, %c0_28] : memref<2784x128xf32, #tpu.memory_space<vmem>>, vector<64x32xf32>
    %cst_29 = arith.constant dense<0.000000e+00> : vector<8x32xf32>
    %46 = tpu.matmul %32, %45, %cst_29 {dimension_numbers = #tpu.dot_dimension_numbers<[1], [0], [0], [1], [0, 0, 1, 1], [], []>} : vector<8x64xf32>, vector<64x32xf32>, vector<8x32xf32> -> vector<8x32xf32>
    %c672 = arith.constant 672 : index
    %c0_30 = arith.constant 0 : index
    %47 = vector.load %arg1[%c672, %c0_30] : memref<2784x128xf32, #tpu.memory_space<vmem>>, vector<16x8xf32>
    %cst_31 = arith.constant dense<0.000000e+00> : vector<16x32xf32>
    %48 = tpu.matmul %47, %46, %cst_31 {dimension_numbers = #tpu.dot_dimension_numbers<[1], [0], [0], [1], [0, 0, 1, 1], [], []>} : vector<16x8xf32>, vector<8x32xf32>, vector<16x32xf32> -> vector<16x32xf32>
    %49 = arith.addf %44, %48 : vector<16x32xf32>
    %cst_32 = arith.constant 0.000000e+00 : f32
    %50 = vector.broadcast %cst_32 : f32 to vector<16x32xf32>
    %51 = arith.maximumf %49, %50 : vector<16x32xf32>
    %c704 = arith.constant 704 : index
    %c0_33 = arith.constant 0 : index
    %52 = vector.load %arg1[%c704, %c0_33] : memref<2784x128xf32, #tpu.memory_space<vmem>>, vector<32x16xf32>
    %cst_34 = arith.constant dense<0.000000e+00> : vector<32x32xf32>
    %53 = tpu.matmul %52, %51, %cst_34 {dimension_numbers = #tpu.dot_dimension_numbers<[1], [0], [0], [1], [0, 0, 1, 1], [], []>} : vector<32x16xf32>, vector<16x32xf32>, vector<32x32xf32> -> vector<32x32xf32>
    %c736 = arith.constant 736 : index
    %c0_35 = arith.constant 0 : index
    %54 = vector.load %arg1[%c736, %c0_35] : memref<2784x128xf32, #tpu.memory_space<vmem>>, vector<32x1xf32>
    %55 = vector.broadcast %54 : vector<32x1xf32> to vector<32x32xf32>
    %56 = arith.addf %53, %55 : vector<32x32xf32>
    %57 = vector.extract_strided_slice %56 {offsets = [0, 0], sizes = [16, 32], strides = [1, 1]} : vector<32x32xf32> to vector<16x32xf32>
    %58 = vector.extract_strided_slice %56 {offsets = [16, 0], sizes = [16, 32], strides = [1, 1]} : vector<32x32xf32> to vector<16x32xf32>
    %59 = arith.negf %58 : vector<16x32xf32>
    %60 = math.exp %59 : vector<16x32xf32>
    %cst_36 = arith.constant 1.000000e+00 : f32
    %61 = vector.broadcast %cst_36 : f32 to vector<16x32xf32>
    %62 = arith.addf %61, %60 : vector<16x32xf32>
    %63 = arith.divf %61, %62 : vector<16x32xf32>
    %64 = arith.mulf %57, %63 : vector<16x32xf32>
    %c960 = arith.constant 960 : index
    %c0_37 = arith.constant 0 : index
    %65 = vector.load %arg1[%c960, %c0_37] : memref<2784x128xf32, #tpu.memory_space<vmem>>, vector<32x1xf32>
    %c768 = arith.constant 768 : index
    %c0_38 = arith.constant 0 : index
    %66 = vector.load %arg1[%c768, %c0_38] : memref<2784x128xf32, #tpu.memory_space<vmem>>, vector<32x16xf32>
    %cst_39 = arith.constant dense<0.000000e+00> : vector<16x16xf32>
    %67 = tpu.matmul %64, %66, %cst_39 {dimension_numbers = #tpu.dot_dimension_numbers<[1], [0], [0], [1], [0, 0, 1, 1], [], []>} : vector<16x32xf32>, vector<32x16xf32>, vector<16x16xf32> -> vector<16x16xf32>
    %c800 = arith.constant 800 : index
    %c0_40 = arith.constant 0 : index
    %68 = vector.load %arg1[%c800, %c0_40] : memref<2784x128xf32, #tpu.memory_space<vmem>>, vector<32x16xf32>
    %cst_41 = arith.constant dense<0.000000e+00> : vector<32x16xf32>
    %69 = tpu.matmul %68, %67, %cst_41 {dimension_numbers = #tpu.dot_dimension_numbers<[1], [0], [0], [1], [0, 0, 1, 1], [], []>} : vector<32x16xf32>, vector<16x16xf32>, vector<32x16xf32> -> vector<32x16xf32>
    %70 = vector.broadcast %65 : vector<32x1xf32> to vector<32x16xf32>
    %71 = arith.addf %70, %69 : vector<32x16xf32>
    %c832 = arith.constant 832 : index
    %c0_42 = arith.constant 0 : index
    %72 = vector.load %arg1[%c832, %c0_42] : memref<2784x128xf32, #tpu.memory_space<vmem>>, vector<32x16xf32>
    %cst_43 = arith.constant dense<0.000000e+00> : vector<16x16xf32>
    %73 = tpu.matmul %64, %72, %cst_43 {dimension_numbers = #tpu.dot_dimension_numbers<[1], [0], [0], [1], [0, 0, 1, 1], [], []>} : vector<16x32xf32>, vector<32x16xf32>, vector<16x16xf32> -> vector<16x16xf32>
    %c864 = arith.constant 864 : index
    %c0_44 = arith.constant 0 : index
    %74 = vector.load %arg1[%c864, %c0_44] : memref<2784x128xf32, #tpu.memory_space<vmem>>, vector<32x16xf32>
    %cst_45 = arith.constant dense<0.000000e+00> : vector<32x16xf32>
    %75 = tpu.matmul %74, %73, %cst_45 {dimension_numbers = #tpu.dot_dimension_numbers<[1], [0], [0], [1], [0, 0, 1, 1], [], []>} : vector<32x16xf32>, vector<16x16xf32>, vector<32x16xf32> -> vector<32x16xf32>
    %76 = arith.addf %71, %75 : vector<32x16xf32>
    %c896 = arith.constant 896 : index
    %c0_46 = arith.constant 0 : index
    %77 = vector.load %arg1[%c896, %c0_46] : memref<2784x128xf32, #tpu.memory_space<vmem>>, vector<32x16xf32>
    %cst_47 = arith.constant dense<0.000000e+00> : vector<16x16xf32>
    %78 = tpu.matmul %64, %77, %cst_47 {dimension_numbers = #tpu.dot_dimension_numbers<[1], [0], [0], [1], [0, 0, 1, 1], [], []>} : vector<16x32xf32>, vector<32x16xf32>, vector<16x16xf32> -> vector<16x16xf32>
    %c928 = arith.constant 928 : index
    %c0_48 = arith.constant 0 : index
    %79 = vector.load %arg1[%c928, %c0_48] : memref<2784x128xf32, #tpu.memory_space<vmem>>, vector<32x16xf32>
    %cst_49 = arith.constant dense<0.000000e+00> : vector<32x16xf32>
    %80 = tpu.matmul %79, %78, %cst_49 {dimension_numbers = #tpu.dot_dimension_numbers<[1], [0], [0], [1], [0, 0, 1, 1], [], []>} : vector<32x16xf32>, vector<16x16xf32>, vector<32x16xf32> -> vector<32x16xf32>
    %81 = arith.addf %76, %80 : vector<32x16xf32>
    %cst_50 = arith.constant 0.000000e+00 : f32
    %82 = vector.broadcast %cst_50 : f32 to vector<32x16xf32>
    %83 = arith.maximumf %81, %82 : vector<32x16xf32>
    %c992 = arith.constant 992 : index
    %c0_51 = arith.constant 0 : index
    %84 = vector.load %arg1[%c992, %c0_51] : memref<2784x128xf32, #tpu.memory_space<vmem>>, vector<64x32xf32>
    %cst_52 = arith.constant dense<0.000000e+00> : vector<64x16xf32>
    %85 = tpu.matmul %84, %83, %cst_52 {dimension_numbers = #tpu.dot_dimension_numbers<[1], [0], [0], [1], [0, 0, 1, 1], [], []>} : vector<64x32xf32>, vector<32x16xf32>, vector<64x16xf32> -> vector<64x16xf32>
    %c1056 = arith.constant 1056 : index
    %c0_53 = arith.constant 0 : index
    %86 = vector.load %arg1[%c1056, %c0_53] : memref<2784x128xf32, #tpu.memory_space<vmem>>, vector<64x1xf32>
    %87 = vector.broadcast %86 : vector<64x1xf32> to vector<64x16xf32>
    %88 = arith.addf %85, %87 : vector<64x16xf32>
    %89 = vector.extract_strided_slice %88 {offsets = [0, 0], sizes = [32, 16], strides = [1, 1]} : vector<64x16xf32> to vector<32x16xf32>
    %90 = vector.extract_strided_slice %88 {offsets = [32, 0], sizes = [32, 16], strides = [1, 1]} : vector<64x16xf32> to vector<32x16xf32>
    %91 = arith.negf %90 : vector<32x16xf32>
    %92 = math.exp %91 : vector<32x16xf32>
    %cst_54 = arith.constant 1.000000e+00 : f32
    %93 = vector.broadcast %cst_54 : f32 to vector<32x16xf32>
    %94 = arith.addf %93, %92 : vector<32x16xf32>
    %95 = arith.divf %93, %94 : vector<32x16xf32>
    %96 = arith.mulf %89, %95 : vector<32x16xf32>
    %c1120 = arith.constant 1120 : index
    %c0_55 = arith.constant 0 : index
    %97 = vector.load %arg1[%c1120, %c0_55] : memref<2784x128xf32, #tpu.memory_space<vmem>>, vector<16x16xf32>
    %cst_56 = arith.constant dense<0.000000e+00> : vector<32x16xf32>
    %98 = tpu.matmul %96, %97, %cst_56 {dimension_numbers = #tpu.dot_dimension_numbers<[1], [0], [0], [1], [0, 0, 1, 1], [], []>} : vector<32x16xf32>, vector<16x16xf32>, vector<32x16xf32> -> vector<32x16xf32>
    %c1136 = arith.constant 1136 : index
    %c0_57 = arith.constant 0 : index
    %99 = vector.load %arg1[%c1136, %c0_57] : memref<2784x128xf32, #tpu.memory_space<vmem>>, vector<1x16xf32>
    %100 = vector.broadcast %99 : vector<1x16xf32> to vector<32x16xf32>
    %101 = arith.addf %98, %100 : vector<32x16xf32>
    %c1440 = arith.constant 1440 : index
    %c0_58 = arith.constant 0 : index
    %102 = vector.load %arg1[%c1440, %c0_58] : memref<2784x128xf32, #tpu.memory_space<vmem>>, vector<32x32xf32>
    %c1432 = arith.constant 1432 : index
    %c0_59 = arith.constant 0 : index
    %103 = vector.load %arg1[%c1432, %c0_59] : memref<2784x128xf32, #tpu.memory_space<vmem>>, vector<1x16xf32>
    %c1144 = arith.constant 1144 : index
    %c0_60 = arith.constant 0 : index
    %104 = vector.load %arg1[%c1144, %c0_60] : memref<2784x128xf32, #tpu.memory_space<vmem>>, vector<16x4xf32>
    %cst_61 = arith.constant dense<0.000000e+00> : vector<32x4xf32>
    %105 = tpu.matmul %101, %104, %cst_61 {dimension_numbers = #tpu.dot_dimension_numbers<[1], [0], [0], [1], [0, 0, 1, 1], [], []>} : vector<32x16xf32>, vector<16x4xf32>, vector<32x4xf32> -> vector<32x4xf32>
    %c1160 = arith.constant 1160 : index
    %c0_62 = arith.constant 0 : index
    %106 = vector.load %arg1[%c1160, %c0_62] : memref<2784x128xf32, #tpu.memory_space<vmem>>, vector<1x4xf32>
    %107 = vector.broadcast %106 : vector<1x4xf32> to vector<32x4xf32>
    %108 = arith.addf %105, %107 : vector<32x4xf32>
    %c1168 = arith.constant 1168 : index
    %c0_63 = arith.constant 0 : index
    %109 = vector.load %arg1[%c1168, %c0_63] : memref<2784x128xf32, #tpu.memory_space<vmem>>, vector<16x4xf32>
    %cst_64 = arith.constant dense<0.000000e+00> : vector<32x4xf32>
    %110 = tpu.matmul %101, %109, %cst_64 {dimension_numbers = #tpu.dot_dimension_numbers<[1], [0], [0], [1], [0, 0, 1, 1], [], []>} : vector<32x16xf32>, vector<16x4xf32>, vector<32x4xf32> -> vector<32x4xf32>
    %c1184 = arith.constant 1184 : index
    %c0_65 = arith.constant 0 : index
    %111 = vector.load %arg1[%c1184, %c0_65] : memref<2784x128xf32, #tpu.memory_space<vmem>>, vector<1x4xf32>
    %112 = vector.broadcast %111 : vector<1x4xf32> to vector<32x4xf32>
    %113 = arith.addf %110, %112 : vector<32x4xf32>
    %c1192 = arith.constant 1192 : index
    %c0_66 = arith.constant 0 : index
    %114 = vector.load %arg1[%c1192, %c0_66] : memref<2784x128xf32, #tpu.memory_space<vmem>>, vector<16x16xf32>
    %cst_67 = arith.constant dense<0.000000e+00> : vector<32x16xf32>
    %115 = tpu.matmul %101, %114, %cst_67 {dimension_numbers = #tpu.dot_dimension_numbers<[1], [0], [0], [1], [0, 0, 1, 1], [], []>} : vector<32x16xf32>, vector<16x16xf32>, vector<32x16xf32> -> vector<32x16xf32>
    %c1208 = arith.constant 1208 : index
    %c0_68 = arith.constant 0 : index
    %116 = vector.load %arg1[%c1208, %c0_68] : memref<2784x128xf32, #tpu.memory_space<vmem>>, vector<1x16xf32>
    %117 = vector.broadcast %116 : vector<1x16xf32> to vector<32x16xf32>
    %118 = arith.addf %115, %117 : vector<32x16xf32>
    %cst_69 = arith.constant dense<0.000000e+00> : vector<32x32xf32>
    %119 = tpu.matmul %108, %113, %cst_69 {dimension_numbers = #tpu.dot_dimension_numbers<[1], [1], [0], [0], [0, 0, 1, 0], [], []>} : vector<32x4xf32>, vector<32x4xf32>, vector<32x32xf32> -> vector<32x32xf32>
    %120 = arith.addf %119, %102 : vector<32x32xf32>
    %cst_70 = arith.constant dense<0xFF800000> : vector<32xf32>
    %121 = vector.multi_reduction <maximumf>, %120, %cst_70 [1] : vector<32x32xf32> to vector<32xf32>
    %122 = vector.shape_cast %121 : vector<32xf32> to vector<32x1xf32>
    %123 = vector.broadcast %122 : vector<32x1xf32> to vector<32x32xf32>
    %124 = arith.subf %120, %123 : vector<32x32xf32>
    %125 = math.exp %124 : vector<32x32xf32>
    %cst_71 = arith.constant dense<0.000000e+00> : vector<32xf32>
    %126 = vector.multi_reduction <add>, %125, %cst_71 [1] : vector<32x32xf32> to vector<32xf32>
    %127 = vector.shape_cast %126 : vector<32xf32> to vector<32x1xf32>
    %128 = tpu.reciprocal %127 {approx = true} : vector<32x1xf32> -> vector<32x1xf32>
    %129 = vector.broadcast %128 : vector<32x1xf32> to vector<32x32xf32>
    %130 = arith.mulf %125, %129 : vector<32x32xf32>
    %cst_72 = arith.constant dense<0.000000e+00> : vector<32x16xf32>
    %131 = tpu.matmul %130, %118, %cst_72 {dimension_numbers = #tpu.dot_dimension_numbers<[1], [0], [0], [1], [0, 0, 1, 1], [], []>} : vector<32x32xf32>, vector<32x16xf32>, vector<32x16xf32> -> vector<32x16xf32>
    %132 = vector.broadcast %103 : vector<1x16xf32> to vector<32x16xf32>
    %133 = arith.addf %132, %131 : vector<32x16xf32>
    %c1216 = arith.constant 1216 : index
    %c0_73 = arith.constant 0 : index
    %134 = vector.load %arg1[%c1216, %c0_73] : memref<2784x128xf32, #tpu.memory_space<vmem>>, vector<16x4xf32>
    %cst_74 = arith.constant dense<0.000000e+00> : vector<32x4xf32>
    %135 = tpu.matmul %101, %134, %cst_74 {dimension_numbers = #tpu.dot_dimension_numbers<[1], [0], [0], [1], [0, 0, 1, 1], [], []>} : vector<32x16xf32>, vector<16x4xf32>, vector<32x4xf32> -> vector<32x4xf32>
    %c1232 = arith.constant 1232 : index
    %c0_75 = arith.constant 0 : index
    %136 = vector.load %arg1[%c1232, %c0_75] : memref<2784x128xf32, #tpu.memory_space<vmem>>, vector<1x4xf32>
    %137 = vector.broadcast %136 : vector<1x4xf32> to vector<32x4xf32>
    %138 = arith.addf %135, %137 : vector<32x4xf32>
    %c1240 = arith.constant 1240 : index
    %c0_76 = arith.constant 0 : index
    %139 = vector.load %arg1[%c1240, %c0_76] : memref<2784x128xf32, #tpu.memory_space<vmem>>, vector<16x4xf32>
    %cst_77 = arith.constant dense<0.000000e+00> : vector<32x4xf32>
    %140 = tpu.matmul %101, %139, %cst_77 {dimension_numbers = #tpu.dot_dimension_numbers<[1], [0], [0], [1], [0, 0, 1, 1], [], []>} : vector<32x16xf32>, vector<16x4xf32>, vector<32x4xf32> -> vector<32x4xf32>
    %c1256 = arith.constant 1256 : index
    %c0_78 = arith.constant 0 : index
    %141 = vector.load %arg1[%c1256, %c0_78] : memref<2784x128xf32, #tpu.memory_space<vmem>>, vector<1x4xf32>
    %142 = vector.broadcast %141 : vector<1x4xf32> to vector<32x4xf32>
    %143 = arith.addf %140, %142 : vector<32x4xf32>
    %c1264 = arith.constant 1264 : index
    %c0_79 = arith.constant 0 : index
    %144 = vector.load %arg1[%c1264, %c0_79] : memref<2784x128xf32, #tpu.memory_space<vmem>>, vector<16x16xf32>
    %cst_80 = arith.constant dense<0.000000e+00> : vector<32x16xf32>
    %145 = tpu.matmul %101, %144, %cst_80 {dimension_numbers = #tpu.dot_dimension_numbers<[1], [0], [0], [1], [0, 0, 1, 1], [], []>} : vector<32x16xf32>, vector<16x16xf32>, vector<32x16xf32> -> vector<32x16xf32>
    %c1280 = arith.constant 1280 : index
    %c0_81 = arith.constant 0 : index
    %146 = vector.load %arg1[%c1280, %c0_81] : memref<2784x128xf32, #tpu.memory_space<vmem>>, vector<1x16xf32>
    %147 = vector.broadcast %146 : vector<1x16xf32> to vector<32x16xf32>
    %148 = arith.addf %145, %147 : vector<32x16xf32>
    %cst_82 = arith.constant dense<0.000000e+00> : vector<32x32xf32>
    %149 = tpu.matmul %138, %143, %cst_82 {dimension_numbers = #tpu.dot_dimension_numbers<[1], [1], [0], [0], [0, 0, 1, 0], [], []>} : vector<32x4xf32>, vector<32x4xf32>, vector<32x32xf32> -> vector<32x32xf32>
    %150 = arith.addf %149, %102 : vector<32x32xf32>
    %cst_83 = arith.constant dense<0xFF800000> : vector<32xf32>
    %151 = vector.multi_reduction <maximumf>, %150, %cst_83 [1] : vector<32x32xf32> to vector<32xf32>
    %152 = vector.shape_cast %151 : vector<32xf32> to vector<32x1xf32>
    %153 = vector.broadcast %152 : vector<32x1xf32> to vector<32x32xf32>
    %154 = arith.subf %150, %153 : vector<32x32xf32>
    %155 = math.exp %154 : vector<32x32xf32>
    %cst_84 = arith.constant dense<0.000000e+00> : vector<32xf32>
    %156 = vector.multi_reduction <add>, %155, %cst_84 [1] : vector<32x32xf32> to vector<32xf32>
    %157 = vector.shape_cast %156 : vector<32xf32> to vector<32x1xf32>
    %158 = tpu.reciprocal %157 {approx = true} : vector<32x1xf32> -> vector<32x1xf32>
    %159 = vector.broadcast %158 : vector<32x1xf32> to vector<32x32xf32>
    %160 = arith.mulf %155, %159 : vector<32x32xf32>
    %cst_85 = arith.constant dense<0.000000e+00> : vector<32x16xf32>
    %161 = tpu.matmul %160, %148, %cst_85 {dimension_numbers = #tpu.dot_dimension_numbers<[1], [0], [0], [1], [0, 0, 1, 1], [], []>} : vector<32x32xf32>, vector<32x16xf32>, vector<32x16xf32> -> vector<32x16xf32>
    %162 = arith.addf %133, %161 : vector<32x16xf32>
    %c1288 = arith.constant 1288 : index
    %c0_86 = arith.constant 0 : index
    %163 = vector.load %arg1[%c1288, %c0_86] : memref<2784x128xf32, #tpu.memory_space<vmem>>, vector<16x4xf32>
    %cst_87 = arith.constant dense<0.000000e+00> : vector<32x4xf32>
    %164 = tpu.matmul %101, %163, %cst_87 {dimension_numbers = #tpu.dot_dimension_numbers<[1], [0], [0], [1], [0, 0, 1, 1], [], []>} : vector<32x16xf32>, vector<16x4xf32>, vector<32x4xf32> -> vector<32x4xf32>
    %c1304 = arith.constant 1304 : index
    %c0_88 = arith.constant 0 : index
    %165 = vector.load %arg1[%c1304, %c0_88] : memref<2784x128xf32, #tpu.memory_space<vmem>>, vector<1x4xf32>
    %166 = vector.broadcast %165 : vector<1x4xf32> to vector<32x4xf32>
    %167 = arith.addf %164, %166 : vector<32x4xf32>
    %c1312 = arith.constant 1312 : index
    %c0_89 = arith.constant 0 : index
    %168 = vector.load %arg1[%c1312, %c0_89] : memref<2784x128xf32, #tpu.memory_space<vmem>>, vector<16x4xf32>
    %cst_90 = arith.constant dense<0.000000e+00> : vector<32x4xf32>
    %169 = tpu.matmul %101, %168, %cst_90 {dimension_numbers = #tpu.dot_dimension_numbers<[1], [0], [0], [1], [0, 0, 1, 1], [], []>} : vector<32x16xf32>, vector<16x4xf32>, vector<32x4xf32> -> vector<32x4xf32>
    %c1328 = arith.constant 1328 : index
    %c0_91 = arith.constant 0 : index
    %170 = vector.load %arg1[%c1328, %c0_91] : memref<2784x128xf32, #tpu.memory_space<vmem>>, vector<1x4xf32>
    %171 = vector.broadcast %170 : vector<1x4xf32> to vector<32x4xf32>
    %172 = arith.addf %169, %171 : vector<32x4xf32>
    %c1336 = arith.constant 1336 : index
    %c0_92 = arith.constant 0 : index
    %173 = vector.load %arg1[%c1336, %c0_92] : memref<2784x128xf32, #tpu.memory_space<vmem>>, vector<16x16xf32>
    %cst_93 = arith.constant dense<0.000000e+00> : vector<32x16xf32>
    %174 = tpu.matmul %101, %173, %cst_93 {dimension_numbers = #tpu.dot_dimension_numbers<[1], [0], [0], [1], [0, 0, 1, 1], [], []>} : vector<32x16xf32>, vector<16x16xf32>, vector<32x16xf32> -> vector<32x16xf32>
    %c1352 = arith.constant 1352 : index
    %c0_94 = arith.constant 0 : index
    %175 = vector.load %arg1[%c1352, %c0_94] : memref<2784x128xf32, #tpu.memory_space<vmem>>, vector<1x16xf32>
    %176 = vector.broadcast %175 : vector<1x16xf32> to vector<32x16xf32>
    %177 = arith.addf %174, %176 : vector<32x16xf32>
    %cst_95 = arith.constant dense<0.000000e+00> : vector<32x32xf32>
    %178 = tpu.matmul %167, %172, %cst_95 {dimension_numbers = #tpu.dot_dimension_numbers<[1], [1], [0], [0], [0, 0, 1, 0], [], []>} : vector<32x4xf32>, vector<32x4xf32>, vector<32x32xf32> -> vector<32x32xf32>
    %179 = arith.addf %178, %102 : vector<32x32xf32>
    %cst_96 = arith.constant dense<0xFF800000> : vector<32xf32>
    %180 = vector.multi_reduction <maximumf>, %179, %cst_96 [1] : vector<32x32xf32> to vector<32xf32>
    %181 = vector.shape_cast %180 : vector<32xf32> to vector<32x1xf32>
    %182 = vector.broadcast %181 : vector<32x1xf32> to vector<32x32xf32>
    %183 = arith.subf %179, %182 : vector<32x32xf32>
    %184 = math.exp %183 : vector<32x32xf32>
    %cst_97 = arith.constant dense<0.000000e+00> : vector<32xf32>
    %185 = vector.multi_reduction <add>, %184, %cst_97 [1] : vector<32x32xf32> to vector<32xf32>
    %186 = vector.shape_cast %185 : vector<32xf32> to vector<32x1xf32>
    %187 = tpu.reciprocal %186 {approx = true} : vector<32x1xf32> -> vector<32x1xf32>
    %188 = vector.broadcast %187 : vector<32x1xf32> to vector<32x32xf32>
    %189 = arith.mulf %184, %188 : vector<32x32xf32>
    %cst_98 = arith.constant dense<0.000000e+00> : vector<32x16xf32>
    %190 = tpu.matmul %189, %177, %cst_98 {dimension_numbers = #tpu.dot_dimension_numbers<[1], [0], [0], [1], [0, 0, 1, 1], [], []>} : vector<32x32xf32>, vector<32x16xf32>, vector<32x16xf32> -> vector<32x16xf32>
    %191 = arith.addf %162, %190 : vector<32x16xf32>
    %c1360 = arith.constant 1360 : index
    %c0_99 = arith.constant 0 : index
    %192 = vector.load %arg1[%c1360, %c0_99] : memref<2784x128xf32, #tpu.memory_space<vmem>>, vector<16x4xf32>
    %cst_100 = arith.constant dense<0.000000e+00> : vector<32x4xf32>
    %193 = tpu.matmul %101, %192, %cst_100 {dimension_numbers = #tpu.dot_dimension_numbers<[1], [0], [0], [1], [0, 0, 1, 1], [], []>} : vector<32x16xf32>, vector<16x4xf32>, vector<32x4xf32> -> vector<32x4xf32>
    %c1376 = arith.constant 1376 : index
    %c0_101 = arith.constant 0 : index
    %194 = vector.load %arg1[%c1376, %c0_101] : memref<2784x128xf32, #tpu.memory_space<vmem>>, vector<1x4xf32>
    %195 = vector.broadcast %194 : vector<1x4xf32> to vector<32x4xf32>
    %196 = arith.addf %193, %195 : vector<32x4xf32>
    %c1384 = arith.constant 1384 : index
    %c0_102 = arith.constant 0 : index
    %197 = vector.load %arg1[%c1384, %c0_102] : memref<2784x128xf32, #tpu.memory_space<vmem>>, vector<16x4xf32>
    %cst_103 = arith.constant dense<0.000000e+00> : vector<32x4xf32>
    %198 = tpu.matmul %101, %197, %cst_103 {dimension_numbers = #tpu.dot_dimension_numbers<[1], [0], [0], [1], [0, 0, 1, 1], [], []>} : vector<32x16xf32>, vector<16x4xf32>, vector<32x4xf32> -> vector<32x4xf32>
    %c1400 = arith.constant 1400 : index
    %c0_104 = arith.constant 0 : index
    %199 = vector.load %arg1[%c1400, %c0_104] : memref<2784x128xf32, #tpu.memory_space<vmem>>, vector<1x4xf32>
    %200 = vector.broadcast %199 : vector<1x4xf32> to vector<32x4xf32>
    %201 = arith.addf %198, %200 : vector<32x4xf32>
    %c1408 = arith.constant 1408 : index
    %c0_105 = arith.constant 0 : index
    %202 = vector.load %arg1[%c1408, %c0_105] : memref<2784x128xf32, #tpu.memory_space<vmem>>, vector<16x16xf32>
    %cst_106 = arith.constant dense<0.000000e+00> : vector<32x16xf32>
    %203 = tpu.matmul %101, %202, %cst_106 {dimension_numbers = #tpu.dot_dimension_numbers<[1], [0], [0], [1], [0, 0, 1, 1], [], []>} : vector<32x16xf32>, vector<16x16xf32>, vector<32x16xf32> -> vector<32x16xf32>
    %c1424 = arith.constant 1424 : index
    %c0_107 = arith.constant 0 : index
    %204 = vector.load %arg1[%c1424, %c0_107] : memref<2784x128xf32, #tpu.memory_space<vmem>>, vector<1x16xf32>
    %205 = vector.broadcast %204 : vector<1x16xf32> to vector<32x16xf32>
    %206 = arith.addf %203, %205 : vector<32x16xf32>
    %cst_108 = arith.constant dense<0.000000e+00> : vector<32x32xf32>
    %207 = tpu.matmul %196, %201, %cst_108 {dimension_numbers = #tpu.dot_dimension_numbers<[1], [1], [0], [0], [0, 0, 1, 0], [], []>} : vector<32x4xf32>, vector<32x4xf32>, vector<32x32xf32> -> vector<32x32xf32>
    %208 = arith.addf %207, %102 : vector<32x32xf32>
    %cst_109 = arith.constant dense<0xFF800000> : vector<32xf32>
    %209 = vector.multi_reduction <maximumf>, %208, %cst_109 [1] : vector<32x32xf32> to vector<32xf32>
    %210 = vector.shape_cast %209 : vector<32xf32> to vector<32x1xf32>
    %211 = vector.broadcast %210 : vector<32x1xf32> to vector<32x32xf32>
    %212 = arith.subf %208, %211 : vector<32x32xf32>
    %213 = math.exp %212 : vector<32x32xf32>
    %cst_110 = arith.constant dense<0.000000e+00> : vector<32xf32>
    %214 = vector.multi_reduction <add>, %213, %cst_110 [1] : vector<32x32xf32> to vector<32xf32>
    %215 = vector.shape_cast %214 : vector<32xf32> to vector<32x1xf32>
    %216 = tpu.reciprocal %215 {approx = true} : vector<32x1xf32> -> vector<32x1xf32>
    %217 = vector.broadcast %216 : vector<32x1xf32> to vector<32x32xf32>
    %218 = arith.mulf %213, %217 : vector<32x32xf32>
    %cst_111 = arith.constant dense<0.000000e+00> : vector<32x16xf32>
    %219 = tpu.matmul %218, %206, %cst_111 {dimension_numbers = #tpu.dot_dimension_numbers<[1], [0], [0], [1], [0, 0, 1, 1], [], []>} : vector<32x32xf32>, vector<32x16xf32>, vector<32x16xf32> -> vector<32x16xf32>
    %220 = arith.addf %191, %219 : vector<32x16xf32>
    %221 = arith.addf %101, %220 : vector<32x16xf32>
    %cst_112 = arith.constant dense<0.000000e+00> : vector<32xf32>
    %222 = vector.multi_reduction <add>, %221, %cst_112 [1] : vector<32x16xf32> to vector<32xf32>
    %223 = vector.shape_cast %222 : vector<32xf32> to vector<32x1xf32>
    %cst_113 = arith.constant 1.600000e+01 : f32
    %224 = vector.broadcast %cst_113 : f32 to vector<32x1xf32>
    %225 = arith.divf %223, %224 : vector<32x1xf32>
    %226 = vector.broadcast %225 : vector<32x1xf32> to vector<32x16xf32>
    %227 = arith.subf %221, %226 : vector<32x16xf32>
    %228 = arith.mulf %227, %227 : vector<32x16xf32>
    %cst_114 = arith.constant dense<0.000000e+00> : vector<32xf32>
    %229 = vector.multi_reduction <add>, %228, %cst_114 [1] : vector<32x16xf32> to vector<32xf32>
    %230 = vector.shape_cast %229 : vector<32xf32> to vector<32x1xf32>
    %cst_115 = arith.constant 1.600000e+01 : f32
    %231 = vector.broadcast %cst_115 : f32 to vector<32x1xf32>
    %232 = arith.divf %230, %231 : vector<32x1xf32>
    %233 = vector.broadcast %225 : vector<32x1xf32> to vector<32x16xf32>
    %234 = arith.subf %221, %233 : vector<32x16xf32>
    %cst_116 = arith.constant 9.99999974E-6 : f32
    %235 = vector.broadcast %cst_116 : f32 to vector<32x1xf32>
    %236 = arith.addf %232, %235 : vector<32x1xf32>
    %237 = math.rsqrt %236 : vector<32x1xf32>
    %238 = vector.broadcast %237 : vector<32x1xf32> to vector<32x16xf32>
    %239 = arith.mulf %234, %238 : vector<32x16xf32>
    %c1472 = arith.constant 1472 : index
    %c0_117 = arith.constant 0 : index
    %240 = vector.load %arg1[%c1472, %c0_117] : memref<2784x128xf32, #tpu.memory_space<vmem>>, vector<1x16xf32>
    %241 = vector.broadcast %240 : vector<1x16xf32> to vector<32x16xf32>
    %242 = arith.mulf %239, %241 : vector<32x16xf32>
    %c1480 = arith.constant 1480 : index
    %c0_118 = arith.constant 0 : index
    %243 = vector.load %arg1[%c1480, %c0_118] : memref<2784x128xf32, #tpu.memory_space<vmem>>, vector<1x16xf32>
    %244 = vector.broadcast %243 : vector<1x16xf32> to vector<32x16xf32>
    %245 = arith.addf %242, %244 : vector<32x16xf32>
    %c1488 = arith.constant 1488 : index
    %c0_119 = arith.constant 0 : index
    %246 = vector.load %arg1[%c1488, %c0_119] : memref<2784x128xf32, #tpu.memory_space<vmem>>, vector<16x8xf32>
    %cst_120 = arith.constant dense<0.000000e+00> : vector<32x8xf32>
    %247 = tpu.matmul %245, %246, %cst_120 {dimension_numbers = #tpu.dot_dimension_numbers<[1], [0], [0], [1], [0, 0, 1, 1], [], []>} : vector<32x16xf32>, vector<16x8xf32>, vector<32x8xf32> -> vector<32x8xf32>
    %c1504 = arith.constant 1504 : index
    %c0_121 = arith.constant 0 : index
    %248 = vector.load %arg1[%c1504, %c0_121] : memref<2784x128xf32, #tpu.memory_space<vmem>>, vector<1x8xf32>
    %249 = vector.broadcast %248 : vector<1x8xf32> to vector<32x8xf32>
    %250 = arith.addf %247, %249 : vector<32x8xf32>
    %cst_122 = arith.constant 0.000000e+00 : f32
    %251 = vector.broadcast %cst_122 : f32 to vector<32x8xf32>
    %252 = arith.maximumf %250, %251 : vector<32x8xf32>
    %c1512 = arith.constant 1512 : index
    %c0_123 = arith.constant 0 : index
    %253 = vector.load %arg1[%c1512, %c0_123] : memref<2784x128xf32, #tpu.memory_space<vmem>>, vector<8x16xf32>
    %cst_124 = arith.constant dense<0.000000e+00> : vector<32x16xf32>
    %254 = tpu.matmul %252, %253, %cst_124 {dimension_numbers = #tpu.dot_dimension_numbers<[1], [0], [0], [1], [0, 0, 1, 1], [], []>} : vector<32x8xf32>, vector<8x16xf32>, vector<32x16xf32> -> vector<32x16xf32>
    %c1520 = arith.constant 1520 : index
    %c0_125 = arith.constant 0 : index
    %255 = vector.load %arg1[%c1520, %c0_125] : memref<2784x128xf32, #tpu.memory_space<vmem>>, vector<1x16xf32>
    %256 = vector.broadcast %255 : vector<1x16xf32> to vector<32x16xf32>
    %257 = arith.addf %254, %256 : vector<32x16xf32>
    %258 = arith.addf %245, %257 : vector<32x16xf32>
    %cst_126 = arith.constant dense<0.000000e+00> : vector<32xf32>
    %259 = vector.multi_reduction <add>, %258, %cst_126 [1] : vector<32x16xf32> to vector<32xf32>
    %260 = vector.shape_cast %259 : vector<32xf32> to vector<32x1xf32>
    %cst_127 = arith.constant 1.600000e+01 : f32
    %261 = vector.broadcast %cst_127 : f32 to vector<32x1xf32>
    %262 = arith.divf %260, %261 : vector<32x1xf32>
    %263 = vector.broadcast %262 : vector<32x1xf32> to vector<32x16xf32>
    %264 = arith.subf %258, %263 : vector<32x16xf32>
    %265 = arith.mulf %264, %264 : vector<32x16xf32>
    %cst_128 = arith.constant dense<0.000000e+00> : vector<32xf32>
    %266 = vector.multi_reduction <add>, %265, %cst_128 [1] : vector<32x16xf32> to vector<32xf32>
    %267 = vector.shape_cast %266 : vector<32xf32> to vector<32x1xf32>
    %cst_129 = arith.constant 1.600000e+01 : f32
    %268 = vector.broadcast %cst_129 : f32 to vector<32x1xf32>
    %269 = arith.divf %267, %268 : vector<32x1xf32>
    %270 = vector.broadcast %262 : vector<32x1xf32> to vector<32x16xf32>
    %271 = arith.subf %258, %270 : vector<32x16xf32>
    %cst_130 = arith.constant 9.99999974E-6 : f32
    %272 = vector.broadcast %cst_130 : f32 to vector<32x1xf32>
    %273 = arith.addf %269, %272 : vector<32x1xf32>
    %274 = math.rsqrt %273 : vector<32x1xf32>
    %275 = vector.broadcast %274 : vector<32x1xf32> to vector<32x16xf32>
    %276 = arith.mulf %271, %275 : vector<32x16xf32>
    %c1528 = arith.constant 1528 : index
    %c0_131 = arith.constant 0 : index
    %277 = vector.load %arg1[%c1528, %c0_131] : memref<2784x128xf32, #tpu.memory_space<vmem>>, vector<1x16xf32>
    %278 = vector.broadcast %277 : vector<1x16xf32> to vector<32x16xf32>
    %279 = arith.mulf %276, %278 : vector<32x16xf32>
    %c1536 = arith.constant 1536 : index
    %c0_132 = arith.constant 0 : index
    %280 = vector.load %arg1[%c1536, %c0_132] : memref<2784x128xf32, #tpu.memory_space<vmem>>, vector<1x16xf32>
    %281 = vector.broadcast %280 : vector<1x16xf32> to vector<32x16xf32>
    %282 = arith.addf %279, %281 : vector<32x16xf32>
    %c1544 = arith.constant 1544 : index
    %c0_133 = arith.constant 0 : index
    %283 = vector.load %arg1[%c1544, %c0_133] : memref<2784x128xf32, #tpu.memory_space<vmem>>, vector<16x16xf32>
    %cst_134 = arith.constant dense<0.000000e+00> : vector<32x16xf32>
    %284 = tpu.matmul %282, %283, %cst_134 {dimension_numbers = #tpu.dot_dimension_numbers<[1], [0], [0], [1], [0, 0, 1, 1], [], []>} : vector<32x16xf32>, vector<16x16xf32>, vector<32x16xf32> -> vector<32x16xf32>
    %c1560 = arith.constant 1560 : index
    %c0_135 = arith.constant 0 : index
    %285 = vector.load %arg1[%c1560, %c0_135] : memref<2784x128xf32, #tpu.memory_space<vmem>>, vector<1x16xf32>
    %286 = vector.broadcast %285 : vector<1x16xf32> to vector<32x16xf32>
    %287 = arith.addf %284, %286 : vector<32x16xf32>
    %c1568 = arith.constant 1568 : index
    %c0_136 = arith.constant 0 : index
    %288 = vector.load %arg1[%c1568, %c0_136] : memref<2784x128xf32, #tpu.memory_space<vmem>>, vector<128x32xf32>
    %cst_137 = arith.constant dense<0.000000e+00> : vector<128x16xf32>
    %289 = tpu.matmul %288, %96, %cst_137 {dimension_numbers = #tpu.dot_dimension_numbers<[1], [0], [0], [1], [0, 0, 1, 1], [], []>} : vector<128x32xf32>, vector<32x16xf32>, vector<128x16xf32> -> vector<128x16xf32>
    %c1696 = arith.constant 1696 : index
    %c0_138 = arith.constant 0 : index
    %290 = vector.load %arg1[%c1696, %c0_138] : memref<2784x128xf32, #tpu.memory_space<vmem>>, vector<128x32xf32>
    %cst_139 = arith.constant dense<0.000000e+00> : vector<128x16xf32>
    %291 = tpu.matmul %290, %287, %cst_139 {dimension_numbers = #tpu.dot_dimension_numbers<[1], [0], [0], [1], [0, 0, 1, 1], [], []>} : vector<128x32xf32>, vector<32x16xf32>, vector<128x16xf32> -> vector<128x16xf32>
    %292 = arith.addf %289, %291 : vector<128x16xf32>
    %c1824 = arith.constant 1824 : index
    %c0_140 = arith.constant 0 : index
    %293 = vector.load %arg1[%c1824, %c0_140] : memref<2784x128xf32, #tpu.memory_space<vmem>>, vector<128x1xf32>
    %294 = vector.broadcast %293 : vector<128x1xf32> to vector<128x16xf32>
    %295 = arith.addf %292, %294 : vector<128x16xf32>
    %296 = vector.extract_strided_slice %295 {offsets = [0, 0], sizes = [64, 16], strides = [1, 1]} : vector<128x16xf32> to vector<64x16xf32>
    %297 = vector.extract_strided_slice %295 {offsets = [64, 0], sizes = [64, 16], strides = [1, 1]} : vector<128x16xf32> to vector<64x16xf32>
    %298 = arith.negf %297 : vector<64x16xf32>
    %299 = math.exp %298 : vector<64x16xf32>
    %cst_141 = arith.constant 1.000000e+00 : f32
    %300 = vector.broadcast %cst_141 : f32 to vector<64x16xf32>
    %301 = arith.addf %300, %299 : vector<64x16xf32>
    %302 = arith.divf %300, %301 : vector<64x16xf32>
    %303 = arith.mulf %296, %302 : vector<64x16xf32>
    %c2016 = arith.constant 2016 : index
    %c0_142 = arith.constant 0 : index
    %304 = vector.load %arg1[%c2016, %c0_142] : memref<2784x128xf32, #tpu.memory_space<vmem>>, vector<16x16xf32>
    %cst_143 = arith.constant dense<0.000000e+00> : vector<64x16xf32>
    %305 = tpu.matmul %303, %304, %cst_143 {dimension_numbers = #tpu.dot_dimension_numbers<[1], [0], [0], [1], [0, 0, 1, 1], [], []>} : vector<64x16xf32>, vector<16x16xf32>, vector<64x16xf32> -> vector<64x16xf32>
    %c2000 = arith.constant 2000 : index
    %c0_144 = arith.constant 0 : index
    %306 = vector.load %arg1[%c2000, %c0_144] : memref<2784x128xf32, #tpu.memory_space<vmem>>, vector<16x1xf32>
    %c1968 = arith.constant 1968 : index
    %c0_145 = arith.constant 0 : index
    %307 = vector.load %arg1[%c1968, %c0_145] : memref<2784x128xf32, #tpu.memory_space<vmem>>, vector<16x64xf32>
    %cst_146 = arith.constant dense<0.000000e+00> : vector<16x16xf32>
    %308 = tpu.matmul %307, %303, %cst_146 {dimension_numbers = #tpu.dot_dimension_numbers<[1], [0], [0], [1], [0, 0, 1, 1], [], []>} : vector<16x64xf32>, vector<64x16xf32>, vector<16x16xf32> -> vector<16x16xf32>
    %309 = vector.broadcast %306 : vector<16x1xf32> to vector<16x16xf32>
    %310 = arith.addf %308, %309 : vector<16x16xf32>
    %cst_147 = arith.constant 0.000000e+00 : f32
    %311 = vector.broadcast %cst_147 : f32 to vector<16x16xf32>
    %312 = arith.maximumf %310, %311 : vector<16x16xf32>
    %c1984 = arith.constant 1984 : index
    %c0_148 = arith.constant 0 : index
    %313 = vector.load %arg1[%c1984, %c0_148] : memref<2784x128xf32, #tpu.memory_space<vmem>>, vector<16x64xf32>
    %cst_149 = arith.constant dense<0.000000e+00> : vector<16x16xf32>
    %314 = tpu.matmul %313, %303, %cst_149 {dimension_numbers = #tpu.dot_dimension_numbers<[1], [0], [0], [1], [0, 0, 1, 1], [], []>} : vector<16x64xf32>, vector<64x16xf32>, vector<16x16xf32> -> vector<16x16xf32>
    %c1952 = arith.constant 1952 : index
    %c0_150 = arith.constant 0 : index
    %315 = vector.load %arg1[%c1952, %c0_150] : memref<2784x128xf32, #tpu.memory_space<vmem>>, vector<16x64xf32>
    %cst_151 = arith.constant dense<0.000000e+00> : vector<16x16xf32>
    %316 = tpu.matmul %315, %305, %cst_151 {dimension_numbers = #tpu.dot_dimension_numbers<[1], [0], [0], [1], [0, 0, 1, 1], [], []>} : vector<16x64xf32>, vector<64x16xf32>, vector<16x16xf32> -> vector<16x16xf32>
    %317 = arith.addf %314, %316 : vector<16x16xf32>
    %318 = vector.broadcast %306 : vector<16x1xf32> to vector<16x16xf32>
    %319 = arith.addf %317, %318 : vector<16x16xf32>
    %cst_152 = arith.constant 0.000000e+00 : f32
    %320 = vector.broadcast %cst_152 : f32 to vector<16x16xf32>
    %321 = arith.maximumf %319, %320 : vector<16x16xf32>
    %c2032 = arith.constant 2032 : index
    %c0_153 = arith.constant 0 : index
    %322 = vector.load %arg1[%c2032, %c0_153] : memref<2784x128xf32, #tpu.memory_space<vmem>>, vector<16x32xf32>
    %cst_154 = arith.constant dense<0.000000e+00> : vector<16x32xf32>
    %323 = tpu.matmul %312, %322, %cst_154 {dimension_numbers = #tpu.dot_dimension_numbers<[1], [0], [0], [1], [0, 0, 1, 1], [], []>} : vector<16x16xf32>, vector<16x32xf32>, vector<16x32xf32> -> vector<16x32xf32>
    %c2048 = arith.constant 2048 : index
    %c0_155 = arith.constant 0 : index
    %324 = vector.load %arg1[%c2048, %c0_155] : memref<2784x128xf32, #tpu.memory_space<vmem>>, vector<16x32xf32>
    %cst_156 = arith.constant dense<0.000000e+00> : vector<16x32xf32>
    %325 = tpu.matmul %321, %324, %cst_156 {dimension_numbers = #tpu.dot_dimension_numbers<[1], [0], [0], [1], [0, 0, 1, 1], [], []>} : vector<16x16xf32>, vector<16x32xf32>, vector<16x32xf32> -> vector<16x32xf32>
    %326 = arith.addf %323, %325 : vector<16x32xf32>
    %c2064 = arith.constant 2064 : index
    %c0_157 = arith.constant 0 : index
    %327 = vector.load %arg1[%c2064, %c0_157] : memref<2784x128xf32, #tpu.memory_space<vmem>>, vector<64x16xf32>
    %cst_158 = arith.constant dense<0.000000e+00> : vector<64x32xf32>
    %328 = tpu.matmul %327, %64, %cst_158 {dimension_numbers = #tpu.dot_dimension_numbers<[1], [0], [0], [1], [0, 0, 1, 1], [], []>} : vector<64x16xf32>, vector<16x32xf32>, vector<64x32xf32> -> vector<64x32xf32>
    %c2128 = arith.constant 2128 : index
    %c0_159 = arith.constant 0 : index
    %329 = vector.load %arg1[%c2128, %c0_159] : memref<2784x128xf32, #tpu.memory_space<vmem>>, vector<64x16xf32>
    %cst_160 = arith.constant dense<0.000000e+00> : vector<64x32xf32>
    %330 = tpu.matmul %329, %326, %cst_160 {dimension_numbers = #tpu.dot_dimension_numbers<[1], [0], [0], [1], [0, 0, 1, 1], [], []>} : vector<64x16xf32>, vector<16x32xf32>, vector<64x32xf32> -> vector<64x32xf32>
    %331 = arith.addf %328, %330 : vector<64x32xf32>
    %c2192 = arith.constant 2192 : index
    %c0_161 = arith.constant 0 : index
    %332 = vector.load %arg1[%c2192, %c0_161] : memref<2784x128xf32, #tpu.memory_space<vmem>>, vector<64x1xf32>
    %333 = vector.broadcast %332 : vector<64x1xf32> to vector<64x32xf32>
    %334 = arith.addf %331, %333 : vector<64x32xf32>
    %335 = vector.extract_strided_slice %334 {offsets = [0, 0], sizes = [32, 32], strides = [1, 1]} : vector<64x32xf32> to vector<32x32xf32>
    %336 = vector.extract_strided_slice %334 {offsets = [32, 0], sizes = [32, 32], strides = [1, 1]} : vector<64x32xf32> to vector<32x32xf32>
    %337 = arith.negf %336 : vector<32x32xf32>
    %338 = math.exp %337 : vector<32x32xf32>
    %cst_162 = arith.constant 1.000000e+00 : f32
    %339 = vector.broadcast %cst_162 : f32 to vector<32x32xf32>
    %340 = arith.addf %339, %338 : vector<32x32xf32>
    %341 = arith.divf %339, %340 : vector<32x32xf32>
    %342 = arith.mulf %335, %341 : vector<32x32xf32>
    %c2288 = arith.constant 2288 : index
    %c0_163 = arith.constant 0 : index
    %343 = vector.load %arg1[%c2288, %c0_163] : memref<2784x128xf32, #tpu.memory_space<vmem>>, vector<32x32xf32>
    %cst_164 = arith.constant dense<0.000000e+00> : vector<32x32xf32>
    %344 = tpu.matmul %342, %343, %cst_164 {dimension_numbers = #tpu.dot_dimension_numbers<[1], [0], [0], [1], [0, 0, 1, 1], [], []>} : vector<32x32xf32>, vector<32x32xf32>, vector<32x32xf32> -> vector<32x32xf32>
    %c2280 = arith.constant 2280 : index
    %c0_165 = arith.constant 0 : index
    %345 = vector.load %arg1[%c2280, %c0_165] : memref<2784x128xf32, #tpu.memory_space<vmem>>, vector<8x1xf32>
    %c2264 = arith.constant 2264 : index
    %c0_166 = arith.constant 0 : index
    %346 = vector.load %arg1[%c2264, %c0_166] : memref<2784x128xf32, #tpu.memory_space<vmem>>, vector<8x32xf32>
    %cst_167 = arith.constant dense<0.000000e+00> : vector<8x32xf32>
    %347 = tpu.matmul %346, %342, %cst_167 {dimension_numbers = #tpu.dot_dimension_numbers<[1], [0], [0], [1], [0, 0, 1, 1], [], []>} : vector<8x32xf32>, vector<32x32xf32>, vector<8x32xf32> -> vector<8x32xf32>
    %348 = vector.broadcast %345 : vector<8x1xf32> to vector<8x32xf32>
    %349 = arith.addf %347, %348 : vector<8x32xf32>
    %cst_168 = arith.constant 0.000000e+00 : f32
    %350 = vector.broadcast %cst_168 : f32 to vector<8x32xf32>
    %351 = arith.maximumf %349, %350 : vector<8x32xf32>
    %c2272 = arith.constant 2272 : index
    %c0_169 = arith.constant 0 : index
    %352 = vector.load %arg1[%c2272, %c0_169] : memref<2784x128xf32, #tpu.memory_space<vmem>>, vector<8x32xf32>
    %cst_170 = arith.constant dense<0.000000e+00> : vector<8x32xf32>
    %353 = tpu.matmul %352, %342, %cst_170 {dimension_numbers = #tpu.dot_dimension_numbers<[1], [0], [0], [1], [0, 0, 1, 1], [], []>} : vector<8x32xf32>, vector<32x32xf32>, vector<8x32xf32> -> vector<8x32xf32>
    %c2256 = arith.constant 2256 : index
    %c0_171 = arith.constant 0 : index
    %354 = vector.load %arg1[%c2256, %c0_171] : memref<2784x128xf32, #tpu.memory_space<vmem>>, vector<8x32xf32>
    %cst_172 = arith.constant dense<0.000000e+00> : vector<8x32xf32>
    %355 = tpu.matmul %354, %344, %cst_172 {dimension_numbers = #tpu.dot_dimension_numbers<[1], [0], [0], [1], [0, 0, 1, 1], [], []>} : vector<8x32xf32>, vector<32x32xf32>, vector<8x32xf32> -> vector<8x32xf32>
    %356 = arith.addf %353, %355 : vector<8x32xf32>
    %357 = vector.broadcast %345 : vector<8x1xf32> to vector<8x32xf32>
    %358 = arith.addf %356, %357 : vector<8x32xf32>
    %cst_173 = arith.constant 0.000000e+00 : f32
    %359 = vector.broadcast %cst_173 : f32 to vector<8x32xf32>
    %360 = arith.maximumf %358, %359 : vector<8x32xf32>
    %c2320 = arith.constant 2320 : index
    %c0_174 = arith.constant 0 : index
    %361 = vector.load %arg1[%c2320, %c0_174] : memref<2784x128xf32, #tpu.memory_space<vmem>>, vector<32x64xf32>
    %cst_175 = arith.constant dense<0.000000e+00> : vector<8x64xf32>
    %362 = tpu.matmul %351, %361, %cst_175 {dimension_numbers = #tpu.dot_dimension_numbers<[1], [0], [0], [1], [0, 0, 1, 1], [], []>} : vector<8x32xf32>, vector<32x64xf32>, vector<8x64xf32> -> vector<8x64xf32>
    %c2352 = arith.constant 2352 : index
    %c0_176 = arith.constant 0 : index
    %363 = vector.load %arg1[%c2352, %c0_176] : memref<2784x128xf32, #tpu.memory_space<vmem>>, vector<32x64xf32>
    %cst_177 = arith.constant dense<0.000000e+00> : vector<8x64xf32>
    %364 = tpu.matmul %360, %363, %cst_177 {dimension_numbers = #tpu.dot_dimension_numbers<[1], [0], [0], [1], [0, 0, 1, 1], [], []>} : vector<8x32xf32>, vector<32x64xf32>, vector<8x64xf32> -> vector<8x64xf32>
    %365 = arith.addf %362, %364 : vector<8x64xf32>
    %c2384 = arith.constant 2384 : index
    %c0_178 = arith.constant 0 : index
    %366 = vector.load %arg1[%c2384, %c0_178] : memref<2784x128xf32, #tpu.memory_space<vmem>>, vector<32x8xf32>
    %cst_179 = arith.constant dense<0.000000e+00> : vector<32x64xf32>
    %367 = tpu.matmul %366, %32, %cst_179 {dimension_numbers = #tpu.dot_dimension_numbers<[1], [0], [0], [1], [0, 0, 1, 1], [], []>} : vector<32x8xf32>, vector<8x64xf32>, vector<32x64xf32> -> vector<32x64xf32>
    %c2416 = arith.constant 2416 : index
    %c0_180 = arith.constant 0 : index
    %368 = vector.load %arg1[%c2416, %c0_180] : memref<2784x128xf32, #tpu.memory_space<vmem>>, vector<32x8xf32>
    %cst_181 = arith.constant dense<0.000000e+00> : vector<32x64xf32>
    %369 = tpu.matmul %368, %365, %cst_181 {dimension_numbers = #tpu.dot_dimension_numbers<[1], [0], [0], [1], [0, 0, 1, 1], [], []>} : vector<32x8xf32>, vector<8x64xf32>, vector<32x64xf32> -> vector<32x64xf32>
    %370 = arith.addf %367, %369 : vector<32x64xf32>
    %c2448 = arith.constant 2448 : index
    %c0_182 = arith.constant 0 : index
    %371 = vector.load %arg1[%c2448, %c0_182] : memref<2784x128xf32, #tpu.memory_space<vmem>>, vector<32x1xf32>
    %372 = vector.broadcast %371 : vector<32x1xf32> to vector<32x64xf32>
    %373 = arith.addf %370, %372 : vector<32x64xf32>
    %374 = vector.extract_strided_slice %373 {offsets = [0, 0], sizes = [16, 64], strides = [1, 1]} : vector<32x64xf32> to vector<16x64xf32>
    %375 = vector.extract_strided_slice %373 {offsets = [16, 0], sizes = [16, 64], strides = [1, 1]} : vector<32x64xf32> to vector<16x64xf32>
    %376 = arith.negf %375 : vector<16x64xf32>
    %377 = math.exp %376 : vector<16x64xf32>
    %cst_183 = arith.constant 1.000000e+00 : f32
    %378 = vector.broadcast %cst_183 : f32 to vector<16x64xf32>
    %379 = arith.addf %378, %377 : vector<16x64xf32>
    %380 = arith.divf %378, %379 : vector<16x64xf32>
    %381 = arith.mulf %374, %380 : vector<16x64xf32>
    %c2512 = arith.constant 2512 : index
    %c0_184 = arith.constant 0 : index
    %382 = vector.load %arg1[%c2512, %c0_184] : memref<2784x128xf32, #tpu.memory_space<vmem>>, vector<64x64xf32>
    %cst_185 = arith.constant dense<0.000000e+00> : vector<16x64xf32>
    %383 = tpu.matmul %381, %382, %cst_185 {dimension_numbers = #tpu.dot_dimension_numbers<[1], [0], [0], [1], [0, 0, 1, 1], [], []>} : vector<16x64xf32>, vector<64x64xf32>, vector<16x64xf32> -> vector<16x64xf32>
    %c2504 = arith.constant 2504 : index
    %c0_186 = arith.constant 0 : index
    %384 = vector.load %arg1[%c2504, %c0_186] : memref<2784x128xf32, #tpu.memory_space<vmem>>, vector<2x1xf32>
    %c2488 = arith.constant 2488 : index
    %c0_187 = arith.constant 0 : index
    %385 = vector.load %arg1[%c2488, %c0_187] : memref<2784x128xf32, #tpu.memory_space<vmem>>, vector<2x16xf32>
    %cst_188 = arith.constant dense<0.000000e+00> : vector<2x64xf32>
    %386 = tpu.matmul %385, %381, %cst_188 {dimension_numbers = #tpu.dot_dimension_numbers<[1], [0], [0], [1], [0, 0, 1, 1], [], []>} : vector<2x16xf32>, vector<16x64xf32>, vector<2x64xf32> -> vector<2x64xf32>
    %387 = vector.broadcast %384 : vector<2x1xf32> to vector<2x64xf32>
    %388 = arith.addf %386, %387 : vector<2x64xf32>
    %cst_189 = arith.constant 0.000000e+00 : f32
    %389 = vector.broadcast %cst_189 : f32 to vector<2x64xf32>
    %390 = arith.maximumf %388, %389 : vector<2x64xf32>
    %c2496 = arith.constant 2496 : index
    %c0_190 = arith.constant 0 : index
    %391 = vector.load %arg1[%c2496, %c0_190] : memref<2784x128xf32, #tpu.memory_space<vmem>>, vector<2x16xf32>
    %cst_191 = arith.constant dense<0.000000e+00> : vector<2x64xf32>
    %392 = tpu.matmul %391, %381, %cst_191 {dimension_numbers = #tpu.dot_dimension_numbers<[1], [0], [0], [1], [0, 0, 1, 1], [], []>} : vector<2x16xf32>, vector<16x64xf32>, vector<2x64xf32> -> vector<2x64xf32>
    %c2480 = arith.constant 2480 : index
    %c0_192 = arith.constant 0 : index
    %393 = vector.load %arg1[%c2480, %c0_192] : memref<2784x128xf32, #tpu.memory_space<vmem>>, vector<2x16xf32>
    %cst_193 = arith.constant dense<0.000000e+00> : vector<2x64xf32>
    %394 = tpu.matmul %393, %383, %cst_193 {dimension_numbers = #tpu.dot_dimension_numbers<[1], [0], [0], [1], [0, 0, 1, 1], [], []>} : vector<2x16xf32>, vector<16x64xf32>, vector<2x64xf32> -> vector<2x64xf32>
    %395 = arith.addf %392, %394 : vector<2x64xf32>
    %396 = vector.broadcast %384 : vector<2x1xf32> to vector<2x64xf32>
    %397 = arith.addf %395, %396 : vector<2x64xf32>
    %cst_194 = arith.constant 0.000000e+00 : f32
    %398 = vector.broadcast %cst_194 : f32 to vector<2x64xf32>
    %399 = arith.maximumf %397, %398 : vector<2x64xf32>
    %c2576 = arith.constant 2576 : index
    %c0_195 = arith.constant 0 : index
    %400 = vector.load %arg1[%c2576, %c0_195] : memref<2784x128xf32, #tpu.memory_space<vmem>>, vector<64x128xf32>
    %cst_196 = arith.constant dense<0.000000e+00> : vector<2x128xf32>
    %401 = tpu.matmul %390, %400, %cst_196 {dimension_numbers = #tpu.dot_dimension_numbers<[1], [0], [0], [1], [0, 0, 1, 1], [], []>} : vector<2x64xf32>, vector<64x128xf32>, vector<2x128xf32> -> vector<2x128xf32>
    %c2640 = arith.constant 2640 : index
    %c0_197 = arith.constant 0 : index
    %402 = vector.load %arg1[%c2640, %c0_197] : memref<2784x128xf32, #tpu.memory_space<vmem>>, vector<64x128xf32>
    %cst_198 = arith.constant dense<0.000000e+00> : vector<2x128xf32>
    %403 = tpu.matmul %399, %402, %cst_198 {dimension_numbers = #tpu.dot_dimension_numbers<[1], [0], [0], [1], [0, 0, 1, 1], [], []>} : vector<2x64xf32>, vector<64x128xf32>, vector<2x128xf32> -> vector<2x128xf32>
    %404 = arith.addf %401, %403 : vector<2x128xf32>
    %c2704 = arith.constant 2704 : index
    %c0_199 = arith.constant 0 : index
    %405 = vector.load %arg1[%c2704, %c0_199] : memref<2784x128xf32, #tpu.memory_space<vmem>>, vector<4x2xf32>
    %cst_200 = arith.constant dense<0.000000e+00> : vector<4x128xf32>
    %406 = tpu.matmul %405, %0, %cst_200 {dimension_numbers = #tpu.dot_dimension_numbers<[1], [0], [0], [1], [0, 0, 1, 1], [], []>} : vector<4x2xf32>, vector<2x128xf32>, vector<4x128xf32> -> vector<4x128xf32>
    %c2712 = arith.constant 2712 : index
    %c0_201 = arith.constant 0 : index
    %407 = vector.load %arg1[%c2712, %c0_201] : memref<2784x128xf32, #tpu.memory_space<vmem>>, vector<4x2xf32>
    %cst_202 = arith.constant dense<0.000000e+00> : vector<4x128xf32>
    %408 = tpu.matmul %407, %404, %cst_202 {dimension_numbers = #tpu.dot_dimension_numbers<[1], [0], [0], [1], [0, 0, 1, 1], [], []>} : vector<4x2xf32>, vector<2x128xf32>, vector<4x128xf32> -> vector<4x128xf32>
    %409 = arith.addf %406, %408 : vector<4x128xf32>
    %c2720 = arith.constant 2720 : index
    %c0_203 = arith.constant 0 : index
    %410 = vector.load %arg1[%c2720, %c0_203] : memref<2784x128xf32, #tpu.memory_space<vmem>>, vector<4x1xf32>
    %411 = vector.broadcast %410 : vector<4x1xf32> to vector<4x128xf32>
    %412 = arith.addf %409, %411 : vector<4x128xf32>
    %c2728 = arith.constant 2728 : index
    %c0_204 = arith.constant 0 : index
    %413 = vector.load %arg1[%c2728, %c0_204] : memref<2784x128xf32, #tpu.memory_space<vmem>>, vector<4x2xf32>
    %cst_205 = arith.constant dense<0.000000e+00> : vector<4x128xf32>
    %414 = tpu.matmul %413, %0, %cst_205 {dimension_numbers = #tpu.dot_dimension_numbers<[1], [0], [0], [1], [0, 0, 1, 1], [], []>} : vector<4x2xf32>, vector<2x128xf32>, vector<4x128xf32> -> vector<4x128xf32>
    %c2736 = arith.constant 2736 : index
    %c0_206 = arith.constant 0 : index
    %415 = vector.load %arg1[%c2736, %c0_206] : memref<2784x128xf32, #tpu.memory_space<vmem>>, vector<4x2xf32>
    %cst_207 = arith.constant dense<0.000000e+00> : vector<4x128xf32>
    %416 = tpu.matmul %415, %404, %cst_207 {dimension_numbers = #tpu.dot_dimension_numbers<[1], [0], [0], [1], [0, 0, 1, 1], [], []>} : vector<4x2xf32>, vector<2x128xf32>, vector<4x128xf32> -> vector<4x128xf32>
    %417 = arith.addf %414, %416 : vector<4x128xf32>
    %c2744 = arith.constant 2744 : index
    %c0_208 = arith.constant 0 : index
    %418 = vector.load %arg1[%c2744, %c0_208] : memref<2784x128xf32, #tpu.memory_space<vmem>>, vector<4x1xf32>
    %419 = vector.broadcast %418 : vector<4x1xf32> to vector<4x128xf32>
    %420 = arith.addf %417, %419 : vector<4x128xf32>
    %421 = arith.negf %420 : vector<4x128xf32>
    %422 = math.exp %421 : vector<4x128xf32>
    %cst_209 = arith.constant 1.000000e+00 : f32
    %423 = vector.broadcast %cst_209 : f32 to vector<4x128xf32>
    %424 = arith.addf %423, %422 : vector<4x128xf32>
    %425 = arith.divf %423, %424 : vector<4x128xf32>
    %426 = arith.mulf %412, %425 : vector<4x128xf32>
    %cst_210 = arith.constant 0.000000e+00 : f32
    %427 = vector.broadcast %cst_210 : f32 to vector<4x1xf32>
    %428 = vector.extract_strided_slice %426 {offsets = [0, 1], sizes = [4, 127], strides = [1, 1]} : vector<4x128xf32> to vector<4x127xf32>
    %429 = tpu.concatenate %428, %427 in 1 : vector<4x127xf32>, vector<4x1xf32> -> vector<4x128xf32>
    %430 = vector.extract_strided_slice %426 {offsets = [0, 0], sizes = [4, 127], strides = [1, 1]} : vector<4x128xf32> to vector<4x127xf32>
    %431 = tpu.concatenate %427, %430 in 1 : vector<4x1xf32>, vector<4x127xf32> -> vector<4x128xf32>
    %c2752 = arith.constant 2752 : index
    %c0_211 = arith.constant 0 : index
    %432 = vector.load %arg1[%c2752, %c0_211] : memref<2784x128xf32, #tpu.memory_space<vmem>>, vector<2x4xf32>
    %cst_212 = arith.constant dense<0.000000e+00> : vector<2x128xf32>
    %433 = tpu.matmul %432, %429, %cst_212 {dimension_numbers = #tpu.dot_dimension_numbers<[1], [0], [0], [1], [0, 0, 1, 1], [], []>} : vector<2x4xf32>, vector<4x128xf32>, vector<2x128xf32> -> vector<2x128xf32>
    %c2760 = arith.constant 2760 : index
    %c0_213 = arith.constant 0 : index
    %434 = vector.load %arg1[%c2760, %c0_213] : memref<2784x128xf32, #tpu.memory_space<vmem>>, vector<2x4xf32>
    %cst_214 = arith.constant dense<0.000000e+00> : vector<2x128xf32>
    %435 = tpu.matmul %434, %426, %cst_214 {dimension_numbers = #tpu.dot_dimension_numbers<[1], [0], [0], [1], [0, 0, 1, 1], [], []>} : vector<2x4xf32>, vector<4x128xf32>, vector<2x128xf32> -> vector<2x128xf32>
    %436 = arith.addf %433, %435 : vector<2x128xf32>
    %c2768 = arith.constant 2768 : index
    %c0_215 = arith.constant 0 : index
    %437 = vector.load %arg1[%c2768, %c0_215] : memref<2784x128xf32, #tpu.memory_space<vmem>>, vector<2x4xf32>
    %cst_216 = arith.constant dense<0.000000e+00> : vector<2x128xf32>
    %438 = tpu.matmul %437, %431, %cst_216 {dimension_numbers = #tpu.dot_dimension_numbers<[1], [0], [0], [1], [0, 0, 1, 1], [], []>} : vector<2x4xf32>, vector<4x128xf32>, vector<2x128xf32> -> vector<2x128xf32>
    %439 = arith.addf %436, %438 : vector<2x128xf32>
    %c2776 = arith.constant 2776 : index
    %c0_217 = arith.constant 0 : index
    %440 = vector.load %arg1[%c2776, %c0_217] : memref<2784x128xf32, #tpu.memory_space<vmem>>, vector<2x1xf32>
    %441 = vector.broadcast %440 : vector<2x1xf32> to vector<2x128xf32>
    %442 = arith.addf %439, %441 : vector<2x128xf32>
    %c0_218 = arith.constant 0 : index
    %c0_219 = arith.constant 0 : index
    %443 = vector.load %arg2[%c0_218, %c0_219] : memref<2x128xf32, #tpu.memory_space<vmem>>, vector<2x128xf32>
    tpu.vector_store %arg2[%c0_218, %c0_219], %442 {strides = array<i32>} : memref<2x128xf32, #tpu.memory_space<vmem>>, vector<2x128xf32>,
    return
  }
}

</mosaic_0001>

<llo_original>
// kernel: _lambda_.1
$region0: #{_lambda_.1}
  #allocation0 [shape = 'u32[]', space=smem, size = 0x4, offset = 0x4, fixed_abs, tag = 'smem constant byte address 0x4 - core index']
  #allocation1 [shape = 'u32[144,128]{1,0:T(1,128)}', space=vmem, size = 0x12000, scoped, tag = 'internal scratch']
  %s0 = inlined_call_operand.hbm [shape: f32[2,128], index: 0, kind: input, shape index: {}]
  %s1 = inlined_call_operand.hbm [shape: f32[2784,128], index: 1, kind: input, shape index: {}]
  %s2 = inlined_call_operand.hbm [shape: f32[2,128], index: 2, kind: output, shape index: {}]
  %s3 = sld [smem:[#allocation0]]
  $region26: #{_lambda_.1} parent=0
    _
  %s5 = ssub.s32 1, %s3
  %s6 = scalar_select 0, %s5, %s3
  $region1: #{_lambda_.1} parent=0
    #allocation2 [shape = 'u8[1024]{0}', space=vmem, size = 0x400, scoped, tag = 'input window, operand 0, single buffered']
    #allocation3 [shape = 's32[1]{0}', space=sflag, size = 0x4, scoped, tag = 'scoped memory for _lambda_.1']
    #allocation4 [shape = 's32[1]{0}', space=sflag, size = 0x4, scoped, tag = 'scoped memory for _lambda_.1']
    #allocation5 [shape = 'u8[1425408]{0}', space=vmem, size = 0x15c000, scoped, tag = 'input window, operand 1, single buffered']
    #allocation6 [shape = 's32[1]{0}', space=sflag, size = 0x4, scoped, tag = 'scoped memory for _lambda_.1']
    #allocation7 [shape = 'u8[1024]{0}', space=vmem, size = 0x400, scoped, tag = 'output window, operand 0, single buffered']
    %7 = vsyncpa [#allocation3], 0
    %8 = vsyncpa [#allocation6], 0
    %9 = vsyncpa [#allocation4], 0
    // Predicated region
    $region2: #{_lambda_.1} parent=1 // pred_check
      _
    $region3: #{_lambda_.1} parent=1 // pred_check_branch
      %11 = sbr.rel (0) target = $region5
    $region4: #{_lambda_.1} parent=1 // pred_region
      %s13 = ssub.s32 32, 32
      %14 = vsyncadd [#allocation3], %s13
      %s16 = sshll.u32 [#allocation2], 4
      %s17 = int_to_ptr.vmem [resolvable:$true] %s16
      %19 = dma.hbm_to_vmem [thread:$0]  %s0, 32, %s17, [#allocation3]
    $region5: #{_lambda_.1} parent=1 // pred_fallthru
      _
    // Predicated region
    $region6: #{_lambda_.1} parent=1 // pred_check
      _
    $region7: #{_lambda_.1} parent=1 // pred_check_branch
      %21 = sbr.rel (0) target = $region9
    $region8: #{_lambda_.1} parent=1 // pred_region
      %s23 = ssub.s32 44544, 44544
      %24 = vsyncadd [#allocation6], %s23
      %s25 = sshll.u32 [#allocation5], 4
      %s26 = int_to_ptr.vmem [resolvable:$true] %s25
      %31 = dma.hbm_to_vmem [thread:$0]  %s1, 44544, %s26, [#allocation6], 128, 128, 8
    $region9: #{_lambda_.1} parent=1 // pred_fallthru
      _
    // Predicated region
    $region10: #{_lambda_.1} parent=1 // pred_check
      _
    $region11: #{_lambda_.1} parent=1 // pred_check_branch
      %33 = sbr.rel (0) target = $region13
    $region12: #{_lambda_.1} parent=1 // pred_region
      %34 = dma.done [#allocation3], 32
    $region13: #{_lambda_.1} parent=1 // pred_fallthru
      _
    // Predicated region
    $region14: #{_lambda_.1} parent=1 // pred_check
      _
    $region15: #{_lambda_.1} parent=1 // pred_check_branch
      %36 = sbr.rel (0) target = $region17
    $region16: #{_lambda_.1} parent=1 // pred_region
      %37 = dma.done [#allocation6], 44544
    $region17: #{_lambda_.1} parent=1 // pred_fallthru
      _
    %v38 = vld [vmem:[#allocation2] sm:$0x3]
    %v39 = vld [vmem:[#allocation5 + $0x198] sm:$0xff]
    %v40 = vld [vmem:[#allocation5] sm:$0xff]
    %v41 = vld [vmem:[#allocation5 + $0x8] sm:$0xff]
    %v42 = vld [vmem:[#allocation5 + $0x10] sm:$0xff]
    %v43 = vld [vmem:[#allocation5 + $0x18] sm:$0xff]
    %v44 = vld [vmem:[#allocation5 + $0x20] sm:$0xff]
    %v45 = vld [vmem:[#allocation5 + $0x28] sm:$0xff]
    %v46 = vld [vmem:[#allocation5 + $0x30] sm:$0xff]
    %v47 = vld [vmem:[#allocation5 + $0x38] sm:$0xff]
    %v48 = vld [vmem:[#allocation5 + $0x40] sm:$0xff]
    %v49 = vld [vmem:[#allocation5 + $0x48] sm:$0xff]
    %v50 = vld [vmem:[#allocation5 + $0x50] sm:$0xff]
    %v51 = vld [vmem:[#allocation5 + $0x58] sm:$0xff]
    %v52 = vld [vmem:[#allocation5 + $0x60] sm:$0xff]
    %v53 = vld [vmem:[#allocation5 + $0x68] sm:$0xff]
    %v54 = vld [vmem:[#allocation5 + $0x70] sm:$0xff]
    %v55 = vld [vmem:[#allocation5 + $0x78] sm:$0xff]
    %56 = vmatprep.subr.mxu0 0.0
    %57 = vmatpush1.msra.mxu0 %v40
    %58 = vmatprep.subr.mxu0 0.0
    %59 = vmatpush1.msra.mxu0 %v41
    %60 = vmatprep.subr.mxu0 0.0
    %61 = vmatpush1.msra.mxu0 %v42
    %62 = vmatprep.subr.mxu0 0.0
    %63 = vmatpush1.msra.mxu0 %v43
    %64 = vmatprep.subr.mxu0 0.0
    %65 = vmatpush1.msra.mxu0 %v44
    %66 = vmatprep.subr.mxu0 0.0
    %67 = vmatpush1.msra.mxu0 %v45
    %68 = vmatprep.subr.mxu0 0.0
    %69 = vmatpush1.msra.mxu0 %v46
    %70 = vmatprep.subr.mxu0 0.0
    %71 = vmatpush1.msra.mxu0 %v47
    %72 = vmatprep.subr.mxu0 0.0
    %73 = vmatpush1.msra.mxu0 %v48
    %74 = vmatprep.subr.mxu0 0.0
    %75 = vmatpush1.msra.mxu0 %v49
    %76 = vmatprep.subr.mxu0 0.0
    %77 = vmatpush1.msra.mxu0 %v50
    %78 = vmatprep.subr.mxu0 0.0
    %79 = vmatpush1.msra.mxu0 %v51
    %80 = vmatprep.subr.mxu0 0.0
    %81 = vmatpush1.msra.mxu0 %v52
    %82 = vmatprep.subr.mxu0 0.0
    %83 = vmatpush1.msra.mxu0 %v53
    %84 = vmatprep.subr.mxu0 0.0
    %85 = vmatpush1.msra.mxu0 %v54
    %86 = vmatprep.subr.mxu0 0.0
    %87 = vmatpush1.msra.mxu0 %v55
    %88 = vmatprep.subr.mxu0 0.0
    %89 = vmatpush1.msra.mxu0 0.0
    %90 = vmatprep.subr.mxu0 0.0
    %91 = vmatpush1.msra.mxu0 0.0
    %92 = vmatprep.subr.mxu0 0.0
    %93 = vmatpush1.msra.mxu0 0.0
    %94 = vmatprep.subr.mxu0 0.0
    %95 = vmatpush1.msra.mxu0 0.0
    %96 = vmatprep.subr.mxu0 0.0
    %97 = vmatpush1.msra.mxu0 0.0
    %98 = vmatprep.subr.mxu0 0.0
    %99 = vmatpush1.msra.mxu0 0.0
    %100 = vmatprep.subr.mxu0 0.0
    %101 = vmatpush1.msra.mxu0 0.0
    %102 = vmatprep.subr.mxu0 0.0
    %103 = vmatpush1.msra.mxu0 0.0
    %104 = vmatprep.subr.mxu0 0.0
    %105 = vmatpush1.msra.mxu0 0.0
    %106 = vmatprep.subr.mxu0 0.0
    %107 = vmatpush1.msra.mxu0 0.0
    %108 = vmatprep.subr.mxu0 0.0
    %109 = vmatpush1.msra.mxu0 0.0
    %110 = vmatprep.subr.mxu0 0.0
    %111 = vmatpush1.msra.mxu0 0.0
    %112 = vmatprep.subr.mxu0 0.0
    %113 = vmatpush1.msra.mxu0 0.0
    %114 = vmatprep.subr.mxu0 0.0
    %115 = vmatpush1.msra.mxu0 0.0
    %116 = vmatprep.subr.mxu0 0.0
    %117 = vmatpush1.msra.mxu0 0.0
    %118 = vmatprep.subr.mxu0 0.0
    %119 = vmatpush1.msra.mxu0 0.0
    %120 = vmatprep.mubr.f32.mxu0 0.0
    %121 = vmatmul.mubr.f32.gmra.mrb[0].mxu0 %v38
    %v122 = vpop.f32.mrb[0].mxu0
    %v123 = vadd.f32 0.0, %v122
    %v124 = vpop.f32.mrb[0].mxu0
    %125 = vdwg.mxu0
    %v126 = vld [vmem:[#allocation5 + $0x80] sm:$0xff]
    %vm127 = vcmask 15360
    %v129 = vsel %vm127, %v126, 0
    %vm131 = vcmask 1041408
    %v133 = vsel %vm131, %v123, 0
    %135 = vmatprep.subr.mxu0 0.0
    %136 = vmatpush1.msra.mxu0 %v133
    %137 = vmatprep.subr.mxu0 0.0
    %138 = vmatpush1.msra.mxu0 0.0
    %139 = vmatprep.subr.mxu0 0.0
    %140 = vmatpush1.msra.mxu0 0.0
    %141 = vmatprep.subr.mxu0 0.0
    %142 = vmatpush1.msra.mxu0 0.0
    %143 = vmatprep.subr.mxu0 0.0
    %144 = vmatpush1.msra.mxu0 0.0
    %145 = vmatprep.subr.mxu0 0.0
    %146 = vmatpush1.msra.mxu0 0.0
    %147 = vmatprep.subr.mxu0 0.0
    %148 = vmatpush1.msra.mxu0 0.0
    %149 = vmatprep.subr.mxu0 0.0
    %150 = vmatpush1.msra.mxu0 0.0
    %151 = vmatprep.subr.mxu0 0.0
    %152 = vmatpush1.msra.mxu0 0.0
    %153 = vmatprep.subr.mxu0 0.0
    %154 = vmatpush1.msra.mxu0 0.0
    %155 = vmatprep.subr.mxu0 0.0
    %156 = vmatpush1.msra.mxu0 0.0
    %157 = vmatprep.subr.mxu0 0.0
    %158 = vmatpush1.msra.mxu0 0.0
    %159 = vmatprep.subr.mxu0 0.0
    %160 = vmatpush1.msra.mxu0 0.0
    %161 = vmatprep.subr.mxu0 0.0
    %162 = vmatpush1.msra.mxu0 0.0
    %163 = vmatprep.subr.mxu0 0.0
    %164 = vmatpush1.msra.mxu0 0.0
    %165 = vmatprep.subr.mxu0 0.0
    %166 = vmatpush1.msra.mxu0 0.0
    %167 = vmatprep.subr.mxu0 0.0
    %168 = vmatpush1.msra.mxu0 0.0
    %169 = vmatprep.subr.mxu0 0.0
    %170 = vmatpush1.msra.mxu0 0.0
    %171 = vmatprep.subr.mxu0 0.0
    %172 = vmatpush1.msra.mxu0 0.0
    %173 = vmatprep.subr.mxu0 0.0
    %174 = vmatpush1.msra.mxu0 0.0
    %175 = vmatprep.subr.mxu0 0.0
    %176 = vmatpush1.msra.mxu0 0.0
    %177 = vmatprep.subr.mxu0 0.0
    %178 = vmatpush1.msra.mxu0 0.0
    %179 = vmatprep.subr.mxu0 0.0
    %180 = vmatpush1.msra.mxu0 0.0
    %181 = vmatprep.subr.mxu0 0.0
    %182 = vmatpush1.msra.mxu0 0.0
    %183 = vmatprep.subr.mxu0 0.0
    %184 = vmatpush1.msra.mxu0 0.0
    %185 = vmatprep.subr.mxu0 0.0
    %186 = vmatpush1.msra.mxu0 0.0
    %187 = vmatprep.subr.mxu0 0.0
    %188 = vmatpush1.msra.mxu0 0.0
    %189 = vmatprep.subr.mxu0 0.0
    %190 = vmatpush1.msra.mxu0 0.0
    %191 = vmatprep.subr.mxu0 0.0
    %192 = vmatpush1.msra.mxu0 0.0
    %193 = vmatprep.subr.mxu0 0.0
    %194 = vmatpush1.msra.mxu0 0.0
    %195 = vmatprep.subr.mxu0 0.0
    %196 = vmatpush1.msra.mxu0 0.0
    %197 = vmatprep.subr.mxu0 0.0
    %198 = vmatpush1.msra.mxu0 0.0
    %199 = vmatprep.mubr.f32.mxu0 0.0
    %200 = vmatmul.mubr.f32.gmra.mrb[0].mxu0 %v129
    %v201 = vpop.f32.mrb[0].mxu0
    %v202 = vadd.f32 0.0, %v201
    %v203 = vpop.f32.mrb[0].mxu0
    %204 = vdwg.mxu0
    %206 = vset.pattern.permute.xlu0 0
    %207 = vperm.xlu0 %206, %v39
    %v208 = vpop.permute.xlu0 %207
    %v210 = vadd.f32 %v208, %v202
    %v211 = vld [vmem:[#allocation5 + $0x88] sm:$0xff]
    %v212 = vld [vmem:[#allocation5 + $0x90] sm:$0xff]
    %v213 = vld [vmem:[#allocation5 + $0x98] sm:$0xff]
    %v214 = vld [vmem:[#allocation5 + $0xa0] sm:$0xff]
    %v215 = vld [vmem:[#allocation5 + $0xa8] sm:$0xff]
    %v216 = vld [vmem:[#allocation5 + $0xb0] sm:$0xff]
    %v217 = vld [vmem:[#allocation5 + $0xb8] sm:$0xff]
    %v218 = vld [vmem:[#allocation5 + $0xc0] sm:$0xff]
    %v219 = vld [vmem:[#allocation5 + $0xc8] sm:$0xff]
    %v220 = vld [vmem:[#allocation5 + $0xd0] sm:$0xff]
    %v221 = vld [vmem:[#allocation5 + $0xd8] sm:$0xff]
    %v222 = vld [vmem:[#allocation5 + $0xe0] sm:$0xff]
    %v223 = vld [vmem:[#allocation5 + $0xe8] sm:$0xff]
    %v224 = vld [vmem:[#allocation5 + $0xf0] sm:$0xff]
    %v225 = vld [vmem:[#allocation5 + $0xf8] sm:$0xff]
    %v226 = vld [vmem:[#allocation5 + $0x100] sm:$0xff]
    %227 = vmatprep.subr.mxu0 0.0
    %228 = vmatpush1.msra.mxu0 %v211
    %229 = vmatprep.subr.mxu0 0.0
    %230 = vmatpush1.msra.mxu0 %v212
    %231 = vmatprep.subr.mxu0 0.0
    %232 = vmatpush1.msra.mxu0 %v213
    %233 = vmatprep.subr.mxu0 0.0
    %234 = vmatpush1.msra.mxu0 %v214
    %235 = vmatprep.subr.mxu0 0.0
    %236 = vmatpush1.msra.mxu0 %v215
    %237 = vmatprep.subr.mxu0 0.0
    %238 = vmatpush1.msra.mxu0 %v216
    %239 = vmatprep.subr.mxu0 0.0
    %240 = vmatpush1.msra.mxu0 %v217
    %241 = vmatprep.subr.mxu0 0.0
    %242 = vmatpush1.msra.mxu0 %v218
    %243 = vmatprep.subr.mxu0 0.0
    %244 = vmatpush1.msra.mxu0 %v219
    %245 = vmatprep.subr.mxu0 0.0
    %246 = vmatpush1.msra.mxu0 %v220
    %247 = vmatprep.subr.mxu0 0.0
    %248 = vmatpush1.msra.mxu0 %v221
    %249 = vmatprep.subr.mxu0 0.0
    %250 = vmatpush1.msra.mxu0 %v222
    %251 = vmatprep.subr.mxu0 0.0
    %252 = vmatpush1.msra.mxu0 %v223
    %253 = vmatprep.subr.mxu0 0.0
    %254 = vmatpush1.msra.mxu0 %v224
    %255 = vmatprep.subr.mxu0 0.0
    %256 = vmatpush1.msra.mxu0 %v225
    %257 = vmatprep.subr.mxu0 0.0
    %258 = vmatpush1.msra.mxu0 %v226
    %259 = vmatprep.subr.mxu0 0.0
    %260 = vmatpush1.msra.mxu0 0.0
    %261 = vmatprep.subr.mxu0 0.0
    %262 = vmatpush1.msra.mxu0 0.0
    %263 = vmatprep.subr.mxu0 0.0
    %264 = vmatpush1.msra.mxu0 0.0
    %265 = vmatprep.subr.mxu0 0.0
    %266 = vmatpush1.msra.mxu0 0.0
    %267 = vmatprep.subr.mxu0 0.0
    %268 = vmatpush1.msra.mxu0 0.0
    %269 = vmatprep.subr.mxu0 0.0
    %270 = vmatpush1.msra.mxu0 0.0
    %271 = vmatprep.subr.mxu0 0.0
    %272 = vmatpush1.msra.mxu0 0.0
    %273 = vmatprep.subr.mxu0 0.0
    %274 = vmatpush1.msra.mxu0 0.0
    %275 = vmatprep.subr.mxu0 0.0
    %276 = vmatpush1.msra.mxu0 0.0
    %277 = vmatprep.subr.mxu0 0.0
    %278 = vmatpush1.msra.mxu0 0.0
    %279 = vmatprep.subr.mxu0 0.0
    %280 = vmatpush1.msra.mxu0 0.0
    %281 = vmatprep.subr.mxu0 0.0
    %282 = vmatpush1.msra.mxu0 0.0
    %283 = vmatprep.subr.mxu0 0.0
    %284 = vmatpush1.msra.mxu0 0.0
    %285 = vmatprep.subr.mxu0 0.0
    %286 = vmatpush1.msra.mxu0 0.0
    %287 = vmatprep.subr.mxu0 0.0
    %288 = vmatpush1.msra.mxu0 0.0
    %289 = vmatprep.subr.mxu0 0.0
    %290 = vmatpush1.msra.mxu0 0.0
    %291 = vmatprep.mubr.f32.mxu0 0.0
    %292 = vmatmul.mubr.f32.gmra.mrb[0].mxu0 %v38
    %v293 = vpop.f32.mrb[0].mxu0
    %v294 = vadd.f32 0.0, %v293
    %v295 = vpop.f32.mrb[0].mxu0
    %296 = vdwg.mxu0
    %v297 = vld [vmem:[#allocation5 + $0x108] sm:$0xff]
    %v299 = vsel %vm127, %v297, 0
    %v302 = vsel %vm131, %v294, 0
    %304 = vmatprep.subr.mxu0 0.0
    %305 = vmatpush1.msra.mxu0 %v302
    %306 = vmatprep.subr.mxu0 0.0
    %307 = vmatpush1.msra.mxu0 0.0
    %308 = vmatprep.subr.mxu0 0.0
    %309 = vmatpush1.msra.mxu0 0.0
    %310 = vmatprep.subr.mxu0 0.0
    %311 = vmatpush1.msra.mxu0 0.0
    %312 = vmatprep.subr.mxu0 0.0
    %313 = vmatpush1.msra.mxu0 0.0
    %314 = vmatprep.subr.mxu0 0.0
    %315 = vmatpush1.msra.mxu0 0.0
    %316 = vmatprep.subr.mxu0 0.0
    %317 = vmatpush1.msra.mxu0 0.0
    %318 = vmatprep.subr.mxu0 0.0
    %319 = vmatpush1.msra.mxu0 0.0
    %320 = vmatprep.subr.mxu0 0.0
    %321 = vmatpush1.msra.mxu0 0.0
    %322 = vmatprep.subr.mxu0 0.0
    %323 = vmatpush1.msra.mxu0 0.0
    %324 = vmatprep.subr.mxu0 0.0
    %325 = vmatpush1.msra.mxu0 0.0
    %326 = vmatprep.subr.mxu0 0.0
    %327 = vmatpush1.msra.mxu0 0.0
    %328 = vmatprep.subr.mxu0 0.0
    %329 = vmatpush1.msra.mxu0 0.0
    %330 = vmatprep.subr.mxu0 0.0
    %331 = vmatpush1.msra.mxu0 0.0
    %332 = vmatprep.subr.mxu0 0.0
    %333 = vmatpush1.msra.mxu0 0.0
    %334 = vmatprep.subr.mxu0 0.0
    %335 = vmatpush1.msra.mxu0 0.0
    %336 = vmatprep.subr.mxu0 0.0
    %337 = vmatpush1.msra.mxu0 0.0
    %338 = vmatprep.subr.mxu0 0.0
    %339 = vmatpush1.msra.mxu0 0.0
    %340 = vmatprep.subr.mxu0 0.0
    %341 = vmatpush1.msra.mxu0 0.0
    %342 = vmatprep.subr.mxu0 0.0
    %343 = vmatpush1.msra.mxu0 0.0
    %344 = vmatprep.subr.mxu0 0.0
    %345 = vmatpush1.msra.mxu0 0.0
    %346 = vmatprep.subr.mxu0 0.0
    %347 = vmatpush1.msra.mxu0 0.0
    %348 = vmatprep.subr.mxu0 0.0
    %349 = vmatpush1.msra.mxu0 0.0
    %350 = vmatprep.subr.mxu0 0.0
    %351 = vmatpush1.msra.mxu0 0.0
    %352 = vmatprep.subr.mxu0 0.0
    %353 = vmatpush1.msra.mxu0 0.0
    %354 = vmatprep.subr.mxu0 0.0
    %355 = vmatpush1.msra.mxu0 0.0
    %356 = vmatprep.subr.mxu0 0.0
    %357 = vmatpush1.msra.mxu0 0.0
    %358 = vmatprep.subr.mxu0 0.0
    %359 = vmatpush1.msra.mxu0 0.0
    %360 = vmatprep.subr.mxu0 0.0
    %361 = vmatpush1.msra.mxu0 0.0
    %362 = vmatprep.subr.mxu0 0.0
    %363 = vmatpush1.msra.mxu0 0.0
    %364 = vmatprep.subr.mxu0 0.0
    %365 = vmatpush1.msra.mxu0 0.0
    %366 = vmatprep.subr.mxu0 0.0
    %367 = vmatpush1.msra.mxu0 0.0
    %368 = vmatprep.mubr.f32.mxu0 0.0
    %369 = vmatmul.mubr.f32.gmra.mrb[0].mxu0 %v299
    %v370 = vpop.f32.mrb[0].mxu0
    %v371 = vadd.f32 0.0, %v370
    %v372 = vpop.f32.mrb[0].mxu0
    %373 = vdwg.mxu0
    %v374 = vadd.f32 %v210, %v371
    %v375 = vld [vmem:[#allocation5 + $0x110] sm:$0xff]
    %v376 = vld [vmem:[#allocation5 + $0x118] sm:$0xff]
    %v377 = vld [vmem:[#allocation5 + $0x120] sm:$0xff]
    %v378 = vld [vmem:[#allocation5 + $0x128] sm:$0xff]
    %v379 = vld [vmem:[#allocation5 + $0x130] sm:$0xff]
    %v380 = vld [vmem:[#allocation5 + $0x138] sm:$0xff]
    %v381 = vld [vmem:[#allocation5 + $0x140] sm:$0xff]
    %v382 = vld [vmem:[#allocation5 + $0x148] sm:$0xff]
    %v383 = vld [vmem:[#allocation5 + $0x150] sm:$0xff]
    %v384 = vld [vmem:[#allocation5 + $0x158] sm:$0xff]
    %v385 = vld [vmem:[#allocation5 + $0x160] sm:$0xff]
    %v386 = vld [vmem:[#allocation5 + $0x168] sm:$0xff]
    %v387 = vld [vmem:[#allocation5 + $0x170] sm:$0xff]
    %v388 = vld [vmem:[#allocation5 + $0x178] sm:$0xff]
    %v389 = vld [vmem:[#allocation5 + $0x180] sm:$0xff]
    %v390 = vld [vmem:[#allocation5 + $0x188] sm:$0xff]
    %391 = vmatprep.subr.mxu0 0.0
    %392 = vmatpush1.msra.mxu0 %v375
    %393 = vmatprep.subr.mxu0 0.0
    %394 = vmatpush1.msra.mxu0 %v376
    %395 = vmatprep.subr.mxu0 0.0
    %396 = vmatpush1.msra.mxu0 %v377
    %397 = vmatprep.subr.mxu0 0.0
    %398 = vmatpush1.msra.mxu0 %v378
    %399 = vmatprep.subr.mxu0 0.0
    %400 = vmatpush1.msra.mxu0 %v379
    %401 = vmatprep.subr.mxu0 0.0
    %402 = vmatpush1.msra.mxu0 %v380
    %403 = vmatprep.subr.mxu0 0.0
    %404 = vmatpush1.msra.mxu0 %v381
    %405 = vmatprep.subr.mxu0 0.0
    %406 = vmatpush1.msra.mxu0 %v382
    %407 = vmatprep.subr.mxu0 0.0
    %408 = vmatpush1.msra.mxu0 %v383
    %409 = vmatprep.subr.mxu0 0.0
    %410 = vmatpush1.msra.mxu0 %v384
    %411 = vmatprep.subr.mxu0 0.0
    %412 = vmatpush1.msra.mxu0 %v385
    %413 = vmatprep.subr.mxu0 0.0
    %414 = vmatpush1.msra.mxu0 %v386
    %415 = vmatprep.subr.mxu0 0.0
    %416 = vmatpush1.msra.mxu0 %v387
    %417 = vmatprep.subr.mxu0 0.0
    %418 = vmatpush1.msra.mxu0 %v388
    %419 = vmatprep.subr.mxu0 0.0
    %420 = vmatpush1.msra.mxu0 %v389
    %421 = vmatprep.subr.mxu0 0.0
    %422 = vmatpush1.msra.mxu0 %v390
    %423 = vmatprep.subr.mxu0 0.0
    %424 = vmatpush1.msra.mxu0 0.0
    %425 = vmatprep.subr.mxu0 0.0
    %426 = vmatpush1.msra.mxu0 0.0
    %427 = vmatprep.subr.mxu0 0.0
    %428 = vmatpush1.msra.mxu0 0.0
    %429 = vmatprep.subr.mxu0 0.0
    %430 = vmatpush1.msra.mxu0 0.0
    %431 = vmatprep.subr.mxu0 0.0
    %432 = vmatpush1.msra.mxu0 0.0
    %433 = vmatprep.subr.mxu0 0.0
    %434 = vmatpush1.msra.mxu0 0.0
    %435 = vmatprep.subr.mxu0 0.0
    %436 = vmatpush1.msra.mxu0 0.0
    %437 = vmatprep.subr.mxu0 0.0
    %438 = vmatpush1.msra.mxu0 0.0
    %439 = vmatprep.subr.mxu0 0.0
    %440 = vmatpush1.msra.mxu0 0.0
    %441 = vmatprep.subr.mxu0 0.0
    %442 = vmatpush1.msra.mxu0 0.0
    %443 = vmatprep.subr.mxu0 0.0
    %444 = vmatpush1.msra.mxu0 0.0
    %445 = vmatprep.subr.mxu0 0.0
    %446 = vmatpush1.msra.mxu0 0.0
    %447 = vmatprep.subr.mxu0 0.0
    %448 = vmatpush1.msra.mxu0 0.0
    %449 = vmatprep.subr.mxu0 0.0
    %450 = vmatpush1.msra.mxu0 0.0
    %451 = vmatprep.subr.mxu0 0.0
    %452 = vmatpush1.msra.mxu0 0.0
    %453 = vmatprep.subr.mxu0 0.0
    %454 = vmatpush1.msra.mxu0 0.0
    %455 = vmatprep.mubr.f32.mxu0 0.0
    %456 = vmatmul.mubr.f32.gmra.mrb[0].mxu0 %v38
    %v457 = vpop.f32.mrb[0].mxu0
    %v458 = vadd.f32 0.0, %v457
    %v459 = vpop.f32.mrb[0].mxu0
    %460 = vdwg.mxu0
    %v461 = vld [vmem:[#allocation5 + $0x190] sm:$0xff]
    %v463 = vsel %vm127, %v461, 0
    %v466 = vsel %vm131, %v458, 0
    %468 = vmatprep.subr.mxu0 0.0
    %469 = vmatpush1.msra.mxu0 %v466
    %470 = vmatprep.subr.mxu0 0.0
    %471 = vmatpush1.msra.mxu0 0.0
    %472 = vmatprep.subr.mxu0 0.0
    %473 = vmatpush1.msra.mxu0 0.0
    %474 = vmatprep.subr.mxu0 0.0
    %475 = vmatpush1.msra.mxu0 0.0
    %476 = vmatprep.subr.mxu0 0.0
    %477 = vmatpush1.msra.mxu0 0.0
    %478 = vmatprep.subr.mxu0 0.0
    %479 = vmatpush1.msra.mxu0 0.0
    %480 = vmatprep.subr.mxu0 0.0
    %481 = vmatpush1.msra.mxu0 0.0
    %482 = vmatprep.subr.mxu0 0.0
    %483 = vmatpush1.msra.mxu0 0.0
    %484 = vmatprep.subr.mxu0 0.0
    %485 = vmatpush1.msra.mxu0 0.0
    %486 = vmatprep.subr.mxu0 0.0
    %487 = vmatpush1.msra.mxu0 0.0
    %488 = vmatprep.subr.mxu0 0.0
    %489 = vmatpush1.msra.mxu0 0.0
    %490 = vmatprep.subr.mxu0 0.0
    %491 = vmatpush1.msra.mxu0 0.0
    %492 = vmatprep.subr.mxu0 0.0
    %493 = vmatpush1.msra.mxu0 0.0
    %494 = vmatprep.subr.mxu0 0.0
    %495 = vmatpush1.msra.mxu0 0.0
    %496 = vmatprep.subr.mxu0 0.0
    %497 = vmatpush1.msra.mxu0 0.0
    %498 = vmatprep.subr.mxu0 0.0
    %499 = vmatpush1.msra.mxu0 0.0
    %500 = vmatprep.subr.mxu0 0.0
    %501 = vmatpush1.msra.mxu0 0.0
    %502 = vmatprep.subr.mxu0 0.0
    %503 = vmatpush1.msra.mxu0 0.0
    %504 = vmatprep.subr.mxu0 0.0
    %505 = vmatpush1.msra.mxu0 0.0
    %506 = vmatprep.subr.mxu0 0.0
    %507 = vmatpush1.msra.mxu0 0.0
    %508 = vmatprep.subr.mxu0 0.0
    %509 = vmatpush1.msra.mxu0 0.0
    %510 = vmatprep.subr.mxu0 0.0
    %511 = vmatpush1.msra.mxu0 0.0
    %512 = vmatprep.subr.mxu0 0.0
    %513 = vmatpush1.msra.mxu0 0.0
    %514 = vmatprep.subr.mxu0 0.0
    %515 = vmatpush1.msra.mxu0 0.0
    %516 = vmatprep.subr.mxu0 0.0
    %517 = vmatpush1.msra.mxu0 0.0
    %518 = vmatprep.subr.mxu0 0.0
    %519 = vmatpush1.msra.mxu0 0.0
    %520 = vmatprep.subr.mxu0 0.0
    %521 = vmatpush1.msra.mxu0 0.0
    %522 = vmatprep.subr.mxu0 0.0
    %523 = vmatpush1.msra.mxu0 0.0
    %524 = vmatprep.subr.mxu0 0.0
    %525 = vmatpush1.msra.mxu0 0.0
    %526 = vmatprep.subr.mxu0 0.0
    %527 = vmatpush1.msra.mxu0 0.0
    %528 = vmatprep.subr.mxu0 0.0
    %529 = vmatpush1.msra.mxu0 0.0
    %530 = vmatprep.subr.mxu0 0.0
    %531 = vmatpush1.msra.mxu0 0.0
    %532 = vmatprep.mubr.f32.mxu0 0.0
    %533 = vmatmul.mubr.f32.gmra.mrb[0].mxu0 %v463
    %v534 = vpop.f32.mrb[0].mxu0
    %v535 = vadd.f32 0.0, %v534
    %v536 = vpop.f32.mrb[0].mxu0
    %537 = vdwg.mxu0
    %v538 = vadd.f32 %v374, %v535
    %v539 = vmax.f32 %v538, 0.0
    %v540 = vld [vmem:[#allocation5 + $0x1a0] sm:$0xff]
    %v541 = vld [vmem:[#allocation5 + $0x1a8] sm:$0xff]
    %v542 = vld [vmem:[#allocation5 + $0x1b0] sm:$0xff]
    %v543 = vld [vmem:[#allocation5 + $0x1b8] sm:$0xff]
    %545 = vset.pattern.permute.xlu0 0
    %546 = vperm.xlu0 %545, %v542
    %v547 = vpop.permute.xlu0 %546
    %550 = vset.pattern.permute.xlu0 0
    %551 = vperm.xlu0 %550, %v543
    %v552 = vpop.permute.xlu0 %551
    %vm554 = vcmask 64512
    %v556 = vsel %vm554, %v540, 0
    %v559 = vsel %vm554, %v541, 0
    %561 = vmatprep.subr.mxu0 0.0
    %562 = vmatpush1.msra.mxu0 %v539
    %563 = vmatprep.subr.mxu0 0.0
    %564 = vmatpush1.msra.mxu0 0.0
    %565 = vmatprep.subr.mxu0 0.0
    %566 = vmatpush1.msra.mxu0 0.0
    %567 = vmatprep.subr.mxu0 0.0
    %568 = vmatpush1.msra.mxu0 0.0
    %569 = vmatprep.subr.mxu0 0.0
    %570 = vmatpush1.msra.mxu0 0.0
    %571 = vmatprep.subr.mxu0 0.0
    %572 = vmatpush1.msra.mxu0 0.0
    %573 = vmatprep.subr.mxu0 0.0
    %574 = vmatpush1.msra.mxu0 0.0
    %575 = vmatprep.subr.mxu0 0.0
    %576 = vmatpush1.msra.mxu0 0.0
    %577 = vmatprep.subr.mxu0 0.0
    %578 = vmatpush1.msra.mxu0 0.0
    %579 = vmatprep.subr.mxu0 0.0
    %580 = vmatpush1.msra.mxu0 0.0
    %581 = vmatprep.subr.mxu0 0.0
    %582 = vmatpush1.msra.mxu0 0.0
    %583 = vmatprep.subr.mxu0 0.0
    %584 = vmatpush1.msra.mxu0 0.0
    %585 = vmatprep.subr.mxu0 0.0
    %586 = vmatpush1.msra.mxu0 0.0
    %587 = vmatprep.subr.mxu0 0.0
    %588 = vmatpush1.msra.mxu0 0.0
    %589 = vmatprep.subr.mxu0 0.0
    %590 = vmatpush1.msra.mxu0 0.0
    %591 = vmatprep.subr.mxu0 0.0
    %592 = vmatpush1.msra.mxu0 0.0
    %593 = vmatprep.subr.mxu0 0.0
    %594 = vmatpush1.msra.mxu0 0.0
    %595 = vmatprep.subr.mxu0 0.0
    %596 = vmatpush1.msra.mxu0 0.0
    %597 = vmatprep.subr.mxu0 0.0
    %598 = vmatpush1.msra.mxu0 0.0
    %599 = vmatprep.subr.mxu0 0.0
    %600 = vmatpush1.msra.mxu0 0.0
    %601 = vmatprep.subr.mxu0 0.0
    %602 = vmatpush1.msra.mxu0 0.0
    %603 = vmatprep.subr.mxu0 0.0
    %604 = vmatpush1.msra.mxu0 0.0
    %605 = vmatprep.subr.mxu0 0.0
    %606 = vmatpush1.msra.mxu0 0.0
    %607 = vmatprep.subr.mxu0 0.0
    %608 = vmatpush1.msra.mxu0 0.0
    %609 = vmatprep.subr.mxu0 0.0
    %610 = vmatpush1.msra.mxu0 0.0
    %611 = vmatprep.subr.mxu0 0.0
    %612 = vmatpush1.msra.mxu0 0.0
    %613 = vmatprep.subr.mxu0 0.0
    %614 = vmatpush1.msra.mxu0 0.0
    %615 = vmatprep.subr.mxu0 0.0
    %616 = vmatpush1.msra.mxu0 0.0
    %617 = vmatprep.subr.mxu0 0.0
    %618 = vmatpush1.msra.mxu0 0.0
    %619 = vmatprep.subr.mxu0 0.0
    %620 = vmatpush1.msra.mxu0 0.0
    %621 = vmatprep.subr.mxu0 0.0
    %622 = vmatpush1.msra.mxu0 0.0
    %623 = vmatprep.subr.mxu0 0.0
    %624 = vmatpush1.msra.mxu0 0.0
    %625 = vmatprep.mubr.f32.mxu0 0.0
    %626 = vmatmul.mubr.f32.gmra.mrb[0].mxu0 %v556
    %v627 = vpop.f32.mrb[0].mxu0
    %v628 = vadd.f32 %v547, %v627
    %v629 = vpop.f32.mrb[0].mxu0
    %630 = vmatprep.mubr.f32.mxu0 0.0
    %631 = vmatmul.mubr.f32.gmra.mrb[0].mxu0 %v559
    %v632 = vpop.f32.mrb[0].mxu0
    %v633 = vadd.f32 %v552, %v632
    %v634 = vpop.f32.mrb[0].mxu0
    %635 = vdwg.mxu0
    %v636 = vxor.u32 %v633, 2147483648
    %v637 = vmul.f32 %v636, 1.442695
    %v638 = vpow.pop %v637
    %v639 = vadd.f32 %v638, 1.0
    %v640 = vrcp.pop %v639
    %v641 = vmul.f32 1.0, %v640
    %v642 = vmul.f32 %v628, %v641
    %v643 = vld [vmem:[#allocation5 + $0x2b0] sm:$0xff]
    %v644 = vld [vmem:[#allocation5 + $0x2b8] sm:$0xff]
    %v645 = vld [vmem:[#allocation5 + $0x1c0] sm:$0xff]
    %v646 = vld [vmem:[#allocation5 + $0x1c8] sm:$0xff]
    %v647 = vld [vmem:[#allocation5 + $0x1d0] sm:$0xff]
    %v648 = vld [vmem:[#allocation5 + $0x1d8] sm:$0xff]
    %v649 = vld [vmem:[#allocation5 + $0x1e0] sm:$0xff]
    %v650 = vld [vmem:[#allocation5 + $0x1e8] sm:$0xff]
    %v651 = vld [vmem:[#allocation5 + $0x1f0] sm:$0xff]
    %v652 = vld [vmem:[#allocation5 + $0x1f8] sm:$0xff]
    %vm653 = vcmask 523264
    %v655 = vsel %vm653, %v642, 0
    %657 = vmatprep.subr.mxu0 0.0
    %658 = vmatpush1.msra.mxu0 %v645
    %659 = vmatprep.subr.mxu0 0.0
    %660 = vmatpush1.msra.mxu0 %v646
    %661 = vmatprep.subr.mxu0 0.0
    %662 = vmatpush1.msra.mxu0 %v647
    %663 = vmatprep.subr.mxu0 0.0
    %664 = vmatpush1.msra.mxu0 %v648
    %665 = vmatprep.subr.mxu0 0.0
    %666 = vmatpush1.msra.mxu0 %v649
    %667 = vmatprep.subr.mxu0 0.0
    %668 = vmatpush1.msra.mxu0 %v650
    %669 = vmatprep.subr.mxu0 0.0
    %670 = vmatpush1.msra.mxu0 %v651
    %671 = vmatprep.subr.mxu0 0.0
    %672 = vmatpush1.msra.mxu0 %v652
    %673 = vmatprep.subr.mxu0 0.0
    %674 = vmatpush1.msra.mxu0 0.0
    %675 = vmatprep.subr.mxu0 0.0
    %676 = vmatpush1.msra.mxu0 0.0
    %677 = vmatprep.subr.mxu0 0.0
    %678 = vmatpush1.msra.mxu0 0.0
    %679 = vmatprep.subr.mxu0 0.0
    %680 = vmatpush1.msra.mxu0 0.0
    %681 = vmatprep.subr.mxu0 0.0
    %682 = vmatpush1.msra.mxu0 0.0
    %683 = vmatprep.subr.mxu0 0.0
    %684 = vmatpush1.msra.mxu0 0.0
    %685 = vmatprep.subr.mxu0 0.0
    %686 = vmatpush1.msra.mxu0 0.0
    %687 = vmatprep.subr.mxu0 0.0
    %688 = vmatpush1.msra.mxu0 0.0
    %689 = vmatprep.subr.mxu0 0.0
    %690 = vmatpush1.msra.mxu0 0.0
    %691 = vmatprep.subr.mxu0 0.0
    %692 = vmatpush1.msra.mxu0 0.0
    %693 = vmatprep.subr.mxu0 0.0
    %694 = vmatpush1.msra.mxu0 0.0
    %695 = vmatprep.subr.mxu0 0.0
    %696 = vmatpush1.msra.mxu0 0.0
    %697 = vmatprep.subr.mxu0 0.0
    %698 = vmatpush1.msra.mxu0 0.0
    %699 = vmatprep.subr.mxu0 0.0
    %700 = vmatpush1.msra.mxu0 0.0
    %701 = vmatprep.subr.mxu0 0.0
    %702 = vmatpush1.msra.mxu0 0.0
    %703 = vmatprep.subr.mxu0 0.0
    %704 = vmatpush1.msra.mxu0 0.0
    %705 = vmatprep.subr.mxu0 0.0
    %706 = vmatpush1.msra.mxu0 0.0
    %707 = vmatprep.subr.mxu0 0.0
    %708 = vmatpush1.msra.mxu0 0.0
    %709 = vmatprep.subr.mxu0 0.0
    %710 = vmatpush1.msra.mxu0 0.0
    %711 = vmatprep.subr.mxu0 0.0
    %712 = vmatpush1.msra.mxu0 0.0
    %713 = vmatprep.subr.mxu0 0.0
    %714 = vmatpush1.msra.mxu0 0.0
    %715 = vmatprep.subr.mxu0 0.0
    %716 = vmatpush1.msra.mxu0 0.0
    %717 = vmatprep.subr.mxu0 0.0
    %718 = vmatpush1.msra.mxu0 0.0
    %719 = vmatprep.subr.mxu0 0.0
    %720 = vmatpush1.msra.mxu0 0.0
    %721 = vmatprep.mubr.f32.mxu0 0.0
    %722 = vmatmul.mubr.f32.gmra.mrb[0].mxu0 %v655
    %v723 = vpop.f32.mrb[0].mxu0
    %v724 = vadd.f32 0.0, %v723
    %v725 = vpop.f32.mrb[0].mxu0
    %726 = vdwg.mxu0
    %v727 = vld [vmem:[#allocation5 + $0x200] sm:$0xff]
    %v728 = vld [vmem:[#allocation5 + $0x208] sm:$0xff]
    %v730 = vsel %vm554, %v727, 0
    %v733 = vsel %vm554, %v728, 0
    %735 = vmatprep.subr.mxu0 0.0
    %736 = vmatpush1.msra.mxu0 %v724
    %737 = vmatprep.subr.mxu0 0.0
    %738 = vmatpush1.msra.mxu0 0.0
    %739 = vmatprep.subr.mxu0 0.0
    %740 = vmatpush1.msra.mxu0 0.0
    %741 = vmatprep.subr.mxu0 0.0
    %742 = vmatpush1.msra.mxu0 0.0
    %743 = vmatprep.subr.mxu0 0.0
    %744 = vmatpush1.msra.mxu0 0.0
    %745 = vmatprep.subr.mxu0 0.0
    %746 = vmatpush1.msra.mxu0 0.0
    %747 = vmatprep.subr.mxu0 0.0
    %748 = vmatpush1.msra.mxu0 0.0
    %749 = vmatprep.subr.mxu0 0.0
    %750 = vmatpush1.msra.mxu0 0.0
    %751 = vmatprep.subr.mxu0 0.0
    %752 = vmatpush1.msra.mxu0 0.0
    %753 = vmatprep.subr.mxu0 0.0
    %754 = vmatpush1.msra.mxu0 0.0
    %755 = vmatprep.subr.mxu0 0.0
    %756 = vmatpush1.msra.mxu0 0.0
    %757 = vmatprep.subr.mxu0 0.0
    %758 = vmatpush1.msra.mxu0 0.0
    %759 = vmatprep.subr.mxu0 0.0
    %760 = vmatpush1.msra.mxu0 0.0
    %761 = vmatprep.subr.mxu0 0.0
    %762 = vmatpush1.msra.mxu0 0.0
    %763 = vmatprep.subr.mxu0 0.0
    %764 = vmatpush1.msra.mxu0 0.0
    %765 = vmatprep.subr.mxu0 0.0
    %766 = vmatpush1.msra.mxu0 0.0
    %767 = vmatprep.subr.mxu0 0.0
    %768 = vmatpush1.msra.mxu0 0.0
    %769 = vmatprep.subr.mxu0 0.0
    %770 = vmatpush1.msra.mxu0 0.0
    %771 = vmatprep.subr.mxu0 0.0
    %772 = vmatpush1.msra.mxu0 0.0
    %773 = vmatprep.subr.mxu0 0.0
    %774 = vmatpush1.msra.mxu0 0.0
    %775 = vmatprep.subr.mxu0 0.0
    %776 = vmatpush1.msra.mxu0 0.0
    %777 = vmatprep.subr.mxu0 0.0
    %778 = vmatpush1.msra.mxu0 0.0
    %779 = vmatprep.subr.mxu0 0.0
    %780 = vmatpush1.msra.mxu0 0.0
    %781 = vmatprep.subr.mxu0 0.0
    %782 = vmatpush1.msra.mxu0 0.0
    %783 = vmatprep.subr.mxu0 0.0
    %784 = vmatpush1.msra.mxu0 0.0
    %785 = vmatprep.subr.mxu0 0.0
    %786 = vmatpush1.msra.mxu0 0.0
    %787 = vmatprep.subr.mxu0 0.0
    %788 = vmatpush1.msra.mxu0 0.0
    %789 = vmatprep.subr.mxu0 0.0
    %790 = vmatpush1.msra.mxu0 0.0
    %791 = vmatprep.subr.mxu0 0.0
    %792 = vmatpush1.msra.mxu0 0.0
    %793 = vmatprep.subr.mxu0 0.0
    %794 = vmatpush1.msra.mxu0 0.0
    %795 = vmatprep.subr.mxu0 0.0
    %796 = vmatpush1.msra.mxu0 0.0
    %797 = vmatprep.subr.mxu0 0.0
    %798 = vmatpush1.msra.mxu0 0.0
    %799 = vmatprep.mubr.f32.mxu0 0.0
    %800 = vmatmul.mubr.f32.gmra.mrb[0].mxu0 %v730
    %v801 = vpop.f32.mrb[0].mxu0
    %v802 = vadd.f32 0.0, %v801
    %v803 = vpop.f32.mrb[0].mxu0
    %804 = vmatprep.mubr.f32.mxu0 0.0
    %805 = vmatmul.mubr.f32.gmra.mrb[0].mxu0 %v733
    %v806 = vpop.f32.mrb[0].mxu0
    %v807 = vadd.f32 0.0, %v806
    %v808 = vpop.f32.mrb[0].mxu0
    %809 = vdwg.mxu0
    %811 = vset.pattern.permute.xlu0 0
    %812 = vperm.xlu0 %811, %v643
    %v813 = vpop.permute.xlu0 %812
    %816 = vset.pattern.permute.xlu0 0
    %817 = vperm.xlu0 %816, %v644
    %v818 = vpop.permute.xlu0 %817
    %v820 = vadd.f32 %v813, %v802
    %v821 = vadd.f32 %v818, %v807
    %v822 = vld [vmem:[#allocation5 + $0x210] sm:$0xff]
    %v823 = vld [vmem:[#allocation5 + $0x218] sm:$0xff]
    %v824 = vld [vmem:[#allocation5 + $0x220] sm:$0xff]
    %v825 = vld [vmem:[#allocation5 + $0x228] sm:$0xff]
    %v826 = vld [vmem:[#allocation5 + $0x230] sm:$0xff]
    %v827 = vld [vmem:[#allocation5 + $0x238] sm:$0xff]
    %v828 = vld [vmem:[#allocation5 + $0x240] sm:$0xff]
    %v829 = vld [vmem:[#allocation5 + $0x248] sm:$0xff]
    %830 = vmatprep.subr.mxu0 0.0
    %831 = vmatpush1.msra.mxu0 %v822
    %832 = vmatprep.subr.mxu0 0.0
    %833 = vmatpush1.msra.mxu0 %v823
    %834 = vmatprep.subr.mxu0 0.0
    %835 = vmatpush1.msra.mxu0 %v824
    %836 = vmatprep.subr.mxu0 0.0
    %837 = vmatpush1.msra.mxu0 %v825
    %838 = vmatprep.subr.mxu0 0.0
    %839 = vmatpush1.msra.mxu0 %v826
    %840 = vmatprep.subr.mxu0 0.0
    %841 = vmatpush1.msra.mxu0 %v827
    %842 = vmatprep.subr.mxu0 0.0
    %843 = vmatpush1.msra.mxu0 %v828
    %844 = vmatprep.subr.mxu0 0.0
    %845 = vmatpush1.msra.mxu0 %v829
    %846 = vmatprep.subr.mxu0 0.0
    %847 = vmatpush1.msra.mxu0 0.0
    %848 = vmatprep.subr.mxu0 0.0
    %849 = vmatpush1.msra.mxu0 0.0
    %850 = vmatprep.subr.mxu0 0.0
    %851 = vmatpush1.msra.mxu0 0.0
    %852 = vmatprep.subr.mxu0 0.0
    %853 = vmatpush1.msra.mxu0 0.0
    %854 = vmatprep.subr.mxu0 0.0
    %855 = vmatpush1.msra.mxu0 0.0
    %856 = vmatprep.subr.mxu0 0.0
    %857 = vmatpush1.msra.mxu0 0.0
    %858 = vmatprep.subr.mxu0 0.0
    %859 = vmatpush1.msra.mxu0 0.0
    %860 = vmatprep.subr.mxu0 0.0
    %861 = vmatpush1.msra.mxu0 0.0
    %862 = vmatprep.subr.mxu0 0.0
    %863 = vmatpush1.msra.mxu0 0.0
    %864 = vmatprep.subr.mxu0 0.0
    %865 = vmatpush1.msra.mxu0 0.0
    %866 = vmatprep.subr.mxu0 0.0
    %867 = vmatpush1.msra.mxu0 0.0
    %868 = vmatprep.subr.mxu0 0.0
    %869 = vmatpush1.msra.mxu0 0.0
    %870 = vmatprep.subr.mxu0 0.0
    %871 = vmatpush1.msra.mxu0 0.0
    %872 = vmatprep.subr.mxu0 0.0
    %873 = vmatpush1.msra.mxu0 0.0
    %874 = vmatprep.subr.mxu0 0.0
    %875 = vmatpush1.msra.mxu0 0.0
    %876 = vmatprep.subr.mxu0 0.0
    %877 = vmatpush1.msra.mxu0 0.0
    %878 = vmatprep.subr.mxu0 0.0
    %879 = vmatpush1.msra.mxu0 0.0
    %880 = vmatprep.subr.mxu0 0.0
    %881 = vmatpush1.msra.mxu0 0.0
    %882 = vmatprep.subr.mxu0 0.0
    %883 = vmatpush1.msra.mxu0 0.0
    %884 = vmatprep.subr.mxu0 0.0
    %885 = vmatpush1.msra.mxu0 0.0
    %886 = vmatprep.subr.mxu0 0.0
    %887 = vmatpush1.msra.mxu0 0.0
    %888 = vmatprep.subr.mxu0 0.0
    %889 = vmatpush1.msra.mxu0 0.0
    %890 = vmatprep.subr.mxu0 0.0
    %891 = vmatpush1.msra.mxu0 0.0
    %892 = vmatprep.subr.mxu0 0.0
    %893 = vmatpush1.msra.mxu0 0.0
    %894 = vmatprep.mubr.f32.mxu0 0.0
    %895 = vmatmul.mubr.f32.gmra.mrb[0].mxu0 %v655
    %v896 = vpop.f32.mrb[0].mxu0
    %v897 = vadd.f32 0.0, %v896
    %v898 = vpop.f32.mrb[0].mxu0
    %899 = vdwg.mxu0
    %v900 = vld [vmem:[#allocation5 + $0x250] sm:$0xff]
    %v901 = vld [vmem:[#allocation5 + $0x258] sm:$0xff]
    %v903 = vsel %vm554, %v900, 0
    %v906 = vsel %vm554, %v901, 0
    %908 = vmatprep.subr.mxu0 0.0
    %909 = vmatpush1.msra.mxu0 %v897
    %910 = vmatprep.subr.mxu0 0.0
    %911 = vmatpush1.msra.mxu0 0.0
    %912 = vmatprep.subr.mxu0 0.0
    %913 = vmatpush1.msra.mxu0 0.0
    %914 = vmatprep.subr.mxu0 0.0
    %915 = vmatpush1.msra.mxu0 0.0
    %916 = vmatprep.subr.mxu0 0.0
    %917 = vmatpush1.msra.mxu0 0.0
    %918 = vmatprep.subr.mxu0 0.0
    %919 = vmatpush1.msra.mxu0 0.0
    %920 = vmatprep.subr.mxu0 0.0
    %921 = vmatpush1.msra.mxu0 0.0
    %922 = vmatprep.subr.mxu0 0.0
    %923 = vmatpush1.msra.mxu0 0.0
    %924 = vmatprep.subr.mxu0 0.0
    %925 = vmatpush1.msra.mxu0 0.0
    %926 = vmatprep.subr.mxu0 0.0
    %927 = vmatpush1.msra.mxu0 0.0
    %928 = vmatprep.subr.mxu0 0.0
    %929 = vmatpush1.msra.mxu0 0.0
    %930 = vmatprep.subr.mxu0 0.0
    %931 = vmatpush1.msra.mxu0 0.0
    %932 = vmatprep.subr.mxu0 0.0
    %933 = vmatpush1.msra.mxu0 0.0
    %934 = vmatprep.subr.mxu0 0.0
    %935 = vmatpush1.msra.mxu0 0.0
    %936 = vmatprep.subr.mxu0 0.0
    %937 = vmatpush1.msra.mxu0 0.0
    %938 = vmatprep.subr.mxu0 0.0
    %939 = vmatpush1.msra.mxu0 0.0
    %940 = vmatprep.subr.mxu0 0.0
    %941 = vmatpush1.msra.mxu0 0.0
    %942 = vmatprep.subr.mxu0 0.0
    %943 = vmatpush1.msra.mxu0 0.0
    %944 = vmatprep.subr.mxu0 0.0
    %945 = vmatpush1.msra.mxu0 0.0
    %946 = vmatprep.subr.mxu0 0.0
    %947 = vmatpush1.msra.mxu0 0.0
    %948 = vmatprep.subr.mxu0 0.0
    %949 = vmatpush1.msra.mxu0 0.0
    %950 = vmatprep.subr.mxu0 0.0
    %951 = vmatpush1.msra.mxu0 0.0
    %952 = vmatprep.subr.mxu0 0.0
    %953 = vmatpush1.msra.mxu0 0.0
    %954 = vmatprep.subr.mxu0 0.0
    %955 = vmatpush1.msra.mxu0 0.0
    %956 = vmatprep.subr.mxu0 0.0
    %957 = vmatpush1.msra.mxu0 0.0
    %958 = vmatprep.subr.mxu0 0.0
    %959 = vmatpush1.msra.mxu0 0.0
    %960 = vmatprep.subr.mxu0 0.0
    %961 = vmatpush1.msra.mxu0 0.0
    %962 = vmatprep.subr.mxu0 0.0
    %963 = vmatpush1.msra.mxu0 0.0
    %964 = vmatprep.subr.mxu0 0.0
    %965 = vmatpush1.msra.mxu0 0.0
    %966 = vmatprep.subr.mxu0 0.0
    %967 = vmatpush1.msra.mxu0 0.0
    %968 = vmatprep.subr.mxu0 0.0
    %969 = vmatpush1.msra.mxu0 0.0
    %970 = vmatprep.subr.mxu0 0.0
    %971 = vmatpush1.msra.mxu0 0.0
    %972 = vmatprep.mubr.f32.mxu0 0.0
    %973 = vmatmul.mubr.f32.gmra.mrb[0].mxu0 %v903
    %v974 = vpop.f32.mrb[0].mxu0
    %v975 = vadd.f32 0.0, %v974
    %v976 = vpop.f32.mrb[0].mxu0
    %977 = vmatprep.mubr.f32.mxu0 0.0
    %978 = vmatmul.mubr.f32.gmra.mrb[0].mxu0 %v906
    %v979 = vpop.f32.mrb[0].mxu0
    %v980 = vadd.f32 0.0, %v979
    %v981 = vpop.f32.mrb[0].mxu0
    %982 = vdwg.mxu0
    %v983 = vadd.f32 %v820, %v975
    %v984 = vadd.f32 %v821, %v980
    %v985 = vld [vmem:[#allocation5 + $0x260] sm:$0xff]
    %v986 = vld [vmem:[#allocation5 + $0x268] sm:$0xff]
    %v987 = vld [vmem:[#allocation5 + $0x270] sm:$0xff]
    %v988 = vld [vmem:[#allocation5 + $0x278] sm:$0xff]
    %v989 = vld [vmem:[#allocation5 + $0x280] sm:$0xff]
    %v990 = vld [vmem:[#allocation5 + $0x288] sm:$0xff]
    %v991 = vld [vmem:[#allocation5 + $0x290] sm:$0xff]
    %v992 = vld [vmem:[#allocation5 + $0x298] sm:$0xff]
    %993 = vmatprep.subr.mxu0 0.0
    %994 = vmatpush1.msra.mxu0 %v985
    %995 = vmatprep.subr.mxu0 0.0
    %996 = vmatpush1.msra.mxu0 %v986
    %997 = vmatprep.subr.mxu0 0.0
    %998 = vmatpush1.msra.mxu0 %v987
    %999 = vmatprep.subr.mxu0 0.0
    %1000 = vmatpush1.msra.mxu0 %v988
    %1001 = vmatprep.subr.mxu0 0.0
    %1002 = vmatpush1.msra.mxu0 %v989
    %1003 = vmatprep.subr.mxu0 0.0
    %1004 = vmatpush1.msra.mxu0 %v990
    %1005 = vmatprep.subr.mxu0 0.0
    %1006 = vmatpush1.msra.mxu0 %v991
    %1007 = vmatprep.subr.mxu0 0.0
    %1008 = vmatpush1.msra.mxu0 %v992
    %1009 = vmatprep.subr.mxu0 0.0
    %1010 = vmatpush1.msra.mxu0 0.0
    %1011 = vmatprep.subr.mxu0 0.0
    %1012 = vmatpush1.msra.mxu0 0.0
    %1013 = vmatprep.subr.mxu0 0.0
    %1014 = vmatpush1.msra.mxu0 0.0
    %1015 = vmatprep.subr.mxu0 0.0
    %1016 = vmatpush1.msra.mxu0 0.0
    %1017 = vmatprep.subr.mxu0 0.0
    %1018 = vmatpush1.msra.mxu0 0.0
    %1019 = vmatprep.subr.mxu0 0.0
    %1020 = vmatpush1.msra.mxu0 0.0
    %1021 = vmatprep.subr.mxu0 0.0
    %1022 = vmatpush1.msra.mxu0 0.0
    %1023 = vmatprep.subr.mxu0 0.0
    %1024 = vmatpush1.msra.mxu0 0.0
    %1025 = vmatprep.subr.mxu0 0.0
    %1026 = vmatpush1.msra.mxu0 0.0
    %1027 = vmatprep.subr.mxu0 0.0
    %1028 = vmatpush1.msra.mxu0 0.0
    %1029 = vmatprep.subr.mxu0 0.0
    %1030 = vmatpush1.msra.mxu0 0.0
    %1031 = vmatprep.subr.mxu0 0.0
    %1032 = vmatpush1.msra.mxu0 0.0
    %1033 = vmatprep.subr.mxu0 0.0
    %1034 = vmatpush1.msra.mxu0 0.0
    %1035 = vmatprep.subr.mxu0 0.0
    %1036 = vmatpush1.msra.mxu0 0.0
    %1037 = vmatprep.subr.mxu0 0.0
    %1038 = vmatpush1.msra.mxu0 0.0
    %1039 = vmatprep.subr.mxu0 0.0
    %1040 = vmatpush1.msra.mxu0 0.0
    %1041 = vmatprep.subr.mxu0 0.0
    %1042 = vmatpush1.msra.mxu0 0.0
    %1043 = vmatprep.subr.mxu0 0.0
    %1044 = vmatpush1.msra.mxu0 0.0
    %1045 = vmatprep.subr.mxu0 0.0
    %1046 = vmatpush1.msra.mxu0 0.0
    %1047 = vmatprep.subr.mxu0 0.0
    %1048 = vmatpush1.msra.mxu0 0.0
    %1049 = vmatprep.subr.mxu0 0.0
    %1050 = vmatpush1.msra.mxu0 0.0
    %1051 = vmatprep.subr.mxu0 0.0
    %1052 = vmatpush1.msra.mxu0 0.0
    %1053 = vmatprep.subr.mxu0 0.0
    %1054 = vmatpush1.msra.mxu0 0.0
    %1055 = vmatprep.subr.mxu0 0.0
    %1056 = vmatpush1.msra.mxu0 0.0
    %1057 = vmatprep.mubr.f32.mxu0 0.0
    %1058 = vmatmul.mubr.f32.gmra.mrb[0].mxu0 %v655
    %v1059 = vpop.f32.mrb[0].mxu0
    %v1060 = vadd.f32 0.0, %v1059
    %v1061 = vpop.f32.mrb[0].mxu0
    %1062 = vdwg.mxu0
    %v1063 = vld [vmem:[#allocation5 + $0x2a0] sm:$0xff]
    %v1064 = vld [vmem:[#allocation5 + $0x2a8] sm:$0xff]
    %v1066 = vsel %vm554, %v1063, 0
    %v1069 = vsel %vm554, %v1064, 0
    %1071 = vmatprep.subr.mxu0 0.0
    %1072 = vmatpush1.msra.mxu0 %v1060
    %1073 = vmatprep.subr.mxu0 0.0
    %1074 = vmatpush1.msra.mxu0 0.0
    %1075 = vmatprep.subr.mxu0 0.0
    %1076 = vmatpush1.msra.mxu0 0.0
    %1077 = vmatprep.subr.mxu0 0.0
    %1078 = vmatpush1.msra.mxu0 0.0
    %1079 = vmatprep.subr.mxu0 0.0
    %1080 = vmatpush1.msra.mxu0 0.0
    %1081 = vmatprep.subr.mxu0 0.0
    %1082 = vmatpush1.msra.mxu0 0.0
    %1083 = vmatprep.subr.mxu0 0.0
    %1084 = vmatpush1.msra.mxu0 0.0
    %1085 = vmatprep.subr.mxu0 0.0
    %1086 = vmatpush1.msra.mxu0 0.0
    %1087 = vmatprep.subr.mxu0 0.0
    %1088 = vmatpush1.msra.mxu0 0.0
    %1089 = vmatprep.subr.mxu0 0.0
    %1090 = vmatpush1.msra.mxu0 0.0
    %1091 = vmatprep.subr.mxu0 0.0
    %1092 = vmatpush1.msra.mxu0 0.0
    %1093 = vmatprep.subr.mxu0 0.0
    %1094 = vmatpush1.msra.mxu0 0.0
    %1095 = vmatprep.subr.mxu0 0.0
    %1096 = vmatpush1.msra.mxu0 0.0
    %1097 = vmatprep.subr.mxu0 0.0
    %1098 = vmatpush1.msra.mxu0 0.0
    %1099 = vmatprep.subr.mxu0 0.0
    %1100 = vmatpush1.msra.mxu0 0.0
    %1101 = vmatprep.subr.mxu0 0.0
    %1102 = vmatpush1.msra.mxu0 0.0
    %1103 = vmatprep.subr.mxu0 0.0
    %1104 = vmatpush1.msra.mxu0 0.0
    %1105 = vmatprep.subr.mxu0 0.0
    %1106 = vmatpush1.msra.mxu0 0.0
    %1107 = vmatprep.subr.mxu0 0.0
    %1108 = vmatpush1.msra.mxu0 0.0
    %1109 = vmatprep.subr.mxu0 0.0
    %1110 = vmatpush1.msra.mxu0 0.0
    %1111 = vmatprep.subr.mxu0 0.0
    %1112 = vmatpush1.msra.mxu0 0.0
    %1113 = vmatprep.subr.mxu0 0.0
    %1114 = vmatpush1.msra.mxu0 0.0
    %1115 = vmatprep.subr.mxu0 0.0
    %1116 = vmatpush1.msra.mxu0 0.0
    %1117 = vmatprep.subr.mxu0 0.0
    %1118 = vmatpush1.msra.mxu0 0.0
    %1119 = vmatprep.subr.mxu0 0.0
    %1120 = vmatpush1.msra.mxu0 0.0
    %1121 = vmatprep.subr.mxu0 0.0
    %1122 = vmatpush1.msra.mxu0 0.0
    %1123 = vmatprep.subr.mxu0 0.0
    %1124 = vmatpush1.msra.mxu0 0.0
    %1125 = vmatprep.subr.mxu0 0.0
    %1126 = vmatpush1.msra.mxu0 0.0
    %1127 = vmatprep.subr.mxu0 0.0
    %1128 = vmatpush1.msra.mxu0 0.0
    %1129 = vmatprep.subr.mxu0 0.0
    %1130 = vmatpush1.msra.mxu0 0.0
    %1131 = vmatprep.subr.mxu0 0.0
    %1132 = vmatpush1.msra.mxu0 0.0
    %1133 = vmatprep.subr.mxu0 0.0
    %1134 = vmatpush1.msra.mxu0 0.0
    %1135 = vmatprep.mubr.f32.mxu0 0.0
    %1136 = vmatmul.mubr.f32.gmra.mrb[0].mxu0 %v1066
    %v1137 = vpop.f32.mrb[0].mxu0
    %v1138 = vadd.f32 0.0, %v1137
    %v1139 = vpop.f32.mrb[0].mxu0
    %1140 = vmatprep.mubr.f32.mxu0 0.0
    %1141 = vmatmul.mubr.f32.gmra.mrb[0].mxu0 %v1069
    %v1142 = vpop.f32.mrb[0].mxu0
    %v1143 = vadd.f32 0.0, %v1142
    %v1144 = vpop.f32.mrb[0].mxu0
    %1145 = vdwg.mxu0
    %v1146 = vadd.f32 %v983, %v1138
    %v1147 = vadd.f32 %v984, %v1143
    %v1148 = vmax.f32 %v1146, 0.0
    %v1149 = vmax.f32 %v1147, 0.0
    %v1150 = vld [vmem:[#allocation5 + $0x2c0] sm:$0xff]
    %v1151 = vld [vmem:[#allocation5 + $0x2c8] sm:$0xff]
    %v1152 = vld [vmem:[#allocation5 + $0x2d0] sm:$0xff]
    %v1153 = vld [vmem:[#allocation5 + $0x2d8] sm:$0xff]
    %v1154 = vld [vmem:[#allocation5 + $0x2e0] sm:$0xff]
    %v1155 = vld [vmem:[#allocation5 + $0x2e8] sm:$0xff]
    %v1156 = vld [vmem:[#allocation5 + $0x2f0] sm:$0xff]
    %v1157 = vld [vmem:[#allocation5 + $0x2f8] sm:$0xff]
    %1159 = vset.pattern.permute.xlu0 0
    %1160 = vperm.xlu0 %1159, %v1154
    %v1161 = vpop.permute.xlu0 %1160
    %1164 = vset.pattern.permute.xlu0 0
    %1165 = vperm.xlu0 %1164, %v1155
    %v1166 = vpop.permute.xlu0 %1165
    %1169 = vset.pattern.permute.xlu0 0
    %1170 = vperm.xlu0 %1169, %v1156
    %v1171 = vpop.permute.xlu0 %1170
    %1174 = vset.pattern.permute.xlu0 0
    %1175 = vperm.xlu0 %1174, %v1157
    %v1176 = vpop.permute.xlu0 %1175
    %vm1178 = vcmask 130048
    %v1180 = vsel %vm1178, %v1150, 0
    %v1183 = vsel %vm1178, %v1151, 0
    %v1186 = vsel %vm1178, %v1152, 0
    %v1189 = vsel %vm1178, %v1153, 0
    %1191 = vmatprep.subr.mxu0 0.0
    %1192 = vmatpush1.msra.mxu0 %v1148
    %1193 = vmatprep.subr.mxu0 0.0
    %1194 = vmatpush1.msra.mxu0 %v1149
    %1195 = vmatprep.subr.mxu0 0.0
    %1196 = vmatpush1.msra.mxu0 0.0
    %1197 = vmatprep.subr.mxu0 0.0
    %1198 = vmatpush1.msra.mxu0 0.0
    %1199 = vmatprep.subr.mxu0 0.0
    %1200 = vmatpush1.msra.mxu0 0.0
    %1201 = vmatprep.subr.mxu0 0.0
    %1202 = vmatpush1.msra.mxu0 0.0
    %1203 = vmatprep.subr.mxu0 0.0
    %1204 = vmatpush1.msra.mxu0 0.0
    %1205 = vmatprep.subr.mxu0 0.0
    %1206 = vmatpush1.msra.mxu0 0.0
    %1207 = vmatprep.subr.mxu0 0.0
    %1208 = vmatpush1.msra.mxu0 0.0
    %1209 = vmatprep.subr.mxu0 0.0
    %1210 = vmatpush1.msra.mxu0 0.0
    %1211 = vmatprep.subr.mxu0 0.0
    %1212 = vmatpush1.msra.mxu0 0.0
    %1213 = vmatprep.subr.mxu0 0.0
    %1214 = vmatpush1.msra.mxu0 0.0
    %1215 = vmatprep.subr.mxu0 0.0
    %1216 = vmatpush1.msra.mxu0 0.0
    %1217 = vmatprep.subr.mxu0 0.0
    %1218 = vmatpush1.msra.mxu0 0.0
    %1219 = vmatprep.subr.mxu0 0.0
    %1220 = vmatpush1.msra.mxu0 0.0
    %1221 = vmatprep.subr.mxu0 0.0
    %1222 = vmatpush1.msra.mxu0 0.0
    %1223 = vmatprep.subr.mxu0 0.0
    %1224 = vmatpush1.msra.mxu0 0.0
    %1225 = vmatprep.subr.mxu0 0.0
    %1226 = vmatpush1.msra.mxu0 0.0
    %1227 = vmatprep.subr.mxu0 0.0
    %1228 = vmatpush1.msra.mxu0 0.0
    %1229 = vmatprep.subr.mxu0 0.0
    %1230 = vmatpush1.msra.mxu0 0.0
    %1231 = vmatprep.subr.mxu0 0.0
    %1232 = vmatpush1.msra.mxu0 0.0
    %1233 = vmatprep.subr.mxu0 0.0
    %1234 = vmatpush1.msra.mxu0 0.0
    %1235 = vmatprep.subr.mxu0 0.0
    %1236 = vmatpush1.msra.mxu0 0.0
    %1237 = vmatprep.subr.mxu0 0.0
    %1238 = vmatpush1.msra.mxu0 0.0
    %1239 = vmatprep.subr.mxu0 0.0
    %1240 = vmatpush1.msra.mxu0 0.0
    %1241 = vmatprep.subr.mxu0 0.0
    %1242 = vmatpush1.msra.mxu0 0.0
    %1243 = vmatprep.subr.mxu0 0.0
    %1244 = vmatpush1.msra.mxu0 0.0
    %1245 = vmatprep.subr.mxu0 0.0
    %1246 = vmatpush1.msra.mxu0 0.0
    %1247 = vmatprep.subr.mxu0 0.0
    %1248 = vmatpush1.msra.mxu0 0.0
    %1249 = vmatprep.subr.mxu0 0.0
    %1250 = vmatpush1.msra.mxu0 0.0
    %1251 = vmatprep.subr.mxu0 0.0
    %1252 = vmatpush1.msra.mxu0 0.0
    %1253 = vmatprep.subr.mxu0 0.0
    %1254 = vmatpush1.msra.mxu0 0.0
    %1255 = vmatprep.mubr.f32.mxu0 0.0
    %1256 = vmatmul.mubr.f32.gmra.mrb[0].mxu0 %v1180
    %v1257 = vpop.f32.mrb[0].mxu0
    %v1258 = vadd.f32 %v1161, %v1257
    %v1259 = vpop.f32.mrb[0].mxu0
    %1260 = vmatprep.mubr.f32.mxu0 0.0
    %1261 = vmatmul.mubr.f32.gmra.mrb[0].mxu0 %v1183
    %v1262 = vpop.f32.mrb[0].mxu0
    %v1263 = vadd.f32 %v1166, %v1262
    %v1264 = vpop.f32.mrb[0].mxu0
    %1265 = vmatprep.mubr.f32.mxu0 0.0
    %1266 = vmatmul.mubr.f32.gmra.mrb[0].mxu0 %v1186
    %v1267 = vpop.f32.mrb[0].mxu0
    %v1268 = vadd.f32 %v1171, %v1267
    %v1269 = vpop.f32.mrb[0].mxu0
    %1270 = vmatprep.mubr.f32.mxu0 0.0
    %1271 = vmatmul.mubr.f32.gmra.mrb[0].mxu0 %v1189
    %v1272 = vpop.f32.mrb[0].mxu0
    %v1273 = vadd.f32 %v1176, %v1272
    %v1274 = vpop.f32.mrb[0].mxu0
    %1275 = vdwg.mxu0
    %v1276 = vxor.u32 %v1268, 2147483648
    %v1277 = vxor.u32 %v1273, 2147483648
    %v1278 = vmul.f32 %v1276, 1.442695
    %v1279 = vpow.pop %v1278
    %v1280 = vmul.f32 %v1277, 1.442695
    %v1281 = vpow.pop %v1280
    %v1282 = vadd.f32 %v1279, 1.0
    %v1283 = vadd.f32 %v1281, 1.0
    %v1284 = vrcp.pop %v1282
    %v1285 = vmul.f32 1.0, %v1284
    %v1286 = vrcp.pop %v1283
    %v1287 = vmul.f32 1.0, %v1286
    %v1288 = vmul.f32 %v1258, %v1285
    %v1289 = vmul.f32 %v1263, %v1287
    %v1290 = vld [vmem:[#allocation5 + $0x3c0] sm:$0xff]
    %v1291 = vld [vmem:[#allocation5 + $0x3c8] sm:$0xff]
    %v1292 = vld [vmem:[#allocation5 + $0x3d0] sm:$0xff]
    %v1293 = vld [vmem:[#allocation5 + $0x3d8] sm:$0xff]
    %v1294 = vld [vmem:[#allocation5 + $0x300] sm:$0xff]
    %v1295 = vld [vmem:[#allocation5 + $0x308] sm:$0xff]
    %v1296 = vld [vmem:[#allocation5 + $0x310] sm:$0xff]
    %v1297 = vld [vmem:[#allocation5 + $0x318] sm:$0xff]
    %vm1298 = vcmask 261120
    %v1300 = vsel %vm1298, %v1288, 0
    %v1303 = vsel %vm1298, %v1289, 0
    %1305 = vmatprep.subr.mxu0 0.0
    %1306 = vmatpush1.msra.mxu0 %v1294
    %1307 = vmatprep.subr.mxu0 0.0
    %1308 = vmatpush1.msra.mxu0 %v1295
    %1309 = vmatprep.subr.mxu0 0.0
    %1310 = vmatpush1.msra.mxu0 %v1296
    %1311 = vmatprep.subr.mxu0 0.0
    %1312 = vmatpush1.msra.mxu0 %v1297
    %1313 = vmatprep.subr.mxu0 0.0
    %1314 = vmatpush1.msra.mxu0 0.0
    %1315 = vmatprep.subr.mxu0 0.0
    %1316 = vmatpush1.msra.mxu0 0.0
    %1317 = vmatprep.subr.mxu0 0.0
    %1318 = vmatpush1.msra.mxu0 0.0
    %1319 = vmatprep.subr.mxu0 0.0
    %1320 = vmatpush1.msra.mxu0 0.0
    %1321 = vmatprep.subr.mxu0 0.0
    %1322 = vmatpush1.msra.mxu0 0.0
    %1323 = vmatprep.subr.mxu0 0.0
    %1324 = vmatpush1.msra.mxu0 0.0
    %1325 = vmatprep.subr.mxu0 0.0
    %1326 = vmatpush1.msra.mxu0 0.0
    %1327 = vmatprep.subr.mxu0 0.0
    %1328 = vmatpush1.msra.mxu0 0.0
    %1329 = vmatprep.subr.mxu0 0.0
    %1330 = vmatpush1.msra.mxu0 0.0
    %1331 = vmatprep.subr.mxu0 0.0
    %1332 = vmatpush1.msra.mxu0 0.0
    %1333 = vmatprep.subr.mxu0 0.0
    %1334 = vmatpush1.msra.mxu0 0.0
    %1335 = vmatprep.subr.mxu0 0.0
    %1336 = vmatpush1.msra.mxu0 0.0
    %1337 = vmatprep.subr.mxu0 0.0
    %1338 = vmatpush1.msra.mxu0 0.0
    %1339 = vmatprep.subr.mxu0 0.0
    %1340 = vmatpush1.msra.mxu0 0.0
    %1341 = vmatprep.subr.mxu0 0.0
    %1342 = vmatpush1.msra.mxu0 0.0
    %1343 = vmatprep.subr.mxu0 0.0
    %1344 = vmatpush1.msra.mxu0 0.0
    %1345 = vmatprep.subr.mxu0 0.0
    %1346 = vmatpush1.msra.mxu0 0.0
    %1347 = vmatprep.subr.mxu0 0.0
    %1348 = vmatpush1.msra.mxu0 0.0
    %1349 = vmatprep.subr.mxu0 0.0
    %1350 = vmatpush1.msra.mxu0 0.0
    %1351 = vmatprep.subr.mxu0 0.0
    %1352 = vmatpush1.msra.mxu0 0.0
    %1353 = vmatprep.subr.mxu0 0.0
    %1354 = vmatpush1.msra.mxu0 0.0
    %1355 = vmatprep.subr.mxu0 0.0
    %1356 = vmatpush1.msra.mxu0 0.0
    %1357 = vmatprep.subr.mxu0 0.0
    %1358 = vmatpush1.msra.mxu0 0.0
    %1359 = vmatprep.subr.mxu0 0.0
    %1360 = vmatpush1.msra.mxu0 0.0
    %1361 = vmatprep.subr.mxu0 0.0
    %1362 = vmatpush1.msra.mxu0 0.0
    %1363 = vmatprep.subr.mxu0 0.0
    %1364 = vmatpush1.msra.mxu0 0.0
    %1365 = vmatprep.subr.mxu0 0.0
    %1366 = vmatpush1.msra.mxu0 0.0
    %1367 = vmatprep.subr.mxu0 0.0
    %1368 = vmatpush1.msra.mxu0 0.0
    %1369 = vmatprep.mubr.f32.mxu0 0.0
    %1370 = vmatmul.mubr.f32.gmra.mrb[0].mxu0 %v1300
    %v1371 = vpop.f32.mrb[0].mxu0
    %v1372 = vadd.f32 0.0, %v1371
    %v1373 = vpop.f32.mrb[0].mxu0
    %1374 = vmatprep.mubr.f32.mxu0 0.0
    %1375 = vmatmul.mubr.f32.gmra.mrb[0].mxu0 %v1303
    %v1376 = vpop.f32.mrb[0].mxu0
    %v1377 = vadd.f32 0.0, %v1376
    %v1378 = vpop.f32.mrb[0].mxu0
    %1379 = vdwg.mxu0
    %v1380 = vld [vmem:[#allocation5 + $0x320] sm:$0xff]
    %v1381 = vld [vmem:[#allocation5 + $0x328] sm:$0xff]
    %v1382 = vld [vmem:[#allocation5 + $0x330] sm:$0xff]
    %v1383 = vld [vmem:[#allocation5 + $0x338] sm:$0xff]
    %v1385 = vsel %vm1178, %v1380, 0
    %v1388 = vsel %vm1178, %v1381, 0
    %v1391 = vsel %vm1178, %v1382, 0
    %v1394 = vsel %vm1178, %v1383, 0
    %1396 = vmatprep.subr.mxu0 0.0
    %1397 = vmatpush1.msra.mxu0 %v1372
    %1398 = vmatprep.subr.mxu0 0.0
    %1399 = vmatpush1.msra.mxu0 %v1377
    %1400 = vmatprep.subr.mxu0 0.0
    %1401 = vmatpush1.msra.mxu0 0.0
    %1402 = vmatprep.subr.mxu0 0.0
    %1403 = vmatpush1.msra.mxu0 0.0
    %1404 = vmatprep.subr.mxu0 0.0
    %1405 = vmatpush1.msra.mxu0 0.0
    %1406 = vmatprep.subr.mxu0 0.0
    %1407 = vmatpush1.msra.mxu0 0.0
    %1408 = vmatprep.subr.mxu0 0.0
    %1409 = vmatpush1.msra.mxu0 0.0
    %1410 = vmatprep.subr.mxu0 0.0
    %1411 = vmatpush1.msra.mxu0 0.0
    %1412 = vmatprep.subr.mxu0 0.0
    %1413 = vmatpush1.msra.mxu0 0.0
    %1414 = vmatprep.subr.mxu0 0.0
    %1415 = vmatpush1.msra.mxu0 0.0
    %1416 = vmatprep.subr.mxu0 0.0
    %1417 = vmatpush1.msra.mxu0 0.0
    %1418 = vmatprep.subr.mxu0 0.0
    %1419 = vmatpush1.msra.mxu0 0.0
    %1420 = vmatprep.subr.mxu0 0.0
    %1421 = vmatpush1.msra.mxu0 0.0
    %1422 = vmatprep.subr.mxu0 0.0
    %1423 = vmatpush1.msra.mxu0 0.0
    %1424 = vmatprep.subr.mxu0 0.0
    %1425 = vmatpush1.msra.mxu0 0.0
    %1426 = vmatprep.subr.mxu0 0.0
    %1427 = vmatpush1.msra.mxu0 0.0
    %1428 = vmatprep.subr.mxu0 0.0
    %1429 = vmatpush1.msra.mxu0 0.0
    %1430 = vmatprep.subr.mxu0 0.0
    %1431 = vmatpush1.msra.mxu0 0.0
    %1432 = vmatprep.subr.mxu0 0.0
    %1433 = vmatpush1.msra.mxu0 0.0
    %1434 = vmatprep.subr.mxu0 0.0
    %1435 = vmatpush1.msra.mxu0 0.0
    %1436 = vmatprep.subr.mxu0 0.0
    %1437 = vmatpush1.msra.mxu0 0.0
    %1438 = vmatprep.subr.mxu0 0.0
    %1439 = vmatpush1.msra.mxu0 0.0
    %1440 = vmatprep.subr.mxu0 0.0
    %1441 = vmatpush1.msra.mxu0 0.0
    %1442 = vmatprep.subr.mxu0 0.0
    %1443 = vmatpush1.msra.mxu0 0.0
    %1444 = vmatprep.subr.mxu0 0.0
    %1445 = vmatpush1.msra.mxu0 0.0
    %1446 = vmatprep.subr.mxu0 0.0
    %1447 = vmatpush1.msra.mxu0 0.0
    %1448 = vmatprep.subr.mxu0 0.0
    %1449 = vmatpush1.msra.mxu0 0.0
    %1450 = vmatprep.subr.mxu0 0.0
    %1451 = vmatpush1.msra.mxu0 0.0
    %1452 = vmatprep.subr.mxu0 0.0
    %1453 = vmatpush1.msra.mxu0 0.0
    %1454 = vmatprep.subr.mxu0 0.0
    %1455 = vmatpush1.msra.mxu0 0.0
    %1456 = vmatprep.subr.mxu0 0.0
    %1457 = vmatpush1.msra.mxu0 0.0
    %1458 = vmatprep.subr.mxu0 0.0
    %1459 = vmatpush1.msra.mxu0 0.0
    %1460 = vmatprep.mubr.f32.mxu0 0.0
    %1461 = vmatmul.mubr.f32.gmra.mrb[0].mxu0 %v1385
    %v1462 = vpop.f32.mrb[0].mxu0
    %v1463 = vadd.f32 0.0, %v1462
    %v1464 = vpop.f32.mrb[0].mxu0
    %1465 = vmatprep.mubr.f32.mxu0 0.0
    %1466 = vmatmul.mubr.f32.gmra.mrb[0].mxu0 %v1388
    %v1467 = vpop.f32.mrb[0].mxu0
    %v1468 = vadd.f32 0.0, %v1467
    %v1469 = vpop.f32.mrb[0].mxu0
    %1470 = vmatprep.mubr.f32.mxu0 0.0
    %1471 = vmatmul.mubr.f32.gmra.mrb[0].mxu0 %v1391
    %v1472 = vpop.f32.mrb[0].mxu0
    %v1473 = vadd.f32 0.0, %v1472
    %v1474 = vpop.f32.mrb[0].mxu0
    %1475 = vmatprep.mubr.f32.mxu0 0.0
    %1476 = vmatmul.mubr.f32.gmra.mrb[0].mxu0 %v1394
    %v1477 = vpop.f32.mrb[0].mxu0
    %v1478 = vadd.f32 0.0, %v1477
    %v1479 = vpop.f32.mrb[0].mxu0
    %1480 = vdwg.mxu0
    %1482 = vset.pattern.permute.xlu0 0
    %1483 = vperm.xlu0 %1482, %v1290
    %v1484 = vpop.permute.xlu0 %1483
    %1487 = vset.pattern.permute.xlu0 0
    %1488 = vperm.xlu0 %1487, %v1291
    %v1489 = vpop.permute.xlu0 %1488
    %1492 = vset.pattern.permute.xlu0 0
    %1493 = vperm.xlu0 %1492, %v1292
    %v1494 = vpop.permute.xlu0 %1493
    %1497 = vset.pattern.permute.xlu0 0
    %1498 = vperm.xlu0 %1497, %v1293
    %v1499 = vpop.permute.xlu0 %1498
    %v1501 = vadd.f32 %v1484, %v1463
    %v1502 = vadd.f32 %v1489, %v1468
    %v1503 = vadd.f32 %v1494, %v1473
    %v1504 = vadd.f32 %v1499, %v1478
    %v1505 = vld [vmem:[#allocation5 + $0x340] sm:$0xff]
    %v1506 = vld [vmem:[#allocation5 + $0x348] sm:$0xff]
    %v1507 = vld [vmem:[#allocation5 + $0x350] sm:$0xff]
    %v1508 = vld [vmem:[#allocation5 + $0x358] sm:$0xff]
    %1509 = vmatprep.subr.mxu0 0.0
    %1510 = vmatpush1.msra.mxu0 %v1505
    %1511 = vmatprep.subr.mxu0 0.0
    %1512 = vmatpush1.msra.mxu0 %v1506
    %1513 = vmatprep.subr.mxu0 0.0
    %1514 = vmatpush1.msra.mxu0 %v1507
    %1515 = vmatprep.subr.mxu0 0.0
    %1516 = vmatpush1.msra.mxu0 %v1508
    %1517 = vmatprep.subr.mxu0 0.0
    %1518 = vmatpush1.msra.mxu0 0.0
    %1519 = vmatprep.subr.mxu0 0.0
    %1520 = vmatpush1.msra.mxu0 0.0
    %1521 = vmatprep.subr.mxu0 0.0
    %1522 = vmatpush1.msra.mxu0 0.0
    %1523 = vmatprep.subr.mxu0 0.0
    %1524 = vmatpush1.msra.mxu0 0.0
    %1525 = vmatprep.subr.mxu0 0.0
    %1526 = vmatpush1.msra.mxu0 0.0
    %1527 = vmatprep.subr.mxu0 0.0
    %1528 = vmatpush1.msra.mxu0 0.0
    %1529 = vmatprep.subr.mxu0 0.0
    %1530 = vmatpush1.msra.mxu0 0.0
    %1531 = vmatprep.subr.mxu0 0.0
    %1532 = vmatpush1.msra.mxu0 0.0
    %1533 = vmatprep.subr.mxu0 0.0
    %1534 = vmatpush1.msra.mxu0 0.0
    %1535 = vmatprep.subr.mxu0 0.0
    %1536 = vmatpush1.msra.mxu0 0.0
    %1537 = vmatprep.subr.mxu0 0.0
    %1538 = vmatpush1.msra.mxu0 0.0
    %1539 = vmatprep.subr.mxu0 0.0
    %1540 = vmatpush1.msra.mxu0 0.0
    %1541 = vmatprep.subr.mxu0 0.0
    %1542 = vmatpush1.msra.mxu0 0.0
    %1543 = vmatprep.subr.mxu0 0.0
    %1544 = vmatpush1.msra.mxu0 0.0
    %1545 = vmatprep.subr.mxu0 0.0
    %1546 = vmatpush1.msra.mxu0 0.0
    %1547 = vmatprep.subr.mxu0 0.0
    %1548 = vmatpush1.msra.mxu0 0.0
    %1549 = vmatprep.subr.mxu0 0.0
    %1550 = vmatpush1.msra.mxu0 0.0
    %1551 = vmatprep.subr.mxu0 0.0
    %1552 = vmatpush1.msra.mxu0 0.0
    %1553 = vmatprep.subr.mxu0 0.0
    %1554 = vmatpush1.msra.mxu0 0.0
    %1555 = vmatprep.subr.mxu0 0.0
    %1556 = vmatpush1.msra.mxu0 0.0
    %1557 = vmatprep.subr.mxu0 0.0
    %1558 = vmatpush1.msra.mxu0 0.0
    %1559 = vmatprep.subr.mxu0 0.0
    %1560 = vmatpush1.msra.mxu0 0.0
    %1561 = vmatprep.subr.mxu0 0.0
    %1562 = vmatpush1.msra.mxu0 0.0
    %1563 = vmatprep.subr.mxu0 0.0
    %1564 = vmatpush1.msra.mxu0 0.0
    %1565 = vmatprep.subr.mxu0 0.0
    %1566 = vmatpush1.msra.mxu0 0.0
    %1567 = vmatprep.subr.mxu0 0.0
    %1568 = vmatpush1.msra.mxu0 0.0
    %1569 = vmatprep.subr.mxu0 0.0
    %1570 = vmatpush1.msra.mxu0 0.0
    %1571 = vmatprep.subr.mxu0 0.0
    %1572 = vmatpush1.msra.mxu0 0.0
    %1573 = vmatprep.mubr.f32.mxu0 0.0
    %1574 = vmatmul.mubr.f32.gmra.mrb[0].mxu0 %v1300
    %v1575 = vpop.f32.mrb[0].mxu0
    %v1576 = vadd.f32 0.0, %v1575
    %v1577 = vpop.f32.mrb[0].mxu0
    %1578 = vmatprep.mubr.f32.mxu0 0.0
    %1579 = vmatmul.mubr.f32.gmra.mrb[0].mxu0 %v1303
    %v1580 = vpop.f32.mrb[0].mxu0
    %v1581 = vadd.f32 0.0, %v1580
    %v1582 = vpop.f32.mrb[0].mxu0
    %1583 = vdwg.mxu0
    %v1584 = vld [vmem:[#allocation5 + $0x360] sm:$0xff]
    %v1585 = vld [vmem:[#allocation5 + $0x368] sm:$0xff]
    %v1586 = vld [vmem:[#allocation5 + $0x370] sm:$0xff]
    %v1587 = vld [vmem:[#allocation5 + $0x378] sm:$0xff]
    %v1589 = vsel %vm1178, %v1584, 0
    %v1592 = vsel %vm1178, %v1585, 0
    %v1595 = vsel %vm1178, %v1586, 0
    %v1598 = vsel %vm1178, %v1587, 0
    %1600 = vmatprep.subr.mxu0 0.0
    %1601 = vmatpush1.msra.mxu0 %v1576
    %1602 = vmatprep.subr.mxu0 0.0
    %1603 = vmatpush1.msra.mxu0 %v1581
    %1604 = vmatprep.subr.mxu0 0.0
    %1605 = vmatpush1.msra.mxu0 0.0
    %1606 = vmatprep.subr.mxu0 0.0
    %1607 = vmatpush1.msra.mxu0 0.0
    %1608 = vmatprep.subr.mxu0 0.0
    %1609 = vmatpush1.msra.mxu0 0.0
    %1610 = vmatprep.subr.mxu0 0.0
    %1611 = vmatpush1.msra.mxu0 0.0
    %1612 = vmatprep.subr.mxu0 0.0
    %1613 = vmatpush1.msra.mxu0 0.0
    %1614 = vmatprep.subr.mxu0 0.0
    %1615 = vmatpush1.msra.mxu0 0.0
    %1616 = vmatprep.subr.mxu0 0.0
    %1617 = vmatpush1.msra.mxu0 0.0
    %1618 = vmatprep.subr.mxu0 0.0
    %1619 = vmatpush1.msra.mxu0 0.0
    %1620 = vmatprep.subr.mxu0 0.0
    %1621 = vmatpush1.msra.mxu0 0.0
    %1622 = vmatprep.subr.mxu0 0.0
    %1623 = vmatpush1.msra.mxu0 0.0
    %1624 = vmatprep.subr.mxu0 0.0
    %1625 = vmatpush1.msra.mxu0 0.0
    %1626 = vmatprep.subr.mxu0 0.0
    %1627 = vmatpush1.msra.mxu0 0.0
    %1628 = vmatprep.subr.mxu0 0.0
    %1629 = vmatpush1.msra.mxu0 0.0
    %1630 = vmatprep.subr.mxu0 0.0
    %1631 = vmatpush1.msra.mxu0 0.0
    %1632 = vmatprep.subr.mxu0 0.0
    %1633 = vmatpush1.msra.mxu0 0.0
    %1634 = vmatprep.subr.mxu0 0.0
    %1635 = vmatpush1.msra.mxu0 0.0
    %1636 = vmatprep.subr.mxu0 0.0
    %1637 = vmatpush1.msra.mxu0 0.0
    %1638 = vmatprep.subr.mxu0 0.0
    %1639 = vmatpush1.msra.mxu0 0.0
    %1640 = vmatprep.subr.mxu0 0.0
    %1641 = vmatpush1.msra.mxu0 0.0
    %1642 = vmatprep.subr.mxu0 0.0
    %1643 = vmatpush1.msra.mxu0 0.0
    %1644 = vmatprep.subr.mxu0 0.0
    %1645 = vmatpush1.msra.mxu0 0.0
    %1646 = vmatprep.subr.mxu0 0.0
    %1647 = vmatpush1.msra.mxu0 0.0
    %1648 = vmatprep.subr.mxu0 0.0
    %1649 = vmatpush1.msra.mxu0 0.0
    %1650 = vmatprep.subr.mxu0 0.0
    %1651 = vmatpush1.msra.mxu0 0.0
    %1652 = vmatprep.subr.mxu0 0.0
    %1653 = vmatpush1.msra.mxu0 0.0
    %1654 = vmatprep.subr.mxu0 0.0
    %1655 = vmatpush1.msra.mxu0 0.0
    %1656 = vmatprep.subr.mxu0 0.0
    %1657 = vmatpush1.msra.mxu0 0.0
    %1658 = vmatprep.subr.mxu0 0.0
    %1659 = vmatpush1.msra.mxu0 0.0
    %1660 = vmatprep.subr.mxu0 0.0
    %1661 = vmatpush1.msra.mxu0 0.0
    %1662 = vmatprep.subr.mxu0 0.0
    %1663 = vmatpush1.msra.mxu0 0.0
    %1664 = vmatprep.mubr.f32.mxu0 0.0
    %1665 = vmatmul.mubr.f32.gmra.mrb[0].mxu0 %v1589
    %v1666 = vpop.f32.mrb[0].mxu0
    %v1667 = vadd.f32 0.0, %v1666
    %v1668 = vpop.f32.mrb[0].mxu0
    %1669 = vmatprep.mubr.f32.mxu0 0.0
    %1670 = vmatmul.mubr.f32.gmra.mrb[0].mxu0 %v1592
    %v1671 = vpop.f32.mrb[0].mxu0
    %v1672 = vadd.f32 0.0, %v1671
    %v1673 = vpop.f32.mrb[0].mxu0
    %1674 = vmatprep.mubr.f32.mxu0 0.0
    %1675 = vmatmul.mubr.f32.gmra.mrb[0].mxu0 %v1595
    %v1676 = vpop.f32.mrb[0].mxu0
    %v1677 = vadd.f32 0.0, %v1676
    %v1678 = vpop.f32.mrb[0].mxu0
    %1679 = vmatprep.mubr.f32.mxu0 0.0
    %1680 = vmatmul.mubr.f32.gmra.mrb[0].mxu0 %v1598
    %v1681 = vpop.f32.mrb[0].mxu0
    %v1682 = vadd.f32 0.0, %v1681
    %v1683 = vpop.f32.mrb[0].mxu0
    %1684 = vdwg.mxu0
    %v1685 = vadd.f32 %v1501, %v1667
    %v1686 = vadd.f32 %v1502, %v1672
    %v1687 = vadd.f32 %v1503, %v1677
    %v1688 = vadd.f32 %v1504, %v1682
    %v1689 = vld [vmem:[#allocation5 + $0x380] sm:$0xff]
    %v1690 = vld [vmem:[#allocation5 + $0x388] sm:$0xff]
    %v1691 = vld [vmem:[#allocation5 + $0x390] sm:$0xff]
    %v1692 = vld [vmem:[#allocation5 + $0x398] sm:$0xff]
    %1693 = vmatprep.subr.mxu0 0.0
    %1694 = vmatpush1.msra.mxu0 %v1689
    %1695 = vmatprep.subr.mxu0 0.0
    %1696 = vmatpush1.msra.mxu0 %v1690
    %1697 = vmatprep.subr.mxu0 0.0
    %1698 = vmatpush1.msra.mxu0 %v1691
    %1699 = vmatprep.subr.mxu0 0.0
    %1700 = vmatpush1.msra.mxu0 %v1692
    %1701 = vmatprep.subr.mxu0 0.0
    %1702 = vmatpush1.msra.mxu0 0.0
    %1703 = vmatprep.subr.mxu0 0.0
    %1704 = vmatpush1.msra.mxu0 0.0
    %1705 = vmatprep.subr.mxu0 0.0
    %1706 = vmatpush1.msra.mxu0 0.0
    %1707 = vmatprep.subr.mxu0 0.0
    %1708 = vmatpush1.msra.mxu0 0.0
    %1709 = vmatprep.subr.mxu0 0.0
    %1710 = vmatpush1.msra.mxu0 0.0
    %1711 = vmatprep.subr.mxu0 0.0
    %1712 = vmatpush1.msra.mxu0 0.0
    %1713 = vmatprep.subr.mxu0 0.0
    %1714 = vmatpush1.msra.mxu0 0.0
    %1715 = vmatprep.subr.mxu0 0.0
    %1716 = vmatpush1.msra.mxu0 0.0
    %1717 = vmatprep.subr.mxu0 0.0
    %1718 = vmatpush1.msra.mxu0 0.0
    %1719 = vmatprep.subr.mxu0 0.0
    %1720 = vmatpush1.msra.mxu0 0.0
    %1721 = vmatprep.subr.mxu0 0.0
    %1722 = vmatpush1.msra.mxu0 0.0
    %1723 = vmatprep.subr.mxu0 0.0
    %1724 = vmatpush1.msra.mxu0 0.0
    %1725 = vmatprep.subr.mxu0 0.0
    %1726 = vmatpush1.msra.mxu0 0.0
    %1727 = vmatprep.subr.mxu0 0.0
    %1728 = vmatpush1.msra.mxu0 0.0
    %1729 = vmatprep.subr.mxu0 0.0
    %1730 = vmatpush1.msra.mxu0 0.0
    %1731 = vmatprep.subr.mxu0 0.0
    %1732 = vmatpush1.msra.mxu0 0.0
    %1733 = vmatprep.subr.mxu0 0.0
    %1734 = vmatpush1.msra.mxu0 0.0
    %1735 = vmatprep.subr.mxu0 0.0
    %1736 = vmatpush1.msra.mxu0 0.0
    %1737 = vmatprep.subr.mxu0 0.0
    %1738 = vmatpush1.msra.mxu0 0.0
    %1739 = vmatprep.subr.mxu0 0.0
    %1740 = vmatpush1.msra.mxu0 0.0
    %1741 = vmatprep.subr.mxu0 0.0
    %1742 = vmatpush1.msra.mxu0 0.0
    %1743 = vmatprep.subr.mxu0 0.0
    %1744 = vmatpush1.msra.mxu0 0.0
    %1745 = vmatprep.subr.mxu0 0.0
    %1746 = vmatpush1.msra.mxu0 0.0
    %1747 = vmatprep.subr.mxu0 0.0
    %1748 = vmatpush1.msra.mxu0 0.0
    %1749 = vmatprep.subr.mxu0 0.0
    %1750 = vmatpush1.msra.mxu0 0.0
    %1751 = vmatprep.subr.mxu0 0.0
    %1752 = vmatpush1.msra.mxu0 0.0
    %1753 = vmatprep.subr.mxu0 0.0
    %1754 = vmatpush1.msra.mxu0 0.0
    %1755 = vmatprep.subr.mxu0 0.0
    %1756 = vmatpush1.msra.mxu0 0.0
    %1757 = vmatprep.mubr.f32.mxu0 0.0
    %1758 = vmatmul.mubr.f32.gmra.mrb[0].mxu0 %v1300
    %v1759 = vpop.f32.mrb[0].mxu0
    %v1760 = vadd.f32 0.0, %v1759
    %v1761 = vpop.f32.mrb[0].mxu0
    %1762 = vmatprep.mubr.f32.mxu0 0.0
    %1763 = vmatmul.mubr.f32.gmra.mrb[0].mxu0 %v1303
    %v1764 = vpop.f32.mrb[0].mxu0
    %v1765 = vadd.f32 0.0, %v1764
    %v1766 = vpop.f32.mrb[0].mxu0
    %1767 = vdwg.mxu0
    %v1768 = vld [vmem:[#allocation5 + $0x3a0] sm:$0xff]
    %v1769 = vld [vmem:[#allocation5 + $0x3a8] sm:$0xff]
    %v1770 = vld [vmem:[#allocation5 + $0x3b0] sm:$0xff]
    %v1771 = vld [vmem:[#allocation5 + $0x3b8] sm:$0xff]
    %v1773 = vsel %vm1178, %v1768, 0
    %v1776 = vsel %vm1178, %v1769, 0
    %v1779 = vsel %vm1178, %v1770, 0
    %v1782 = vsel %vm1178, %v1771, 0
    %1784 = vmatprep.subr.mxu0 0.0
    %1785 = vmatpush1.msra.mxu0 %v1760
    %1786 = vmatprep.subr.mxu0 0.0
    %1787 = vmatpush1.msra.mxu0 %v1765
    %1788 = vmatprep.subr.mxu0 0.0
    %1789 = vmatpush1.msra.mxu0 0.0
    %1790 = vmatprep.subr.mxu0 0.0
    %1791 = vmatpush1.msra.mxu0 0.0
    %1792 = vmatprep.subr.mxu0 0.0
    %1793 = vmatpush1.msra.mxu0 0.0
    %1794 = vmatprep.subr.mxu0 0.0
    %1795 = vmatpush1.msra.mxu0 0.0
    %1796 = vmatprep.subr.mxu0 0.0
    %1797 = vmatpush1.msra.mxu0 0.0
    %1798 = vmatprep.subr.mxu0 0.0
    %1799 = vmatpush1.msra.mxu0 0.0
    %1800 = vmatprep.subr.mxu0 0.0
    %1801 = vmatpush1.msra.mxu0 0.0
    %1802 = vmatprep.subr.mxu0 0.0
    %1803 = vmatpush1.msra.mxu0 0.0
    %1804 = vmatprep.subr.mxu0 0.0
    %1805 = vmatpush1.msra.mxu0 0.0
    %1806 = vmatprep.subr.mxu0 0.0
    %1807 = vmatpush1.msra.mxu0 0.0
    %1808 = vmatprep.subr.mxu0 0.0
    %1809 = vmatpush1.msra.mxu0 0.0
    %1810 = vmatprep.subr.mxu0 0.0
    %1811 = vmatpush1.msra.mxu0 0.0
    %1812 = vmatprep.subr.mxu0 0.0
    %1813 = vmatpush1.msra.mxu0 0.0
    %1814 = vmatprep.subr.mxu0 0.0
    %1815 = vmatpush1.msra.mxu0 0.0
    %1816 = vmatprep.subr.mxu0 0.0
    %1817 = vmatpush1.msra.mxu0 0.0
    %1818 = vmatprep.subr.mxu0 0.0
    %1819 = vmatpush1.msra.mxu0 0.0
    %1820 = vmatprep.subr.mxu0 0.0
    %1821 = vmatpush1.msra.mxu0 0.0
    %1822 = vmatprep.subr.mxu0 0.0
    %1823 = vmatpush1.msra.mxu0 0.0
    %1824 = vmatprep.subr.mxu0 0.0
    %1825 = vmatpush1.msra.mxu0 0.0
    %1826 = vmatprep.subr.mxu0 0.0
    %1827 = vmatpush1.msra.mxu0 0.0
    %1828 = vmatprep.subr.mxu0 0.0
    %1829 = vmatpush1.msra.mxu0 0.0
    %1830 = vmatprep.subr.mxu0 0.0
    %1831 = vmatpush1.msra.mxu0 0.0
    %1832 = vmatprep.subr.mxu0 0.0
    %1833 = vmatpush1.msra.mxu0 0.0
    %1834 = vmatprep.subr.mxu0 0.0
    %1835 = vmatpush1.msra.mxu0 0.0
    %1836 = vmatprep.subr.mxu0 0.0
    %1837 = vmatpush1.msra.mxu0 0.0
    %1838 = vmatprep.subr.mxu0 0.0
    %1839 = vmatpush1.msra.mxu0 0.0
    %1840 = vmatprep.subr.mxu0 0.0
    %1841 = vmatpush1.msra.mxu0 0.0
    %1842 = vmatprep.subr.mxu0 0.0
    %1843 = vmatpush1.msra.mxu0 0.0
    %1844 = vmatprep.subr.mxu0 0.0
    %1845 = vmatpush1.msra.mxu0 0.0
    %1846 = vmatprep.subr.mxu0 0.0
    %1847 = vmatpush1.msra.mxu0 0.0
    %1848 = vmatprep.mubr.f32.mxu0 0.0
    %1849 = vmatmul.mubr.f32.gmra.mrb[0].mxu0 %v1773
    %v1850 = vpop.f32.mrb[0].mxu0
    %v1851 = vadd.f32 0.0, %v1850
    %v1852 = vpop.f32.mrb[0].mxu0
    %1853 = vmatprep.mubr.f32.mxu0 0.0
    %1854 = vmatmul.mubr.f32.gmra.mrb[0].mxu0 %v1776
    %v1855 = vpop.f32.mrb[0].mxu0
    %v1856 = vadd.f32 0.0, %v1855
    %v1857 = vpop.f32.mrb[0].mxu0
    %1858 = vmatprep.mubr.f32.mxu0 0.0
    %1859 = vmatmul.mubr.f32.gmra.mrb[0].mxu0 %v1779
    %v1860 = vpop.f32.mrb[0].mxu0
    %v1861 = vadd.f32 0.0, %v1860
    %v1862 = vpop.f32.mrb[0].mxu0
    %1863 = vmatprep.mubr.f32.mxu0 0.0
    %1864 = vmatmul.mubr.f32.gmra.mrb[0].mxu0 %v1782
    %v1865 = vpop.f32.mrb[0].mxu0
    %v1866 = vadd.f32 0.0, %v1865
    %v1867 = vpop.f32.mrb[0].mxu0
    %1868 = vdwg.mxu0
    %v1869 = vadd.f32 %v1685, %v1851
    %v1870 = vadd.f32 %v1686, %v1856
    %v1871 = vadd.f32 %v1687, %v1861
    %v1872 = vadd.f32 %v1688, %v1866
    %v1873 = vmax.f32 %v1869, 0.0
    %v1874 = vmax.f32 %v1870, 0.0
    %v1875 = vmax.f32 %v1871, 0.0
    %v1876 = vmax.f32 %v1872, 0.0
    %v1877 = vld [vmem:[#allocation5 + $0x3e0] sm:$0xff]
    %v1878 = vld [vmem:[#allocation5 + $0x3e8] sm:$0xff]
    %v1879 = vld [vmem:[#allocation5 + $0x3f0] sm:$0xff]
    %v1880 = vld [vmem:[#allocation5 + $0x3f8] sm:$0xff]
    %v1881 = vld [vmem:[#allocation5 + $0x400] sm:$0xff]
    %v1882 = vld [vmem:[#allocation5 + $0x408] sm:$0xff]
    %v1883 = vld [vmem:[#allocation5 + $0x410] sm:$0xff]
    %v1884 = vld [vmem:[#allocation5 + $0x418] sm:$0xff]
    %v1885 = vld [vmem:[#allocation5 + $0x420] sm:$0xff]
    %v1886 = vld [vmem:[#allocation5 + $0x428] sm:$0xff]
    %v1887 = vld [vmem:[#allocation5 + $0x430] sm:$0xff]
    %v1888 = vld [vmem:[#allocation5 + $0x438] sm:$0xff]
    %v1889 = vld [vmem:[#allocation5 + $0x440] sm:$0xff]
    %v1890 = vld [vmem:[#allocation5 + $0x448] sm:$0xff]
    %v1891 = vld [vmem:[#allocation5 + $0x450] sm:$0xff]
    %v1892 = vld [vmem:[#allocation5 + $0x458] sm:$0xff]
    %1894 = vset.pattern.permute.xlu0 0
    %1895 = vperm.xlu0 %1894, %v1885
    %v1896 = vpop.permute.xlu0 %1895
    %1899 = vset.pattern.permute.xlu0 0
    %1900 = vperm.xlu0 %1899, %v1886
    %v1901 = vpop.permute.xlu0 %1900
    %1904 = vset.pattern.permute.xlu0 0
    %1905 = vperm.xlu0 %1904, %v1887
    %v1906 = vpop.permute.xlu0 %1905
    %1909 = vset.pattern.permute.xlu0 0
    %1910 = vperm.xlu0 %1909, %v1888
    %v1911 = vpop.permute.xlu0 %1910
    %1914 = vset.pattern.permute.xlu0 0
    %1915 = vperm.xlu0 %1914, %v1889
    %v1916 = vpop.permute.xlu0 %1915
    %1919 = vset.pattern.permute.xlu0 0
    %1920 = vperm.xlu0 %1919, %v1890
    %v1921 = vpop.permute.xlu0 %1920
    %1924 = vset.pattern.permute.xlu0 0
    %1925 = vperm.xlu0 %1924, %v1891
    %v1926 = vpop.permute.xlu0 %1925
    %1929 = vset.pattern.permute.xlu0 0
    %1930 = vperm.xlu0 %1929, %v1892
    %v1931 = vpop.permute.xlu0 %1930
    %v1934 = vsel %vm1298, %v1877, 0
    %v1937 = vsel %vm1298, %v1878, 0
    %v1940 = vsel %vm1298, %v1879, 0
    %v1943 = vsel %vm1298, %v1880, 0
    %v1946 = vsel %vm1298, %v1881, 0
    %v1949 = vsel %vm1298, %v1882, 0
    %v1952 = vsel %vm1298, %v1883, 0
    %v1955 = vsel %vm1298, %v1884, 0
    %1957 = vmatprep.subr.mxu0 0.0
    %1958 = vmatpush1.msra.mxu0 %v1873
    %1959 = vmatprep.subr.mxu0 0.0
    %1960 = vmatpush1.msra.mxu0 %v1874
    %1961 = vmatprep.subr.mxu0 0.0
    %1962 = vmatpush1.msra.mxu0 %v1875
    %1963 = vmatprep.subr.mxu0 0.0
    %1964 = vmatpush1.msra.mxu0 %v1876
    %1965 = vmatprep.subr.mxu0 0.0
    %1966 = vmatpush1.msra.mxu0 0.0
    %1967 = vmatprep.subr.mxu0 0.0
    %1968 = vmatpush1.msra.mxu0 0.0
    %1969 = vmatprep.subr.mxu0 0.0
    %1970 = vmatpush1.msra.mxu0 0.0
    %1971 = vmatprep.subr.mxu0 0.0
    %1972 = vmatpush1.msra.mxu0 0.0
    %1973 = vmatprep.subr.mxu0 0.0
    %1974 = vmatpush1.msra.mxu0 0.0
    %1975 = vmatprep.subr.mxu0 0.0
    %1976 = vmatpush1.msra.mxu0 0.0
    %1977 = vmatprep.subr.mxu0 0.0
    %1978 = vmatpush1.msra.mxu0 0.0
    %1979 = vmatprep.subr.mxu0 0.0
    %1980 = vmatpush1.msra.mxu0 0.0
    %1981 = vmatprep.subr.mxu0 0.0
    %1982 = vmatpush1.msra.mxu0 0.0
    %1983 = vmatprep.subr.mxu0 0.0
    %1984 = vmatpush1.msra.mxu0 0.0
    %1985 = vmatprep.subr.mxu0 0.0
    %1986 = vmatpush1.msra.mxu0 0.0
    %1987 = vmatprep.subr.mxu0 0.0
    %1988 = vmatpush1.msra.mxu0 0.0
    %1989 = vmatprep.subr.mxu0 0.0
    %1990 = vmatpush1.msra.mxu0 0.0
    %1991 = vmatprep.subr.mxu0 0.0
    %1992 = vmatpush1.msra.mxu0 0.0
    %1993 = vmatprep.subr.mxu0 0.0
    %1994 = vmatpush1.msra.mxu0 0.0
    %1995 = vmatprep.subr.mxu0 0.0
    %1996 = vmatpush1.msra.mxu0 0.0
    %1997 = vmatprep.subr.mxu0 0.0
    %1998 = vmatpush1.msra.mxu0 0.0
    %1999 = vmatprep.subr.mxu0 0.0
    %2000 = vmatpush1.msra.mxu0 0.0
    %2001 = vmatprep.subr.mxu0 0.0
    %2002 = vmatpush1.msra.mxu0 0.0
    %2003 = vmatprep.subr.mxu0 0.0
    %2004 = vmatpush1.msra.mxu0 0.0
    %2005 = vmatprep.subr.mxu0 0.0
    %2006 = vmatpush1.msra.mxu0 0.0
    %2007 = vmatprep.subr.mxu0 0.0
    %2008 = vmatpush1.msra.mxu0 0.0
    %2009 = vmatprep.subr.mxu0 0.0
    %2010 = vmatpush1.msra.mxu0 0.0
    %2011 = vmatprep.subr.mxu0 0.0
    %2012 = vmatpush1.msra.mxu0 0.0
    %2013 = vmatprep.subr.mxu0 0.0
    %2014 = vmatpush1.msra.mxu0 0.0
    %2015 = vmatprep.subr.mxu0 0.0
    %2016 = vmatpush1.msra.mxu0 0.0
    %2017 = vmatprep.subr.mxu0 0.0
    %2018 = vmatpush1.msra.mxu0 0.0
    %2019 = vmatprep.subr.mxu0 0.0
    %2020 = vmatpush1.msra.mxu0 0.0
    %2021 = vmatprep.mubr.f32.mxu0 0.0
    %2022 = vmatmul.mubr.f32.gmra.mrb[0].mxu0 %v1934
    %v2023 = vpop.f32.mrb[0].mxu0
    %v2024 = vadd.f32 %v1896, %v2023
    %v2025 = vpop.f32.mrb[0].mxu0
    %2026 = vmatprep.mubr.f32.mxu0 0.0
    %2027 = vmatmul.mubr.f32.gmra.mrb[0].mxu0 %v1937
    %v2028 = vpop.f32.mrb[0].mxu0
    %v2029 = vadd.f32 %v1901, %v2028
    %v2030 = vpop.f32.mrb[0].mxu0
    %2031 = vmatprep.mubr.f32.mxu0 0.0
    %2032 = vmatmul.mubr.f32.gmra.mrb[0].mxu0 %v1940
    %v2033 = vpop.f32.mrb[0].mxu0
    %v2034 = vadd.f32 %v1906, %v2033
    %v2035 = vpop.f32.mrb[0].mxu0
    %2036 = vmatprep.mubr.f32.mxu0 0.0
    %2037 = vmatmul.mubr.f32.gmra.mrb[0].mxu0 %v1943
    %v2038 = vpop.f32.mrb[0].mxu0
    %v2039 = vadd.f32 %v1911, %v2038
    %v2040 = vpop.f32.mrb[0].mxu0
    %2041 = vmatprep.mubr.f32.mxu0 0.0
    %2042 = vmatmul.mubr.f32.gmra.mrb[0].mxu0 %v1946
    %v2043 = vpop.f32.mrb[0].mxu0
    %v2044 = vadd.f32 %v1916, %v2043
    %v2045 = vpop.f32.mrb[0].mxu0
    %2046 = vmatprep.mubr.f32.mxu0 0.0
    %2047 = vmatmul.mubr.f32.gmra.mrb[0].mxu0 %v1949
    %v2048 = vpop.f32.mrb[0].mxu0
    %v2049 = vadd.f32 %v1921, %v2048
    %v2050 = vpop.f32.mrb[0].mxu0
    %2051 = vmatprep.mubr.f32.mxu0 0.0
    %2052 = vmatmul.mubr.f32.gmra.mrb[0].mxu0 %v1952
    %v2053 = vpop.f32.mrb[0].mxu0
    %v2054 = vadd.f32 %v1926, %v2053
    %v2055 = vpop.f32.mrb[0].mxu0
    %2056 = vmatprep.mubr.f32.mxu0 0.0
    %2057 = vmatmul.mubr.f32.gmra.mrb[0].mxu0 %v1955
    %v2058 = vpop.f32.mrb[0].mxu0
    %v2059 = vadd.f32 %v1931, %v2058
    %v2060 = vpop.f32.mrb[0].mxu0
    %2061 = vdwg.mxu0
    %v2062 = vxor.u32 %v2044, 2147483648
    %v2063 = vxor.u32 %v2049, 2147483648
    %v2064 = vxor.u32 %v2054, 2147483648
    %v2065 = vxor.u32 %v2059, 2147483648
    %v2066 = vmul.f32 %v2062, 1.442695
    %v2067 = vpow.pop %v2066
    %v2068 = vmul.f32 %v2063, 1.442695
    %v2069 = vpow.pop %v2068
    %v2070 = vmul.f32 %v2064, 1.442695
    %v2071 = vpow.pop %v2070
    %v2072 = vmul.f32 %v2065, 1.442695
    %v2073 = vpow.pop %v2072
    %v2074 = vadd.f32 %v2067, 1.0
    %v2075 = vadd.f32 %v2069, 1.0
    %v2076 = vadd.f32 %v2071, 1.0
    %v2077 = vadd.f32 %v2073, 1.0
    %v2078 = vrcp.pop %v2074
    %v2079 = vmul.f32 1.0, %v2078
    %v2080 = vrcp.pop %v2075
    %v2081 = vmul.f32 1.0, %v2080
    %v2082 = vrcp.pop %v2076
    %v2083 = vmul.f32 1.0, %v2082
    %v2084 = vrcp.pop %v2077
    %v2085 = vmul.f32 1.0, %v2084
    %v2086 = vmul.f32 %v2024, %v2079
    %v2087 = vmul.f32 %v2029, %v2081
    %v2088 = vmul.f32 %v2034, %v2083
    %v2089 = vmul.f32 %v2039, %v2085
    %v2090 = vld [vmem:[#allocation5 + $0x460] sm:$0xff]
    %v2091 = vld [vmem:[#allocation5 + $0x468] sm:$0xff]
    %v2092 = vld [vmem:[#allocation5 + $0x470] sm:$0x1]
    %v2093 = vlaneseq
    %v2094 = vshrl.u32 %v2093, 7
    %v2095 = vsub.s32 0, %v2094
    %v2096 = vrot.slane %v2092, %v2095
    %v2098 = vsel %vm1178, %v2086, 0
    %v2101 = vsel %vm1178, %v2087, 0
    %v2104 = vsel %vm1178, %v2088, 0
    %v2107 = vsel %vm1178, %v2089, 0
    %2109 = vmatprep.subr.mxu0 0.0
    %2110 = vmatpush1.msra.mxu0 %v2090
    %2111 = vmatprep.subr.mxu0 0.0
    %2112 = vmatpush1.msra.mxu0 %v2091
    %2113 = vmatprep.subr.mxu0 0.0
    %2114 = vmatpush1.msra.mxu0 0.0
    %2115 = vmatprep.subr.mxu0 0.0
    %2116 = vmatpush1.msra.mxu0 0.0
    %2117 = vmatprep.subr.mxu0 0.0
    %2118 = vmatpush1.msra.mxu0 0.0
    %2119 = vmatprep.subr.mxu0 0.0
    %2120 = vmatpush1.msra.mxu0 0.0
    %2121 = vmatprep.subr.mxu0 0.0
    %2122 = vmatpush1.msra.mxu0 0.0
    %2123 = vmatprep.subr.mxu0 0.0
    %2124 = vmatpush1.msra.mxu0 0.0
    %2125 = vmatprep.subr.mxu0 0.0
    %2126 = vmatpush1.msra.mxu0 0.0
    %2127 = vmatprep.subr.mxu0 0.0
    %2128 = vmatpush1.msra.mxu0 0.0
    %2129 = vmatprep.subr.mxu0 0.0
    %2130 = vmatpush1.msra.mxu0 0.0
    %2131 = vmatprep.subr.mxu0 0.0
    %2132 = vmatpush1.msra.mxu0 0.0
    %2133 = vmatprep.subr.mxu0 0.0
    %2134 = vmatpush1.msra.mxu0 0.0
    %2135 = vmatprep.subr.mxu0 0.0
    %2136 = vmatpush1.msra.mxu0 0.0
    %2137 = vmatprep.subr.mxu0 0.0
    %2138 = vmatpush1.msra.mxu0 0.0
    %2139 = vmatprep.subr.mxu0 0.0
    %2140 = vmatpush1.msra.mxu0 0.0
    %2141 = vmatprep.subr.mxu0 0.0
    %2142 = vmatpush1.msra.mxu0 0.0
    %2143 = vmatprep.subr.mxu0 0.0
    %2144 = vmatpush1.msra.mxu0 0.0
    %2145 = vmatprep.subr.mxu0 0.0
    %2146 = vmatpush1.msra.mxu0 0.0
    %2147 = vmatprep.subr.mxu0 0.0
    %2148 = vmatpush1.msra.mxu0 0.0
    %2149 = vmatprep.subr.mxu0 0.0
    %2150 = vmatpush1.msra.mxu0 0.0
    %2151 = vmatprep.subr.mxu0 0.0
    %2152 = vmatpush1.msra.mxu0 0.0
    %2153 = vmatprep.subr.mxu0 0.0
    %2154 = vmatpush1.msra.mxu0 0.0
    %2155 = vmatprep.subr.mxu0 0.0
    %2156 = vmatpush1.msra.mxu0 0.0
    %2157 = vmatprep.subr.mxu0 0.0
    %2158 = vmatpush1.msra.mxu0 0.0
    %2159 = vmatprep.subr.mxu0 0.0
    %2160 = vmatpush1.msra.mxu0 0.0
    %2161 = vmatprep.subr.mxu0 0.0
    %2162 = vmatpush1.msra.mxu0 0.0
    %2163 = vmatprep.subr.mxu0 0.0
    %2164 = vmatpush1.msra.mxu0 0.0
    %2165 = vmatprep.subr.mxu0 0.0
    %2166 = vmatpush1.msra.mxu0 0.0
    %2167 = vmatprep.subr.mxu0 0.0
    %2168 = vmatpush1.msra.mxu0 0.0
    %2169 = vmatprep.subr.mxu0 0.0
    %2170 = vmatpush1.msra.mxu0 0.0
    %2171 = vmatprep.subr.mxu0 0.0
    %2172 = vmatpush1.msra.mxu0 0.0
    %2173 = vmatprep.mubr.f32.mxu0 0.0
    %2174 = vmatmul.mubr.f32.gmra.mrb[0].mxu0 %v2098
    %v2175 = vpop.f32.mrb[0].mxu0
    %v2176 = vadd.f32 %v2096, %v2175
    %v2177 = vpop.f32.mrb[0].mxu0
    %2178 = vmatprep.mubr.f32.mxu0 0.0
    %2179 = vmatmul.mubr.f32.gmra.mrb[0].mxu0 %v2101
    %v2180 = vpop.f32.mrb[0].mxu0
    %v2181 = vadd.f32 %v2096, %v2180
    %v2182 = vpop.f32.mrb[0].mxu0
    %2183 = vmatprep.mubr.f32.mxu0 0.0
    %2184 = vmatmul.mubr.f32.gmra.mrb[0].mxu0 %v2104
    %v2185 = vpop.f32.mrb[0].mxu0
    %v2186 = vadd.f32 %v2096, %v2185
    %v2187 = vpop.f32.mrb[0].mxu0
    %2188 = vmatprep.mubr.f32.mxu0 0.0
    %2189 = vmatmul.mubr.f32.gmra.mrb[0].mxu0 %v2107
    %v2190 = vpop.f32.mrb[0].mxu0
    %v2191 = vadd.f32 %v2096, %v2190
    %v2192 = vpop.f32.mrb[0].mxu0
    %2193 = vdwg.mxu0
    %v2194 = vld [vmem:[#allocation5 + $0x5a0] sm:$0xff]
    %v2195 = vld [vmem:[#allocation5 + $0x5a8] sm:$0xff]
    %v2196 = vld [vmem:[#allocation5 + $0x5b0] sm:$0xff]
    %v2197 = vld [vmem:[#allocation5 + $0x5b8] sm:$0xff]
    %v2198 = vld [vmem:[#allocation5 + $0x598] sm:$0x1]
    %v2199 = vld [vmem:[#allocation5 + $0x478] sm:$0xff]
    %v2200 = vld [vmem:[#allocation5 + $0x480] sm:$0xff]
    %v2201 = vld [vmem:[#allocation5 + $0x488] sm:$0x1]
    %v2202 = vlaneseq
    %v2203 = vshrl.u32 %v2202, 7
    %v2204 = vsub.s32 0, %v2203
    %v2205 = vrot.slane %v2201, %v2204
    %v2207 = vsel %vm1178, %v2176, 0
    %v2210 = vsel %vm1178, %v2181, 0
    %v2213 = vsel %vm1178, %v2186, 0
    %v2216 = vsel %vm1178, %v2191, 0
    %2218 = vmatprep.subr.mxu0 0.0
    %2219 = vmatpush1.msra.mxu0 %v2199
    %2220 = vmatprep.subr.mxu0 0.0
    %2221 = vmatpush1.msra.mxu0 %v2200
    %2222 = vmatprep.subr.mxu0 0.0
    %2223 = vmatpush1.msra.mxu0 0.0
    %2224 = vmatprep.subr.mxu0 0.0
    %2225 = vmatpush1.msra.mxu0 0.0
    %2226 = vmatprep.subr.mxu0 0.0
    %2227 = vmatpush1.msra.mxu0 0.0
    %2228 = vmatprep.subr.mxu0 0.0
    %2229 = vmatpush1.msra.mxu0 0.0
    %2230 = vmatprep.subr.mxu0 0.0
    %2231 = vmatpush1.msra.mxu0 0.0
    %2232 = vmatprep.subr.mxu0 0.0
    %2233 = vmatpush1.msra.mxu0 0.0
    %2234 = vmatprep.subr.mxu0 0.0
    %2235 = vmatpush1.msra.mxu0 0.0
    %2236 = vmatprep.subr.mxu0 0.0
    %2237 = vmatpush1.msra.mxu0 0.0
    %2238 = vmatprep.subr.mxu0 0.0
    %2239 = vmatpush1.msra.mxu0 0.0
    %2240 = vmatprep.subr.mxu0 0.0
    %2241 = vmatpush1.msra.mxu0 0.0
    %2242 = vmatprep.subr.mxu0 0.0
    %2243 = vmatpush1.msra.mxu0 0.0
    %2244 = vmatprep.subr.mxu0 0.0
    %2245 = vmatpush1.msra.mxu0 0.0
    %2246 = vmatprep.subr.mxu0 0.0
    %2247 = vmatpush1.msra.mxu0 0.0
    %2248 = vmatprep.subr.mxu0 0.0
    %2249 = vmatpush1.msra.mxu0 0.0
    %2250 = vmatprep.subr.mxu0 0.0
    %2251 = vmatpush1.msra.mxu0 0.0
    %2252 = vmatprep.subr.mxu0 0.0
    %2253 = vmatpush1.msra.mxu0 0.0
    %2254 = vmatprep.subr.mxu0 0.0
    %2255 = vmatpush1.msra.mxu0 0.0
    %2256 = vmatprep.subr.mxu0 0.0
    %2257 = vmatpush1.msra.mxu0 0.0
    %2258 = vmatprep.subr.mxu0 0.0
    %2259 = vmatpush1.msra.mxu0 0.0
    %2260 = vmatprep.subr.mxu0 0.0
    %2261 = vmatpush1.msra.mxu0 0.0
    %2262 = vmatprep.subr.mxu0 0.0
    %2263 = vmatpush1.msra.mxu0 0.0
    %2264 = vmatprep.subr.mxu0 0.0
    %2265 = vmatpush1.msra.mxu0 0.0
    %2266 = vmatprep.subr.mxu0 0.0
    %2267 = vmatpush1.msra.mxu0 0.0
    %2268 = vmatprep.subr.mxu0 0.0
    %2269 = vmatpush1.msra.mxu0 0.0
    %2270 = vmatprep.subr.mxu0 0.0
    %2271 = vmatpush1.msra.mxu0 0.0
    %2272 = vmatprep.subr.mxu0 0.0
    %2273 = vmatpush1.msra.mxu0 0.0
    %2274 = vmatprep.subr.mxu0 0.0
    %2275 = vmatpush1.msra.mxu0 0.0
    %2276 = vmatprep.subr.mxu0 0.0
    %2277 = vmatpush1.msra.mxu0 0.0
    %2278 = vmatprep.subr.mxu0 0.0
    %2279 = vmatpush1.msra.mxu0 0.0
    %2280 = vmatprep.subr.mxu0 0.0
    %2281 = vmatpush1.msra.mxu0 0.0
    %2282 = vmatprep.mubr.f32.mxu0 0.0
    %2283 = vmatmul.mubr.f32.gmra.mrb[0].mxu0 %v2207
    %v2284 = vpop.f32.mrb[0].mxu0
    %v2285 = vadd.f32 %v2205, %v2284
    %v2286 = vpop.f32.mrb[0].mxu0
    %2287 = vmatprep.mubr.f32.mxu0 0.0
    %2288 = vmatmul.mubr.f32.gmra.mrb[0].mxu0 %v2210
    %v2289 = vpop.f32.mrb[0].mxu0
    %v2290 = vadd.f32 %v2205, %v2289
    %v2291 = vpop.f32.mrb[0].mxu0
    %2292 = vmatprep.mubr.f32.mxu0 0.0
    %2293 = vmatmul.mubr.f32.gmra.mrb[0].mxu0 %v2213
    %v2294 = vpop.f32.mrb[0].mxu0
    %v2295 = vadd.f32 %v2205, %v2294
    %v2296 = vpop.f32.mrb[0].mxu0
    %2297 = vmatprep.mubr.f32.mxu0 0.0
    %2298 = vmatmul.mubr.f32.gmra.mrb[0].mxu0 %v2216
    %v2299 = vpop.f32.mrb[0].mxu0
    %v2300 = vadd.f32 %v2205, %v2299
    %v2301 = vpop.f32.mrb[0].mxu0
    %2302 = vdwg.mxu0
    %v2303 = vld [vmem:[#allocation5 + $0x490] sm:$0xff]
    %v2304 = vld [vmem:[#allocation5 + $0x498] sm:$0xff]
    %v2305 = vld [vmem:[#allocation5 + $0x4a0] sm:$0x1]
    %v2306 = vlaneseq
    %v2307 = vshrl.u32 %v2306, 7
    %v2308 = vsub.s32 0, %v2307
    %v2309 = vrot.slane %v2305, %v2308
    %2310 = vmatprep.subr.mxu0 0.0
    %2311 = vmatpush1.msra.mxu0 %v2303
    %2312 = vmatprep.subr.mxu0 0.0
    %2313 = vmatpush1.msra.mxu0 %v2304
    %2314 = vmatprep.subr.mxu0 0.0
    %2315 = vmatpush1.msra.mxu0 0.0
    %2316 = vmatprep.subr.mxu0 0.0
    %2317 = vmatpush1.msra.mxu0 0.0
    %2318 = vmatprep.subr.mxu0 0.0
    %2319 = vmatpush1.msra.mxu0 0.0
    %2320 = vmatprep.subr.mxu0 0.0
    %2321 = vmatpush1.msra.mxu0 0.0
    %2322 = vmatprep.subr.mxu0 0.0
    %2323 = vmatpush1.msra.mxu0 0.0
    %2324 = vmatprep.subr.mxu0 0.0
    %2325 = vmatpush1.msra.mxu0 0.0
    %2326 = vmatprep.subr.mxu0 0.0
    %2327 = vmatpush1.msra.mxu0 0.0
    %2328 = vmatprep.subr.mxu0 0.0
    %2329 = vmatpush1.msra.mxu0 0.0
    %2330 = vmatprep.subr.mxu0 0.0
    %2331 = vmatpush1.msra.mxu0 0.0
    %2332 = vmatprep.subr.mxu0 0.0
    %2333 = vmatpush1.msra.mxu0 0.0
    %2334 = vmatprep.subr.mxu0 0.0
    %2335 = vmatpush1.msra.mxu0 0.0
    %2336 = vmatprep.subr.mxu0 0.0
    %2337 = vmatpush1.msra.mxu0 0.0
    %2338 = vmatprep.subr.mxu0 0.0
    %2339 = vmatpush1.msra.mxu0 0.0
    %2340 = vmatprep.subr.mxu0 0.0
    %2341 = vmatpush1.msra.mxu0 0.0
    %2342 = vmatprep.subr.mxu0 0.0
    %2343 = vmatpush1.msra.mxu0 0.0
    %2344 = vmatprep.subr.mxu0 0.0
    %2345 = vmatpush1.msra.mxu0 0.0
    %2346 = vmatprep.subr.mxu0 0.0
    %2347 = vmatpush1.msra.mxu0 0.0
    %2348 = vmatprep.subr.mxu0 0.0
    %2349 = vmatpush1.msra.mxu0 0.0
    %2350 = vmatprep.subr.mxu0 0.0
    %2351 = vmatpush1.msra.mxu0 0.0
    %2352 = vmatprep.subr.mxu0 0.0
    %2353 = vmatpush1.msra.mxu0 0.0
    %2354 = vmatprep.subr.mxu0 0.0
    %2355 = vmatpush1.msra.mxu0 0.0
    %2356 = vmatprep.subr.mxu0 0.0
    %2357 = vmatpush1.msra.mxu0 0.0
    %2358 = vmatprep.subr.mxu0 0.0
    %2359 = vmatpush1.msra.mxu0 0.0
    %2360 = vmatprep.subr.mxu0 0.0
    %2361 = vmatpush1.msra.mxu0 0.0
    %2362 = vmatprep.subr.mxu0 0.0
    %2363 = vmatpush1.msra.mxu0 0.0
    %2364 = vmatprep.subr.mxu0 0.0
    %2365 = vmatpush1.msra.mxu0 0.0
    %2366 = vmatprep.subr.mxu0 0.0
    %2367 = vmatpush1.msra.mxu0 0.0
    %2368 = vmatprep.subr.mxu0 0.0
    %2369 = vmatpush1.msra.mxu0 0.0
    %2370 = vmatprep.subr.mxu0 0.0
    %2371 = vmatpush1.msra.mxu0 0.0
    %2372 = vmatprep.subr.mxu0 0.0
    %2373 = vmatpush1.msra.mxu0 0.0
    %2374 = vmatprep.mubr.f32.mxu0 0.0
    %2375 = vmatmul.mubr.f32.gmra.mrb[0].mxu0 %v2207
    %v2376 = vpop.f32.mrb[0].mxu0
    %v2377 = vadd.f32 %v2309, %v2376
    %v2378 = vpop.f32.mrb[0].mxu0
    %2379 = vmatprep.mubr.f32.mxu0 0.0
    %2380 = vmatmul.mubr.f32.gmra.mrb[0].mxu0 %v2210
    %v2381 = vpop.f32.mrb[0].mxu0
    %v2382 = vadd.f32 %v2309, %v2381
    %v2383 = vpop.f32.mrb[0].mxu0
    %2384 = vmatprep.mubr.f32.mxu0 0.0
    %2385 = vmatmul.mubr.f32.gmra.mrb[0].mxu0 %v2213
    %v2386 = vpop.f32.mrb[0].mxu0
    %v2387 = vadd.f32 %v2309, %v2386
    %v2388 = vpop.f32.mrb[0].mxu0
    %2389 = vmatprep.mubr.f32.mxu0 0.0
    %2390 = vmatmul.mubr.f32.gmra.mrb[0].mxu0 %v2216
    %v2391 = vpop.f32.mrb[0].mxu0
    %v2392 = vadd.f32 %v2309, %v2391
    %v2393 = vpop.f32.mrb[0].mxu0
    %2394 = vdwg.mxu0
    %v2395 = vld [vmem:[#allocation5 + $0x4a8] sm:$0xff]
    %v2396 = vld [vmem:[#allocation5 + $0x4b0] sm:$0xff]
    %v2397 = vld [vmem:[#allocation5 + $0x4b8] sm:$0x1]
    %v2398 = vlaneseq
    %v2399 = vshrl.u32 %v2398, 7
    %v2400 = vsub.s32 0, %v2399
    %v2401 = vrot.slane %v2397, %v2400
    %2402 = vmatprep.subr.mxu0 0.0
    %2403 = vmatpush1.msra.mxu0 %v2395
    %2404 = vmatprep.subr.mxu0 0.0
    %2405 = vmatpush1.msra.mxu0 %v2396
    %2406 = vmatprep.subr.mxu0 0.0
    %2407 = vmatpush1.msra.mxu0 0.0
    %2408 = vmatprep.subr.mxu0 0.0
    %2409 = vmatpush1.msra.mxu0 0.0
    %2410 = vmatprep.subr.mxu0 0.0
    %2411 = vmatpush1.msra.mxu0 0.0
    %2412 = vmatprep.subr.mxu0 0.0
    %2413 = vmatpush1.msra.mxu0 0.0
    %2414 = vmatprep.subr.mxu0 0.0
    %2415 = vmatpush1.msra.mxu0 0.0
    %2416 = vmatprep.subr.mxu0 0.0
    %2417 = vmatpush1.msra.mxu0 0.0
    %2418 = vmatprep.subr.mxu0 0.0
    %2419 = vmatpush1.msra.mxu0 0.0
    %2420 = vmatprep.subr.mxu0 0.0
    %2421 = vmatpush1.msra.mxu0 0.0
    %2422 = vmatprep.subr.mxu0 0.0
    %2423 = vmatpush1.msra.mxu0 0.0
    %2424 = vmatprep.subr.mxu0 0.0
    %2425 = vmatpush1.msra.mxu0 0.0
    %2426 = vmatprep.subr.mxu0 0.0
    %2427 = vmatpush1.msra.mxu0 0.0
    %2428 = vmatprep.subr.mxu0 0.0
    %2429 = vmatpush1.msra.mxu0 0.0
    %2430 = vmatprep.subr.mxu0 0.0
    %2431 = vmatpush1.msra.mxu0 0.0
    %2432 = vmatprep.subr.mxu0 0.0
    %2433 = vmatpush1.msra.mxu0 0.0
    %2434 = vmatprep.subr.mxu0 0.0
    %2435 = vmatpush1.msra.mxu0 0.0
    %2436 = vmatprep.subr.mxu0 0.0
    %2437 = vmatpush1.msra.mxu0 0.0
    %2438 = vmatprep.subr.mxu0 0.0
    %2439 = vmatpush1.msra.mxu0 0.0
    %2440 = vmatprep.subr.mxu0 0.0
    %2441 = vmatpush1.msra.mxu0 0.0
    %2442 = vmatprep.subr.mxu0 0.0
    %2443 = vmatpush1.msra.mxu0 0.0
    %2444 = vmatprep.subr.mxu0 0.0
    %2445 = vmatpush1.msra.mxu0 0.0
    %2446 = vmatprep.subr.mxu0 0.0
    %2447 = vmatpush1.msra.mxu0 0.0
    %2448 = vmatprep.subr.mxu0 0.0
    %2449 = vmatpush1.msra.mxu0 0.0
    %2450 = vmatprep.subr.mxu0 0.0
    %2451 = vmatpush1.msra.mxu0 0.0
    %2452 = vmatprep.subr.mxu0 0.0
    %2453 = vmatpush1.msra.mxu0 0.0
    %2454 = vmatprep.subr.mxu0 0.0
    %2455 = vmatpush1.msra.mxu0 0.0
    %2456 = vmatprep.subr.mxu0 0.0
    %2457 = vmatpush1.msra.mxu0 0.0
    %2458 = vmatprep.subr.mxu0 0.0
    %2459 = vmatpush1.msra.mxu0 0.0
    %2460 = vmatprep.subr.mxu0 0.0
    %2461 = vmatpush1.msra.mxu0 0.0
    %2462 = vmatprep.subr.mxu0 0.0
    %2463 = vmatpush1.msra.mxu0 0.0
    %2464 = vmatprep.subr.mxu0 0.0
    %2465 = vmatpush1.msra.mxu0 0.0
    %2466 = vmatprep.mubr.f32.mxu0 0.0
    %2467 = vmatmul.mubr.f32.gmra.mrb[0].mxu0 %v2207
    %v2468 = vpop.f32.mrb[0].mxu0
    %v2469 = vadd.f32 %v2401, %v2468
    %v2470 = vpop.f32.mrb[0].mxu0
    %2471 = vmatprep.mubr.f32.mxu0 0.0
    %2472 = vmatmul.mubr.f32.gmra.mrb[0].mxu0 %v2210
    %v2473 = vpop.f32.mrb[0].mxu0
    %v2474 = vadd.f32 %v2401, %v2473
    %v2475 = vpop.f32.mrb[0].mxu0
    %2476 = vmatprep.mubr.f32.mxu0 0.0
    %2477 = vmatmul.mubr.f32.gmra.mrb[0].mxu0 %v2213
    %v2478 = vpop.f32.mrb[0].mxu0
    %v2479 = vadd.f32 %v2401, %v2478
    %v2480 = vpop.f32.mrb[0].mxu0
    %2481 = vmatprep.mubr.f32.mxu0 0.0
    %2482 = vmatmul.mubr.f32.gmra.mrb[0].mxu0 %v2216
    %v2483 = vpop.f32.mrb[0].mxu0
    %v2484 = vadd.f32 %v2401, %v2483
    %v2485 = vpop.f32.mrb[0].mxu0
    %2486 = vdwg.mxu0
    %vm2487 = vcmask 31744
    %v2489 = vsel %vm2487, %v2285, 0
    %v2492 = vsel %vm2487, %v2290, 0
    %v2495 = vsel %vm2487, %v2295, 0
    %v2498 = vsel %vm2487, %v2300, 0
    %v2501 = vsel %vm2487, %v2377, 0
    %v2504 = vsel %vm2487, %v2382, 0
    %v2507 = vsel %vm2487, %v2387, 0
    %v2510 = vsel %vm2487, %v2392, 0
    %2512 = vmatprep.subr.mxu0 0.0
    %2513 = vmatpush1.xpose.msra.mxu0 %v2501
    %2514 = vmatprep.subr.mxu0 0.0
    %2515 = vmatpush1.xpose.msra.mxu0 %v2504
    %2516 = vmatprep.subr.mxu0 0.0
    %2517 = vmatpush1.xpose.msra.mxu0 %v2507
    %2518 = vmatprep.subr.mxu0 0.0
    %2519 = vmatpush1.xpose.msra.mxu0 %v2510
    %2520 = vmatprep.subr.mxu0 0.0
    %2521 = vmatpush1.xpose.msra.mxu0 0.0
    %2522 = vmatprep.subr.mxu0 0.0
    %2523 = vmatpush1.xpose.msra.mxu0 0.0
    %2524 = vmatprep.subr.mxu0 0.0
    %2525 = vmatpush1.xpose.msra.mxu0 0.0
    %2526 = vmatprep.subr.mxu0 0.0
    %2527 = vmatpush1.xpose.msra.mxu0 0.0
    %2528 = vmatprep.subr.mxu0 0.0
    %2529 = vmatpush1.xpose.msra.mxu0 0.0
    %2530 = vmatprep.subr.mxu0 0.0
    %2531 = vmatpush1.xpose.msra.mxu0 0.0
    %2532 = vmatprep.subr.mxu0 0.0
    %2533 = vmatpush1.xpose.msra.mxu0 0.0
    %2534 = vmatprep.subr.mxu0 0.0
    %2535 = vmatpush1.xpose.msra.mxu0 0.0
    %2536 = vmatprep.subr.mxu0 0.0
    %2537 = vmatpush1.xpose.msra.mxu0 0.0
    %2538 = vmatprep.subr.mxu0 0.0
    %2539 = vmatpush1.xpose.msra.mxu0 0.0
    %2540 = vmatprep.subr.mxu0 0.0
    %2541 = vmatpush1.xpose.msra.mxu0 0.0
    %2542 = vmatprep.subr.mxu0 0.0
    %2543 = vmatpush1.xpose.msra.mxu0 0.0
    %2544 = vmatprep.subr.mxu0 0.0
    %2545 = vmatpush1.xpose.msra.mxu0 0.0
    %2546 = vmatprep.subr.mxu0 0.0
    %2547 = vmatpush1.xpose.msra.mxu0 0.0
    %2548 = vmatprep.subr.mxu0 0.0
    %2549 = vmatpush1.xpose.msra.mxu0 0.0
    %2550 = vmatprep.subr.mxu0 0.0
    %2551 = vmatpush1.xpose.msra.mxu0 0.0
    %2552 = vmatprep.subr.mxu0 0.0
    %2553 = vmatpush1.xpose.msra.mxu0 0.0
    %2554 = vmatprep.subr.mxu0 0.0
    %2555 = vmatpush1.xpose.msra.mxu0 0.0
    %2556 = vmatprep.subr.mxu0 0.0
    %2557 = vmatpush1.xpose.msra.mxu0 0.0
    %2558 = vmatprep.subr.mxu0 0.0
    %2559 = vmatpush1.xpose.msra.mxu0 0.0
    %2560 = vmatprep.subr.mxu0 0.0
    %2561 = vmatpush1.xpose.msra.mxu0 0.0
    %2562 = vmatprep.subr.mxu0 0.0
    %2563 = vmatpush1.xpose.msra.mxu0 0.0
    %2564 = vmatprep.subr.mxu0 0.0
    %2565 = vmatpush1.xpose.msra.mxu0 0.0
    %2566 = vmatprep.subr.mxu0 0.0
    %2567 = vmatpush1.xpose.msra.mxu0 0.0
    %2568 = vmatprep.subr.mxu0 0.0
    %2569 = vmatpush1.xpose.msra.mxu0 0.0
    %2570 = vmatprep.subr.mxu0 0.0
    %2571 = vmatpush1.xpose.msra.mxu0 0.0
    %2572 = vmatprep.subr.mxu0 0.0
    %2573 = vmatpush1.xpose.msra.mxu0 0.0
    %2574 = vmatprep.subr.mxu0 0.0
    %2575 = vmatpush1.xpose.msra.mxu0 0.0
    %2576 = vmatprep.mubr.f32.mxu0 0.0
    %2577 = vmatmul.mubr.f32.gmra.mrb[0].mxu0 %v2489
    %v2578 = vpop.f32.mrb[0].mxu0
    %v2579 = vadd.f32 %v2194, %v2578
    %v2580 = vpop.f32.mrb[0].mxu0
    %2581 = vmatprep.mubr.f32.mxu0 0.0
    %2582 = vmatmul.mubr.f32.gmra.mrb[0].mxu0 %v2492
    %v2583 = vpop.f32.mrb[0].mxu0
    %v2584 = vadd.f32 %v2195, %v2583
    %v2585 = vpop.f32.mrb[0].mxu0
    %2586 = vmatprep.mubr.f32.mxu0 0.0
    %2587 = vmatmul.mubr.f32.gmra.mrb[0].mxu0 %v2495
    %v2588 = vpop.f32.mrb[0].mxu0
    %v2589 = vadd.f32 %v2196, %v2588
    %v2590 = vpop.f32.mrb[0].mxu0
    %2591 = vmatprep.mubr.f32.mxu0 0.0
    %2592 = vmatmul.mubr.f32.gmra.mrb[0].mxu0 %v2498
    %v2593 = vpop.f32.mrb[0].mxu0
    %v2594 = vadd.f32 %v2197, %v2593
    %v2595 = vpop.f32.mrb[0].mxu0
    %2596 = vdwg.mxu0
    %v2597 = vsel %vm1298, %v2579, -inf
    %2598 = vmax.xlane.f32.xlu0 %v2597
    %v2599 = vpop.xlane.xlu0 %2598
    %v2600 = vsel %vm1298, %v2584, -inf
    %2601 = vmax.xlane.f32.xlu0 %v2600
    %v2602 = vpop.xlane.xlu0 %2601
    %v2603 = vsel %vm1298, %v2589, -inf
    %2604 = vmax.xlane.f32.xlu0 %v2603
    %v2605 = vpop.xlane.xlu0 %2604
    %v2606 = vsel %vm1298, %v2594, -inf
    %2607 = vmax.xlane.f32.xlu0 %v2606
    %v2608 = vpop.xlane.xlu0 %2607
    %v2609 = vsub.f32 %v2579, %v2599
    %v2610 = vsub.f32 %v2584, %v2602
    %v2611 = vsub.f32 %v2589, %v2605
    %v2612 = vsub.f32 %v2594, %v2608
    %v2613 = vmul.f32 %v2609, 1.442695
    %v2614 = vpow.pop %v2613
    %v2615 = vmul.f32 %v2610, 1.442695
    %v2616 = vpow.pop %v2615
    %v2617 = vmul.f32 %v2611, 1.442695
    %v2618 = vpow.pop %v2617
    %v2619 = vmul.f32 %v2612, 1.442695
    %v2620 = vpow.pop %v2619
    %v2621 = vsel %vm1298, %v2614, 0.0
    %2622 = vadd.xlane.f32.xlu0 %v2621
    %v2623 = vpop.xlane.xlu0 %2622
    %v2624 = vsel %vm1298, %v2616, 0.0
    %2625 = vadd.xlane.f32.xlu0 %v2624
    %v2626 = vpop.xlane.xlu0 %2625
    %v2627 = vsel %vm1298, %v2618, 0.0
    %2628 = vadd.xlane.f32.xlu0 %v2627
    %v2629 = vpop.xlane.xlu0 %2628
    %v2630 = vsel %vm1298, %v2620, 0.0
    %2631 = vadd.xlane.f32.xlu0 %v2630
    %v2632 = vpop.xlane.xlu0 %2631
    %v2633 = vrcp.pop %v2623
    %v2634 = vrcp.pop %v2626
    %v2635 = vrcp.pop %v2629
    %v2636 = vrcp.pop %v2632
    %v2637 = vmul.f32 %v2614, %v2633
    %v2638 = vmul.f32 %v2616, %v2634
    %v2639 = vmul.f32 %v2618, %v2635
    %v2640 = vmul.f32 %v2620, %v2636
    %v2642 = vsel %vm1298, %v2637, 0
    %v2645 = vsel %vm1298, %v2638, 0
    %v2648 = vsel %vm1298, %v2639, 0
    %v2651 = vsel %vm1298, %v2640, 0
    %2653 = vmatprep.subr.mxu0 0.0
    %2654 = vmatpush1.msra.mxu0 %v2469
    %2655 = vmatprep.subr.mxu0 0.0
    %2656 = vmatpush1.msra.mxu0 %v2474
    %2657 = vmatprep.subr.mxu0 0.0
    %2658 = vmatpush1.msra.mxu0 %v2479
    %2659 = vmatprep.subr.mxu0 0.0
    %2660 = vmatpush1.msra.mxu0 %v2484
    %2661 = vmatprep.subr.mxu0 0.0
    %2662 = vmatpush1.msra.mxu0 0.0
    %2663 = vmatprep.subr.mxu0 0.0
    %2664 = vmatpush1.msra.mxu0 0.0
    %2665 = vmatprep.subr.mxu0 0.0
    %2666 = vmatpush1.msra.mxu0 0.0
    %2667 = vmatprep.subr.mxu0 0.0
    %2668 = vmatpush1.msra.mxu0 0.0
    %2669 = vmatprep.subr.mxu0 0.0
    %2670 = vmatpush1.msra.mxu0 0.0
    %2671 = vmatprep.subr.mxu0 0.0
    %2672 = vmatpush1.msra.mxu0 0.0
    %2673 = vmatprep.subr.mxu0 0.0
    %2674 = vmatpush1.msra.mxu0 0.0
    %2675 = vmatprep.subr.mxu0 0.0
    %2676 = vmatpush1.msra.mxu0 0.0
    %2677 = vmatprep.subr.mxu0 0.0
    %2678 = vmatpush1.msra.mxu0 0.0
    %2679 = vmatprep.subr.mxu0 0.0
    %2680 = vmatpush1.msra.mxu0 0.0
    %2681 = vmatprep.subr.mxu0 0.0
    %2682 = vmatpush1.msra.mxu0 0.0
    %2683 = vmatprep.subr.mxu0 0.0
    %2684 = vmatpush1.msra.mxu0 0.0
    %2685 = vmatprep.subr.mxu0 0.0
    %2686 = vmatpush1.msra.mxu0 0.0
    %2687 = vmatprep.subr.mxu0 0.0
    %2688 = vmatpush1.msra.mxu0 0.0
    %2689 = vmatprep.subr.mxu0 0.0
    %2690 = vmatpush1.msra.mxu0 0.0
    %2691 = vmatprep.subr.mxu0 0.0
    %2692 = vmatpush1.msra.mxu0 0.0
    %2693 = vmatprep.subr.mxu0 0.0
    %2694 = vmatpush1.msra.mxu0 0.0
    %2695 = vmatprep.subr.mxu0 0.0
    %2696 = vmatpush1.msra.mxu0 0.0
    %2697 = vmatprep.subr.mxu0 0.0
    %2698 = vmatpush1.msra.mxu0 0.0
    %2699 = vmatprep.subr.mxu0 0.0
    %2700 = vmatpush1.msra.mxu0 0.0
    %2701 = vmatprep.subr.mxu0 0.0
    %2702 = vmatpush1.msra.mxu0 0.0
    %2703 = vmatprep.subr.mxu0 0.0
    %2704 = vmatpush1.msra.mxu0 0.0
    %2705 = vmatprep.subr.mxu0 0.0
    %2706 = vmatpush1.msra.mxu0 0.0
    %2707 = vmatprep.subr.mxu0 0.0
    %2708 = vmatpush1.msra.mxu0 0.0
    %2709 = vmatprep.subr.mxu0 0.0
    %2710 = vmatpush1.msra.mxu0 0.0
    %2711 = vmatprep.subr.mxu0 0.0
    %2712 = vmatpush1.msra.mxu0 0.0
    %2713 = vmatprep.subr.mxu0 0.0
    %2714 = vmatpush1.msra.mxu0 0.0
    %2715 = vmatprep.subr.mxu0 0.0
    %2716 = vmatpush1.msra.mxu0 0.0
    %2717 = vmatprep.mubr.f32.mxu0 0.0
    %2718 = vmatmul.mubr.f32.gmra.mrb[0].mxu0 %v2642
    %v2719 = vpop.f32.mrb[0].mxu0
    %v2720 = vadd.f32 0.0, %v2719
    %v2721 = vpop.f32.mrb[0].mxu0
    %2722 = vmatprep.mubr.f32.mxu0 0.0
    %2723 = vmatmul.mubr.f32.gmra.mrb[0].mxu0 %v2645
    %v2724 = vpop.f32.mrb[0].mxu0
    %v2725 = vadd.f32 0.0, %v2724
    %v2726 = vpop.f32.mrb[0].mxu0
    %2727 = vmatprep.mubr.f32.mxu0 0.0
    %2728 = vmatmul.mubr.f32.gmra.mrb[0].mxu0 %v2648
    %v2729 = vpop.f32.mrb[0].mxu0
    %v2730 = vadd.f32 0.0, %v2729
    %v2731 = vpop.f32.mrb[0].mxu0
    %2732 = vmatprep.mubr.f32.mxu0 0.0
    %2733 = vmatmul.mubr.f32.gmra.mrb[0].mxu0 %v2651
    %v2734 = vpop.f32.mrb[0].mxu0
    %v2735 = vadd.f32 0.0, %v2734
    %v2736 = vpop.f32.mrb[0].mxu0
    %2737 = vdwg.mxu0
    %v2738 = vlaneseq
    %v2739 = vshrl.u32 %v2738, 7
    %v2740 = vsub.s32 0, %v2739
    %v2741 = vrot.slane %v2198, %v2740
    %v2742 = vadd.f32 %v2741, %v2720
    %v2743 = vadd.f32 %v2741, %v2725
    %v2744 = vadd.f32 %v2741, %v2730
    %v2745 = vadd.f32 %v2741, %v2735
    %v2746 = vld [vmem:[#allocation5 + $0x4c0] sm:$0xff]
    %v2747 = vld [vmem:[#allocation5 + $0x4c8] sm:$0xff]
    %v2748 = vld [vmem:[#allocation5 + $0x4d0] sm:$0x1]
    %v2749 = vlaneseq
    %v2750 = vshrl.u32 %v2749, 7
    %v2751 = vsub.s32 0, %v2750
    %v2752 = vrot.slane %v2748, %v2751
    %2753 = vmatprep.subr.mxu0 0.0
    %2754 = vmatpush1.msra.mxu0 %v2746
    %2755 = vmatprep.subr.mxu0 0.0
    %2756 = vmatpush1.msra.mxu0 %v2747
    %2757 = vmatprep.subr.mxu0 0.0
    %2758 = vmatpush1.msra.mxu0 0.0
    %2759 = vmatprep.subr.mxu0 0.0
    %2760 = vmatpush1.msra.mxu0 0.0
    %2761 = vmatprep.subr.mxu0 0.0
    %2762 = vmatpush1.msra.mxu0 0.0
    %2763 = vmatprep.subr.mxu0 0.0
    %2764 = vmatpush1.msra.mxu0 0.0
    %2765 = vmatprep.subr.mxu0 0.0
    %2766 = vmatpush1.msra.mxu0 0.0
    %2767 = vmatprep.subr.mxu0 0.0
    %2768 = vmatpush1.msra.mxu0 0.0
    %2769 = vmatprep.subr.mxu0 0.0
    %2770 = vmatpush1.msra.mxu0 0.0
    %2771 = vmatprep.subr.mxu0 0.0
    %2772 = vmatpush1.msra.mxu0 0.0
    %2773 = vmatprep.subr.mxu0 0.0
    %2774 = vmatpush1.msra.mxu0 0.0
    %2775 = vmatprep.subr.mxu0 0.0
    %2776 = vmatpush1.msra.mxu0 0.0
    %2777 = vmatprep.subr.mxu0 0.0
    %2778 = vmatpush1.msra.mxu0 0.0
    %2779 = vmatprep.subr.mxu0 0.0
    %2780 = vmatpush1.msra.mxu0 0.0
    %2781 = vmatprep.subr.mxu0 0.0
    %2782 = vmatpush1.msra.mxu0 0.0
    %2783 = vmatprep.subr.mxu0 0.0
    %2784 = vmatpush1.msra.mxu0 0.0
    %2785 = vmatprep.subr.mxu0 0.0
    %2786 = vmatpush1.msra.mxu0 0.0
    %2787 = vmatprep.subr.mxu0 0.0
    %2788 = vmatpush1.msra.mxu0 0.0
    %2789 = vmatprep.subr.mxu0 0.0
    %2790 = vmatpush1.msra.mxu0 0.0
    %2791 = vmatprep.subr.mxu0 0.0
    %2792 = vmatpush1.msra.mxu0 0.0
    %2793 = vmatprep.subr.mxu0 0.0
    %2794 = vmatpush1.msra.mxu0 0.0
    %2795 = vmatprep.subr.mxu0 0.0
    %2796 = vmatpush1.msra.mxu0 0.0
    %2797 = vmatprep.subr.mxu0 0.0
    %2798 = vmatpush1.msra.mxu0 0.0
    %2799 = vmatprep.subr.mxu0 0.0
    %2800 = vmatpush1.msra.mxu0 0.0
    %2801 = vmatprep.subr.mxu0 0.0
    %2802 = vmatpush1.msra.mxu0 0.0
    %2803 = vmatprep.subr.mxu0 0.0
    %2804 = vmatpush1.msra.mxu0 0.0
    %2805 = vmatprep.subr.mxu0 0.0
    %2806 = vmatpush1.msra.mxu0 0.0
    %2807 = vmatprep.subr.mxu0 0.0
    %2808 = vmatpush1.msra.mxu0 0.0
    %2809 = vmatprep.subr.mxu0 0.0
    %2810 = vmatpush1.msra.mxu0 0.0
    %2811 = vmatprep.subr.mxu0 0.0
    %2812 = vmatpush1.msra.mxu0 0.0
    %2813 = vmatprep.subr.mxu0 0.0
    %2814 = vmatpush1.msra.mxu0 0.0
    %2815 = vmatprep.subr.mxu0 0.0
    %2816 = vmatpush1.msra.mxu0 0.0
    %2817 = vmatprep.mubr.f32.mxu0 0.0
    %2818 = vmatmul.mubr.f32.gmra.mrb[0].mxu0 %v2207
    %v2819 = vpop.f32.mrb[0].mxu0
    %v2820 = vadd.f32 %v2752, %v2819
    %v2821 = vpop.f32.mrb[0].mxu0
    %2822 = vmatprep.mubr.f32.mxu0 0.0
    %2823 = vmatmul.mubr.f32.gmra.mrb[0].mxu0 %v2210
    %v2824 = vpop.f32.mrb[0].mxu0
    %v2825 = vadd.f32 %v2752, %v2824
    %v2826 = vpop.f32.mrb[0].mxu0
    %2827 = vmatprep.mubr.f32.mxu0 0.0
    %2828 = vmatmul.mubr.f32.gmra.mrb[0].mxu0 %v2213
    %v2829 = vpop.f32.mrb[0].mxu0
    %v2830 = vadd.f32 %v2752, %v2829
    %v2831 = vpop.f32.mrb[0].mxu0
    %2832 = vmatprep.mubr.f32.mxu0 0.0
    %2833 = vmatmul.mubr.f32.gmra.mrb[0].mxu0 %v2216
    %v2834 = vpop.f32.mrb[0].mxu0
    %v2835 = vadd.f32 %v2752, %v2834
    %v2836 = vpop.f32.mrb[0].mxu0
    %2837 = vdwg.mxu0
    %v2838 = vld [vmem:[#allocation5 + $0x4d8] sm:$0xff]
    %v2839 = vld [vmem:[#allocation5 + $0x4e0] sm:$0xff]
    %v2840 = vld [vmem:[#allocation5 + $0x4e8] sm:$0x1]
    %v2841 = vlaneseq
    %v2842 = vshrl.u32 %v2841, 7
    %v2843 = vsub.s32 0, %v2842
    %v2844 = vrot.slane %v2840, %v2843
    %2845 = vmatprep.subr.mxu0 0.0
    %2846 = vmatpush1.msra.mxu0 %v2838
    %2847 = vmatprep.subr.mxu0 0.0
    %2848 = vmatpush1.msra.mxu0 %v2839
    %2849 = vmatprep.subr.mxu0 0.0
    %2850 = vmatpush1.msra.mxu0 0.0
    %2851 = vmatprep.subr.mxu0 0.0
    %2852 = vmatpush1.msra.mxu0 0.0
    %2853 = vmatprep.subr.mxu0 0.0
    %2854 = vmatpush1.msra.mxu0 0.0
    %2855 = vmatprep.subr.mxu0 0.0
    %2856 = vmatpush1.msra.mxu0 0.0
    %2857 = vmatprep.subr.mxu0 0.0
    %2858 = vmatpush1.msra.mxu0 0.0
    %2859 = vmatprep.subr.mxu0 0.0
    %2860 = vmatpush1.msra.mxu0 0.0
    %2861 = vmatprep.subr.mxu0 0.0
    %2862 = vmatpush1.msra.mxu0 0.0
    %2863 = vmatprep.subr.mxu0 0.0
    %2864 = vmatpush1.msra.mxu0 0.0
    %2865 = vmatprep.subr.mxu0 0.0
    %2866 = vmatpush1.msra.mxu0 0.0
    %2867 = vmatprep.subr.mxu0 0.0
    %2868 = vmatpush1.msra.mxu0 0.0
    %2869 = vmatprep.subr.mxu0 0.0
    %2870 = vmatpush1.msra.mxu0 0.0
    %2871 = vmatprep.subr.mxu0 0.0
    %2872 = vmatpush1.msra.mxu0 0.0
    %2873 = vmatprep.subr.mxu0 0.0
    %2874 = vmatpush1.msra.mxu0 0.0
    %2875 = vmatprep.subr.mxu0 0.0
    %2876 = vmatpush1.msra.mxu0 0.0
    %2877 = vmatprep.subr.mxu0 0.0
    %2878 = vmatpush1.msra.mxu0 0.0
    %2879 = vmatprep.subr.mxu0 0.0
    %2880 = vmatpush1.msra.mxu0 0.0
    %2881 = vmatprep.subr.mxu0 0.0
    %2882 = vmatpush1.msra.mxu0 0.0
    %2883 = vmatprep.subr.mxu0 0.0
    %2884 = vmatpush1.msra.mxu0 0.0
    %2885 = vmatprep.subr.mxu0 0.0
    %2886 = vmatpush1.msra.mxu0 0.0
    %2887 = vmatprep.subr.mxu0 0.0
    %2888 = vmatpush1.msra.mxu0 0.0
    %2889 = vmatprep.subr.mxu0 0.0
    %2890 = vmatpush1.msra.mxu0 0.0
    %2891 = vmatprep.subr.mxu0 0.0
    %2892 = vmatpush1.msra.mxu0 0.0
    %2893 = vmatprep.subr.mxu0 0.0
    %2894 = vmatpush1.msra.mxu0 0.0
    %2895 = vmatprep.subr.mxu0 0.0
    %2896 = vmatpush1.msra.mxu0 0.0
    %2897 = vmatprep.subr.mxu0 0.0
    %2898 = vmatpush1.msra.mxu0 0.0
    %2899 = vmatprep.subr.mxu0 0.0
    %2900 = vmatpush1.msra.mxu0 0.0
    %2901 = vmatprep.subr.mxu0 0.0
    %2902 = vmatpush1.msra.mxu0 0.0
    %2903 = vmatprep.subr.mxu0 0.0
    %2904 = vmatpush1.msra.mxu0 0.0
    %2905 = vmatprep.subr.mxu0 0.0
    %2906 = vmatpush1.msra.mxu0 0.0
    %2907 = vmatprep.subr.mxu0 0.0
    %2908 = vmatpush1.msra.mxu0 0.0
    %2909 = vmatprep.mubr.f32.mxu0 0.0
    %2910 = vmatmul.mubr.f32.gmra.mrb[0].mxu0 %v2207
    %v2911 = vpop.f32.mrb[0].mxu0
    %v2912 = vadd.f32 %v2844, %v2911
    %v2913 = vpop.f32.mrb[0].mxu0
    %2914 = vmatprep.mubr.f32.mxu0 0.0
    %2915 = vmatmul.mubr.f32.gmra.mrb[0].mxu0 %v2210
    %v2916 = vpop.f32.mrb[0].mxu0
    %v2917 = vadd.f32 %v2844, %v2916
    %v2918 = vpop.f32.mrb[0].mxu0
    %2919 = vmatprep.mubr.f32.mxu0 0.0
    %2920 = vmatmul.mubr.f32.gmra.mrb[0].mxu0 %v2213
    %v2921 = vpop.f32.mrb[0].mxu0
    %v2922 = vadd.f32 %v2844, %v2921
    %v2923 = vpop.f32.mrb[0].mxu0
    %2924 = vmatprep.mubr.f32.mxu0 0.0
    %2925 = vmatmul.mubr.f32.gmra.mrb[0].mxu0 %v2216
    %v2926 = vpop.f32.mrb[0].mxu0
    %v2927 = vadd.f32 %v2844, %v2926
    %v2928 = vpop.f32.mrb[0].mxu0
    %2929 = vdwg.mxu0
    %v2930 = vld [vmem:[#allocation5 + $0x4f0] sm:$0xff]
    %v2931 = vld [vmem:[#allocation5 + $0x4f8] sm:$0xff]
    %v2932 = vld [vmem:[#allocation5 + $0x500] sm:$0x1]
    %v2933 = vlaneseq
    %v2934 = vshrl.u32 %v2933, 7
    %v2935 = vsub.s32 0, %v2934
    %v2936 = vrot.slane %v2932, %v2935
    %2937 = vmatprep.subr.mxu0 0.0
    %2938 = vmatpush1.msra.mxu0 %v2930
    %2939 = vmatprep.subr.mxu0 0.0
    %2940 = vmatpush1.msra.mxu0 %v2931
    %2941 = vmatprep.subr.mxu0 0.0
    %2942 = vmatpush1.msra.mxu0 0.0
    %2943 = vmatprep.subr.mxu0 0.0
    %2944 = vmatpush1.msra.mxu0 0.0
    %2945 = vmatprep.subr.mxu0 0.0
    %2946 = vmatpush1.msra.mxu0 0.0
    %2947 = vmatprep.subr.mxu0 0.0
    %2948 = vmatpush1.msra.mxu0 0.0
    %2949 = vmatprep.subr.mxu0 0.0
    %2950 = vmatpush1.msra.mxu0 0.0
    %2951 = vmatprep.subr.mxu0 0.0
    %2952 = vmatpush1.msra.mxu0 0.0
    %2953 = vmatprep.subr.mxu0 0.0
    %2954 = vmatpush1.msra.mxu0 0.0
    %2955 = vmatprep.subr.mxu0 0.0
    %2956 = vmatpush1.msra.mxu0 0.0
    %2957 = vmatprep.subr.mxu0 0.0
    %2958 = vmatpush1.msra.mxu0 0.0
    %2959 = vmatprep.subr.mxu0 0.0
    %2960 = vmatpush1.msra.mxu0 0.0
    %2961 = vmatprep.subr.mxu0 0.0
    %2962 = vmatpush1.msra.mxu0 0.0
    %2963 = vmatprep.subr.mxu0 0.0
    %2964 = vmatpush1.msra.mxu0 0.0
    %2965 = vmatprep.subr.mxu0 0.0
    %2966 = vmatpush1.msra.mxu0 0.0
    %2967 = vmatprep.subr.mxu0 0.0
    %2968 = vmatpush1.msra.mxu0 0.0
    %2969 = vmatprep.subr.mxu0 0.0
    %2970 = vmatpush1.msra.mxu0 0.0
    %2971 = vmatprep.subr.mxu0 0.0
    %2972 = vmatpush1.msra.mxu0 0.0
    %2973 = vmatprep.subr.mxu0 0.0
    %2974 = vmatpush1.msra.mxu0 0.0
    %2975 = vmatprep.subr.mxu0 0.0
    %2976 = vmatpush1.msra.mxu0 0.0
    %2977 = vmatprep.subr.mxu0 0.0
    %2978 = vmatpush1.msra.mxu0 0.0
    %2979 = vmatprep.subr.mxu0 0.0
    %2980 = vmatpush1.msra.mxu0 0.0
    %2981 = vmatprep.subr.mxu0 0.0
    %2982 = vmatpush1.msra.mxu0 0.0
    %2983 = vmatprep.subr.mxu0 0.0
    %2984 = vmatpush1.msra.mxu0 0.0
    %2985 = vmatprep.subr.mxu0 0.0
    %2986 = vmatpush1.msra.mxu0 0.0
    %2987 = vmatprep.subr.mxu0 0.0
    %2988 = vmatpush1.msra.mxu0 0.0
    %2989 = vmatprep.subr.mxu0 0.0
    %2990 = vmatpush1.msra.mxu0 0.0
    %2991 = vmatprep.subr.mxu0 0.0
    %2992 = vmatpush1.msra.mxu0 0.0
    %2993 = vmatprep.subr.mxu0 0.0
    %2994 = vmatpush1.msra.mxu0 0.0
    %2995 = vmatprep.subr.mxu0 0.0
    %2996 = vmatpush1.msra.mxu0 0.0
    %2997 = vmatprep.subr.mxu0 0.0
    %2998 = vmatpush1.msra.mxu0 0.0
    %2999 = vmatprep.subr.mxu0 0.0
    %3000 = vmatpush1.msra.mxu0 0.0
    %3001 = vmatprep.mubr.f32.mxu0 0.0
    %3002 = vmatmul.mubr.f32.gmra.mrb[0].mxu0 %v2207
    %v3003 = vpop.f32.mrb[0].mxu0
    %v3004 = vadd.f32 %v2936, %v3003
    %v3005 = vpop.f32.mrb[0].mxu0
    %3006 = vmatprep.mubr.f32.mxu0 0.0
    %3007 = vmatmul.mubr.f32.gmra.mrb[0].mxu0 %v2210
    %v3008 = vpop.f32.mrb[0].mxu0
    %v3009 = vadd.f32 %v2936, %v3008
    %v3010 = vpop.f32.mrb[0].mxu0
    %3011 = vmatprep.mubr.f32.mxu0 0.0
    %3012 = vmatmul.mubr.f32.gmra.mrb[0].mxu0 %v2213
    %v3013 = vpop.f32.mrb[0].mxu0
    %v3014 = vadd.f32 %v2936, %v3013
    %v3015 = vpop.f32.mrb[0].mxu0
    %3016 = vmatprep.mubr.f32.mxu0 0.0
    %3017 = vmatmul.mubr.f32.gmra.mrb[0].mxu0 %v2216
    %v3018 = vpop.f32.mrb[0].mxu0
    %v3019 = vadd.f32 %v2936, %v3018
    %v3020 = vpop.f32.mrb[0].mxu0
    %3021 = vdwg.mxu0
    %v3023 = vsel %vm2487, %v2820, 0
    %v3026 = vsel %vm2487, %v2825, 0
    %v3029 = vsel %vm2487, %v2830, 0
    %v3032 = vsel %vm2487, %v2835, 0
    %v3035 = vsel %vm2487, %v2912, 0
    %v3038 = vsel %vm2487, %v2917, 0
    %v3041 = vsel %vm2487, %v2922, 0
    %v3044 = vsel %vm2487, %v2927, 0
    %3046 = vmatprep.subr.mxu0 0.0
    %3047 = vmatpush1.xpose.msra.mxu0 %v3035
    %3048 = vmatprep.subr.mxu0 0.0
    %3049 = vmatpush1.xpose.msra.mxu0 %v3038
    %3050 = vmatprep.subr.mxu0 0.0
    %3051 = vmatpush1.xpose.msra.mxu0 %v3041
    %3052 = vmatprep.subr.mxu0 0.0
    %3053 = vmatpush1.xpose.msra.mxu0 %v3044
    %3054 = vmatprep.subr.mxu0 0.0
    %3055 = vmatpush1.xpose.msra.mxu0 0.0
    %3056 = vmatprep.subr.mxu0 0.0
    %3057 = vmatpush1.xpose.msra.mxu0 0.0
    %3058 = vmatprep.subr.mxu0 0.0
    %3059 = vmatpush1.xpose.msra.mxu0 0.0
    %3060 = vmatprep.subr.mxu0 0.0
    %3061 = vmatpush1.xpose.msra.mxu0 0.0
    %3062 = vmatprep.subr.mxu0 0.0
    %3063 = vmatpush1.xpose.msra.mxu0 0.0
    %3064 = vmatprep.subr.mxu0 0.0
    %3065 = vmatpush1.xpose.msra.mxu0 0.0
    %3066 = vmatprep.subr.mxu0 0.0
    %3067 = vmatpush1.xpose.msra.mxu0 0.0
    %3068 = vmatprep.subr.mxu0 0.0
    %3069 = vmatpush1.xpose.msra.mxu0 0.0
    %3070 = vmatprep.subr.mxu0 0.0
    %3071 = vmatpush1.xpose.msra.mxu0 0.0
    %3072 = vmatprep.subr.mxu0 0.0
    %3073 = vmatpush1.xpose.msra.mxu0 0.0
    %3074 = vmatprep.subr.mxu0 0.0
    %3075 = vmatpush1.xpose.msra.mxu0 0.0
    %3076 = vmatprep.subr.mxu0 0.0
    %3077 = vmatpush1.xpose.msra.mxu0 0.0
    %3078 = vmatprep.subr.mxu0 0.0
    %3079 = vmatpush1.xpose.msra.mxu0 0.0
    %3080 = vmatprep.subr.mxu0 0.0
    %3081 = vmatpush1.xpose.msra.mxu0 0.0
    %3082 = vmatprep.subr.mxu0 0.0
    %3083 = vmatpush1.xpose.msra.mxu0 0.0
    %3084 = vmatprep.subr.mxu0 0.0
    %3085 = vmatpush1.xpose.msra.mxu0 0.0
    %3086 = vmatprep.subr.mxu0 0.0
    %3087 = vmatpush1.xpose.msra.mxu0 0.0
    %3088 = vmatprep.subr.mxu0 0.0
    %3089 = vmatpush1.xpose.msra.mxu0 0.0
    %3090 = vmatprep.subr.mxu0 0.0
    %3091 = vmatpush1.xpose.msra.mxu0 0.0
    %3092 = vmatprep.subr.mxu0 0.0
    %3093 = vmatpush1.xpose.msra.mxu0 0.0
    %3094 = vmatprep.subr.mxu0 0.0
    %3095 = vmatpush1.xpose.msra.mxu0 0.0
    %3096 = vmatprep.subr.mxu0 0.0
    %3097 = vmatpush1.xpose.msra.mxu0 0.0
    %3098 = vmatprep.subr.mxu0 0.0
    %3099 = vmatpush1.xpose.msra.mxu0 0.0
    %3100 = vmatprep.subr.mxu0 0.0
    %3101 = vmatpush1.xpose.msra.mxu0 0.0
    %3102 = vmatprep.subr.mxu0 0.0
    %3103 = vmatpush1.xpose.msra.mxu0 0.0
    %3104 = vmatprep.subr.mxu0 0.0
    %3105 = vmatpush1.xpose.msra.mxu0 0.0
    %3106 = vmatprep.subr.mxu0 0.0
    %3107 = vmatpush1.xpose.msra.mxu0 0.0
    %3108 = vmatprep.subr.mxu0 0.0
    %3109 = vmatpush1.xpose.msra.mxu0 0.0
    %3110 = vmatprep.mubr.f32.mxu0 0.0
    %3111 = vmatmul.mubr.f32.gmra.mrb[0].mxu0 %v3023
    %v3112 = vpop.f32.mrb[0].mxu0
    %v3113 = vadd.f32 %v2194, %v3112
    %v3114 = vpop.f32.mrb[0].mxu0
    %3115 = vmatprep.mubr.f32.mxu0 0.0
    %3116 = vmatmul.mubr.f32.gmra.mrb[0].mxu0 %v3026
    %v3117 = vpop.f32.mrb[0].mxu0
    %v3118 = vadd.f32 %v2195, %v3117
    %v3119 = vpop.f32.mrb[0].mxu0
    %3120 = vmatprep.mubr.f32.mxu0 0.0
    %3121 = vmatmul.mubr.f32.gmra.mrb[0].mxu0 %v3029
    %v3122 = vpop.f32.mrb[0].mxu0
    %v3123 = vadd.f32 %v2196, %v3122
    %v3124 = vpop.f32.mrb[0].mxu0
    %3125 = vmatprep.mubr.f32.mxu0 0.0
    %3126 = vmatmul.mubr.f32.gmra.mrb[0].mxu0 %v3032
    %v3127 = vpop.f32.mrb[0].mxu0
    %v3128 = vadd.f32 %v2197, %v3127
    %v3129 = vpop.f32.mrb[0].mxu0
    %3130 = vdwg.mxu0
    %v3131 = vsel %vm1298, %v3113, -inf
    %3132 = vmax.xlane.f32.xlu0 %v3131
    %v3133 = vpop.xlane.xlu0 %3132
    %v3134 = vsel %vm1298, %v3118, -inf
    %3135 = vmax.xlane.f32.xlu0 %v3134
    %v3136 = vpop.xlane.xlu0 %3135
    %v3137 = vsel %vm1298, %v3123, -inf
    %3138 = vmax.xlane.f32.xlu0 %v3137
    %v3139 = vpop.xlane.xlu0 %3138
    %v3140 = vsel %vm1298, %v3128, -inf
    %3141 = vmax.xlane.f32.xlu0 %v3140
    %v3142 = vpop.xlane.xlu0 %3141
    %v3143 = vsub.f32 %v3113, %v3133
    %v3144 = vsub.f32 %v3118, %v3136
    %v3145 = vsub.f32 %v3123, %v3139
    %v3146 = vsub.f32 %v3128, %v3142
    %v3147 = vmul.f32 %v3143, 1.442695
    %v3148 = vpow.pop %v3147
    %v3149 = vmul.f32 %v3144, 1.442695
    %v3150 = vpow.pop %v3149
    %v3151 = vmul.f32 %v3145, 1.442695
    %v3152 = vpow.pop %v3151
    %v3153 = vmul.f32 %v3146, 1.442695
    %v3154 = vpow.pop %v3153
    %v3155 = vsel %vm1298, %v3148, 0.0
    %3156 = vadd.xlane.f32.xlu0 %v3155
    %v3157 = vpop.xlane.xlu0 %3156
    %v3158 = vsel %vm1298, %v3150, 0.0
    %3159 = vadd.xlane.f32.xlu0 %v3158
    %v3160 = vpop.xlane.xlu0 %3159
    %v3161 = vsel %vm1298, %v3152, 0.0
    %3162 = vadd.xlane.f32.xlu0 %v3161
    %v3163 = vpop.xlane.xlu0 %3162
    %v3164 = vsel %vm1298, %v3154, 0.0
    %3165 = vadd.xlane.f32.xlu0 %v3164
    %v3166 = vpop.xlane.xlu0 %3165
    %v3167 = vrcp.pop %v3157
    %v3168 = vrcp.pop %v3160
    %v3169 = vrcp.pop %v3163
    %v3170 = vrcp.pop %v3166
    %v3171 = vmul.f32 %v3148, %v3167
    %v3172 = vmul.f32 %v3150, %v3168
    %v3173 = vmul.f32 %v3152, %v3169
    %v3174 = vmul.f32 %v3154, %v3170
    %v3176 = vsel %vm1298, %v3171, 0
    %v3179 = vsel %vm1298, %v3172, 0
    %v3182 = vsel %vm1298, %v3173, 0
    %v3185 = vsel %vm1298, %v3174, 0
    %3187 = vmatprep.subr.mxu0 0.0
    %3188 = vmatpush1.msra.mxu0 %v3004
    %3189 = vmatprep.subr.mxu0 0.0
    %3190 = vmatpush1.msra.mxu0 %v3009
    %3191 = vmatprep.subr.mxu0 0.0
    %3192 = vmatpush1.msra.mxu0 %v3014
    %3193 = vmatprep.subr.mxu0 0.0
    %3194 = vmatpush1.msra.mxu0 %v3019
    %3195 = vmatprep.subr.mxu0 0.0
    %3196 = vmatpush1.msra.mxu0 0.0
    %3197 = vmatprep.subr.mxu0 0.0
    %3198 = vmatpush1.msra.mxu0 0.0
    %3199 = vmatprep.subr.mxu0 0.0
    %3200 = vmatpush1.msra.mxu0 0.0
    %3201 = vmatprep.subr.mxu0 0.0
    %3202 = vmatpush1.msra.mxu0 0.0
    %3203 = vmatprep.subr.mxu0 0.0
    %3204 = vmatpush1.msra.mxu0 0.0
    %3205 = vmatprep.subr.mxu0 0.0
    %3206 = vmatpush1.msra.mxu0 0.0
    %3207 = vmatprep.subr.mxu0 0.0
    %3208 = vmatpush1.msra.mxu0 0.0
    %3209 = vmatprep.subr.mxu0 0.0
    %3210 = vmatpush1.msra.mxu0 0.0
    %3211 = vmatprep.subr.mxu0 0.0
    %3212 = vmatpush1.msra.mxu0 0.0
    %3213 = vmatprep.subr.mxu0 0.0
    %3214 = vmatpush1.msra.mxu0 0.0
    %3215 = vmatprep.subr.mxu0 0.0
    %3216 = vmatpush1.msra.mxu0 0.0
    %3217 = vmatprep.subr.mxu0 0.0
    %3218 = vmatpush1.msra.mxu0 0.0
    %3219 = vmatprep.subr.mxu0 0.0
    %3220 = vmatpush1.msra.mxu0 0.0
    %3221 = vmatprep.subr.mxu0 0.0
    %3222 = vmatpush1.msra.mxu0 0.0
    %3223 = vmatprep.subr.mxu0 0.0
    %3224 = vmatpush1.msra.mxu0 0.0
    %3225 = vmatprep.subr.mxu0 0.0
    %3226 = vmatpush1.msra.mxu0 0.0
    %3227 = vmatprep.subr.mxu0 0.0
    %3228 = vmatpush1.msra.mxu0 0.0
    %3229 = vmatprep.subr.mxu0 0.0
    %3230 = vmatpush1.msra.mxu0 0.0
    %3231 = vmatprep.subr.mxu0 0.0
    %3232 = vmatpush1.msra.mxu0 0.0
    %3233 = vmatprep.subr.mxu0 0.0
    %3234 = vmatpush1.msra.mxu0 0.0
    %3235 = vmatprep.subr.mxu0 0.0
    %3236 = vmatpush1.msra.mxu0 0.0
    %3237 = vmatprep.subr.mxu0 0.0
    %3238 = vmatpush1.msra.mxu0 0.0
    %3239 = vmatprep.subr.mxu0 0.0
    %3240 = vmatpush1.msra.mxu0 0.0
    %3241 = vmatprep.subr.mxu0 0.0
    %3242 = vmatpush1.msra.mxu0 0.0
    %3243 = vmatprep.subr.mxu0 0.0
    %3244 = vmatpush1.msra.mxu0 0.0
    %3245 = vmatprep.subr.mxu0 0.0
    %3246 = vmatpush1.msra.mxu0 0.0
    %3247 = vmatprep.subr.mxu0 0.0
    %3248 = vmatpush1.msra.mxu0 0.0
    %3249 = vmatprep.subr.mxu0 0.0
    %3250 = vmatpush1.msra.mxu0 0.0
    %3251 = vmatprep.mubr.f32.mxu0 0.0
    %3252 = vmatmul.mubr.f32.gmra.mrb[0].mxu0 %v3176
    %v3253 = vpop.f32.mrb[0].mxu0
    %v3254 = vadd.f32 0.0, %v3253
    %v3255 = vpop.f32.mrb[0].mxu0
    %3256 = vmatprep.mubr.f32.mxu0 0.0
    %3257 = vmatmul.mubr.f32.gmra.mrb[0].mxu0 %v3179
    %v3258 = vpop.f32.mrb[0].mxu0
    %v3259 = vadd.f32 0.0, %v3258
    %v3260 = vpop.f32.mrb[0].mxu0
    %3261 = vmatprep.mubr.f32.mxu0 0.0
    %3262 = vmatmul.mubr.f32.gmra.mrb[0].mxu0 %v3182
    %v3263 = vpop.f32.mrb[0].mxu0
    %v3264 = vadd.f32 0.0, %v3263
    %v3265 = vpop.f32.mrb[0].mxu0
    %3266 = vmatprep.mubr.f32.mxu0 0.0
    %3267 = vmatmul.mubr.f32.gmra.mrb[0].mxu0 %v3185
    %v3268 = vpop.f32.mrb[0].mxu0
    %v3269 = vadd.f32 0.0, %v3268
    %v3270 = vpop.f32.mrb[0].mxu0
    %3271 = vdwg.mxu0
    %v3272 = vadd.f32 %v2742, %v3254
    %v3273 = vadd.f32 %v2743, %v3259
    %v3274 = vadd.f32 %v2744, %v3264
    %v3275 = vadd.f32 %v2745, %v3269
    %v3276 = vld [vmem:[#allocation5 + $0x508] sm:$0xff]
    %v3277 = vld [vmem:[#allocation5 + $0x510] sm:$0xff]
    %v3278 = vld [vmem:[#allocation5 + $0x518] sm:$0x1]
    %v3279 = vlaneseq
    %v3280 = vshrl.u32 %v3279, 7
    %v3281 = vsub.s32 0, %v3280
    %v3282 = vrot.slane %v3278, %v3281
    %3283 = vmatprep.subr.mxu0 0.0
    %3284 = vmatpush1.msra.mxu0 %v3276
    %3285 = vmatprep.subr.mxu0 0.0
    %3286 = vmatpush1.msra.mxu0 %v3277
    %3287 = vmatprep.subr.mxu0 0.0
    %3288 = vmatpush1.msra.mxu0 0.0
    %3289 = vmatprep.subr.mxu0 0.0
    %3290 = vmatpush1.msra.mxu0 0.0
    %3291 = vmatprep.subr.mxu0 0.0
    %3292 = vmatpush1.msra.mxu0 0.0
    %3293 = vmatprep.subr.mxu0 0.0
    %3294 = vmatpush1.msra.mxu0 0.0
    %3295 = vmatprep.subr.mxu0 0.0
    %3296 = vmatpush1.msra.mxu0 0.0
    %3297 = vmatprep.subr.mxu0 0.0
    %3298 = vmatpush1.msra.mxu0 0.0
    %3299 = vmatprep.subr.mxu0 0.0
    %3300 = vmatpush1.msra.mxu0 0.0
    %3301 = vmatprep.subr.mxu0 0.0
    %3302 = vmatpush1.msra.mxu0 0.0
    %3303 = vmatprep.subr.mxu0 0.0
    %3304 = vmatpush1.msra.mxu0 0.0
    %3305 = vmatprep.subr.mxu0 0.0
    %3306 = vmatpush1.msra.mxu0 0.0
    %3307 = vmatprep.subr.mxu0 0.0
    %3308 = vmatpush1.msra.mxu0 0.0
    %3309 = vmatprep.subr.mxu0 0.0
    %3310 = vmatpush1.msra.mxu0 0.0
    %3311 = vmatprep.subr.mxu0 0.0
    %3312 = vmatpush1.msra.mxu0 0.0
    %3313 = vmatprep.subr.mxu0 0.0
    %3314 = vmatpush1.msra.mxu0 0.0
    %3315 = vmatprep.subr.mxu0 0.0
    %3316 = vmatpush1.msra.mxu0 0.0
    %3317 = vmatprep.subr.mxu0 0.0
    %3318 = vmatpush1.msra.mxu0 0.0
    %3319 = vmatprep.subr.mxu0 0.0
    %3320 = vmatpush1.msra.mxu0 0.0
    %3321 = vmatprep.subr.mxu0 0.0
    %3322 = vmatpush1.msra.mxu0 0.0
    %3323 = vmatprep.subr.mxu0 0.0
    %3324 = vmatpush1.msra.mxu0 0.0
    %3325 = vmatprep.subr.mxu0 0.0
    %3326 = vmatpush1.msra.mxu0 0.0
    %3327 = vmatprep.subr.mxu0 0.0
    %3328 = vmatpush1.msra.mxu0 0.0
    %3329 = vmatprep.subr.mxu0 0.0
    %3330 = vmatpush1.msra.mxu0 0.0
    %3331 = vmatprep.subr.mxu0 0.0
    %3332 = vmatpush1.msra.mxu0 0.0
    %3333 = vmatprep.subr.mxu0 0.0
    %3334 = vmatpush1.msra.mxu0 0.0
    %3335 = vmatprep.subr.mxu0 0.0
    %3336 = vmatpush1.msra.mxu0 0.0
    %3337 = vmatprep.subr.mxu0 0.0
    %3338 = vmatpush1.msra.mxu0 0.0
    %3339 = vmatprep.subr.mxu0 0.0
    %3340 = vmatpush1.msra.mxu0 0.0
    %3341 = vmatprep.subr.mxu0 0.0
    %3342 = vmatpush1.msra.mxu0 0.0
    %3343 = vmatprep.subr.mxu0 0.0
    %3344 = vmatpush1.msra.mxu0 0.0
    %3345 = vmatprep.subr.mxu0 0.0
    %3346 = vmatpush1.msra.mxu0 0.0
    %3347 = vmatprep.mubr.f32.mxu0 0.0
    %3348 = vmatmul.mubr.f32.gmra.mrb[0].mxu0 %v2207
    %v3349 = vpop.f32.mrb[0].mxu0
    %v3350 = vadd.f32 %v3282, %v3349
    %v3351 = vpop.f32.mrb[0].mxu0
    %3352 = vmatprep.mubr.f32.mxu0 0.0
    %3353 = vmatmul.mubr.f32.gmra.mrb[0].mxu0 %v2210
    %v3354 = vpop.f32.mrb[0].mxu0
    %v3355 = vadd.f32 %v3282, %v3354
    %v3356 = vpop.f32.mrb[0].mxu0
    %3357 = vmatprep.mubr.f32.mxu0 0.0
    %3358 = vmatmul.mubr.f32.gmra.mrb[0].mxu0 %v2213
    %v3359 = vpop.f32.mrb[0].mxu0
    %v3360 = vadd.f32 %v3282, %v3359
    %v3361 = vpop.f32.mrb[0].mxu0
    %3362 = vmatprep.mubr.f32.mxu0 0.0
    %3363 = vmatmul.mubr.f32.gmra.mrb[0].mxu0 %v2216
    %v3364 = vpop.f32.mrb[0].mxu0
    %v3365 = vadd.f32 %v3282, %v3364
    %v3366 = vpop.f32.mrb[0].mxu0
    %3367 = vdwg.mxu0
    %v3368 = vld [vmem:[#allocation5 + $0x520] sm:$0xff]
    %v3369 = vld [vmem:[#allocation5 + $0x528] sm:$0xff]
    %v3370 = vld [vmem:[#allocation5 + $0x530] sm:$0x1]
    %v3371 = vlaneseq
    %v3372 = vshrl.u32 %v3371, 7
    %v3373 = vsub.s32 0, %v3372
    %v3374 = vrot.slane %v3370, %v3373
    %3375 = vmatprep.subr.mxu0 0.0
    %3376 = vmatpush1.msra.mxu0 %v3368
    %3377 = vmatprep.subr.mxu0 0.0
    %3378 = vmatpush1.msra.mxu0 %v3369
    %3379 = vmatprep.subr.mxu0 0.0
    %3380 = vmatpush1.msra.mxu0 0.0
    %3381 = vmatprep.subr.mxu0 0.0
    %3382 = vmatpush1.msra.mxu0 0.0
    %3383 = vmatprep.subr.mxu0 0.0
    %3384 = vmatpush1.msra.mxu0 0.0
    %3385 = vmatprep.subr.mxu0 0.0
    %3386 = vmatpush1.msra.mxu0 0.0
    %3387 = vmatprep.subr.mxu0 0.0
    %3388 = vmatpush1.msra.mxu0 0.0
    %3389 = vmatprep.subr.mxu0 0.0
    %3390 = vmatpush1.msra.mxu0 0.0
    %3391 = vmatprep.subr.mxu0 0.0
    %3392 = vmatpush1.msra.mxu0 0.0
    %3393 = vmatprep.subr.mxu0 0.0
    %3394 = vmatpush1.msra.mxu0 0.0
    %3395 = vmatprep.subr.mxu0 0.0
    %3396 = vmatpush1.msra.mxu0 0.0
    %3397 = vmatprep.subr.mxu0 0.0
    %3398 = vmatpush1.msra.mxu0 0.0
    %3399 = vmatprep.subr.mxu0 0.0
    %3400 = vmatpush1.msra.mxu0 0.0
    %3401 = vmatprep.subr.mxu0 0.0
    %3402 = vmatpush1.msra.mxu0 0.0
    %3403 = vmatprep.subr.mxu0 0.0
    %3404 = vmatpush1.msra.mxu0 0.0
    %3405 = vmatprep.subr.mxu0 0.0
    %3406 = vmatpush1.msra.mxu0 0.0
    %3407 = vmatprep.subr.mxu0 0.0
    %3408 = vmatpush1.msra.mxu0 0.0
    %3409 = vmatprep.subr.mxu0 0.0
    %3410 = vmatpush1.msra.mxu0 0.0
    %3411 = vmatprep.subr.mxu0 0.0
    %3412 = vmatpush1.msra.mxu0 0.0
    %3413 = vmatprep.subr.mxu0 0.0
    %3414 = vmatpush1.msra.mxu0 0.0
    %3415 = vmatprep.subr.mxu0 0.0
    %3416 = vmatpush1.msra.mxu0 0.0
    %3417 = vmatprep.subr.mxu0 0.0
    %3418 = vmatpush1.msra.mxu0 0.0
    %3419 = vmatprep.subr.mxu0 0.0
    %3420 = vmatpush1.msra.mxu0 0.0
    %3421 = vmatprep.subr.mxu0 0.0
    %3422 = vmatpush1.msra.mxu0 0.0
    %3423 = vmatprep.subr.mxu0 0.0
    %3424 = vmatpush1.msra.mxu0 0.0
    %3425 = vmatprep.subr.mxu0 0.0
    %3426 = vmatpush1.msra.mxu0 0.0
    %3427 = vmatprep.subr.mxu0 0.0
    %3428 = vmatpush1.msra.mxu0 0.0
    %3429 = vmatprep.subr.mxu0 0.0
    %3430 = vmatpush1.msra.mxu0 0.0
    %3431 = vmatprep.subr.mxu0 0.0
    %3432 = vmatpush1.msra.mxu0 0.0
    %3433 = vmatprep.subr.mxu0 0.0
    %3434 = vmatpush1.msra.mxu0 0.0
    %3435 = vmatprep.subr.mxu0 0.0
    %3436 = vmatpush1.msra.mxu0 0.0
    %3437 = vmatprep.subr.mxu0 0.0
    %3438 = vmatpush1.msra.mxu0 0.0
    %3439 = vmatprep.mubr.f32.mxu0 0.0
    %3440 = vmatmul.mubr.f32.gmra.mrb[0].mxu0 %v2207
    %v3441 = vpop.f32.mrb[0].mxu0
    %v3442 = vadd.f32 %v3374, %v3441
    %v3443 = vpop.f32.mrb[0].mxu0
    %3444 = vmatprep.mubr.f32.mxu0 0.0
    %3445 = vmatmul.mubr.f32.gmra.mrb[0].mxu0 %v2210
    %v3446 = vpop.f32.mrb[0].mxu0
    %v3447 = vadd.f32 %v3374, %v3446
    %v3448 = vpop.f32.mrb[0].mxu0
    %3449 = vmatprep.mubr.f32.mxu0 0.0
    %3450 = vmatmul.mubr.f32.gmra.mrb[0].mxu0 %v2213
    %v3451 = vpop.f32.mrb[0].mxu0
    %v3452 = vadd.f32 %v3374, %v3451
    %v3453 = vpop.f32.mrb[0].mxu0
    %3454 = vmatprep.mubr.f32.mxu0 0.0
    %3455 = vmatmul.mubr.f32.gmra.mrb[0].mxu0 %v2216
    %v3456 = vpop.f32.mrb[0].mxu0
    %v3457 = vadd.f32 %v3374, %v3456
    %v3458 = vpop.f32.mrb[0].mxu0
    %3459 = vdwg.mxu0
    %v3460 = vld [vmem:[#allocation5 + $0x538] sm:$0xff]
    %v3461 = vld [vmem:[#allocation5 + $0x540] sm:$0xff]
    %v3462 = vld [vmem:[#allocation5 + $0x548] sm:$0x1]
    %v3463 = vlaneseq
    %v3464 = vshrl.u32 %v3463, 7
    %v3465 = vsub.s32 0, %v3464
    %v3466 = vrot.slane %v3462, %v3465
    %3467 = vmatprep.subr.mxu0 0.0
    %3468 = vmatpush1.msra.mxu0 %v3460
    %3469 = vmatprep.subr.mxu0 0.0
    %3470 = vmatpush1.msra.mxu0 %v3461
    %3471 = vmatprep.subr.mxu0 0.0
    %3472 = vmatpush1.msra.mxu0 0.0
    %3473 = vmatprep.subr.mxu0 0.0
    %3474 = vmatpush1.msra.mxu0 0.0
    %3475 = vmatprep.subr.mxu0 0.0
    %3476 = vmatpush1.msra.mxu0 0.0
    %3477 = vmatprep.subr.mxu0 0.0
    %3478 = vmatpush1.msra.mxu0 0.0
    %3479 = vmatprep.subr.mxu0 0.0
    %3480 = vmatpush1.msra.mxu0 0.0
    %3481 = vmatprep.subr.mxu0 0.0
    %3482 = vmatpush1.msra.mxu0 0.0
    %3483 = vmatprep.subr.mxu0 0.0
    %3484 = vmatpush1.msra.mxu0 0.0
    %3485 = vmatprep.subr.mxu0 0.0
    %3486 = vmatpush1.msra.mxu0 0.0
    %3487 = vmatprep.subr.mxu0 0.0
    %3488 = vmatpush1.msra.mxu0 0.0
    %3489 = vmatprep.subr.mxu0 0.0
    %3490 = vmatpush1.msra.mxu0 0.0
    %3491 = vmatprep.subr.mxu0 0.0
    %3492 = vmatpush1.msra.mxu0 0.0
    %3493 = vmatprep.subr.mxu0 0.0
    %3494 = vmatpush1.msra.mxu0 0.0
    %3495 = vmatprep.subr.mxu0 0.0
    %3496 = vmatpush1.msra.mxu0 0.0
    %3497 = vmatprep.subr.mxu0 0.0
    %3498 = vmatpush1.msra.mxu0 0.0
    %3499 = vmatprep.subr.mxu0 0.0
    %3500 = vmatpush1.msra.mxu0 0.0
    %3501 = vmatprep.subr.mxu0 0.0
    %3502 = vmatpush1.msra.mxu0 0.0
    %3503 = vmatprep.subr.mxu0 0.0
    %3504 = vmatpush1.msra.mxu0 0.0
    %3505 = vmatprep.subr.mxu0 0.0
    %3506 = vmatpush1.msra.mxu0 0.0
    %3507 = vmatprep.subr.mxu0 0.0
    %3508 = vmatpush1.msra.mxu0 0.0
    %3509 = vmatprep.subr.mxu0 0.0
    %3510 = vmatpush1.msra.mxu0 0.0
    %3511 = vmatprep.subr.mxu0 0.0
    %3512 = vmatpush1.msra.mxu0 0.0
    %3513 = vmatprep.subr.mxu0 0.0
    %3514 = vmatpush1.msra.mxu0 0.0
    %3515 = vmatprep.subr.mxu0 0.0
    %3516 = vmatpush1.msra.mxu0 0.0
    %3517 = vmatprep.subr.mxu0 0.0
    %3518 = vmatpush1.msra.mxu0 0.0
    %3519 = vmatprep.subr.mxu0 0.0
    %3520 = vmatpush1.msra.mxu0 0.0
    %3521 = vmatprep.subr.mxu0 0.0
    %3522 = vmatpush1.msra.mxu0 0.0
    %3523 = vmatprep.subr.mxu0 0.0
    %3524 = vmatpush1.msra.mxu0 0.0
    %3525 = vmatprep.subr.mxu0 0.0
    %3526 = vmatpush1.msra.mxu0 0.0
    %3527 = vmatprep.subr.mxu0 0.0
    %3528 = vmatpush1.msra.mxu0 0.0
    %3529 = vmatprep.subr.mxu0 0.0
    %3530 = vmatpush1.msra.mxu0 0.0
    %3531 = vmatprep.mubr.f32.mxu0 0.0
    %3532 = vmatmul.mubr.f32.gmra.mrb[0].mxu0 %v2207
    %v3533 = vpop.f32.mrb[0].mxu0
    %v3534 = vadd.f32 %v3466, %v3533
    %v3535 = vpop.f32.mrb[0].mxu0
    %3536 = vmatprep.mubr.f32.mxu0 0.0
    %3537 = vmatmul.mubr.f32.gmra.mrb[0].mxu0 %v2210
    %v3538 = vpop.f32.mrb[0].mxu0
    %v3539 = vadd.f32 %v3466, %v3538
    %v3540 = vpop.f32.mrb[0].mxu0
    %3541 = vmatprep.mubr.f32.mxu0 0.0
    %3542 = vmatmul.mubr.f32.gmra.mrb[0].mxu0 %v2213
    %v3543 = vpop.f32.mrb[0].mxu0
    %v3544 = vadd.f32 %v3466, %v3543
    %v3545 = vpop.f32.mrb[0].mxu0
    %3546 = vmatprep.mubr.f32.mxu0 0.0
    %3547 = vmatmul.mubr.f32.gmra.mrb[0].mxu0 %v2216
    %v3548 = vpop.f32.mrb[0].mxu0
    %v3549 = vadd.f32 %v3466, %v3548
    %v3550 = vpop.f32.mrb[0].mxu0
    %3551 = vdwg.mxu0
    %v3553 = vsel %vm2487, %v3350, 0
    %v3556 = vsel %vm2487, %v3355, 0
    %v3559 = vsel %vm2487, %v3360, 0
    %v3562 = vsel %vm2487, %v3365, 0
    %v3565 = vsel %vm2487, %v3442, 0
    %v3568 = vsel %vm2487, %v3447, 0
    %v3571 = vsel %vm2487, %v3452, 0
    %v3574 = vsel %vm2487, %v3457, 0
    %3576 = vmatprep.subr.mxu0 0.0
    %3577 = vmatpush1.xpose.msra.mxu0 %v3565
    %3578 = vmatprep.subr.mxu0 0.0
    %3579 = vmatpush1.xpose.msra.mxu0 %v3568
    %3580 = vmatprep.subr.mxu0 0.0
    %3581 = vmatpush1.xpose.msra.mxu0 %v3571
    %3582 = vmatprep.subr.mxu0 0.0
    %3583 = vmatpush1.xpose.msra.mxu0 %v3574
    %3584 = vmatprep.subr.mxu0 0.0
    %3585 = vmatpush1.xpose.msra.mxu0 0.0
    %3586 = vmatprep.subr.mxu0 0.0
    %3587 = vmatpush1.xpose.msra.mxu0 0.0
    %3588 = vmatprep.subr.mxu0 0.0
    %3589 = vmatpush1.xpose.msra.mxu0 0.0
    %3590 = vmatprep.subr.mxu0 0.0
    %3591 = vmatpush1.xpose.msra.mxu0 0.0
    %3592 = vmatprep.subr.mxu0 0.0
    %3593 = vmatpush1.xpose.msra.mxu0 0.0
    %3594 = vmatprep.subr.mxu0 0.0
    %3595 = vmatpush1.xpose.msra.mxu0 0.0
    %3596 = vmatprep.subr.mxu0 0.0
    %3597 = vmatpush1.xpose.msra.mxu0 0.0
    %3598 = vmatprep.subr.mxu0 0.0
    %3599 = vmatpush1.xpose.msra.mxu0 0.0
    %3600 = vmatprep.subr.mxu0 0.0
    %3601 = vmatpush1.xpose.msra.mxu0 0.0
    %3602 = vmatprep.subr.mxu0 0.0
    %3603 = vmatpush1.xpose.msra.mxu0 0.0
    %3604 = vmatprep.subr.mxu0 0.0
    %3605 = vmatpush1.xpose.msra.mxu0 0.0
    %3606 = vmatprep.subr.mxu0 0.0
    %3607 = vmatpush1.xpose.msra.mxu0 0.0
    %3608 = vmatprep.subr.mxu0 0.0
    %3609 = vmatpush1.xpose.msra.mxu0 0.0
    %3610 = vmatprep.subr.mxu0 0.0
    %3611 = vmatpush1.xpose.msra.mxu0 0.0
    %3612 = vmatprep.subr.mxu0 0.0
    %3613 = vmatpush1.xpose.msra.mxu0 0.0
    %3614 = vmatprep.subr.mxu0 0.0
    %3615 = vmatpush1.xpose.msra.mxu0 0.0
    %3616 = vmatprep.subr.mxu0 0.0
    %3617 = vmatpush1.xpose.msra.mxu0 0.0
    %3618 = vmatprep.subr.mxu0 0.0
    %3619 = vmatpush1.xpose.msra.mxu0 0.0
    %3620 = vmatprep.subr.mxu0 0.0
    %3621 = vmatpush1.xpose.msra.mxu0 0.0
    %3622 = vmatprep.subr.mxu0 0.0
    %3623 = vmatpush1.xpose.msra.mxu0 0.0
    %3624 = vmatprep.subr.mxu0 0.0
    %3625 = vmatpush1.xpose.msra.mxu0 0.0
    %3626 = vmatprep.subr.mxu0 0.0
    %3627 = vmatpush1.xpose.msra.mxu0 0.0
    %3628 = vmatprep.subr.mxu0 0.0
    %3629 = vmatpush1.xpose.msra.mxu0 0.0
    %3630 = vmatprep.subr.mxu0 0.0
    %3631 = vmatpush1.xpose.msra.mxu0 0.0
    %3632 = vmatprep.subr.mxu0 0.0
    %3633 = vmatpush1.xpose.msra.mxu0 0.0
    %3634 = vmatprep.subr.mxu0 0.0
    %3635 = vmatpush1.xpose.msra.mxu0 0.0
    %3636 = vmatprep.subr.mxu0 0.0
    %3637 = vmatpush1.xpose.msra.mxu0 0.0
    %3638 = vmatprep.subr.mxu0 0.0
    %3639 = vmatpush1.xpose.msra.mxu0 0.0
    %3640 = vmatprep.mubr.f32.mxu0 0.0
    %3641 = vmatmul.mubr.f32.gmra.mrb[0].mxu0 %v3553
    %v3642 = vpop.f32.mrb[0].mxu0
    %v3643 = vadd.f32 %v2194, %v3642
    %v3644 = vpop.f32.mrb[0].mxu0
    %3645 = vmatprep.mubr.f32.mxu0 0.0
    %3646 = vmatmul.mubr.f32.gmra.mrb[0].mxu0 %v3556
    %v3647 = vpop.f32.mrb[0].mxu0
    %v3648 = vadd.f32 %v2195, %v3647
    %v3649 = vpop.f32.mrb[0].mxu0
    %3650 = vmatprep.mubr.f32.mxu0 0.0
    %3651 = vmatmul.mubr.f32.gmra.mrb[0].mxu0 %v3559
    %v3652 = vpop.f32.mrb[0].mxu0
    %v3653 = vadd.f32 %v2196, %v3652
    %v3654 = vpop.f32.mrb[0].mxu0
    %3655 = vmatprep.mubr.f32.mxu0 0.0
    %3656 = vmatmul.mubr.f32.gmra.mrb[0].mxu0 %v3562
    %v3657 = vpop.f32.mrb[0].mxu0
    %v3658 = vadd.f32 %v2197, %v3657
    %v3659 = vpop.f32.mrb[0].mxu0
    %3660 = vdwg.mxu0
    %v3661 = vsel %vm1298, %v3643, -inf
    %3662 = vmax.xlane.f32.xlu0 %v3661
    %v3663 = vpop.xlane.xlu0 %3662
    %v3664 = vsel %vm1298, %v3648, -inf
    %3665 = vmax.xlane.f32.xlu0 %v3664
    %v3666 = vpop.xlane.xlu0 %3665
    %v3667 = vsel %vm1298, %v3653, -inf
    %3668 = vmax.xlane.f32.xlu0 %v3667
    %v3669 = vpop.xlane.xlu0 %3668
    %v3670 = vsel %vm1298, %v3658, -inf
    %3671 = vmax.xlane.f32.xlu0 %v3670
    %v3672 = vpop.xlane.xlu0 %3671
    %v3673 = vsub.f32 %v3643, %v3663
    %v3674 = vsub.f32 %v3648, %v3666
    %v3675 = vsub.f32 %v3653, %v3669
    %v3676 = vsub.f32 %v3658, %v3672
    %v3677 = vmul.f32 %v3673, 1.442695
    %v3678 = vpow.pop %v3677
    %v3679 = vmul.f32 %v3674, 1.442695
    %v3680 = vpow.pop %v3679
    %v3681 = vmul.f32 %v3675, 1.442695
    %v3682 = vpow.pop %v3681
    %v3683 = vmul.f32 %v3676, 1.442695
    %v3684 = vpow.pop %v3683
    %v3685 = vsel %vm1298, %v3678, 0.0
    %3686 = vadd.xlane.f32.xlu0 %v3685
    %v3687 = vpop.xlane.xlu0 %3686
    %v3688 = vsel %vm1298, %v3680, 0.0
    %3689 = vadd.xlane.f32.xlu0 %v3688
    %v3690 = vpop.xlane.xlu0 %3689
    %v3691 = vsel %vm1298, %v3682, 0.0
    %3692 = vadd.xlane.f32.xlu0 %v3691
    %v3693 = vpop.xlane.xlu0 %3692
    %v3694 = vsel %vm1298, %v3684, 0.0
    %3695 = vadd.xlane.f32.xlu0 %v3694
    %v3696 = vpop.xlane.xlu0 %3695
    %v3697 = vrcp.pop %v3687
    %v3698 = vrcp.pop %v3690
    %v3699 = vrcp.pop %v3693
    %v3700 = vrcp.pop %v3696
    %v3701 = vmul.f32 %v3678, %v3697
    %v3702 = vmul.f32 %v3680, %v3698
    %v3703 = vmul.f32 %v3682, %v3699
    %v3704 = vmul.f32 %v3684, %v3700
    %v3706 = vsel %vm1298, %v3701, 0
    %v3709 = vsel %vm1298, %v3702, 0
    %v3712 = vsel %vm1298, %v3703, 0
    %v3715 = vsel %vm1298, %v3704, 0
    %3717 = vmatprep.subr.mxu0 0.0
    %3718 = vmatpush1.msra.mxu0 %v3534
    %3719 = vmatprep.subr.mxu0 0.0
    %3720 = vmatpush1.msra.mxu0 %v3539
    %3721 = vmatprep.subr.mxu0 0.0
    %3722 = vmatpush1.msra.mxu0 %v3544
    %3723 = vmatprep.subr.mxu0 0.0
    %3724 = vmatpush1.msra.mxu0 %v3549
    %3725 = vmatprep.subr.mxu0 0.0
    %3726 = vmatpush1.msra.mxu0 0.0
    %3727 = vmatprep.subr.mxu0 0.0
    %3728 = vmatpush1.msra.mxu0 0.0
    %3729 = vmatprep.subr.mxu0 0.0
    %3730 = vmatpush1.msra.mxu0 0.0
    %3731 = vmatprep.subr.mxu0 0.0
    %3732 = vmatpush1.msra.mxu0 0.0
    %3733 = vmatprep.subr.mxu0 0.0
    %3734 = vmatpush1.msra.mxu0 0.0
    %3735 = vmatprep.subr.mxu0 0.0
    %3736 = vmatpush1.msra.mxu0 0.0
    %3737 = vmatprep.subr.mxu0 0.0
    %3738 = vmatpush1.msra.mxu0 0.0
    %3739 = vmatprep.subr.mxu0 0.0
    %3740 = vmatpush1.msra.mxu0 0.0
    %3741 = vmatprep.subr.mxu0 0.0
    %3742 = vmatpush1.msra.mxu0 0.0
    %3743 = vmatprep.subr.mxu0 0.0
    %3744 = vmatpush1.msra.mxu0 0.0
    %3745 = vmatprep.subr.mxu0 0.0
    %3746 = vmatpush1.msra.mxu0 0.0
    %3747 = vmatprep.subr.mxu0 0.0
    %3748 = vmatpush1.msra.mxu0 0.0
    %3749 = vmatprep.subr.mxu0 0.0
    %3750 = vmatpush1.msra.mxu0 0.0
    %3751 = vmatprep.subr.mxu0 0.0
    %3752 = vmatpush1.msra.mxu0 0.0
    %3753 = vmatprep.subr.mxu0 0.0
    %3754 = vmatpush1.msra.mxu0 0.0
    %3755 = vmatprep.subr.mxu0 0.0
    %3756 = vmatpush1.msra.mxu0 0.0
    %3757 = vmatprep.subr.mxu0 0.0
    %3758 = vmatpush1.msra.mxu0 0.0
    %3759 = vmatprep.subr.mxu0 0.0
    %3760 = vmatpush1.msra.mxu0 0.0
    %3761 = vmatprep.subr.mxu0 0.0
    %3762 = vmatpush1.msra.mxu0 0.0
    %3763 = vmatprep.subr.mxu0 0.0
    %3764 = vmatpush1.msra.mxu0 0.0
    %3765 = vmatprep.subr.mxu0 0.0
    %3766 = vmatpush1.msra.mxu0 0.0
    %3767 = vmatprep.subr.mxu0 0.0
    %3768 = vmatpush1.msra.mxu0 0.0
    %3769 = vmatprep.subr.mxu0 0.0
    %3770 = vmatpush1.msra.mxu0 0.0
    %3771 = vmatprep.subr.mxu0 0.0
    %3772 = vmatpush1.msra.mxu0 0.0
    %3773 = vmatprep.subr.mxu0 0.0
    %3774 = vmatpush1.msra.mxu0 0.0
    %3775 = vmatprep.subr.mxu0 0.0
    %3776 = vmatpush1.msra.mxu0 0.0
    %3777 = vmatprep.subr.mxu0 0.0
    %3778 = vmatpush1.msra.mxu0 0.0
    %3779 = vmatprep.subr.mxu0 0.0
    %3780 = vmatpush1.msra.mxu0 0.0
    %3781 = vmatprep.mubr.f32.mxu0 0.0
    %3782 = vmatmul.mubr.f32.gmra.mrb[0].mxu0 %v3706
    %v3783 = vpop.f32.mrb[0].mxu0
    %v3784 = vadd.f32 0.0, %v3783
    %v3785 = vpop.f32.mrb[0].mxu0
    %3786 = vmatprep.mubr.f32.mxu0 0.0
    %3787 = vmatmul.mubr.f32.gmra.mrb[0].mxu0 %v3709
    %v3788 = vpop.f32.mrb[0].mxu0
    %v3789 = vadd.f32 0.0, %v3788
    %v3790 = vpop.f32.mrb[0].mxu0
    %3791 = vmatprep.mubr.f32.mxu0 0.0
    %3792 = vmatmul.mubr.f32.gmra.mrb[0].mxu0 %v3712
    %v3793 = vpop.f32.mrb[0].mxu0
    %v3794 = vadd.f32 0.0, %v3793
    %v3795 = vpop.f32.mrb[0].mxu0
    %3796 = vmatprep.mubr.f32.mxu0 0.0
    %3797 = vmatmul.mubr.f32.gmra.mrb[0].mxu0 %v3715
    %v3798 = vpop.f32.mrb[0].mxu0
    %v3799 = vadd.f32 0.0, %v3798
    %v3800 = vpop.f32.mrb[0].mxu0
    %3801 = vdwg.mxu0
    %v3802 = vadd.f32 %v3272, %v3784
    %v3803 = vadd.f32 %v3273, %v3789
    %v3804 = vadd.f32 %v3274, %v3794
    %v3805 = vadd.f32 %v3275, %v3799
    %v3806 = vld [vmem:[#allocation5 + $0x550] sm:$0xff]
    %v3807 = vld [vmem:[#allocation5 + $0x558] sm:$0xff]
    %v3808 = vld [vmem:[#allocation5 + $0x560] sm:$0x1]
    %v3809 = vlaneseq
    %v3810 = vshrl.u32 %v3809, 7
    %v3811 = vsub.s32 0, %v3810
    %v3812 = vrot.slane %v3808, %v3811
    %3813 = vmatprep.subr.mxu0 0.0
    %3814 = vmatpush1.msra.mxu0 %v3806
    %3815 = vmatprep.subr.mxu0 0.0
    %3816 = vmatpush1.msra.mxu0 %v3807
    %3817 = vmatprep.subr.mxu0 0.0
    %3818 = vmatpush1.msra.mxu0 0.0
    %3819 = vmatprep.subr.mxu0 0.0
    %3820 = vmatpush1.msra.mxu0 0.0
    %3821 = vmatprep.subr.mxu0 0.0
    %3822 = vmatpush1.msra.mxu0 0.0
    %3823 = vmatprep.subr.mxu0 0.0
    %3824 = vmatpush1.msra.mxu0 0.0
    %3825 = vmatprep.subr.mxu0 0.0
    %3826 = vmatpush1.msra.mxu0 0.0
    %3827 = vmatprep.subr.mxu0 0.0
    %3828 = vmatpush1.msra.mxu0 0.0
    %3829 = vmatprep.subr.mxu0 0.0
    %3830 = vmatpush1.msra.mxu0 0.0
    %3831 = vmatprep.subr.mxu0 0.0
    %3832 = vmatpush1.msra.mxu0 0.0
    %3833 = vmatprep.subr.mxu0 0.0
    %3834 = vmatpush1.msra.mxu0 0.0
    %3835 = vmatprep.subr.mxu0 0.0
    %3836 = vmatpush1.msra.mxu0 0.0
    %3837 = vmatprep.subr.mxu0 0.0
    %3838 = vmatpush1.msra.mxu0 0.0
    %3839 = vmatprep.subr.mxu0 0.0
    %3840 = vmatpush1.msra.mxu0 0.0
    %3841 = vmatprep.subr.mxu0 0.0
    %3842 = vmatpush1.msra.mxu0 0.0
    %3843 = vmatprep.subr.mxu0 0.0
    %3844 = vmatpush1.msra.mxu0 0.0
    %3845 = vmatprep.subr.mxu0 0.0
    %3846 = vmatpush1.msra.mxu0 0.0
    %3847 = vmatprep.subr.mxu0 0.0
    %3848 = vmatpush1.msra.mxu0 0.0
    %3849 = vmatprep.subr.mxu0 0.0
    %3850 = vmatpush1.msra.mxu0 0.0
    %3851 = vmatprep.subr.mxu0 0.0
    %3852 = vmatpush1.msra.mxu0 0.0
    %3853 = vmatprep.subr.mxu0 0.0
    %3854 = vmatpush1.msra.mxu0 0.0
    %3855 = vmatprep.subr.mxu0 0.0
    %3856 = vmatpush1.msra.mxu0 0.0
    %3857 = vmatprep.subr.mxu0 0.0
    %3858 = vmatpush1.msra.mxu0 0.0
    %3859 = vmatprep.subr.mxu0 0.0
    %3860 = vmatpush1.msra.mxu0 0.0
    %3861 = vmatprep.subr.mxu0 0.0
    %3862 = vmatpush1.msra.mxu0 0.0
    %3863 = vmatprep.subr.mxu0 0.0
    %3864 = vmatpush1.msra.mxu0 0.0
    %3865 = vmatprep.subr.mxu0 0.0
    %3866 = vmatpush1.msra.mxu0 0.0
    %3867 = vmatprep.subr.mxu0 0.0
    %3868 = vmatpush1.msra.mxu0 0.0
    %3869 = vmatprep.subr.mxu0 0.0
    %3870 = vmatpush1.msra.mxu0 0.0
    %3871 = vmatprep.subr.mxu0 0.0
    %3872 = vmatpush1.msra.mxu0 0.0
    %3873 = vmatprep.subr.mxu0 0.0
    %3874 = vmatpush1.msra.mxu0 0.0
    %3875 = vmatprep.subr.mxu0 0.0
    %3876 = vmatpush1.msra.mxu0 0.0
    %3877 = vmatprep.mubr.f32.mxu0 0.0
    %3878 = vmatmul.mubr.f32.gmra.mrb[0].mxu0 %v2207
    %v3879 = vpop.f32.mrb[0].mxu0
    %v3880 = vadd.f32 %v3812, %v3879
    %v3881 = vpop.f32.mrb[0].mxu0
    %3882 = vmatprep.mubr.f32.mxu0 0.0
    %3883 = vmatmul.mubr.f32.gmra.mrb[0].mxu0 %v2210
    %v3884 = vpop.f32.mrb[0].mxu0
    %v3885 = vadd.f32 %v3812, %v3884
    %v3886 = vpop.f32.mrb[0].mxu0
    %3887 = vmatprep.mubr.f32.mxu0 0.0
    %3888 = vmatmul.mubr.f32.gmra.mrb[0].mxu0 %v2213
    %v3889 = vpop.f32.mrb[0].mxu0
    %v3890 = vadd.f32 %v3812, %v3889
    %v3891 = vpop.f32.mrb[0].mxu0
    %3892 = vmatprep.mubr.f32.mxu0 0.0
    %3893 = vmatmul.mubr.f32.gmra.mrb[0].mxu0 %v2216
    %v3894 = vpop.f32.mrb[0].mxu0
    %v3895 = vadd.f32 %v3812, %v3894
    %v3896 = vpop.f32.mrb[0].mxu0
    %3897 = vdwg.mxu0
    %v3898 = vld [vmem:[#allocation5 + $0x568] sm:$0xff]
    %v3899 = vld [vmem:[#allocation5 + $0x570] sm:$0xff]
    %v3900 = vld [vmem:[#allocation5 + $0x578] sm:$0x1]
    %v3901 = vlaneseq
    %v3902 = vshrl.u32 %v3901, 7
    %v3903 = vsub.s32 0, %v3902
    %v3904 = vrot.slane %v3900, %v3903
    %3905 = vmatprep.subr.mxu0 0.0
    %3906 = vmatpush1.msra.mxu0 %v3898
    %3907 = vmatprep.subr.mxu0 0.0
    %3908 = vmatpush1.msra.mxu0 %v3899
    %3909 = vmatprep.subr.mxu0 0.0
    %3910 = vmatpush1.msra.mxu0 0.0
    %3911 = vmatprep.subr.mxu0 0.0
    %3912 = vmatpush1.msra.mxu0 0.0
    %3913 = vmatprep.subr.mxu0 0.0
    %3914 = vmatpush1.msra.mxu0 0.0
    %3915 = vmatprep.subr.mxu0 0.0
    %3916 = vmatpush1.msra.mxu0 0.0
    %3917 = vmatprep.subr.mxu0 0.0
    %3918 = vmatpush1.msra.mxu0 0.0
    %3919 = vmatprep.subr.mxu0 0.0
    %3920 = vmatpush1.msra.mxu0 0.0
    %3921 = vmatprep.subr.mxu0 0.0
    %3922 = vmatpush1.msra.mxu0 0.0
    %3923 = vmatprep.subr.mxu0 0.0
    %3924 = vmatpush1.msra.mxu0 0.0
    %3925 = vmatprep.subr.mxu0 0.0
    %3926 = vmatpush1.msra.mxu0 0.0
    %3927 = vmatprep.subr.mxu0 0.0
    %3928 = vmatpush1.msra.mxu0 0.0
    %3929 = vmatprep.subr.mxu0 0.0
    %3930 = vmatpush1.msra.mxu0 0.0
    %3931 = vmatprep.subr.mxu0 0.0
    %3932 = vmatpush1.msra.mxu0 0.0
    %3933 = vmatprep.subr.mxu0 0.0
    %3934 = vmatpush1.msra.mxu0 0.0
    %3935 = vmatprep.subr.mxu0 0.0
    %3936 = vmatpush1.msra.mxu0 0.0
    %3937 = vmatprep.subr.mxu0 0.0
    %3938 = vmatpush1.msra.mxu0 0.0
    %3939 = vmatprep.subr.mxu0 0.0
    %3940 = vmatpush1.msra.mxu0 0.0
    %3941 = vmatprep.subr.mxu0 0.0
    %3942 = vmatpush1.msra.mxu0 0.0
    %3943 = vmatprep.subr.mxu0 0.0
    %3944 = vmatpush1.msra.mxu0 0.0
    %3945 = vmatprep.subr.mxu0 0.0
    %3946 = vmatpush1.msra.mxu0 0.0
    %3947 = vmatprep.subr.mxu0 0.0
    %3948 = vmatpush1.msra.mxu0 0.0
    %3949 = vmatprep.subr.mxu0 0.0
    %3950 = vmatpush1.msra.mxu0 0.0
    %3951 = vmatprep.subr.mxu0 0.0
    %3952 = vmatpush1.msra.mxu0 0.0
    %3953 = vmatprep.subr.mxu0 0.0
    %3954 = vmatpush1.msra.mxu0 0.0
    %3955 = vmatprep.subr.mxu0 0.0
    %3956 = vmatpush1.msra.mxu0 0.0
    %3957 = vmatprep.subr.mxu0 0.0
    %3958 = vmatpush1.msra.mxu0 0.0
    %3959 = vmatprep.subr.mxu0 0.0
    %3960 = vmatpush1.msra.mxu0 0.0
    %3961 = vmatprep.subr.mxu0 0.0
    %3962 = vmatpush1.msra.mxu0 0.0
    %3963 = vmatprep.subr.mxu0 0.0
    %3964 = vmatpush1.msra.mxu0 0.0
    %3965 = vmatprep.subr.mxu0 0.0
    %3966 = vmatpush1.msra.mxu0 0.0
    %3967 = vmatprep.subr.mxu0 0.0
    %3968 = vmatpush1.msra.mxu0 0.0
    %3969 = vmatprep.mubr.f32.mxu0 0.0
    %3970 = vmatmul.mubr.f32.gmra.mrb[0].mxu0 %v2207
    %v3971 = vpop.f32.mrb[0].mxu0
    %v3972 = vadd.f32 %v3904, %v3971
    %v3973 = vpop.f32.mrb[0].mxu0
    %3974 = vmatprep.mubr.f32.mxu0 0.0
    %3975 = vmatmul.mubr.f32.gmra.mrb[0].mxu0 %v2210
    %v3976 = vpop.f32.mrb[0].mxu0
    %v3977 = vadd.f32 %v3904, %v3976
    %v3978 = vpop.f32.mrb[0].mxu0
    %3979 = vmatprep.mubr.f32.mxu0 0.0
    %3980 = vmatmul.mubr.f32.gmra.mrb[0].mxu0 %v2213
    %v3981 = vpop.f32.mrb[0].mxu0
    %v3982 = vadd.f32 %v3904, %v3981
    %v3983 = vpop.f32.mrb[0].mxu0
    %3984 = vmatprep.mubr.f32.mxu0 0.0
    %3985 = vmatmul.mubr.f32.gmra.mrb[0].mxu0 %v2216
    %v3986 = vpop.f32.mrb[0].mxu0
    %v3987 = vadd.f32 %v3904, %v3986
    %v3988 = vpop.f32.mrb[0].mxu0
    %3989 = vdwg.mxu0
    %v3990 = vld [vmem:[#allocation5 + $0x580] sm:$0xff]
    %v3991 = vld [vmem:[#allocation5 + $0x588] sm:$0xff]
    %v3992 = vld [vmem:[#allocation5 + $0x590] sm:$0x1]
    %v3993 = vlaneseq
    %v3994 = vshrl.u32 %v3993, 7
    %v3995 = vsub.s32 0, %v3994
    %v3996 = vrot.slane %v3992, %v3995
    %3997 = vmatprep.subr.mxu0 0.0
    %3998 = vmatpush1.msra.mxu0 %v3990
    %3999 = vmatprep.subr.mxu0 0.0
    %4000 = vmatpush1.msra.mxu0 %v3991
    %4001 = vmatprep.subr.mxu0 0.0
    %4002 = vmatpush1.msra.mxu0 0.0
    %4003 = vmatprep.subr.mxu0 0.0
    %4004 = vmatpush1.msra.mxu0 0.0
    %4005 = vmatprep.subr.mxu0 0.0
    %4006 = vmatpush1.msra.mxu0 0.0
    %4007 = vmatprep.subr.mxu0 0.0
    %4008 = vmatpush1.msra.mxu0 0.0
    %4009 = vmatprep.subr.mxu0 0.0
    %4010 = vmatpush1.msra.mxu0 0.0
    %4011 = vmatprep.subr.mxu0 0.0
    %4012 = vmatpush1.msra.mxu0 0.0
    %4013 = vmatprep.subr.mxu0 0.0
    %4014 = vmatpush1.msra.mxu0 0.0
    %4015 = vmatprep.subr.mxu0 0.0
    %4016 = vmatpush1.msra.mxu0 0.0
    %4017 = vmatprep.subr.mxu0 0.0
    %4018 = vmatpush1.msra.mxu0 0.0
    %4019 = vmatprep.subr.mxu0 0.0
    %4020 = vmatpush1.msra.mxu0 0.0
    %4021 = vmatprep.subr.mxu0 0.0
    %4022 = vmatpush1.msra.mxu0 0.0
    %4023 = vmatprep.subr.mxu0 0.0
    %4024 = vmatpush1.msra.mxu0 0.0
    %4025 = vmatprep.subr.mxu0 0.0
    %4026 = vmatpush1.msra.mxu0 0.0
    %4027 = vmatprep.subr.mxu0 0.0
    %4028 = vmatpush1.msra.mxu0 0.0
    %4029 = vmatprep.subr.mxu0 0.0
    %4030 = vmatpush1.msra.mxu0 0.0
    %4031 = vmatprep.subr.mxu0 0.0
    %4032 = vmatpush1.msra.mxu0 0.0
    %4033 = vmatprep.subr.mxu0 0.0
    %4034 = vmatpush1.msra.mxu0 0.0
    %4035 = vmatprep.subr.mxu0 0.0
    %4036 = vmatpush1.msra.mxu0 0.0
    %4037 = vmatprep.subr.mxu0 0.0
    %4038 = vmatpush1.msra.mxu0 0.0
    %4039 = vmatprep.subr.mxu0 0.0
    %4040 = vmatpush1.msra.mxu0 0.0
    %4041 = vmatprep.subr.mxu0 0.0
    %4042 = vmatpush1.msra.mxu0 0.0
    %4043 = vmatprep.subr.mxu0 0.0
    %4044 = vmatpush1.msra.mxu0 0.0
    %4045 = vmatprep.subr.mxu0 0.0
    %4046 = vmatpush1.msra.mxu0 0.0
    %4047 = vmatprep.subr.mxu0 0.0
    %4048 = vmatpush1.msra.mxu0 0.0
    %4049 = vmatprep.subr.mxu0 0.0
    %4050 = vmatpush1.msra.mxu0 0.0
    %4051 = vmatprep.subr.mxu0 0.0
    %4052 = vmatpush1.msra.mxu0 0.0
    %4053 = vmatprep.subr.mxu0 0.0
    %4054 = vmatpush1.msra.mxu0 0.0
    %4055 = vmatprep.subr.mxu0 0.0
    %4056 = vmatpush1.msra.mxu0 0.0
    %4057 = vmatprep.subr.mxu0 0.0
    %4058 = vmatpush1.msra.mxu0 0.0
    %4059 = vmatprep.subr.mxu0 0.0
    %4060 = vmatpush1.msra.mxu0 0.0
    %4061 = vmatprep.mubr.f32.mxu0 0.0
    %4062 = vmatmul.mubr.f32.gmra.mrb[0].mxu0 %v2207
    %v4063 = vpop.f32.mrb[0].mxu0
    %v4064 = vadd.f32 %v3996, %v4063
    %v4065 = vpop.f32.mrb[0].mxu0
    %4066 = vmatprep.mubr.f32.mxu0 0.0
    %4067 = vmatmul.mubr.f32.gmra.mrb[0].mxu0 %v2210
    %v4068 = vpop.f32.mrb[0].mxu0
    %v4069 = vadd.f32 %v3996, %v4068
    %v4070 = vpop.f32.mrb[0].mxu0
    %4071 = vmatprep.mubr.f32.mxu0 0.0
    %4072 = vmatmul.mubr.f32.gmra.mrb[0].mxu0 %v2213
    %v4073 = vpop.f32.mrb[0].mxu0
    %v4074 = vadd.f32 %v3996, %v4073
    %v4075 = vpop.f32.mrb[0].mxu0
    %4076 = vmatprep.mubr.f32.mxu0 0.0
    %4077 = vmatmul.mubr.f32.gmra.mrb[0].mxu0 %v2216
    %v4078 = vpop.f32.mrb[0].mxu0
    %v4079 = vadd.f32 %v3996, %v4078
    %v4080 = vpop.f32.mrb[0].mxu0
    %4081 = vdwg.mxu0
    %v4083 = vsel %vm2487, %v3880, 0
    %v4086 = vsel %vm2487, %v3885, 0
    %v4089 = vsel %vm2487, %v3890, 0
    %v4092 = vsel %vm2487, %v3895, 0
    %v4095 = vsel %vm2487, %v3972, 0
    %v4098 = vsel %vm2487, %v3977, 0
    %v4101 = vsel %vm2487, %v3982, 0
    %v4104 = vsel %vm2487, %v3987, 0
    %4106 = vmatprep.subr.mxu0 0.0
    %4107 = vmatpush1.xpose.msra.mxu0 %v4095
    %4108 = vmatprep.subr.mxu0 0.0
    %4109 = vmatpush1.xpose.msra.mxu0 %v4098
    %4110 = vmatprep.subr.mxu0 0.0
    %4111 = vmatpush1.xpose.msra.mxu0 %v4101
    %4112 = vmatprep.subr.mxu0 0.0
    %4113 = vmatpush1.xpose.msra.mxu0 %v4104
    %4114 = vmatprep.subr.mxu0 0.0
    %4115 = vmatpush1.xpose.msra.mxu0 0.0
    %4116 = vmatprep.subr.mxu0 0.0
    %4117 = vmatpush1.xpose.msra.mxu0 0.0
    %4118 = vmatprep.subr.mxu0 0.0
    %4119 = vmatpush1.xpose.msra.mxu0 0.0
    %4120 = vmatprep.subr.mxu0 0.0
    %4121 = vmatpush1.xpose.msra.mxu0 0.0
    %4122 = vmatprep.subr.mxu0 0.0
    %4123 = vmatpush1.xpose.msra.mxu0 0.0
    %4124 = vmatprep.subr.mxu0 0.0
    %4125 = vmatpush1.xpose.msra.mxu0 0.0
    %4126 = vmatprep.subr.mxu0 0.0
    %4127 = vmatpush1.xpose.msra.mxu0 0.0
    %4128 = vmatprep.subr.mxu0 0.0
    %4129 = vmatpush1.xpose.msra.mxu0 0.0
    %4130 = vmatprep.subr.mxu0 0.0
    %4131 = vmatpush1.xpose.msra.mxu0 0.0
    %4132 = vmatprep.subr.mxu0 0.0
    %4133 = vmatpush1.xpose.msra.mxu0 0.0
    %4134 = vmatprep.subr.mxu0 0.0
    %4135 = vmatpush1.xpose.msra.mxu0 0.0
    %4136 = vmatprep.subr.mxu0 0.0
    %4137 = vmatpush1.xpose.msra.mxu0 0.0
    %4138 = vmatprep.subr.mxu0 0.0
    %4139 = vmatpush1.xpose.msra.mxu0 0.0
    %4140 = vmatprep.subr.mxu0 0.0
    %4141 = vmatpush1.xpose.msra.mxu0 0.0
    %4142 = vmatprep.subr.mxu0 0.0
    %4143 = vmatpush1.xpose.msra.mxu0 0.0
    %4144 = vmatprep.subr.mxu0 0.0
    %4145 = vmatpush1.xpose.msra.mxu0 0.0
    %4146 = vmatprep.subr.mxu0 0.0
    %4147 = vmatpush1.xpose.msra.mxu0 0.0
    %4148 = vmatprep.subr.mxu0 0.0
    %4149 = vmatpush1.xpose.msra.mxu0 0.0
    %4150 = vmatprep.subr.mxu0 0.0
    %4151 = vmatpush1.xpose.msra.mxu0 0.0
    %4152 = vmatprep.subr.mxu0 0.0
    %4153 = vmatpush1.xpose.msra.mxu0 0.0
    %4154 = vmatprep.subr.mxu0 0.0
    %4155 = vmatpush1.xpose.msra.mxu0 0.0
    %4156 = vmatprep.subr.mxu0 0.0
    %4157 = vmatpush1.xpose.msra.mxu0 0.0
    %4158 = vmatprep.subr.mxu0 0.0
    %4159 = vmatpush1.xpose.msra.mxu0 0.0
    %4160 = vmatprep.subr.mxu0 0.0
    %4161 = vmatpush1.xpose.msra.mxu0 0.0
    %4162 = vmatprep.subr.mxu0 0.0
    %4163 = vmatpush1.xpose.msra.mxu0 0.0
    %4164 = vmatprep.subr.mxu0 0.0
    %4165 = vmatpush1.xpose.msra.mxu0 0.0
    %4166 = vmatprep.subr.mxu0 0.0
    %4167 = vmatpush1.xpose.msra.mxu0 0.0
    %4168 = vmatprep.subr.mxu0 0.0
    %4169 = vmatpush1.xpose.msra.mxu0 0.0
    %4170 = vmatprep.mubr.f32.mxu0 0.0
    %4171 = vmatmul.mubr.f32.gmra.mrb[0].mxu0 %v4083
    %v4172 = vpop.f32.mrb[0].mxu0
    %v4173 = vadd.f32 %v2194, %v4172
    %v4174 = vpop.f32.mrb[0].mxu0
    %4175 = vmatprep.mubr.f32.mxu0 0.0
    %4176 = vmatmul.mubr.f32.gmra.mrb[0].mxu0 %v4086
    %v4177 = vpop.f32.mrb[0].mxu0
    %v4178 = vadd.f32 %v2195, %v4177
    %v4179 = vpop.f32.mrb[0].mxu0
    %4180 = vmatprep.mubr.f32.mxu0 0.0
    %4181 = vmatmul.mubr.f32.gmra.mrb[0].mxu0 %v4089
    %v4182 = vpop.f32.mrb[0].mxu0
    %v4183 = vadd.f32 %v2196, %v4182
    %v4184 = vpop.f32.mrb[0].mxu0
    %4185 = vmatprep.mubr.f32.mxu0 0.0
    %4186 = vmatmul.mubr.f32.gmra.mrb[0].mxu0 %v4092
    %v4187 = vpop.f32.mrb[0].mxu0
    %v4188 = vadd.f32 %v2197, %v4187
    %v4189 = vpop.f32.mrb[0].mxu0
    %4190 = vdwg.mxu0
    %v4191 = vsel %vm1298, %v4173, -inf
    %4192 = vmax.xlane.f32.xlu0 %v4191
    %v4193 = vpop.xlane.xlu0 %4192
    %v4194 = vsel %vm1298, %v4178, -inf
    %4195 = vmax.xlane.f32.xlu0 %v4194
    %v4196 = vpop.xlane.xlu0 %4195
    %v4197 = vsel %vm1298, %v4183, -inf
    %4198 = vmax.xlane.f32.xlu0 %v4197
    %v4199 = vpop.xlane.xlu0 %4198
    %v4200 = vsel %vm1298, %v4188, -inf
    %4201 = vmax.xlane.f32.xlu0 %v4200
    %v4202 = vpop.xlane.xlu0 %4201
    %v4203 = vsub.f32 %v4173, %v4193
    %v4204 = vsub.f32 %v4178, %v4196
    %v4205 = vsub.f32 %v4183, %v4199
    %v4206 = vsub.f32 %v4188, %v4202
    %v4207 = vmul.f32 %v4203, 1.442695
    %v4208 = vpow.pop %v4207
    %v4209 = vmul.f32 %v4204, 1.442695
    %v4210 = vpow.pop %v4209
    %v4211 = vmul.f32 %v4205, 1.442695
    %v4212 = vpow.pop %v4211
    %v4213 = vmul.f32 %v4206, 1.442695
    %v4214 = vpow.pop %v4213
    %v4215 = vsel %vm1298, %v4208, 0.0
    %4216 = vadd.xlane.f32.xlu0 %v4215
    %v4217 = vpop.xlane.xlu0 %4216
    %v4218 = vsel %vm1298, %v4210, 0.0
    %4219 = vadd.xlane.f32.xlu0 %v4218
    %v4220 = vpop.xlane.xlu0 %4219
    %v4221 = vsel %vm1298, %v4212, 0.0
    %4222 = vadd.xlane.f32.xlu0 %v4221
    %v4223 = vpop.xlane.xlu0 %4222
    %v4224 = vsel %vm1298, %v4214, 0.0
    %4225 = vadd.xlane.f32.xlu0 %v4224
    %v4226 = vpop.xlane.xlu0 %4225
    %v4227 = vrcp.pop %v4217
    %v4228 = vrcp.pop %v4220
    %v4229 = vrcp.pop %v4223
    %v4230 = vrcp.pop %v4226
    %v4231 = vmul.f32 %v4208, %v4227
    %v4232 = vmul.f32 %v4210, %v4228
    %v4233 = vmul.f32 %v4212, %v4229
    %v4234 = vmul.f32 %v4214, %v4230
    %v4236 = vsel %vm1298, %v4231, 0
    %v4239 = vsel %vm1298, %v4232, 0
    %v4242 = vsel %vm1298, %v4233, 0
    %v4245 = vsel %vm1298, %v4234, 0
    %4247 = vmatprep.subr.mxu0 0.0
    %4248 = vmatpush1.msra.mxu0 %v4064
    %4249 = vmatprep.subr.mxu0 0.0
    %4250 = vmatpush1.msra.mxu0 %v4069
    %4251 = vmatprep.subr.mxu0 0.0
    %4252 = vmatpush1.msra.mxu0 %v4074
    %4253 = vmatprep.subr.mxu0 0.0
    %4254 = vmatpush1.msra.mxu0 %v4079
    %4255 = vmatprep.subr.mxu0 0.0
    %4256 = vmatpush1.msra.mxu0 0.0
    %4257 = vmatprep.subr.mxu0 0.0
    %4258 = vmatpush1.msra.mxu0 0.0
    %4259 = vmatprep.subr.mxu0 0.0
    %4260 = vmatpush1.msra.mxu0 0.0
    %4261 = vmatprep.subr.mxu0 0.0
    %4262 = vmatpush1.msra.mxu0 0.0
    %4263 = vmatprep.subr.mxu0 0.0
    %4264 = vmatpush1.msra.mxu0 0.0
    %4265 = vmatprep.subr.mxu0 0.0
    %4266 = vmatpush1.msra.mxu0 0.0
    %4267 = vmatprep.subr.mxu0 0.0
    %4268 = vmatpush1.msra.mxu0 0.0
    %4269 = vmatprep.subr.mxu0 0.0
    %4270 = vmatpush1.msra.mxu0 0.0
    %4271 = vmatprep.subr.mxu0 0.0
    %4272 = vmatpush1.msra.mxu0 0.0
    %4273 = vmatprep.subr.mxu0 0.0
    %4274 = vmatpush1.msra.mxu0 0.0
    %4275 = vmatprep.subr.mxu0 0.0
    %4276 = vmatpush1.msra.mxu0 0.0
    %4277 = vmatprep.subr.mxu0 0.0
    %4278 = vmatpush1.msra.mxu0 0.0
    %4279 = vmatprep.subr.mxu0 0.0
    %4280 = vmatpush1.msra.mxu0 0.0
    %4281 = vmatprep.subr.mxu0 0.0
    %4282 = vmatpush1.msra.mxu0 0.0
    %4283 = vmatprep.subr.mxu0 0.0
    %4284 = vmatpush1.msra.mxu0 0.0
    %4285 = vmatprep.subr.mxu0 0.0
    %4286 = vmatpush1.msra.mxu0 0.0
    %4287 = vmatprep.subr.mxu0 0.0
    %4288 = vmatpush1.msra.mxu0 0.0
    %4289 = vmatprep.subr.mxu0 0.0
    %4290 = vmatpush1.msra.mxu0 0.0
    %4291 = vmatprep.subr.mxu0 0.0
    %4292 = vmatpush1.msra.mxu0 0.0
    %4293 = vmatprep.subr.mxu0 0.0
    %4294 = vmatpush1.msra.mxu0 0.0
    %4295 = vmatprep.subr.mxu0 0.0
    %4296 = vmatpush1.msra.mxu0 0.0
    %4297 = vmatprep.subr.mxu0 0.0
    %4298 = vmatpush1.msra.mxu0 0.0
    %4299 = vmatprep.subr.mxu0 0.0
    %4300 = vmatpush1.msra.mxu0 0.0
    %4301 = vmatprep.subr.mxu0 0.0
    %4302 = vmatpush1.msra.mxu0 0.0
    %4303 = vmatprep.subr.mxu0 0.0
    %4304 = vmatpush1.msra.mxu0 0.0
    %4305 = vmatprep.subr.mxu0 0.0
    %4306 = vmatpush1.msra.mxu0 0.0
    %4307 = vmatprep.subr.mxu0 0.0
    %4308 = vmatpush1.msra.mxu0 0.0
    %4309 = vmatprep.subr.mxu0 0.0
    %4310 = vmatpush1.msra.mxu0 0.0
    %4311 = vmatprep.mubr.f32.mxu0 0.0
    %4312 = vmatmul.mubr.f32.gmra.mrb[0].mxu0 %v4236
    %v4313 = vpop.f32.mrb[0].mxu0
    %v4314 = vadd.f32 0.0, %v4313
    %v4315 = vpop.f32.mrb[0].mxu0
    %4316 = vmatprep.mubr.f32.mxu0 0.0
    %4317 = vmatmul.mubr.f32.gmra.mrb[0].mxu0 %v4239
    %v4318 = vpop.f32.mrb[0].mxu0
    %v4319 = vadd.f32 0.0, %v4318
    %v4320 = vpop.f32.mrb[0].mxu0
    %4321 = vmatprep.mubr.f32.mxu0 0.0
    %4322 = vmatmul.mubr.f32.gmra.mrb[0].mxu0 %v4242
    %v4323 = vpop.f32.mrb[0].mxu0
    %v4324 = vadd.f32 0.0, %v4323
    %v4325 = vpop.f32.mrb[0].mxu0
    %4326 = vmatprep.mubr.f32.mxu0 0.0
    %4327 = vmatmul.mubr.f32.gmra.mrb[0].mxu0 %v4245
    %v4328 = vpop.f32.mrb[0].mxu0
    %v4329 = vadd.f32 0.0, %v4328
    %v4330 = vpop.f32.mrb[0].mxu0
    %4331 = vdwg.mxu0
    %v4332 = vadd.f32 %v3802, %v4314
    %v4333 = vadd.f32 %v3803, %v4319
    %v4334 = vadd.f32 %v3804, %v4324
    %v4335 = vadd.f32 %v3805, %v4329
    %v4336 = vadd.f32 %v2176, %v4332
    %v4337 = vadd.f32 %v2181, %v4333
    %v4338 = vadd.f32 %v2186, %v4334
    %v4339 = vadd.f32 %v2191, %v4335
    %v4340 = vsel %vm1178, %v4336, 0.0
    %4341 = vadd.xlane.f32.xlu0 %v4340
    %v4342 = vpop.xlane.xlu0 %4341
    %v4343 = vsel %vm1178, %v4337, 0.0
    %4344 = vadd.xlane.f32.xlu0 %v4343
    %v4345 = vpop.xlane.xlu0 %4344
    %v4346 = vsel %vm1178, %v4338, 0.0
    %4347 = vadd.xlane.f32.xlu0 %v4346
    %v4348 = vpop.xlane.xlu0 %4347
    %v4349 = vsel %vm1178, %v4339, 0.0
    %4350 = vadd.xlane.f32.xlu0 %v4349
    %v4351 = vpop.xlane.xlu0 %4350
    %v4352 = vrcp.pop 16.0
    %v4353 = vmul.f32 %v4342, %v4352
    %v4354 = vmul.f32 %v4345, %v4352
    %v4355 = vmul.f32 %v4348, %v4352
    %v4356 = vmul.f32 %v4351, %v4352
    %v4357 = vsub.f32 %v4336, %v4353
    %v4358 = vsub.f32 %v4337, %v4354
    %v4359 = vsub.f32 %v4338, %v4355
    %v4360 = vsub.f32 %v4339, %v4356
    %v4361 = vmul.f32 %v4357, %v4357
    %v4362 = vmul.f32 %v4358, %v4358
    %v4363 = vmul.f32 %v4359, %v4359
    %v4364 = vmul.f32 %v4360, %v4360
    %v4365 = vsel %vm1178, %v4361, 0.0
    %4366 = vadd.xlane.f32.xlu0 %v4365
    %v4367 = vpop.xlane.xlu0 %4366
    %v4368 = vsel %vm1178, %v4362, 0.0
    %4369 = vadd.xlane.f32.xlu0 %v4368
    %v4370 = vpop.xlane.xlu0 %4369
    %v4371 = vsel %vm1178, %v4363, 0.0
    %4372 = vadd.xlane.f32.xlu0 %v4371
    %v4373 = vpop.xlane.xlu0 %4372
    %v4374 = vsel %vm1178, %v4364, 0.0
    %4375 = vadd.xlane.f32.xlu0 %v4374
    %v4376 = vpop.xlane.xlu0 %4375
    %v4377 = vmul.f32 %v4367, %v4352
    %v4378 = vmul.f32 %v4370, %v4352
    %v4379 = vmul.f32 %v4373, %v4352
    %v4380 = vmul.f32 %v4376, %v4352
    %v4381 = vadd.f32 %v4377, 1e-05
    %v4382 = vadd.f32 %v4378, 1e-05
    %v4383 = vadd.f32 %v4379, 1e-05
    %v4384 = vadd.f32 %v4380, 1e-05
    %v4385 = vrsqrt.pop %v4381
    %v4386 = vrsqrt.pop %v4382
    %v4387 = vrsqrt.pop %v4383
    %v4388 = vrsqrt.pop %v4384
    %v4389 = vmul.f32 %v4357, %v4385
    %v4390 = vmul.f32 %v4358, %v4386
    %v4391 = vmul.f32 %v4359, %v4387
    %v4392 = vmul.f32 %v4360, %v4388
    %v4393 = vld [vmem:[#allocation5 + $0x5c0] sm:$0x1]
    %v4394 = vlaneseq
    %v4395 = vshrl.u32 %v4394, 7
    %v4396 = vsub.s32 0, %v4395
    %v4397 = vrot.slane %v4393, %v4396
    %v4398 = vmul.f32 %v4389, %v4397
    %v4399 = vmul.f32 %v4390, %v4397
    %v4400 = vmul.f32 %v4391, %v4397
    %v4401 = vmul.f32 %v4392, %v4397
    %v4402 = vld [vmem:[#allocation5 + $0x5c8] sm:$0x1]
    %v4403 = vlaneseq
    %v4404 = vshrl.u32 %v4403, 7
    %v4405 = vsub.s32 0, %v4404
    %v4406 = vrot.slane %v4402, %v4405
    %v4407 = vadd.f32 %v4398, %v4406
    %v4408 = vadd.f32 %v4399, %v4406
    %v4409 = vadd.f32 %v4400, %v4406
    %v4410 = vadd.f32 %v4401, %v4406
    %v4411 = vld [vmem:[#allocation5 + $0x5d0] sm:$0xff]
    %v4412 = vld [vmem:[#allocation5 + $0x5d8] sm:$0xff]
    %v4413 = vld [vmem:[#allocation5 + $0x5e0] sm:$0x1]
    %v4414 = vlaneseq
    %v4415 = vshrl.u32 %v4414, 7
    %v4416 = vsub.s32 0, %v4415
    %v4417 = vrot.slane %v4413, %v4416
    %v4419 = vsel %vm1178, %v4407, 0
    %v4422 = vsel %vm1178, %v4408, 0
    %v4425 = vsel %vm1178, %v4409, 0
    %v4428 = vsel %vm1178, %v4410, 0
    %4430 = vmatprep.subr.mxu0 0.0
    %4431 = vmatpush1.msra.mxu0 %v4411
    %4432 = vmatprep.subr.mxu0 0.0
    %4433 = vmatpush1.msra.mxu0 %v4412
    %4434 = vmatprep.subr.mxu0 0.0
    %4435 = vmatpush1.msra.mxu0 0.0
    %4436 = vmatprep.subr.mxu0 0.0
    %4437 = vmatpush1.msra.mxu0 0.0
    %4438 = vmatprep.subr.mxu0 0.0
    %4439 = vmatpush1.msra.mxu0 0.0
    %4440 = vmatprep.subr.mxu0 0.0
    %4441 = vmatpush1.msra.mxu0 0.0
    %4442 = vmatprep.subr.mxu0 0.0
    %4443 = vmatpush1.msra.mxu0 0.0
    %4444 = vmatprep.subr.mxu0 0.0
    %4445 = vmatpush1.msra.mxu0 0.0
    %4446 = vmatprep.subr.mxu0 0.0
    %4447 = vmatpush1.msra.mxu0 0.0
    %4448 = vmatprep.subr.mxu0 0.0
    %4449 = vmatpush1.msra.mxu0 0.0
    %4450 = vmatprep.subr.mxu0 0.0
    %4451 = vmatpush1.msra.mxu0 0.0
    %4452 = vmatprep.subr.mxu0 0.0
    %4453 = vmatpush1.msra.mxu0 0.0
    %4454 = vmatprep.subr.mxu0 0.0
    %4455 = vmatpush1.msra.mxu0 0.0
    %4456 = vmatprep.subr.mxu0 0.0
    %4457 = vmatpush1.msra.mxu0 0.0
    %4458 = vmatprep.subr.mxu0 0.0
    %4459 = vmatpush1.msra.mxu0 0.0
    %4460 = vmatprep.subr.mxu0 0.0
    %4461 = vmatpush1.msra.mxu0 0.0
    %4462 = vmatprep.subr.mxu0 0.0
    %4463 = vmatpush1.msra.mxu0 0.0
    %4464 = vmatprep.subr.mxu0 0.0
    %4465 = vmatpush1.msra.mxu0 0.0
    %4466 = vmatprep.subr.mxu0 0.0
    %4467 = vmatpush1.msra.mxu0 0.0
    %4468 = vmatprep.subr.mxu0 0.0
    %4469 = vmatpush1.msra.mxu0 0.0
    %4470 = vmatprep.subr.mxu0 0.0
    %4471 = vmatpush1.msra.mxu0 0.0
    %4472 = vmatprep.subr.mxu0 0.0
    %4473 = vmatpush1.msra.mxu0 0.0
    %4474 = vmatprep.subr.mxu0 0.0
    %4475 = vmatpush1.msra.mxu0 0.0
    %4476 = vmatprep.subr.mxu0 0.0
    %4477 = vmatpush1.msra.mxu0 0.0
    %4478 = vmatprep.subr.mxu0 0.0
    %4479 = vmatpush1.msra.mxu0 0.0
    %4480 = vmatprep.subr.mxu0 0.0
    %4481 = vmatpush1.msra.mxu0 0.0
    %4482 = vmatprep.subr.mxu0 0.0
    %4483 = vmatpush1.msra.mxu0 0.0
    %4484 = vmatprep.subr.mxu0 0.0
    %4485 = vmatpush1.msra.mxu0 0.0
    %4486 = vmatprep.subr.mxu0 0.0
    %4487 = vmatpush1.msra.mxu0 0.0
    %4488 = vmatprep.subr.mxu0 0.0
    %4489 = vmatpush1.msra.mxu0 0.0
    %4490 = vmatprep.subr.mxu0 0.0
    %4491 = vmatpush1.msra.mxu0 0.0
    %4492 = vmatprep.subr.mxu0 0.0
    %4493 = vmatpush1.msra.mxu0 0.0
    %4494 = vmatprep.mubr.f32.mxu0 0.0
    %4495 = vmatmul.mubr.f32.gmra.mrb[0].mxu0 %v4419
    %v4496 = vpop.f32.mrb[0].mxu0
    %v4497 = vadd.f32 %v4417, %v4496
    %v4498 = vpop.f32.mrb[0].mxu0
    %4499 = vmatprep.mubr.f32.mxu0 0.0
    %4500 = vmatmul.mubr.f32.gmra.mrb[0].mxu0 %v4422
    %v4501 = vpop.f32.mrb[0].mxu0
    %v4502 = vadd.f32 %v4417, %v4501
    %v4503 = vpop.f32.mrb[0].mxu0
    %4504 = vmatprep.mubr.f32.mxu0 0.0
    %4505 = vmatmul.mubr.f32.gmra.mrb[0].mxu0 %v4425
    %v4506 = vpop.f32.mrb[0].mxu0
    %v4507 = vadd.f32 %v4417, %v4506
    %v4508 = vpop.f32.mrb[0].mxu0
    %4509 = vmatprep.mubr.f32.mxu0 0.0
    %4510 = vmatmul.mubr.f32.gmra.mrb[0].mxu0 %v4428
    %v4511 = vpop.f32.mrb[0].mxu0
    %v4512 = vadd.f32 %v4417, %v4511
    %v4513 = vpop.f32.mrb[0].mxu0
    %4514 = vdwg.mxu0
    %v4515 = vmax.f32 %v4497, 0.0
    %v4516 = vmax.f32 %v4502, 0.0
    %v4517 = vmax.f32 %v4507, 0.0
    %v4518 = vmax.f32 %v4512, 0.0
    %v4519 = vld [vmem:[#allocation5 + $0x5e8] sm:$0xff]
    %v4520 = vld [vmem:[#allocation5 + $0x5f0] sm:$0x1]
    %v4521 = vlaneseq
    %v4522 = vshrl.u32 %v4521, 7
    %v4523 = vsub.s32 0, %v4522
    %v4524 = vrot.slane %v4520, %v4523
    %v4526 = vsel %vm554, %v4515, 0
    %v4529 = vsel %vm554, %v4516, 0
    %v4532 = vsel %vm554, %v4517, 0
    %v4535 = vsel %vm554, %v4518, 0
    %4537 = vmatprep.subr.mxu0 0.0
    %4538 = vmatpush1.msra.mxu0 %v4519
    %4539 = vmatprep.subr.mxu0 0.0
    %4540 = vmatpush1.msra.mxu0 0.0
    %4541 = vmatprep.subr.mxu0 0.0
    %4542 = vmatpush1.msra.mxu0 0.0
    %4543 = vmatprep.subr.mxu0 0.0
    %4544 = vmatpush1.msra.mxu0 0.0
    %4545 = vmatprep.subr.mxu0 0.0
    %4546 = vmatpush1.msra.mxu0 0.0
    %4547 = vmatprep.subr.mxu0 0.0
    %4548 = vmatpush1.msra.mxu0 0.0
    %4549 = vmatprep.subr.mxu0 0.0
    %4550 = vmatpush1.msra.mxu0 0.0
    %4551 = vmatprep.subr.mxu0 0.0
    %4552 = vmatpush1.msra.mxu0 0.0
    %4553 = vmatprep.subr.mxu0 0.0
    %4554 = vmatpush1.msra.mxu0 0.0
    %4555 = vmatprep.subr.mxu0 0.0
    %4556 = vmatpush1.msra.mxu0 0.0
    %4557 = vmatprep.subr.mxu0 0.0
    %4558 = vmatpush1.msra.mxu0 0.0
    %4559 = vmatprep.subr.mxu0 0.0
    %4560 = vmatpush1.msra.mxu0 0.0
    %4561 = vmatprep.subr.mxu0 0.0
    %4562 = vmatpush1.msra.mxu0 0.0
    %4563 = vmatprep.subr.mxu0 0.0
    %4564 = vmatpush1.msra.mxu0 0.0
    %4565 = vmatprep.subr.mxu0 0.0
    %4566 = vmatpush1.msra.mxu0 0.0
    %4567 = vmatprep.subr.mxu0 0.0
    %4568 = vmatpush1.msra.mxu0 0.0
    %4569 = vmatprep.subr.mxu0 0.0
    %4570 = vmatpush1.msra.mxu0 0.0
    %4571 = vmatprep.subr.mxu0 0.0
    %4572 = vmatpush1.msra.mxu0 0.0
    %4573 = vmatprep.subr.mxu0 0.0
    %4574 = vmatpush1.msra.mxu0 0.0
    %4575 = vmatprep.subr.mxu0 0.0
    %4576 = vmatpush1.msra.mxu0 0.0
    %4577 = vmatprep.subr.mxu0 0.0
    %4578 = vmatpush1.msra.mxu0 0.0
    %4579 = vmatprep.subr.mxu0 0.0
    %4580 = vmatpush1.msra.mxu0 0.0
    %4581 = vmatprep.subr.mxu0 0.0
    %4582 = vmatpush1.msra.mxu0 0.0
    %4583 = vmatprep.subr.mxu0 0.0
    %4584 = vmatpush1.msra.mxu0 0.0
    %4585 = vmatprep.subr.mxu0 0.0
    %4586 = vmatpush1.msra.mxu0 0.0
    %4587 = vmatprep.subr.mxu0 0.0
    %4588 = vmatpush1.msra.mxu0 0.0
    %4589 = vmatprep.subr.mxu0 0.0
    %4590 = vmatpush1.msra.mxu0 0.0
    %4591 = vmatprep.subr.mxu0 0.0
    %4592 = vmatpush1.msra.mxu0 0.0
    %4593 = vmatprep.subr.mxu0 0.0
    %4594 = vmatpush1.msra.mxu0 0.0
    %4595 = vmatprep.subr.mxu0 0.0
    %4596 = vmatpush1.msra.mxu0 0.0
    %4597 = vmatprep.subr.mxu0 0.0
    %4598 = vmatpush1.msra.mxu0 0.0
    %4599 = vmatprep.subr.mxu0 0.0
    %4600 = vmatpush1.msra.mxu0 0.0
    %4601 = vmatprep.mubr.f32.mxu0 0.0
    %4602 = vmatmul.mubr.f32.gmra.mrb[0].mxu0 %v4526
    %v4603 = vpop.f32.mrb[0].mxu0
    %v4604 = vadd.f32 %v4524, %v4603
    %v4605 = vpop.f32.mrb[0].mxu0
    %4606 = vmatprep.mubr.f32.mxu0 0.0
    %4607 = vmatmul.mubr.f32.gmra.mrb[0].mxu0 %v4529
    %v4608 = vpop.f32.mrb[0].mxu0
    %v4609 = vadd.f32 %v4524, %v4608
    %v4610 = vpop.f32.mrb[0].mxu0
    %4611 = vmatprep.mubr.f32.mxu0 0.0
    %4612 = vmatmul.mubr.f32.gmra.mrb[0].mxu0 %v4532
    %v4613 = vpop.f32.mrb[0].mxu0
    %v4614 = vadd.f32 %v4524, %v4613
    %v4615 = vpop.f32.mrb[0].mxu0
    %4616 = vmatprep.mubr.f32.mxu0 0.0
    %4617 = vmatmul.mubr.f32.gmra.mrb[0].mxu0 %v4535
    %v4618 = vpop.f32.mrb[0].mxu0
    %v4619 = vadd.f32 %v4524, %v4618
    %v4620 = vpop.f32.mrb[0].mxu0
    %4621 = vdwg.mxu0
    %v4622 = vadd.f32 %v4407, %v4604
    %v4623 = vadd.f32 %v4408, %v4609
    %v4624 = vadd.f32 %v4409, %v4614
    %v4625 = vadd.f32 %v4410, %v4619
    %v4626 = vsel %vm1178, %v4622, 0.0
    %4627 = vadd.xlane.f32.xlu0 %v4626
    %v4628 = vpop.xlane.xlu0 %4627
    %v4629 = vsel %vm1178, %v4623, 0.0
    %4630 = vadd.xlane.f32.xlu0 %v4629
    %v4631 = vpop.xlane.xlu0 %4630
    %v4632 = vsel %vm1178, %v4624, 0.0
    %4633 = vadd.xlane.f32.xlu0 %v4632
    %v4634 = vpop.xlane.xlu0 %4633
    %v4635 = vsel %vm1178, %v4625, 0.0
    %4636 = vadd.xlane.f32.xlu0 %v4635
    %v4637 = vpop.xlane.xlu0 %4636
    %v4638 = vmul.f32 %v4628, %v4352
    %v4639 = vmul.f32 %v4631, %v4352
    %v4640 = vmul.f32 %v4634, %v4352
    %v4641 = vmul.f32 %v4637, %v4352
    %v4642 = vsub.f32 %v4622, %v4638
    %v4643 = vsub.f32 %v4623, %v4639
    %v4644 = vsub.f32 %v4624, %v4640
    %v4645 = vsub.f32 %v4625, %v4641
    %v4646 = vmul.f32 %v4642, %v4642
    %v4647 = vmul.f32 %v4643, %v4643
    %v4648 = vmul.f32 %v4644, %v4644
    %v4649 = vmul.f32 %v4645, %v4645
    %v4650 = vsel %vm1178, %v4646, 0.0
    %4651 = vadd.xlane.f32.xlu0 %v4650
    %v4652 = vpop.xlane.xlu0 %4651
    %v4653 = vsel %vm1178, %v4647, 0.0
    %4654 = vadd.xlane.f32.xlu0 %v4653
    %v4655 = vpop.xlane.xlu0 %4654
    %v4656 = vsel %vm1178, %v4648, 0.0
    %4657 = vadd.xlane.f32.xlu0 %v4656
    %v4658 = vpop.xlane.xlu0 %4657
    %v4659 = vsel %vm1178, %v4649, 0.0
    %4660 = vadd.xlane.f32.xlu0 %v4659
    %v4661 = vpop.xlane.xlu0 %4660
    %v4662 = vmul.f32 %v4652, %v4352
    %v4663 = vmul.f32 %v4655, %v4352
    %v4664 = vmul.f32 %v4658, %v4352
    %v4665 = vmul.f32 %v4661, %v4352
    %v4666 = vadd.f32 %v4662, 1e-05
    %v4667 = vadd.f32 %v4663, 1e-05
    %v4668 = vadd.f32 %v4664, 1e-05
    %v4669 = vadd.f32 %v4665, 1e-05
    %v4670 = vrsqrt.pop %v4666
    %v4671 = vrsqrt.pop %v4667
    %v4672 = vrsqrt.pop %v4668
    %v4673 = vrsqrt.pop %v4669
    %v4674 = vmul.f32 %v4642, %v4670
    %v4675 = vmul.f32 %v4643, %v4671
    %v4676 = vmul.f32 %v4644, %v4672
    %v4677 = vmul.f32 %v4645, %v4673
    %v4678 = vld [vmem:[#allocation5 + $0x5f8] sm:$0x1]
    %v4679 = vlaneseq
    %v4680 = vshrl.u32 %v4679, 7
    %v4681 = vsub.s32 0, %v4680
    %v4682 = vrot.slane %v4678, %v4681
    %v4683 = vmul.f32 %v4674, %v4682
    %v4684 = vmul.f32 %v4675, %v4682
    %v4685 = vmul.f32 %v4676, %v4682
    %v4686 = vmul.f32 %v4677, %v4682
    %v4687 = vld [vmem:[#allocation5 + $0x600] sm:$0x1]
    %v4688 = vlaneseq
    %v4689 = vshrl.u32 %v4688, 7
    %v4690 = vsub.s32 0, %v4689
    %v4691 = vrot.slane %v4687, %v4690
    %v4692 = vadd.f32 %v4683, %v4691
    %v4693 = vadd.f32 %v4684, %v4691
    %v4694 = vadd.f32 %v4685, %v4691
    %v4695 = vadd.f32 %v4686, %v4691
    %v4696 = vld [vmem:[#allocation5 + $0x608] sm:$0xff]
    %v4697 = vld [vmem:[#allocation5 + $0x610] sm:$0xff]
    %v4698 = vld [vmem:[#allocation5 + $0x618] sm:$0x1]
    %v4699 = vlaneseq
    %v4700 = vshrl.u32 %v4699, 7
    %v4701 = vsub.s32 0, %v4700
    %v4702 = vrot.slane %v4698, %v4701
    %v4704 = vsel %vm1178, %v4692, 0
    %v4707 = vsel %vm1178, %v4693, 0
    %v4710 = vsel %vm1178, %v4694, 0
    %v4713 = vsel %vm1178, %v4695, 0
    %4715 = vmatprep.subr.mxu0 0.0
    %4716 = vmatpush1.msra.mxu0 %v4696
    %4717 = vmatprep.subr.mxu0 0.0
    %4718 = vmatpush1.msra.mxu0 %v4697
    %4719 = vmatprep.subr.mxu0 0.0
    %4720 = vmatpush1.msra.mxu0 0.0
    %4721 = vmatprep.subr.mxu0 0.0
    %4722 = vmatpush1.msra.mxu0 0.0
    %4723 = vmatprep.subr.mxu0 0.0
    %4724 = vmatpush1.msra.mxu0 0.0
    %4725 = vmatprep.subr.mxu0 0.0
    %4726 = vmatpush1.msra.mxu0 0.0
    %4727 = vmatprep.subr.mxu0 0.0
    %4728 = vmatpush1.msra.mxu0 0.0
    %4729 = vmatprep.subr.mxu0 0.0
    %4730 = vmatpush1.msra.mxu0 0.0
    %4731 = vmatprep.subr.mxu0 0.0
    %4732 = vmatpush1.msra.mxu0 0.0
    %4733 = vmatprep.subr.mxu0 0.0
    %4734 = vmatpush1.msra.mxu0 0.0
    %4735 = vmatprep.subr.mxu0 0.0
    %4736 = vmatpush1.msra.mxu0 0.0
    %4737 = vmatprep.subr.mxu0 0.0
    %4738 = vmatpush1.msra.mxu0 0.0
    %4739 = vmatprep.subr.mxu0 0.0
    %4740 = vmatpush1.msra.mxu0 0.0
    %4741 = vmatprep.subr.mxu0 0.0
    %4742 = vmatpush1.msra.mxu0 0.0
    %4743 = vmatprep.subr.mxu0 0.0
    %4744 = vmatpush1.msra.mxu0 0.0
    %4745 = vmatprep.subr.mxu0 0.0
    %4746 = vmatpush1.msra.mxu0 0.0
    %4747 = vmatprep.subr.mxu0 0.0
    %4748 = vmatpush1.msra.mxu0 0.0
    %4749 = vmatprep.subr.mxu0 0.0
    %4750 = vmatpush1.msra.mxu0 0.0
    %4751 = vmatprep.subr.mxu0 0.0
    %4752 = vmatpush1.msra.mxu0 0.0
    %4753 = vmatprep.subr.mxu0 0.0
    %4754 = vmatpush1.msra.mxu0 0.0
    %4755 = vmatprep.subr.mxu0 0.0
    %4756 = vmatpush1.msra.mxu0 0.0
    %4757 = vmatprep.subr.mxu0 0.0
    %4758 = vmatpush1.msra.mxu0 0.0
    %4759 = vmatprep.subr.mxu0 0.0
    %4760 = vmatpush1.msra.mxu0 0.0
    %4761 = vmatprep.subr.mxu0 0.0
    %4762 = vmatpush1.msra.mxu0 0.0
    %4763 = vmatprep.subr.mxu0 0.0
    %4764 = vmatpush1.msra.mxu0 0.0
    %4765 = vmatprep.subr.mxu0 0.0
    %4766 = vmatpush1.msra.mxu0 0.0
    %4767 = vmatprep.subr.mxu0 0.0
    %4768 = vmatpush1.msra.mxu0 0.0
    %4769 = vmatprep.subr.mxu0 0.0
    %4770 = vmatpush1.msra.mxu0 0.0
    %4771 = vmatprep.subr.mxu0 0.0
    %4772 = vmatpush1.msra.mxu0 0.0
    %4773 = vmatprep.subr.mxu0 0.0
    %4774 = vmatpush1.msra.mxu0 0.0
    %4775 = vmatprep.subr.mxu0 0.0
    %4776 = vmatpush1.msra.mxu0 0.0
    %4777 = vmatprep.subr.mxu0 0.0
    %4778 = vmatpush1.msra.mxu0 0.0
    %4779 = vmatprep.mubr.f32.mxu0 0.0
    %4780 = vmatmul.mubr.f32.gmra.mrb[0].mxu0 %v4704
    %v4781 = vpop.f32.mrb[0].mxu0
    %v4782 = vadd.f32 %v4702, %v4781
    %v4783 = vpop.f32.mrb[0].mxu0
    %4784 = vmatprep.mubr.f32.mxu0 0.0
    %4785 = vmatmul.mubr.f32.gmra.mrb[0].mxu0 %v4707
    %v4786 = vpop.f32.mrb[0].mxu0
    %v4787 = vadd.f32 %v4702, %v4786
    %v4788 = vpop.f32.mrb[0].mxu0
    %4789 = vmatprep.mubr.f32.mxu0 0.0
    %4790 = vmatmul.mubr.f32.gmra.mrb[0].mxu0 %v4710
    %v4791 = vpop.f32.mrb[0].mxu0
    %v4792 = vadd.f32 %v4702, %v4791
    %v4793 = vpop.f32.mrb[0].mxu0
    %4794 = vmatprep.mubr.f32.mxu0 0.0
    %4795 = vmatmul.mubr.f32.gmra.mrb[0].mxu0 %v4713
    %v4796 = vpop.f32.mrb[0].mxu0
    %v4797 = vadd.f32 %v4702, %v4796
    %v4798 = vpop.f32.mrb[0].mxu0
    %4799 = vdwg.mxu0
    %v4800 = vld [vmem:[#allocation5 + $0x620] sm:$0xff]
    %v4801 = vld [vmem:[#allocation5 + $0x628] sm:$0xff]
    %v4802 = vld [vmem:[#allocation5 + $0x630] sm:$0xff]
    %v4803 = vld [vmem:[#allocation5 + $0x638] sm:$0xff]
    %v4804 = vld [vmem:[#allocation5 + $0x640] sm:$0xff]
    %v4805 = vld [vmem:[#allocation5 + $0x648] sm:$0xff]
    %v4806 = vld [vmem:[#allocation5 + $0x650] sm:$0xff]
    %v4807 = vld [vmem:[#allocation5 + $0x658] sm:$0xff]
    %v4808 = vld [vmem:[#allocation5 + $0x660] sm:$0xff]
    %v4809 = vld [vmem:[#allocation5 + $0x668] sm:$0xff]
    %v4810 = vld [vmem:[#allocation5 + $0x670] sm:$0xff]
    %v4811 = vld [vmem:[#allocation5 + $0x678] sm:$0xff]
    %v4812 = vld [vmem:[#allocation5 + $0x680] sm:$0xff]
    %v4813 = vld [vmem:[#allocation5 + $0x688] sm:$0xff]
    %v4814 = vld [vmem:[#allocation5 + $0x690] sm:$0xff]
    %v4815 = vld [vmem:[#allocation5 + $0x698] sm:$0xff]
    %v4816 = vld [vmem:[#allocation5 + $0x6a0] sm:$0xff]
    %v4817 = vld [vmem:[#allocation5 + $0x6a8] sm:$0xff]
    %v4818 = vld [vmem:[#allocation5 + $0x6b0] sm:$0xff]
    %v4819 = vld [vmem:[#allocation5 + $0x6b8] sm:$0xff]
    %v4820 = vld [vmem:[#allocation5 + $0x6c0] sm:$0xff]
    %v4821 = vld [vmem:[#allocation5 + $0x6c8] sm:$0xff]
    %v4822 = vld [vmem:[#allocation5 + $0x6d0] sm:$0xff]
    %v4823 = vld [vmem:[#allocation5 + $0x6d8] sm:$0xff]
    %v4824 = vld [vmem:[#allocation5 + $0x6e0] sm:$0xff]
    %v4825 = vld [vmem:[#allocation5 + $0x6e8] sm:$0xff]
    %v4826 = vld [vmem:[#allocation5 + $0x6f0] sm:$0xff]
    %v4827 = vld [vmem:[#allocation5 + $0x6f8] sm:$0xff]
    %v4828 = vld [vmem:[#allocation5 + $0x700] sm:$0xff]
    %v4829 = vld [vmem:[#allocation5 + $0x708] sm:$0xff]
    %v4830 = vld [vmem:[#allocation5 + $0x710] sm:$0xff]
    %v4831 = vld [vmem:[#allocation5 + $0x718] sm:$0xff]
    %v4833 = vsel %vm1298, %v4816, 0
    %v4836 = vsel %vm1298, %v4817, 0
    %v4839 = vsel %vm1298, %v4818, 0
    %v4842 = vsel %vm1298, %v4819, 0
    %v4845 = vsel %vm1298, %v4820, 0
    %v4848 = vsel %vm1298, %v4821, 0
    %v4851 = vsel %vm1298, %v4822, 0
    %v4854 = vsel %vm1298, %v4823, 0
    %v4857 = vsel %vm1298, %v4824, 0
    %v4860 = vsel %vm1298, %v4825, 0
    %v4863 = vsel %vm1298, %v4826, 0
    %v4866 = vsel %vm1298, %v4827, 0
    %v4869 = vsel %vm1298, %v4828, 0
    %v4872 = vsel %vm1298, %v4829, 0
    %v4875 = vsel %vm1298, %v4830, 0
    %v4878 = vsel %vm1298, %v4831, 0
    %4880 = vmatprep.subr.mxu0 0.0
    %4881 = vmatpush1.msra.mxu0 %v4782
    %4882 = vmatprep.subr.mxu0 0.0
    %4883 = vmatpush1.msra.mxu0 %v4787
    %4884 = vmatprep.subr.mxu0 0.0
    %4885 = vmatpush1.msra.mxu0 %v4792
    %4886 = vmatprep.subr.mxu0 0.0
    %4887 = vmatpush1.msra.mxu0 %v4797
    %4888 = vmatprep.subr.mxu0 0.0
    %4889 = vmatpush1.msra.mxu0 0.0
    %4890 = vmatprep.subr.mxu0 0.0
    %4891 = vmatpush1.msra.mxu0 0.0
    %4892 = vmatprep.subr.mxu0 0.0
    %4893 = vmatpush1.msra.mxu0 0.0
    %4894 = vmatprep.subr.mxu0 0.0
    %4895 = vmatpush1.msra.mxu0 0.0
    %4896 = vmatprep.subr.mxu0 0.0
    %4897 = vmatpush1.msra.mxu0 0.0
    %4898 = vmatprep.subr.mxu0 0.0
    %4899 = vmatpush1.msra.mxu0 0.0
    %4900 = vmatprep.subr.mxu0 0.0
    %4901 = vmatpush1.msra.mxu0 0.0
    %4902 = vmatprep.subr.mxu0 0.0
    %4903 = vmatpush1.msra.mxu0 0.0
    %4904 = vmatprep.subr.mxu0 0.0
    %4905 = vmatpush1.msra.mxu0 0.0
    %4906 = vmatprep.subr.mxu0 0.0
    %4907 = vmatpush1.msra.mxu0 0.0
    %4908 = vmatprep.subr.mxu0 0.0
    %4909 = vmatpush1.msra.mxu0 0.0
    %4910 = vmatprep.subr.mxu0 0.0
    %4911 = vmatpush1.msra.mxu0 0.0
    %4912 = vmatprep.subr.mxu0 0.0
    %4913 = vmatpush1.msra.mxu0 0.0
    %4914 = vmatprep.subr.mxu0 0.0
    %4915 = vmatpush1.msra.mxu0 0.0
    %4916 = vmatprep.subr.mxu0 0.0
    %4917 = vmatpush1.msra.mxu0 0.0
    %4918 = vmatprep.subr.mxu0 0.0
    %4919 = vmatpush1.msra.mxu0 0.0
    %4920 = vmatprep.subr.mxu0 0.0
    %4921 = vmatpush1.msra.mxu0 0.0
    %4922 = vmatprep.subr.mxu0 0.0
    %4923 = vmatpush1.msra.mxu0 0.0
    %4924 = vmatprep.subr.mxu0 0.0
    %4925 = vmatpush1.msra.mxu0 0.0
    %4926 = vmatprep.subr.mxu0 0.0
    %4927 = vmatpush1.msra.mxu0 0.0
    %4928 = vmatprep.subr.mxu0 0.0
    %4929 = vmatpush1.msra.mxu0 0.0
    %4930 = vmatprep.subr.mxu0 0.0
    %4931 = vmatpush1.msra.mxu0 0.0
    %4932 = vmatprep.subr.mxu0 0.0
    %4933 = vmatpush1.msra.mxu0 0.0
    %4934 = vmatprep.subr.mxu0 0.0
    %4935 = vmatpush1.msra.mxu0 0.0
    %4936 = vmatprep.subr.mxu0 0.0
    %4937 = vmatpush1.msra.mxu0 0.0
    %4938 = vmatprep.subr.mxu0 0.0
    %4939 = vmatpush1.msra.mxu0 0.0
    %4940 = vmatprep.subr.mxu0 0.0
    %4941 = vmatpush1.msra.mxu0 0.0
    %4942 = vmatprep.subr.mxu0 0.0
    %4943 = vmatpush1.msra.mxu0 0.0
    %4944 = vmatprep.mubr.f32.mxu0 0.0
    %4945 = vmatmul.mubr.f32.gmra.mrb[0].mxu0 %v4833
    %v4946 = vpop.f32.mrb[0].mxu0
    %v4947 = vadd.f32 0.0, %v4946
    %v4948 = vpop.f32.mrb[0].mxu0
    %4949 = vmatprep.mubr.f32.mxu0 0.0
    %4950 = vmatmul.mubr.f32.gmra.mrb[0].mxu0 %v4836
    %v4951 = vpop.f32.mrb[0].mxu0
    %v4952 = vadd.f32 0.0, %v4951
    %v4953 = vpop.f32.mrb[0].mxu0
    %4954 = vmatprep.mubr.f32.mxu0 0.0
    %4955 = vmatmul.mubr.f32.gmra.mrb[0].mxu0 %v4839
    %v4956 = vpop.f32.mrb[0].mxu0
    %v4957 = vadd.f32 0.0, %v4956
    %v4958 = vpop.f32.mrb[0].mxu0
    %4959 = vmatprep.mubr.f32.mxu0 0.0
    %4960 = vmatmul.mubr.f32.gmra.mrb[0].mxu0 %v4842
    %v4961 = vpop.f32.mrb[0].mxu0
    %v4962 = vadd.f32 0.0, %v4961
    %v4963 = vpop.f32.mrb[0].mxu0
    %4964 = vmatprep.mubr.f32.mxu0 0.0
    %4965 = vmatmul.mubr.f32.gmra.mrb[0].mxu0 %v4845
    %v4966 = vpop.f32.mrb[0].mxu0
    %v4967 = vadd.f32 0.0, %v4966
    %v4968 = vpop.f32.mrb[0].mxu0
    %4969 = vmatprep.mubr.f32.mxu0 0.0
    %4970 = vmatmul.mubr.f32.gmra.mrb[0].mxu0 %v4848
    %v4971 = vpop.f32.mrb[0].mxu0
    %v4972 = vadd.f32 0.0, %v4971
    %v4973 = vpop.f32.mrb[0].mxu0
    %4974 = vmatprep.mubr.f32.mxu0 0.0
    %4975 = vmatmul.mubr.f32.gmra.mrb[0].mxu0 %v4851
    %v4976 = vpop.f32.mrb[0].mxu0
    %v4977 = vadd.f32 0.0, %v4976
    %v4978 = vpop.f32.mrb[0].mxu0
    %4979 = vmatprep.mubr.f32.mxu0 0.0
    %4980 = vmatmul.mubr.f32.gmra.mrb[0].mxu0 %v4854
    %v4981 = vpop.f32.mrb[0].mxu0
    %v4982 = vadd.f32 0.0, %v4981
    %v4983 = vpop.f32.mrb[0].mxu0
    %4984 = vmatprep.mubr.f32.mxu0 0.0
    %4985 = vmatmul.mubr.f32.gmra.mrb[0].mxu0 %v4857
    %v4986 = vpop.f32.mrb[0].mxu0
    %v4987 = vadd.f32 0.0, %v4986
    %v4988 = vpop.f32.mrb[0].mxu0
    %4989 = vmatprep.mubr.f32.mxu0 0.0
    %4990 = vmatmul.mubr.f32.gmra.mrb[0].mxu0 %v4860
    %v4991 = vpop.f32.mrb[0].mxu0
    %v4992 = vadd.f32 0.0, %v4991
    %v4993 = vpop.f32.mrb[0].mxu0
    %4994 = vmatprep.mubr.f32.mxu0 0.0
    %4995 = vmatmul.mubr.f32.gmra.mrb[0].mxu0 %v4863
    %v4996 = vpop.f32.mrb[0].mxu0
    %v4997 = vadd.f32 0.0, %v4996
    %v4998 = vpop.f32.mrb[0].mxu0
    %4999 = vmatprep.mubr.f32.mxu0 0.0
    %5000 = vmatmul.mubr.f32.gmra.mrb[0].mxu0 %v4866
    %v5001 = vpop.f32.mrb[0].mxu0
    %v5002 = vadd.f32 0.0, %v5001
    %v5003 = vpop.f32.mrb[0].mxu0
    %5004 = vmatprep.mubr.f32.mxu0 0.0
    %5005 = vmatmul.mubr.f32.gmra.mrb[0].mxu0 %v4869
    %v5006 = vpop.f32.mrb[0].mxu0
    %v5007 = vadd.f32 0.0, %v5006
    %v5008 = vpop.f32.mrb[0].mxu0
    %5009 = vmatprep.mubr.f32.mxu0 0.0
    %5010 = vmatmul.mubr.f32.gmra.mrb[0].mxu0 %v4872
    %v5011 = vpop.f32.mrb[0].mxu0
    %v5012 = vadd.f32 0.0, %v5011
    %v5013 = vpop.f32.mrb[0].mxu0
    %5014 = vmatprep.mubr.f32.mxu0 0.0
    %5015 = vmatmul.mubr.f32.gmra.mrb[0].mxu0 %v4875
    %v5016 = vpop.f32.mrb[0].mxu0
    %v5017 = vadd.f32 0.0, %v5016
    %v5018 = vpop.f32.mrb[0].mxu0
    %5019 = vmatprep.mubr.f32.mxu0 0.0
    %5020 = vmatmul.mubr.f32.gmra.mrb[0].mxu0 %v4878
    %v5021 = vpop.f32.mrb[0].mxu0
    %v5022 = vadd.f32 0.0, %v5021
    %v5023 = vpop.f32.mrb[0].mxu0
    %5024 = vdwg.mxu0
    %v5026 = vsel %vm1298, %v4800, 0
    %v5029 = vsel %vm1298, %v4801, 0
    %v5032 = vsel %vm1298, %v4802, 0
    %v5035 = vsel %vm1298, %v4803, 0
    %v5038 = vsel %vm1298, %v4804, 0
    %v5041 = vsel %vm1298, %v4805, 0
    %v5044 = vsel %vm1298, %v4806, 0
    %v5047 = vsel %vm1298, %v4807, 0
    %v5050 = vsel %vm1298, %v4808, 0
    %v5053 = vsel %vm1298, %v4809, 0
    %v5056 = vsel %vm1298, %v4810, 0
    %v5059 = vsel %vm1298, %v4811, 0
    %v5062 = vsel %vm1298, %v4812, 0
    %v5065 = vsel %vm1298, %v4813, 0
    %v5068 = vsel %vm1298, %v4814, 0
    %v5071 = vsel %vm1298, %v4815, 0
    %5073 = vmatprep.subr.mxu0 0.0
    %5074 = vmatpush1.msra.mxu0 %v2086
    %5075 = vmatprep.subr.mxu0 0.0
    %5076 = vmatpush1.msra.mxu0 %v2087
    %5077 = vmatprep.subr.mxu0 0.0
    %5078 = vmatpush1.msra.mxu0 %v2088
    %5079 = vmatprep.subr.mxu0 0.0
    %5080 = vmatpush1.msra.mxu0 %v2089
    %5081 = vmatprep.subr.mxu0 0.0
    %5082 = vmatpush1.msra.mxu0 0.0
    %5083 = vmatprep.subr.mxu0 0.0
    %5084 = vmatpush1.msra.mxu0 0.0
    %5085 = vmatprep.subr.mxu0 0.0
    %5086 = vmatpush1.msra.mxu0 0.0
    %5087 = vmatprep.subr.mxu0 0.0
    %5088 = vmatpush1.msra.mxu0 0.0
    %5089 = vmatprep.subr.mxu0 0.0
    %5090 = vmatpush1.msra.mxu0 0.0
    %5091 = vmatprep.subr.mxu0 0.0
    %5092 = vmatpush1.msra.mxu0 0.0
    %5093 = vmatprep.subr.mxu0 0.0
    %5094 = vmatpush1.msra.mxu0 0.0
    %5095 = vmatprep.subr.mxu0 0.0
    %5096 = vmatpush1.msra.mxu0 0.0
    %5097 = vmatprep.subr.mxu0 0.0
    %5098 = vmatpush1.msra.mxu0 0.0
    %5099 = vmatprep.subr.mxu0 0.0
    %5100 = vmatpush1.msra.mxu0 0.0
    %5101 = vmatprep.subr.mxu0 0.0
    %5102 = vmatpush1.msra.mxu0 0.0
    %5103 = vmatprep.subr.mxu0 0.0
    %5104 = vmatpush1.msra.mxu0 0.0
    %5105 = vmatprep.subr.mxu0 0.0
    %5106 = vmatpush1.msra.mxu0 0.0
    %5107 = vmatprep.subr.mxu0 0.0
    %5108 = vmatpush1.msra.mxu0 0.0
    %5109 = vmatprep.subr.mxu0 0.0
    %5110 = vmatpush1.msra.mxu0 0.0
    %5111 = vmatprep.subr.mxu0 0.0
    %5112 = vmatpush1.msra.mxu0 0.0
    %5113 = vmatprep.subr.mxu0 0.0
    %5114 = vmatpush1.msra.mxu0 0.0
    %5115 = vmatprep.subr.mxu0 0.0
    %5116 = vmatpush1.msra.mxu0 0.0
    %5117 = vmatprep.subr.mxu0 0.0
    %5118 = vmatpush1.msra.mxu0 0.0
    %5119 = vmatprep.subr.mxu0 0.0
    %5120 = vmatpush1.msra.mxu0 0.0
    %5121 = vmatprep.subr.mxu0 0.0
    %5122 = vmatpush1.msra.mxu0 0.0
    %5123 = vmatprep.subr.mxu0 0.0
    %5124 = vmatpush1.msra.mxu0 0.0
    %5125 = vmatprep.subr.mxu0 0.0
    %5126 = vmatpush1.msra.mxu0 0.0
    %5127 = vmatprep.subr.mxu0 0.0
    %5128 = vmatpush1.msra.mxu0 0.0
    %5129 = vmatprep.subr.mxu0 0.0
    %5130 = vmatpush1.msra.mxu0 0.0
    %5131 = vmatprep.subr.mxu0 0.0
    %5132 = vmatpush1.msra.mxu0 0.0
    %5133 = vmatprep.subr.mxu0 0.0
    %5134 = vmatpush1.msra.mxu0 0.0
    %5135 = vmatprep.subr.mxu0 0.0
    %5136 = vmatpush1.msra.mxu0 0.0
    %5137 = vmatprep.mubr.f32.mxu0 0.0
    %5138 = vmatmul.mubr.f32.gmra.mrb[0].mxu0 %v5026
    %v5139 = vpop.f32.mrb[0].mxu0
    %v5140 = vadd.f32 %v4947, %v5139
    %v5141 = vpop.f32.mrb[0].mxu0
    %5142 = vmatprep.mubr.f32.mxu0 0.0
    %5143 = vmatmul.mubr.f32.gmra.mrb[0].mxu0 %v5029
    %v5144 = vpop.f32.mrb[0].mxu0
    %v5145 = vadd.f32 %v4952, %v5144
    %v5146 = vpop.f32.mrb[0].mxu0
    %5147 = vmatprep.mubr.f32.mxu0 0.0
    %5148 = vmatmul.mubr.f32.gmra.mrb[0].mxu0 %v5032
    %v5149 = vpop.f32.mrb[0].mxu0
    %v5150 = vadd.f32 %v4957, %v5149
    %v5151 = vpop.f32.mrb[0].mxu0
    %5152 = vmatprep.mubr.f32.mxu0 0.0
    %5153 = vmatmul.mubr.f32.gmra.mrb[0].mxu0 %v5035
    %v5154 = vpop.f32.mrb[0].mxu0
    %v5155 = vadd.f32 %v4962, %v5154
    %v5156 = vpop.f32.mrb[0].mxu0
    %5157 = vmatprep.mubr.f32.mxu0 0.0
    %5158 = vmatmul.mubr.f32.gmra.mrb[0].mxu0 %v5038
    %v5159 = vpop.f32.mrb[0].mxu0
    %v5160 = vadd.f32 %v4967, %v5159
    %v5161 = vpop.f32.mrb[0].mxu0
    %5162 = vmatprep.mubr.f32.mxu0 0.0
    %5163 = vmatmul.mubr.f32.gmra.mrb[0].mxu0 %v5041
    %v5164 = vpop.f32.mrb[0].mxu0
    %v5165 = vadd.f32 %v4972, %v5164
    %v5166 = vpop.f32.mrb[0].mxu0
    %5167 = vmatprep.mubr.f32.mxu0 0.0
    %5168 = vmatmul.mubr.f32.gmra.mrb[0].mxu0 %v5044
    %v5169 = vpop.f32.mrb[0].mxu0
    %v5170 = vadd.f32 %v4977, %v5169
    %v5171 = vpop.f32.mrb[0].mxu0
    %5172 = vmatprep.mubr.f32.mxu0 0.0
    %5173 = vmatmul.mubr.f32.gmra.mrb[0].mxu0 %v5047
    %v5174 = vpop.f32.mrb[0].mxu0
    %v5175 = vadd.f32 %v4982, %v5174
    %v5176 = vpop.f32.mrb[0].mxu0
    %5177 = vmatprep.mubr.f32.mxu0 0.0
    %5178 = vmatmul.mubr.f32.gmra.mrb[0].mxu0 %v5050
    %v5179 = vpop.f32.mrb[0].mxu0
    %v5180 = vadd.f32 %v4987, %v5179
    %v5181 = vpop.f32.mrb[0].mxu0
    %5182 = vmatprep.mubr.f32.mxu0 0.0
    %5183 = vmatmul.mubr.f32.gmra.mrb[0].mxu0 %v5053
    %v5184 = vpop.f32.mrb[0].mxu0
    %v5185 = vadd.f32 %v4992, %v5184
    %v5186 = vpop.f32.mrb[0].mxu0
    %5187 = vmatprep.mubr.f32.mxu0 0.0
    %5188 = vmatmul.mubr.f32.gmra.mrb[0].mxu0 %v5056
    %v5189 = vpop.f32.mrb[0].mxu0
    %v5190 = vadd.f32 %v4997, %v5189
    %v5191 = vpop.f32.mrb[0].mxu0
    %5192 = vmatprep.mubr.f32.mxu0 0.0
    %5193 = vmatmul.mubr.f32.gmra.mrb[0].mxu0 %v5059
    %v5194 = vpop.f32.mrb[0].mxu0
    %v5195 = vadd.f32 %v5002, %v5194
    %v5196 = vpop.f32.mrb[0].mxu0
    %5197 = vmatprep.mubr.f32.mxu0 0.0
    %5198 = vmatmul.mubr.f32.gmra.mrb[0].mxu0 %v5062
    %v5199 = vpop.f32.mrb[0].mxu0
    %v5200 = vadd.f32 %v5007, %v5199
    %v5201 = vpop.f32.mrb[0].mxu0
    %5202 = vmatprep.mubr.f32.mxu0 0.0
    %5203 = vmatmul.mubr.f32.gmra.mrb[0].mxu0 %v5065
    %v5204 = vpop.f32.mrb[0].mxu0
    %v5205 = vadd.f32 %v5012, %v5204
    %v5206 = vpop.f32.mrb[0].mxu0
    %5207 = vmatprep.mubr.f32.mxu0 0.0
    %5208 = vmatmul.mubr.f32.gmra.mrb[0].mxu0 %v5068
    %v5209 = vpop.f32.mrb[0].mxu0
    %v5210 = vadd.f32 %v5017, %v5209
    %v5211 = vpop.f32.mrb[0].mxu0
    %5212 = vmatprep.mubr.f32.mxu0 0.0
    %5213 = vmatmul.mubr.f32.gmra.mrb[0].mxu0 %v5071
    %v5214 = vpop.f32.mrb[0].mxu0
    %v5215 = vadd.f32 %v5022, %v5214
    %v5216 = vpop.f32.mrb[0].mxu0
    %5217 = vdwg.mxu0
    %v5218 = vld [vmem:[#allocation5 + $0x720] sm:$0xff]
    %v5219 = vld [vmem:[#allocation5 + $0x728] sm:$0xff]
    %v5220 = vld [vmem:[#allocation5 + $0x730] sm:$0xff]
    %v5221 = vld [vmem:[#allocation5 + $0x738] sm:$0xff]
    %v5222 = vld [vmem:[#allocation5 + $0x740] sm:$0xff]
    %v5223 = vld [vmem:[#allocation5 + $0x748] sm:$0xff]
    %v5224 = vld [vmem:[#allocation5 + $0x750] sm:$0xff]
    %v5225 = vld [vmem:[#allocation5 + $0x758] sm:$0xff]
    %v5226 = vld [vmem:[#allocation5 + $0x760] sm:$0xff]
    %v5227 = vld [vmem:[#allocation5 + $0x768] sm:$0xff]
    %v5228 = vld [vmem:[#allocation5 + $0x770] sm:$0xff]
    %v5229 = vld [vmem:[#allocation5 + $0x778] sm:$0xff]
    %v5230 = vld [vmem:[#allocation5 + $0x780] sm:$0xff]
    %v5231 = vld [vmem:[#allocation5 + $0x788] sm:$0xff]
    %v5232 = vld [vmem:[#allocation5 + $0x790] sm:$0xff]
    %v5233 = vld [vmem:[#allocation5 + $0x798] sm:$0xff]
    %5235 = vset.pattern.permute.xlu0 0
    %5236 = vperm.xlu0 %5235, %v5218
    %v5237 = vpop.permute.xlu0 %5236
    %5240 = vset.pattern.permute.xlu0 0
    %5241 = vperm.xlu0 %5240, %v5219
    %v5242 = vpop.permute.xlu0 %5241
    %5245 = vset.pattern.permute.xlu0 0
    %5246 = vperm.xlu0 %5245, %v5220
    %v5247 = vpop.permute.xlu0 %5246
    %5250 = vset.pattern.permute.xlu0 0
    %5251 = vperm.xlu0 %5250, %v5221
    %v5252 = vpop.permute.xlu0 %5251
    %5255 = vset.pattern.permute.xlu0 0
    %5256 = vperm.xlu0 %5255, %v5222
    %v5257 = vpop.permute.xlu0 %5256
    %5260 = vset.pattern.permute.xlu0 0
    %5261 = vperm.xlu0 %5260, %v5223
    %v5262 = vpop.permute.xlu0 %5261
    %5265 = vset.pattern.permute.xlu0 0
    %5266 = vperm.xlu0 %5265, %v5224
    %v5267 = vpop.permute.xlu0 %5266
    %5270 = vset.pattern.permute.xlu0 0
    %5271 = vperm.xlu0 %5270, %v5225
    %v5272 = vpop.permute.xlu0 %5271
    %5275 = vset.pattern.permute.xlu0 0
    %5276 = vperm.xlu0 %5275, %v5226
    %v5277 = vpop.permute.xlu0 %5276
    %5280 = vset.pattern.permute.xlu0 0
    %5281 = vperm.xlu0 %5280, %v5227
    %v5282 = vpop.permute.xlu0 %5281
    %5285 = vset.pattern.permute.xlu0 0
    %5286 = vperm.xlu0 %5285, %v5228
    %v5287 = vpop.permute.xlu0 %5286
    %5290 = vset.pattern.permute.xlu0 0
    %5291 = vperm.xlu0 %5290, %v5229
    %v5292 = vpop.permute.xlu0 %5291
    %5295 = vset.pattern.permute.xlu0 0
    %5296 = vperm.xlu0 %5295, %v5230
    %v5297 = vpop.permute.xlu0 %5296
    %5300 = vset.pattern.permute.xlu0 0
    %5301 = vperm.xlu0 %5300, %v5231
    %v5302 = vpop.permute.xlu0 %5301
    %5305 = vset.pattern.permute.xlu0 0
    %5306 = vperm.xlu0 %5305, %v5232
    %v5307 = vpop.permute.xlu0 %5306
    %5310 = vset.pattern.permute.xlu0 0
    %5311 = vperm.xlu0 %5310, %v5233
    %v5312 = vpop.permute.xlu0 %5311
    %v5314 = vadd.f32 %v5140, %v5237
    %v5315 = vadd.f32 %v5145, %v5242
    %v5316 = vadd.f32 %v5150, %v5247
    %v5317 = vadd.f32 %v5155, %v5252
    %v5318 = vadd.f32 %v5160, %v5257
    %v5319 = vadd.f32 %v5165, %v5262
    %v5320 = vadd.f32 %v5170, %v5267
    %v5321 = vadd.f32 %v5175, %v5272
    %v5322 = vadd.f32 %v5180, %v5277
    %v5323 = vadd.f32 %v5185, %v5282
    %v5324 = vadd.f32 %v5190, %v5287
    %v5325 = vadd.f32 %v5195, %v5292
    %v5326 = vadd.f32 %v5200, %v5297
    %v5327 = vadd.f32 %v5205, %v5302
    %v5328 = vadd.f32 %v5210, %v5307
    %v5329 = vadd.f32 %v5215, %v5312
    %v5330 = vxor.u32 %v5322, 2147483648
    %v5331 = vxor.u32 %v5323, 2147483648
    %v5332 = vxor.u32 %v5324, 2147483648
    %v5333 = vxor.u32 %v5325, 2147483648
    %v5334 = vxor.u32 %v5326, 2147483648
    %v5335 = vxor.u32 %v5327, 2147483648
    %v5336 = vxor.u32 %v5328, 2147483648
    %v5337 = vxor.u32 %v5329, 2147483648
    %v5338 = vmul.f32 %v5330, 1.442695
    %v5339 = vpow.pop %v5338
    %v5340 = vmul.f32 %v5331, 1.442695
    %v5341 = vpow.pop %v5340
    %v5342 = vmul.f32 %v5332, 1.442695
    %v5343 = vpow.pop %v5342
    %v5344 = vmul.f32 %v5333, 1.442695
    %v5345 = vpow.pop %v5344
    %v5346 = vmul.f32 %v5334, 1.442695
    %v5347 = vpow.pop %v5346
    %v5348 = vmul.f32 %v5335, 1.442695
    %v5349 = vpow.pop %v5348
    %v5350 = vmul.f32 %v5336, 1.442695
    %v5351 = vpow.pop %v5350
    %v5352 = vmul.f32 %v5337, 1.442695
    %v5353 = vpow.pop %v5352
    %v5354 = vadd.f32 %v5339, 1.0
    %v5355 = vadd.f32 %v5341, 1.0
    %v5356 = vadd.f32 %v5343, 1.0
    %v5357 = vadd.f32 %v5345, 1.0
    %v5358 = vadd.f32 %v5347, 1.0
    %v5359 = vadd.f32 %v5349, 1.0
    %v5360 = vadd.f32 %v5351, 1.0
    %v5361 = vadd.f32 %v5353, 1.0
    %v5362 = vrcp.pop %v5354
    %v5363 = vmul.f32 1.0, %v5362
    %v5364 = vrcp.pop %v5355
    %v5365 = vmul.f32 1.0, %v5364
    %v5366 = vrcp.pop %v5356
    %v5367 = vmul.f32 1.0, %v5366
    %v5368 = vrcp.pop %v5357
    %v5369 = vmul.f32 1.0, %v5368
    %v5370 = vrcp.pop %v5358
    %v5371 = vmul.f32 1.0, %v5370
    %v5372 = vrcp.pop %v5359
    %v5373 = vmul.f32 1.0, %v5372
    %v5374 = vrcp.pop %v5360
    %v5375 = vmul.f32 1.0, %v5374
    %v5376 = vrcp.pop %v5361
    %v5377 = vmul.f32 1.0, %v5376
    %v5378 = vmul.f32 %v5314, %v5363
    %v5379 = vmul.f32 %v5315, %v5365
    %v5380 = vmul.f32 %v5316, %v5367
    %v5381 = vmul.f32 %v5317, %v5369
    %v5382 = vmul.f32 %v5318, %v5371
    %v5383 = vmul.f32 %v5319, %v5373
    %v5384 = vmul.f32 %v5320, %v5375
    %v5385 = vmul.f32 %v5321, %v5377
    %v5386 = vld [vmem:[#allocation5 + $0x7e0] sm:$0xff]
    %v5387 = vld [vmem:[#allocation5 + $0x7e8] sm:$0xff]
    %v5389 = vsel %vm1178, %v5378, 0
    %v5392 = vsel %vm1178, %v5379, 0
    %v5395 = vsel %vm1178, %v5380, 0
    %v5398 = vsel %vm1178, %v5381, 0
    %v5401 = vsel %vm1178, %v5382, 0
    %v5404 = vsel %vm1178, %v5383, 0
    %v5407 = vsel %vm1178, %v5384, 0
    %v5410 = vsel %vm1178, %v5385, 0
    %5412 = vmatprep.subr.mxu0 0.0
    %5413 = vmatpush1.msra.mxu0 %v5386
    %5414 = vmatprep.subr.mxu0 0.0
    %5415 = vmatpush1.msra.mxu0 %v5387
    %5416 = vmatprep.subr.mxu0 0.0
    %5417 = vmatpush1.msra.mxu0 0.0
    %5418 = vmatprep.subr.mxu0 0.0
    %5419 = vmatpush1.msra.mxu0 0.0
    %5420 = vmatprep.subr.mxu0 0.0
    %5421 = vmatpush1.msra.mxu0 0.0
    %5422 = vmatprep.subr.mxu0 0.0
    %5423 = vmatpush1.msra.mxu0 0.0
    %5424 = vmatprep.subr.mxu0 0.0
    %5425 = vmatpush1.msra.mxu0 0.0
    %5426 = vmatprep.subr.mxu0 0.0
    %5427 = vmatpush1.msra.mxu0 0.0
    %5428 = vmatprep.subr.mxu0 0.0
    %5429 = vmatpush1.msra.mxu0 0.0
    %5430 = vmatprep.subr.mxu0 0.0
    %5431 = vmatpush1.msra.mxu0 0.0
    %5432 = vmatprep.subr.mxu0 0.0
    %5433 = vmatpush1.msra.mxu0 0.0
    %5434 = vmatprep.subr.mxu0 0.0
    %5435 = vmatpush1.msra.mxu0 0.0
    %5436 = vmatprep.subr.mxu0 0.0
    %5437 = vmatpush1.msra.mxu0 0.0
    %5438 = vmatprep.subr.mxu0 0.0
    %5439 = vmatpush1.msra.mxu0 0.0
    %5440 = vmatprep.subr.mxu0 0.0
    %5441 = vmatpush1.msra.mxu0 0.0
    %5442 = vmatprep.subr.mxu0 0.0
    %5443 = vmatpush1.msra.mxu0 0.0
    %5444 = vmatprep.subr.mxu0 0.0
    %5445 = vmatpush1.msra.mxu0 0.0
    %5446 = vmatprep.subr.mxu0 0.0
    %5447 = vmatpush1.msra.mxu0 0.0
    %5448 = vmatprep.subr.mxu0 0.0
    %5449 = vmatpush1.msra.mxu0 0.0
    %5450 = vmatprep.subr.mxu0 0.0
    %5451 = vmatpush1.msra.mxu0 0.0
    %5452 = vmatprep.subr.mxu0 0.0
    %5453 = vmatpush1.msra.mxu0 0.0
    %5454 = vmatprep.subr.mxu0 0.0
    %5455 = vmatpush1.msra.mxu0 0.0
    %5456 = vmatprep.subr.mxu0 0.0
    %5457 = vmatpush1.msra.mxu0 0.0
    %5458 = vmatprep.subr.mxu0 0.0
    %5459 = vmatpush1.msra.mxu0 0.0
    %5460 = vmatprep.subr.mxu0 0.0
    %5461 = vmatpush1.msra.mxu0 0.0
    %5462 = vmatprep.subr.mxu0 0.0
    %5463 = vmatpush1.msra.mxu0 0.0
    %5464 = vmatprep.subr.mxu0 0.0
    %5465 = vmatpush1.msra.mxu0 0.0
    %5466 = vmatprep.subr.mxu0 0.0
    %5467 = vmatpush1.msra.mxu0 0.0
    %5468 = vmatprep.subr.mxu0 0.0
    %5469 = vmatpush1.msra.mxu0 0.0
    %5470 = vmatprep.subr.mxu0 0.0
    %5471 = vmatpush1.msra.mxu0 0.0
    %5472 = vmatprep.subr.mxu0 0.0
    %5473 = vmatpush1.msra.mxu0 0.0
    %5474 = vmatprep.subr.mxu0 0.0
    %5475 = vmatpush1.msra.mxu0 0.0
    %5476 = vmatprep.mubr.f32.mxu0 0.0
    %5477 = vmatmul.mubr.f32.gmra.mrb[0].mxu0 %v5389
    %v5478 = vpop.f32.mrb[0].mxu0
    %v5479 = vadd.f32 0.0, %v5478
    %v5480 = vpop.f32.mrb[0].mxu0
    %5481 = vmatprep.mubr.f32.mxu0 0.0
    %5482 = vmatmul.mubr.f32.gmra.mrb[0].mxu0 %v5392
    %v5483 = vpop.f32.mrb[0].mxu0
    %v5484 = vadd.f32 0.0, %v5483
    %v5485 = vpop.f32.mrb[0].mxu0
    %5486 = vmatprep.mubr.f32.mxu0 0.0
    %5487 = vmatmul.mubr.f32.gmra.mrb[0].mxu0 %v5395
    %v5488 = vpop.f32.mrb[0].mxu0
    %v5489 = vadd.f32 0.0, %v5488
    %v5490 = vpop.f32.mrb[0].mxu0
    %5491 = vmatprep.mubr.f32.mxu0 0.0
    %5492 = vmatmul.mubr.f32.gmra.mrb[0].mxu0 %v5398
    %v5493 = vpop.f32.mrb[0].mxu0
    %v5494 = vadd.f32 0.0, %v5493
    %v5495 = vpop.f32.mrb[0].mxu0
    %5496 = vmatprep.mubr.f32.mxu0 0.0
    %5497 = vmatmul.mubr.f32.gmra.mrb[0].mxu0 %v5401
    %v5498 = vpop.f32.mrb[0].mxu0
    %v5499 = vadd.f32 0.0, %v5498
    %v5500 = vpop.f32.mrb[0].mxu0
    %5501 = vmatprep.mubr.f32.mxu0 0.0
    %5502 = vmatmul.mubr.f32.gmra.mrb[0].mxu0 %v5404
    %v5503 = vpop.f32.mrb[0].mxu0
    %v5504 = vadd.f32 0.0, %v5503
    %v5505 = vpop.f32.mrb[0].mxu0
    %5506 = vmatprep.mubr.f32.mxu0 0.0
    %5507 = vmatmul.mubr.f32.gmra.mrb[0].mxu0 %v5407
    %v5508 = vpop.f32.mrb[0].mxu0
    %v5509 = vadd.f32 0.0, %v5508
    %v5510 = vpop.f32.mrb[0].mxu0
    %5511 = vmatprep.mubr.f32.mxu0 0.0
    %5512 = vmatmul.mubr.f32.gmra.mrb[0].mxu0 %v5410
    %v5513 = vpop.f32.mrb[0].mxu0
    %v5514 = vadd.f32 0.0, %v5513
    %v5515 = vpop.f32.mrb[0].mxu0
    %5516 = vdwg.mxu0
    %v5517 = vld [vmem:[#allocation5 + $0x7d0] sm:$0xff]
    %v5518 = vld [vmem:[#allocation5 + $0x7d8] sm:$0xff]
    %v5519 = vld [vmem:[#allocation5 + $0x7b0] sm:$0xff]
    %v5520 = vld [vmem:[#allocation5 + $0x7b8] sm:$0xff]
    %5522 = vset.pattern.permute.xlu0 0
    %5523 = vperm.xlu0 %5522, %v5517
    %v5524 = vpop.permute.xlu0 %5523
    %5527 = vset.pattern.permute.xlu0 0
    %5528 = vperm.xlu0 %5527, %v5518
    %v5529 = vpop.permute.xlu0 %5528
    %v5532 = vsel %vm653, %v5519, 0
    %v5535 = vsel %vm653, %v5520, 0
    %5537 = vmatprep.subr.mxu0 0.0
    %5538 = vmatpush1.msra.mxu0 %v5378
    %5539 = vmatprep.subr.mxu0 0.0
    %5540 = vmatpush1.msra.mxu0 %v5379
    %5541 = vmatprep.subr.mxu0 0.0
    %5542 = vmatpush1.msra.mxu0 %v5380
    %5543 = vmatprep.subr.mxu0 0.0
    %5544 = vmatpush1.msra.mxu0 %v5381
    %5545 = vmatprep.subr.mxu0 0.0
    %5546 = vmatpush1.msra.mxu0 %v5382
    %5547 = vmatprep.subr.mxu0 0.0
    %5548 = vmatpush1.msra.mxu0 %v5383
    %5549 = vmatprep.subr.mxu0 0.0
    %5550 = vmatpush1.msra.mxu0 %v5384
    %5551 = vmatprep.subr.mxu0 0.0
    %5552 = vmatpush1.msra.mxu0 %v5385
    %5553 = vmatprep.subr.mxu0 0.0
    %5554 = vmatpush1.msra.mxu0 0.0
    %5555 = vmatprep.subr.mxu0 0.0
    %5556 = vmatpush1.msra.mxu0 0.0
    %5557 = vmatprep.subr.mxu0 0.0
    %5558 = vmatpush1.msra.mxu0 0.0
    %5559 = vmatprep.subr.mxu0 0.0
    %5560 = vmatpush1.msra.mxu0 0.0
    %5561 = vmatprep.subr.mxu0 0.0
    %5562 = vmatpush1.msra.mxu0 0.0
    %5563 = vmatprep.subr.mxu0 0.0
    %5564 = vmatpush1.msra.mxu0 0.0
    %5565 = vmatprep.subr.mxu0 0.0
    %5566 = vmatpush1.msra.mxu0 0.0
    %5567 = vmatprep.subr.mxu0 0.0
    %5568 = vmatpush1.msra.mxu0 0.0
    %5569 = vmatprep.subr.mxu0 0.0
    %5570 = vmatpush1.msra.mxu0 0.0
    %5571 = vmatprep.subr.mxu0 0.0
    %5572 = vmatpush1.msra.mxu0 0.0
    %5573 = vmatprep.subr.mxu0 0.0
    %5574 = vmatpush1.msra.mxu0 0.0
    %5575 = vmatprep.subr.mxu0 0.0
    %5576 = vmatpush1.msra.mxu0 0.0
    %5577 = vmatprep.subr.mxu0 0.0
    %5578 = vmatpush1.msra.mxu0 0.0
    %5579 = vmatprep.subr.mxu0 0.0
    %5580 = vmatpush1.msra.mxu0 0.0
    %5581 = vmatprep.subr.mxu0 0.0
    %5582 = vmatpush1.msra.mxu0 0.0
    %5583 = vmatprep.subr.mxu0 0.0
    %5584 = vmatpush1.msra.mxu0 0.0
    %5585 = vmatprep.subr.mxu0 0.0
    %5586 = vmatpush1.msra.mxu0 0.0
    %5587 = vmatprep.subr.mxu0 0.0
    %5588 = vmatpush1.msra.mxu0 0.0
    %5589 = vmatprep.subr.mxu0 0.0
    %5590 = vmatpush1.msra.mxu0 0.0
    %5591 = vmatprep.subr.mxu0 0.0
    %5592 = vmatpush1.msra.mxu0 0.0
    %5593 = vmatprep.subr.mxu0 0.0
    %5594 = vmatpush1.msra.mxu0 0.0
    %5595 = vmatprep.subr.mxu0 0.0
    %5596 = vmatpush1.msra.mxu0 0.0
    %5597 = vmatprep.subr.mxu0 0.0
    %5598 = vmatpush1.msra.mxu0 0.0
    %5599 = vmatprep.subr.mxu0 0.0
    %5600 = vmatpush1.msra.mxu0 0.0
    %5601 = vmatprep.mubr.f32.mxu0 0.0
    %5602 = vmatmul.mubr.f32.gmra.mrb[0].mxu0 %v5532
    %v5603 = vpop.f32.mrb[0].mxu0
    %v5604 = vadd.f32 %v5524, %v5603
    %v5605 = vpop.f32.mrb[0].mxu0
    %5606 = vmatprep.mubr.f32.mxu0 0.0
    %5607 = vmatmul.mubr.f32.gmra.mrb[0].mxu0 %v5535
    %v5608 = vpop.f32.mrb[0].mxu0
    %v5609 = vadd.f32 %v5529, %v5608
    %v5610 = vpop.f32.mrb[0].mxu0
    %5611 = vdwg.mxu0
    %v5612 = vmax.f32 %v5604, 0.0
    %v5613 = vmax.f32 %v5609, 0.0
    %v5614 = vld [vmem:[#allocation5 + $0x7c0] sm:$0xff]
    %v5615 = vld [vmem:[#allocation5 + $0x7c8] sm:$0xff]
    %v5616 = vld [vmem:[#allocation5 + $0x7a0] sm:$0xff]
    %v5617 = vld [vmem:[#allocation5 + $0x7a8] sm:$0xff]
    %v5619 = vsel %vm653, %v5616, 0
    %v5622 = vsel %vm653, %v5617, 0
    %5624 = vmatprep.subr.mxu0 0.0
    %5625 = vmatpush1.msra.mxu0 %v5479
    %5626 = vmatprep.subr.mxu0 0.0
    %5627 = vmatpush1.msra.mxu0 %v5484
    %5628 = vmatprep.subr.mxu0 0.0
    %5629 = vmatpush1.msra.mxu0 %v5489
    %5630 = vmatprep.subr.mxu0 0.0
    %5631 = vmatpush1.msra.mxu0 %v5494
    %5632 = vmatprep.subr.mxu0 0.0
    %5633 = vmatpush1.msra.mxu0 %v5499
    %5634 = vmatprep.subr.mxu0 0.0
    %5635 = vmatpush1.msra.mxu0 %v5504
    %5636 = vmatprep.subr.mxu0 0.0
    %5637 = vmatpush1.msra.mxu0 %v5509
    %5638 = vmatprep.subr.mxu0 0.0
    %5639 = vmatpush1.msra.mxu0 %v5514
    %5640 = vmatprep.subr.mxu0 0.0
    %5641 = vmatpush1.msra.mxu0 0.0
    %5642 = vmatprep.subr.mxu0 0.0
    %5643 = vmatpush1.msra.mxu0 0.0
    %5644 = vmatprep.subr.mxu0 0.0
    %5645 = vmatpush1.msra.mxu0 0.0
    %5646 = vmatprep.subr.mxu0 0.0
    %5647 = vmatpush1.msra.mxu0 0.0
    %5648 = vmatprep.subr.mxu0 0.0
    %5649 = vmatpush1.msra.mxu0 0.0
    %5650 = vmatprep.subr.mxu0 0.0
    %5651 = vmatpush1.msra.mxu0 0.0
    %5652 = vmatprep.subr.mxu0 0.0
    %5653 = vmatpush1.msra.mxu0 0.0
    %5654 = vmatprep.subr.mxu0 0.0
    %5655 = vmatpush1.msra.mxu0 0.0
    %5656 = vmatprep.subr.mxu0 0.0
    %5657 = vmatpush1.msra.mxu0 0.0
    %5658 = vmatprep.subr.mxu0 0.0
    %5659 = vmatpush1.msra.mxu0 0.0
    %5660 = vmatprep.subr.mxu0 0.0
    %5661 = vmatpush1.msra.mxu0 0.0
    %5662 = vmatprep.subr.mxu0 0.0
    %5663 = vmatpush1.msra.mxu0 0.0
    %5664 = vmatprep.subr.mxu0 0.0
    %5665 = vmatpush1.msra.mxu0 0.0
    %5666 = vmatprep.subr.mxu0 0.0
    %5667 = vmatpush1.msra.mxu0 0.0
    %5668 = vmatprep.subr.mxu0 0.0
    %5669 = vmatpush1.msra.mxu0 0.0
    %5670 = vmatprep.subr.mxu0 0.0
    %5671 = vmatpush1.msra.mxu0 0.0
    %5672 = vmatprep.subr.mxu0 0.0
    %5673 = vmatpush1.msra.mxu0 0.0
    %5674 = vmatprep.subr.mxu0 0.0
    %5675 = vmatpush1.msra.mxu0 0.0
    %5676 = vmatprep.subr.mxu0 0.0
    %5677 = vmatpush1.msra.mxu0 0.0
    %5678 = vmatprep.subr.mxu0 0.0
    %5679 = vmatpush1.msra.mxu0 0.0
    %5680 = vmatprep.subr.mxu0 0.0
    %5681 = vmatpush1.msra.mxu0 0.0
    %5682 = vmatprep.subr.mxu0 0.0
    %5683 = vmatpush1.msra.mxu0 0.0
    %5684 = vmatprep.subr.mxu0 0.0
    %5685 = vmatpush1.msra.mxu0 0.0
    %5686 = vmatprep.subr.mxu0 0.0
    %5687 = vmatpush1.msra.mxu0 0.0
    %5688 = vmatprep.mubr.f32.mxu0 0.0
    %5689 = vmatmul.mubr.f32.gmra.mrb[0].mxu0 %v5619
    %v5690 = vpop.f32.mrb[0].mxu0
    %v5691 = vadd.f32 0.0, %v5690
    %v5692 = vpop.f32.mrb[0].mxu0
    %5693 = vmatprep.mubr.f32.mxu0 0.0
    %5694 = vmatmul.mubr.f32.gmra.mrb[0].mxu0 %v5622
    %v5695 = vpop.f32.mrb[0].mxu0
    %v5696 = vadd.f32 0.0, %v5695
    %v5697 = vpop.f32.mrb[0].mxu0
    %5698 = vdwg.mxu0
    %v5700 = vsel %vm653, %v5614, 0
    %v5703 = vsel %vm653, %v5615, 0
    %5705 = vmatprep.subr.mxu0 0.0
    %5706 = vmatpush1.msra.mxu0 %v5378
    %5707 = vmatprep.subr.mxu0 0.0
    %5708 = vmatpush1.msra.mxu0 %v5379
    %5709 = vmatprep.subr.mxu0 0.0
    %5710 = vmatpush1.msra.mxu0 %v5380
    %5711 = vmatprep.subr.mxu0 0.0
    %5712 = vmatpush1.msra.mxu0 %v5381
    %5713 = vmatprep.subr.mxu0 0.0
    %5714 = vmatpush1.msra.mxu0 %v5382
    %5715 = vmatprep.subr.mxu0 0.0
    %5716 = vmatpush1.msra.mxu0 %v5383
    %5717 = vmatprep.subr.mxu0 0.0
    %5718 = vmatpush1.msra.mxu0 %v5384
    %5719 = vmatprep.subr.mxu0 0.0
    %5720 = vmatpush1.msra.mxu0 %v5385
    %5721 = vmatprep.subr.mxu0 0.0
    %5722 = vmatpush1.msra.mxu0 0.0
    %5723 = vmatprep.subr.mxu0 0.0
    %5724 = vmatpush1.msra.mxu0 0.0
    %5725 = vmatprep.subr.mxu0 0.0
    %5726 = vmatpush1.msra.mxu0 0.0
    %5727 = vmatprep.subr.mxu0 0.0
    %5728 = vmatpush1.msra.mxu0 0.0
    %5729 = vmatprep.subr.mxu0 0.0
    %5730 = vmatpush1.msra.mxu0 0.0
    %5731 = vmatprep.subr.mxu0 0.0
    %5732 = vmatpush1.msra.mxu0 0.0
    %5733 = vmatprep.subr.mxu0 0.0
    %5734 = vmatpush1.msra.mxu0 0.0
    %5735 = vmatprep.subr.mxu0 0.0
    %5736 = vmatpush1.msra.mxu0 0.0
    %5737 = vmatprep.subr.mxu0 0.0
    %5738 = vmatpush1.msra.mxu0 0.0
    %5739 = vmatprep.subr.mxu0 0.0
    %5740 = vmatpush1.msra.mxu0 0.0
    %5741 = vmatprep.subr.mxu0 0.0
    %5742 = vmatpush1.msra.mxu0 0.0
    %5743 = vmatprep.subr.mxu0 0.0
    %5744 = vmatpush1.msra.mxu0 0.0
    %5745 = vmatprep.subr.mxu0 0.0
    %5746 = vmatpush1.msra.mxu0 0.0
    %5747 = vmatprep.subr.mxu0 0.0
    %5748 = vmatpush1.msra.mxu0 0.0
    %5749 = vmatprep.subr.mxu0 0.0
    %5750 = vmatpush1.msra.mxu0 0.0
    %5751 = vmatprep.subr.mxu0 0.0
    %5752 = vmatpush1.msra.mxu0 0.0
    %5753 = vmatprep.subr.mxu0 0.0
    %5754 = vmatpush1.msra.mxu0 0.0
    %5755 = vmatprep.subr.mxu0 0.0
    %5756 = vmatpush1.msra.mxu0 0.0
    %5757 = vmatprep.subr.mxu0 0.0
    %5758 = vmatpush1.msra.mxu0 0.0
    %5759 = vmatprep.subr.mxu0 0.0
    %5760 = vmatpush1.msra.mxu0 0.0
    %5761 = vmatprep.subr.mxu0 0.0
    %5762 = vmatpush1.msra.mxu0 0.0
    %5763 = vmatprep.subr.mxu0 0.0
    %5764 = vmatpush1.msra.mxu0 0.0
    %5765 = vmatprep.subr.mxu0 0.0
    %5766 = vmatpush1.msra.mxu0 0.0
    %5767 = vmatprep.subr.mxu0 0.0
    %5768 = vmatpush1.msra.mxu0 0.0
    %5769 = vmatprep.mubr.f32.mxu0 0.0
    %5770 = vmatmul.mubr.f32.gmra.mrb[0].mxu0 %v5700
    %v5771 = vpop.f32.mrb[0].mxu0
    %v5772 = vadd.f32 %v5691, %v5771
    %v5773 = vpop.f32.mrb[0].mxu0
    %5774 = vmatprep.mubr.f32.mxu0 0.0
    %5775 = vmatmul.mubr.f32.gmra.mrb[0].mxu0 %v5703
    %v5776 = vpop.f32.mrb[0].mxu0
    %v5777 = vadd.f32 %v5696, %v5776
    %v5778 = vpop.f32.mrb[0].mxu0
    %5779 = vdwg.mxu0
    %v5780 = vadd.f32 %v5772, %v5524
    %v5781 = vadd.f32 %v5777, %v5529
    %v5782 = vmax.f32 %v5780, 0.0
    %v5783 = vmax.f32 %v5781, 0.0
    %v5784 = vld [vmem:[#allocation5 + $0x7f0] sm:$0xff]
    %v5785 = vld [vmem:[#allocation5 + $0x7f8] sm:$0xff]
    %v5786 = vld [vmem:[#allocation5 + $0x800] sm:$0xff]
    %v5787 = vld [vmem:[#allocation5 + $0x808] sm:$0xff]
    %v5789 = vsel %vm1178, %v5782, 0
    %v5792 = vsel %vm1178, %v5783, 0
    %5794 = vmatprep.subr.mxu0 0.0
    %5795 = vmatpush1.msra.mxu0 %v5786
    %5796 = vmatprep.subr.mxu0 0.0
    %5797 = vmatpush1.msra.mxu0 %v5787
    %5798 = vmatprep.subr.mxu0 0.0
    %5799 = vmatpush1.msra.mxu0 0.0
    %5800 = vmatprep.subr.mxu0 0.0
    %5801 = vmatpush1.msra.mxu0 0.0
    %5802 = vmatprep.subr.mxu0 0.0
    %5803 = vmatpush1.msra.mxu0 0.0
    %5804 = vmatprep.subr.mxu0 0.0
    %5805 = vmatpush1.msra.mxu0 0.0
    %5806 = vmatprep.subr.mxu0 0.0
    %5807 = vmatpush1.msra.mxu0 0.0
    %5808 = vmatprep.subr.mxu0 0.0
    %5809 = vmatpush1.msra.mxu0 0.0
    %5810 = vmatprep.subr.mxu0 0.0
    %5811 = vmatpush1.msra.mxu0 0.0
    %5812 = vmatprep.subr.mxu0 0.0
    %5813 = vmatpush1.msra.mxu0 0.0
    %5814 = vmatprep.subr.mxu0 0.0
    %5815 = vmatpush1.msra.mxu0 0.0
    %5816 = vmatprep.subr.mxu0 0.0
    %5817 = vmatpush1.msra.mxu0 0.0
    %5818 = vmatprep.subr.mxu0 0.0
    %5819 = vmatpush1.msra.mxu0 0.0
    %5820 = vmatprep.subr.mxu0 0.0
    %5821 = vmatpush1.msra.mxu0 0.0
    %5822 = vmatprep.subr.mxu0 0.0
    %5823 = vmatpush1.msra.mxu0 0.0
    %5824 = vmatprep.subr.mxu0 0.0
    %5825 = vmatpush1.msra.mxu0 0.0
    %5826 = vmatprep.subr.mxu0 0.0
    %5827 = vmatpush1.msra.mxu0 0.0
    %5828 = vmatprep.subr.mxu0 0.0
    %5829 = vmatpush1.msra.mxu0 0.0
    %5830 = vmatprep.subr.mxu0 0.0
    %5831 = vmatpush1.msra.mxu0 0.0
    %5832 = vmatprep.subr.mxu0 0.0
    %5833 = vmatpush1.msra.mxu0 0.0
    %5834 = vmatprep.subr.mxu0 0.0
    %5835 = vmatpush1.msra.mxu0 0.0
    %5836 = vmatprep.subr.mxu0 0.0
    %5837 = vmatpush1.msra.mxu0 0.0
    %5838 = vmatprep.subr.mxu0 0.0
    %5839 = vmatpush1.msra.mxu0 0.0
    %5840 = vmatprep.subr.mxu0 0.0
    %5841 = vmatpush1.msra.mxu0 0.0
    %5842 = vmatprep.subr.mxu0 0.0
    %5843 = vmatpush1.msra.mxu0 0.0
    %5844 = vmatprep.subr.mxu0 0.0
    %5845 = vmatpush1.msra.mxu0 0.0
    %5846 = vmatprep.subr.mxu0 0.0
    %5847 = vmatpush1.msra.mxu0 0.0
    %5848 = vmatprep.subr.mxu0 0.0
    %5849 = vmatpush1.msra.mxu0 0.0
    %5850 = vmatprep.subr.mxu0 0.0
    %5851 = vmatpush1.msra.mxu0 0.0
    %5852 = vmatprep.subr.mxu0 0.0
    %5853 = vmatpush1.msra.mxu0 0.0
    %5854 = vmatprep.subr.mxu0 0.0
    %5855 = vmatpush1.msra.mxu0 0.0
    %5856 = vmatprep.subr.mxu0 0.0
    %5857 = vmatpush1.msra.mxu0 0.0
    %5858 = vmatprep.mubr.f32.mxu0 0.0
    %5859 = vmatmul.mubr.f32.gmra.mrb[0].mxu0 %v5789
    %v5860 = vpop.f32.mrb[0].mxu0
    %v5861 = vadd.f32 0.0, %v5860
    %v5862 = vpop.f32.mrb[0].mxu0
    %5863 = vmatprep.mubr.f32.mxu0 0.0
    %5864 = vmatmul.mubr.f32.gmra.mrb[0].mxu0 %v5792
    %v5865 = vpop.f32.mrb[0].mxu0
    %v5866 = vadd.f32 0.0, %v5865
    %v5867 = vpop.f32.mrb[0].mxu0
    %5868 = vdwg.mxu0
    %v5870 = vsel %vm1178, %v5612, 0
    %v5873 = vsel %vm1178, %v5613, 0
    %5875 = vmatprep.subr.mxu0 0.0
    %5876 = vmatpush1.msra.mxu0 %v5784
    %5877 = vmatprep.subr.mxu0 0.0
    %5878 = vmatpush1.msra.mxu0 %v5785
    %5879 = vmatprep.subr.mxu0 0.0
    %5880 = vmatpush1.msra.mxu0 0.0
    %5881 = vmatprep.subr.mxu0 0.0
    %5882 = vmatpush1.msra.mxu0 0.0
    %5883 = vmatprep.subr.mxu0 0.0
    %5884 = vmatpush1.msra.mxu0 0.0
    %5885 = vmatprep.subr.mxu0 0.0
    %5886 = vmatpush1.msra.mxu0 0.0
    %5887 = vmatprep.subr.mxu0 0.0
    %5888 = vmatpush1.msra.mxu0 0.0
    %5889 = vmatprep.subr.mxu0 0.0
    %5890 = vmatpush1.msra.mxu0 0.0
    %5891 = vmatprep.subr.mxu0 0.0
    %5892 = vmatpush1.msra.mxu0 0.0
    %5893 = vmatprep.subr.mxu0 0.0
    %5894 = vmatpush1.msra.mxu0 0.0
    %5895 = vmatprep.subr.mxu0 0.0
    %5896 = vmatpush1.msra.mxu0 0.0
    %5897 = vmatprep.subr.mxu0 0.0
    %5898 = vmatpush1.msra.mxu0 0.0
    %5899 = vmatprep.subr.mxu0 0.0
    %5900 = vmatpush1.msra.mxu0 0.0
    %5901 = vmatprep.subr.mxu0 0.0
    %5902 = vmatpush1.msra.mxu0 0.0
    %5903 = vmatprep.subr.mxu0 0.0
    %5904 = vmatpush1.msra.mxu0 0.0
    %5905 = vmatprep.subr.mxu0 0.0
    %5906 = vmatpush1.msra.mxu0 0.0
    %5907 = vmatprep.subr.mxu0 0.0
    %5908 = vmatpush1.msra.mxu0 0.0
    %5909 = vmatprep.subr.mxu0 0.0
    %5910 = vmatpush1.msra.mxu0 0.0
    %5911 = vmatprep.subr.mxu0 0.0
    %5912 = vmatpush1.msra.mxu0 0.0
    %5913 = vmatprep.subr.mxu0 0.0
    %5914 = vmatpush1.msra.mxu0 0.0
    %5915 = vmatprep.subr.mxu0 0.0
    %5916 = vmatpush1.msra.mxu0 0.0
    %5917 = vmatprep.subr.mxu0 0.0
    %5918 = vmatpush1.msra.mxu0 0.0
    %5919 = vmatprep.subr.mxu0 0.0
    %5920 = vmatpush1.msra.mxu0 0.0
    %5921 = vmatprep.subr.mxu0 0.0
    %5922 = vmatpush1.msra.mxu0 0.0
    %5923 = vmatprep.subr.mxu0 0.0
    %5924 = vmatpush1.msra.mxu0 0.0
    %5925 = vmatprep.subr.mxu0 0.0
    %5926 = vmatpush1.msra.mxu0 0.0
    %5927 = vmatprep.subr.mxu0 0.0
    %5928 = vmatpush1.msra.mxu0 0.0
    %5929 = vmatprep.subr.mxu0 0.0
    %5930 = vmatpush1.msra.mxu0 0.0
    %5931 = vmatprep.subr.mxu0 0.0
    %5932 = vmatpush1.msra.mxu0 0.0
    %5933 = vmatprep.subr.mxu0 0.0
    %5934 = vmatpush1.msra.mxu0 0.0
    %5935 = vmatprep.subr.mxu0 0.0
    %5936 = vmatpush1.msra.mxu0 0.0
    %5937 = vmatprep.subr.mxu0 0.0
    %5938 = vmatpush1.msra.mxu0 0.0
    %5939 = vmatprep.mubr.f32.mxu0 0.0
    %5940 = vmatmul.mubr.f32.gmra.mrb[0].mxu0 %v5870
    %v5941 = vpop.f32.mrb[0].mxu0
    %v5942 = vadd.f32 %v5861, %v5941
    %v5943 = vpop.f32.mrb[0].mxu0
    %5944 = vmatprep.mubr.f32.mxu0 0.0
    %5945 = vmatmul.mubr.f32.gmra.mrb[0].mxu0 %v5873
    %v5946 = vpop.f32.mrb[0].mxu0
    %v5947 = vadd.f32 %v5866, %v5946
    %v5948 = vpop.f32.mrb[0].mxu0
    %5949 = vdwg.mxu0
    %v5950 = vld [vmem:[#allocation5 + $0x810] sm:$0xff]
    %v5951 = vld [vmem:[#allocation5 + $0x818] sm:$0xff]
    %v5952 = vld [vmem:[#allocation5 + $0x820] sm:$0xff]
    %v5953 = vld [vmem:[#allocation5 + $0x828] sm:$0xff]
    %v5954 = vld [vmem:[#allocation5 + $0x830] sm:$0xff]
    %v5955 = vld [vmem:[#allocation5 + $0x838] sm:$0xff]
    %v5956 = vld [vmem:[#allocation5 + $0x840] sm:$0xff]
    %v5957 = vld [vmem:[#allocation5 + $0x848] sm:$0xff]
    %v5958 = vld [vmem:[#allocation5 + $0x850] sm:$0xff]
    %v5959 = vld [vmem:[#allocation5 + $0x858] sm:$0xff]
    %v5960 = vld [vmem:[#allocation5 + $0x860] sm:$0xff]
    %v5961 = vld [vmem:[#allocation5 + $0x868] sm:$0xff]
    %v5962 = vld [vmem:[#allocation5 + $0x870] sm:$0xff]
    %v5963 = vld [vmem:[#allocation5 + $0x878] sm:$0xff]
    %v5964 = vld [vmem:[#allocation5 + $0x880] sm:$0xff]
    %v5965 = vld [vmem:[#allocation5 + $0x888] sm:$0xff]
    %v5967 = vsel %vm1178, %v5958, 0
    %v5970 = vsel %vm1178, %v5959, 0
    %v5973 = vsel %vm1178, %v5960, 0
    %v5976 = vsel %vm1178, %v5961, 0
    %v5979 = vsel %vm1178, %v5962, 0
    %v5982 = vsel %vm1178, %v5963, 0
    %v5985 = vsel %vm1178, %v5964, 0
    %v5988 = vsel %vm1178, %v5965, 0
    %5990 = vmatprep.subr.mxu0 0.0
    %5991 = vmatpush1.msra.mxu0 %v5942
    %5992 = vmatprep.subr.mxu0 0.0
    %5993 = vmatpush1.msra.mxu0 %v5947
    %5994 = vmatprep.subr.mxu0 0.0
    %5995 = vmatpush1.msra.mxu0 0.0
    %5996 = vmatprep.subr.mxu0 0.0
    %5997 = vmatpush1.msra.mxu0 0.0
    %5998 = vmatprep.subr.mxu0 0.0
    %5999 = vmatpush1.msra.mxu0 0.0
    %6000 = vmatprep.subr.mxu0 0.0
    %6001 = vmatpush1.msra.mxu0 0.0
    %6002 = vmatprep.subr.mxu0 0.0
    %6003 = vmatpush1.msra.mxu0 0.0
    %6004 = vmatprep.subr.mxu0 0.0
    %6005 = vmatpush1.msra.mxu0 0.0
    %6006 = vmatprep.subr.mxu0 0.0
    %6007 = vmatpush1.msra.mxu0 0.0
    %6008 = vmatprep.subr.mxu0 0.0
    %6009 = vmatpush1.msra.mxu0 0.0
    %6010 = vmatprep.subr.mxu0 0.0
    %6011 = vmatpush1.msra.mxu0 0.0
    %6012 = vmatprep.subr.mxu0 0.0
    %6013 = vmatpush1.msra.mxu0 0.0
    %6014 = vmatprep.subr.mxu0 0.0
    %6015 = vmatpush1.msra.mxu0 0.0
    %6016 = vmatprep.subr.mxu0 0.0
    %6017 = vmatpush1.msra.mxu0 0.0
    %6018 = vmatprep.subr.mxu0 0.0
    %6019 = vmatpush1.msra.mxu0 0.0
    %6020 = vmatprep.subr.mxu0 0.0
    %6021 = vmatpush1.msra.mxu0 0.0
    %6022 = vmatprep.subr.mxu0 0.0
    %6023 = vmatpush1.msra.mxu0 0.0
    %6024 = vmatprep.subr.mxu0 0.0
    %6025 = vmatpush1.msra.mxu0 0.0
    %6026 = vmatprep.subr.mxu0 0.0
    %6027 = vmatpush1.msra.mxu0 0.0
    %6028 = vmatprep.subr.mxu0 0.0
    %6029 = vmatpush1.msra.mxu0 0.0
    %6030 = vmatprep.subr.mxu0 0.0
    %6031 = vmatpush1.msra.mxu0 0.0
    %6032 = vmatprep.subr.mxu0 0.0
    %6033 = vmatpush1.msra.mxu0 0.0
    %6034 = vmatprep.subr.mxu0 0.0
    %6035 = vmatpush1.msra.mxu0 0.0
    %6036 = vmatprep.subr.mxu0 0.0
    %6037 = vmatpush1.msra.mxu0 0.0
    %6038 = vmatprep.subr.mxu0 0.0
    %6039 = vmatpush1.msra.mxu0 0.0
    %6040 = vmatprep.subr.mxu0 0.0
    %6041 = vmatpush1.msra.mxu0 0.0
    %6042 = vmatprep.subr.mxu0 0.0
    %6043 = vmatpush1.msra.mxu0 0.0
    %6044 = vmatprep.subr.mxu0 0.0
    %6045 = vmatpush1.msra.mxu0 0.0
    %6046 = vmatprep.subr.mxu0 0.0
    %6047 = vmatpush1.msra.mxu0 0.0
    %6048 = vmatprep.subr.mxu0 0.0
    %6049 = vmatpush1.msra.mxu0 0.0
    %6050 = vmatprep.subr.mxu0 0.0
    %6051 = vmatpush1.msra.mxu0 0.0
    %6052 = vmatprep.subr.mxu0 0.0
    %6053 = vmatpush1.msra.mxu0 0.0
    %6054 = vmatprep.mubr.f32.mxu0 0.0
    %6055 = vmatmul.mubr.f32.gmra.mrb[0].mxu0 %v5967
    %v6056 = vpop.f32.mrb[0].mxu0
    %v6057 = vadd.f32 0.0, %v6056
    %v6058 = vpop.f32.mrb[0].mxu0
    %6059 = vmatprep.mubr.f32.mxu0 0.0
    %6060 = vmatmul.mubr.f32.gmra.mrb[0].mxu0 %v5970
    %v6061 = vpop.f32.mrb[0].mxu0
    %v6062 = vadd.f32 0.0, %v6061
    %v6063 = vpop.f32.mrb[0].mxu0
    %6064 = vmatprep.mubr.f32.mxu0 0.0
    %6065 = vmatmul.mubr.f32.gmra.mrb[0].mxu0 %v5973
    %v6066 = vpop.f32.mrb[0].mxu0
    %v6067 = vadd.f32 0.0, %v6066
    %v6068 = vpop.f32.mrb[0].mxu0
    %6069 = vmatprep.mubr.f32.mxu0 0.0
    %6070 = vmatmul.mubr.f32.gmra.mrb[0].mxu0 %v5976
    %v6071 = vpop.f32.mrb[0].mxu0
    %v6072 = vadd.f32 0.0, %v6071
    %v6073 = vpop.f32.mrb[0].mxu0
    %6074 = vmatprep.mubr.f32.mxu0 0.0
    %6075 = vmatmul.mubr.f32.gmra.mrb[0].mxu0 %v5979
    %v6076 = vpop.f32.mrb[0].mxu0
    %v6077 = vadd.f32 0.0, %v6076
    %v6078 = vpop.f32.mrb[0].mxu0
    %6079 = vmatprep.mubr.f32.mxu0 0.0
    %6080 = vmatmul.mubr.f32.gmra.mrb[0].mxu0 %v5982
    %v6081 = vpop.f32.mrb[0].mxu0
    %v6082 = vadd.f32 0.0, %v6081
    %v6083 = vpop.f32.mrb[0].mxu0
    %6084 = vmatprep.mubr.f32.mxu0 0.0
    %6085 = vmatmul.mubr.f32.gmra.mrb[0].mxu0 %v5985
    %v6086 = vpop.f32.mrb[0].mxu0
    %v6087 = vadd.f32 0.0, %v6086
    %v6088 = vpop.f32.mrb[0].mxu0
    %6089 = vmatprep.mubr.f32.mxu0 0.0
    %6090 = vmatmul.mubr.f32.gmra.mrb[0].mxu0 %v5988
    %v6091 = vpop.f32.mrb[0].mxu0
    %v6092 = vadd.f32 0.0, %v6091
    %v6093 = vpop.f32.mrb[0].mxu0
    %6094 = vdwg.mxu0
    %v6096 = vsel %vm1178, %v5950, 0
    %v6099 = vsel %vm1178, %v5951, 0
    %v6102 = vsel %vm1178, %v5952, 0
    %v6105 = vsel %vm1178, %v5953, 0
    %v6108 = vsel %vm1178, %v5954, 0
    %v6111 = vsel %vm1178, %v5955, 0
    %v6114 = vsel %vm1178, %v5956, 0
    %v6117 = vsel %vm1178, %v5957, 0
    %6119 = vmatprep.subr.mxu0 0.0
    %6120 = vmatpush1.msra.mxu0 %v1288
    %6121 = vmatprep.subr.mxu0 0.0
    %6122 = vmatpush1.msra.mxu0 %v1289
    %6123 = vmatprep.subr.mxu0 0.0
    %6124 = vmatpush1.msra.mxu0 0.0
    %6125 = vmatprep.subr.mxu0 0.0
    %6126 = vmatpush1.msra.mxu0 0.0
    %6127 = vmatprep.subr.mxu0 0.0
    %6128 = vmatpush1.msra.mxu0 0.0
    %6129 = vmatprep.subr.mxu0 0.0
    %6130 = vmatpush1.msra.mxu0 0.0
    %6131 = vmatprep.subr.mxu0 0.0
    %6132 = vmatpush1.msra.mxu0 0.0
    %6133 = vmatprep.subr.mxu0 0.0
    %6134 = vmatpush1.msra.mxu0 0.0
    %6135 = vmatprep.subr.mxu0 0.0
    %6136 = vmatpush1.msra.mxu0 0.0
    %6137 = vmatprep.subr.mxu0 0.0
    %6138 = vmatpush1.msra.mxu0 0.0
    %6139 = vmatprep.subr.mxu0 0.0
    %6140 = vmatpush1.msra.mxu0 0.0
    %6141 = vmatprep.subr.mxu0 0.0
    %6142 = vmatpush1.msra.mxu0 0.0
    %6143 = vmatprep.subr.mxu0 0.0
    %6144 = vmatpush1.msra.mxu0 0.0
    %6145 = vmatprep.subr.mxu0 0.0
    %6146 = vmatpush1.msra.mxu0 0.0
    %6147 = vmatprep.subr.mxu0 0.0
    %6148 = vmatpush1.msra.mxu0 0.0
    %6149 = vmatprep.subr.mxu0 0.0
    %6150 = vmatpush1.msra.mxu0 0.0
    %6151 = vmatprep.subr.mxu0 0.0
    %6152 = vmatpush1.msra.mxu0 0.0
    %6153 = vmatprep.subr.mxu0 0.0
    %6154 = vmatpush1.msra.mxu0 0.0
    %6155 = vmatprep.subr.mxu0 0.0
    %6156 = vmatpush1.msra.mxu0 0.0
    %6157 = vmatprep.subr.mxu0 0.0
    %6158 = vmatpush1.msra.mxu0 0.0
    %6159 = vmatprep.subr.mxu0 0.0
    %6160 = vmatpush1.msra.mxu0 0.0
    %6161 = vmatprep.subr.mxu0 0.0
    %6162 = vmatpush1.msra.mxu0 0.0
    %6163 = vmatprep.subr.mxu0 0.0
    %6164 = vmatpush1.msra.mxu0 0.0
    %6165 = vmatprep.subr.mxu0 0.0
    %6166 = vmatpush1.msra.mxu0 0.0
    %6167 = vmatprep.subr.mxu0 0.0
    %6168 = vmatpush1.msra.mxu0 0.0
    %6169 = vmatprep.subr.mxu0 0.0
    %6170 = vmatpush1.msra.mxu0 0.0
    %6171 = vmatprep.subr.mxu0 0.0
    %6172 = vmatpush1.msra.mxu0 0.0
    %6173 = vmatprep.subr.mxu0 0.0
    %6174 = vmatpush1.msra.mxu0 0.0
    %6175 = vmatprep.subr.mxu0 0.0
    %6176 = vmatpush1.msra.mxu0 0.0
    %6177 = vmatprep.subr.mxu0 0.0
    %6178 = vmatpush1.msra.mxu0 0.0
    %6179 = vmatprep.subr.mxu0 0.0
    %6180 = vmatpush1.msra.mxu0 0.0
    %6181 = vmatprep.subr.mxu0 0.0
    %6182 = vmatpush1.msra.mxu0 0.0
    %6183 = vmatprep.mubr.f32.mxu0 0.0
    %6184 = vmatmul.mubr.f32.gmra.mrb[0].mxu0 %v6096
    %v6185 = vpop.f32.mrb[0].mxu0
    %v6186 = vadd.f32 %v6057, %v6185
    %v6187 = vpop.f32.mrb[0].mxu0
    %6188 = vmatprep.mubr.f32.mxu0 0.0
    %6189 = vmatmul.mubr.f32.gmra.mrb[0].mxu0 %v6099
    %v6190 = vpop.f32.mrb[0].mxu0
    %v6191 = vadd.f32 %v6062, %v6190
    %v6192 = vpop.f32.mrb[0].mxu0
    %6193 = vmatprep.mubr.f32.mxu0 0.0
    %6194 = vmatmul.mubr.f32.gmra.mrb[0].mxu0 %v6102
    %v6195 = vpop.f32.mrb[0].mxu0
    %v6196 = vadd.f32 %v6067, %v6195
    %v6197 = vpop.f32.mrb[0].mxu0
    %6198 = vmatprep.mubr.f32.mxu0 0.0
    %6199 = vmatmul.mubr.f32.gmra.mrb[0].mxu0 %v6105
    %v6200 = vpop.f32.mrb[0].mxu0
    %v6201 = vadd.f32 %v6072, %v6200
    %v6202 = vpop.f32.mrb[0].mxu0
    %6203 = vmatprep.mubr.f32.mxu0 0.0
    %6204 = vmatmul.mubr.f32.gmra.mrb[0].mxu0 %v6108
    %v6205 = vpop.f32.mrb[0].mxu0
    %v6206 = vadd.f32 %v6077, %v6205
    %v6207 = vpop.f32.mrb[0].mxu0
    %6208 = vmatprep.mubr.f32.mxu0 0.0
    %6209 = vmatmul.mubr.f32.gmra.mrb[0].mxu0 %v6111
    %v6210 = vpop.f32.mrb[0].mxu0
    %v6211 = vadd.f32 %v6082, %v6210
    %v6212 = vpop.f32.mrb[0].mxu0
    %6213 = vmatprep.mubr.f32.mxu0 0.0
    %6214 = vmatmul.mubr.f32.gmra.mrb[0].mxu0 %v6114
    %v6215 = vpop.f32.mrb[0].mxu0
    %v6216 = vadd.f32 %v6087, %v6215
    %v6217 = vpop.f32.mrb[0].mxu0
    %6218 = vmatprep.mubr.f32.mxu0 0.0
    %6219 = vmatmul.mubr.f32.gmra.mrb[0].mxu0 %v6117
    %v6220 = vpop.f32.mrb[0].mxu0
    %v6221 = vadd.f32 %v6092, %v6220
    %v6222 = vpop.f32.mrb[0].mxu0
    %6223 = vdwg.mxu0
    %v6224 = vld [vmem:[#allocation5 + $0x890] sm:$0xff]
    %v6225 = vld [vmem:[#allocation5 + $0x898] sm:$0xff]
    %v6226 = vld [vmem:[#allocation5 + $0x8a0] sm:$0xff]
    %v6227 = vld [vmem:[#allocation5 + $0x8a8] sm:$0xff]
    %v6228 = vld [vmem:[#allocation5 + $0x8b0] sm:$0xff]
    %v6229 = vld [vmem:[#allocation5 + $0x8b8] sm:$0xff]
    %v6230 = vld [vmem:[#allocation5 + $0x8c0] sm:$0xff]
    %v6231 = vld [vmem:[#allocation5 + $0x8c8] sm:$0xff]
    %6233 = vset.pattern.permute.xlu0 0
    %6234 = vperm.xlu0 %6233, %v6224
    %v6235 = vpop.permute.xlu0 %6234
    %6238 = vset.pattern.permute.xlu0 0
    %6239 = vperm.xlu0 %6238, %v6225
    %v6240 = vpop.permute.xlu0 %6239
    %6243 = vset.pattern.permute.xlu0 0
    %6244 = vperm.xlu0 %6243, %v6226
    %v6245 = vpop.permute.xlu0 %6244
    %6248 = vset.pattern.permute.xlu0 0
    %6249 = vperm.xlu0 %6248, %v6227
    %v6250 = vpop.permute.xlu0 %6249
    %6253 = vset.pattern.permute.xlu0 0
    %6254 = vperm.xlu0 %6253, %v6228
    %v6255 = vpop.permute.xlu0 %6254
    %6258 = vset.pattern.permute.xlu0 0
    %6259 = vperm.xlu0 %6258, %v6229
    %v6260 = vpop.permute.xlu0 %6259
    %6263 = vset.pattern.permute.xlu0 0
    %6264 = vperm.xlu0 %6263, %v6230
    %v6265 = vpop.permute.xlu0 %6264
    %6268 = vset.pattern.permute.xlu0 0
    %6269 = vperm.xlu0 %6268, %v6231
    %v6270 = vpop.permute.xlu0 %6269
    %v6272 = vadd.f32 %v6186, %v6235
    %v6273 = vadd.f32 %v6191, %v6240
    %v6274 = vadd.f32 %v6196, %v6245
    %v6275 = vadd.f32 %v6201, %v6250
    %v6276 = vadd.f32 %v6206, %v6255
    %v6277 = vadd.f32 %v6211, %v6260
    %v6278 = vadd.f32 %v6216, %v6265
    %v6279 = vadd.f32 %v6221, %v6270
    %v6280 = vxor.u32 %v6276, 2147483648
    %v6281 = vxor.u32 %v6277, 2147483648
    %v6282 = vxor.u32 %v6278, 2147483648
    %v6283 = vxor.u32 %v6279, 2147483648
    %v6284 = vmul.f32 %v6280, 1.442695
    %v6285 = vpow.pop %v6284
    %v6286 = vmul.f32 %v6281, 1.442695
    %v6287 = vpow.pop %v6286
    %v6288 = vmul.f32 %v6282, 1.442695
    %v6289 = vpow.pop %v6288
    %v6290 = vmul.f32 %v6283, 1.442695
    %v6291 = vpow.pop %v6290
    %v6292 = vadd.f32 %v6285, 1.0
    %v6293 = vadd.f32 %v6287, 1.0
    %v6294 = vadd.f32 %v6289, 1.0
    %v6295 = vadd.f32 %v6291, 1.0
    %v6296 = vrcp.pop %v6292
    %v6297 = vmul.f32 1.0, %v6296
    %v6298 = vrcp.pop %v6293
    %v6299 = vmul.f32 1.0, %v6298
    %v6300 = vrcp.pop %v6294
    %v6301 = vmul.f32 1.0, %v6300
    %v6302 = vrcp.pop %v6295
    %v6303 = vmul.f32 1.0, %v6302
    %v6304 = vmul.f32 %v6272, %v6297
    %v6305 = vmul.f32 %v6273, %v6299
    %v6306 = vmul.f32 %v6274, %v6301
    %v6307 = vmul.f32 %v6275, %v6303
    %v6308 = vld [vmem:[#allocation5 + $0x8f0] sm:$0xff]
    %v6309 = vld [vmem:[#allocation5 + $0x8f8] sm:$0xff]
    %v6310 = vld [vmem:[#allocation5 + $0x900] sm:$0xff]
    %v6311 = vld [vmem:[#allocation5 + $0x908] sm:$0xff]
    %v6313 = vsel %vm1298, %v6304, 0
    %v6316 = vsel %vm1298, %v6305, 0
    %v6319 = vsel %vm1298, %v6306, 0
    %v6322 = vsel %vm1298, %v6307, 0
    %6324 = vmatprep.subr.mxu0 0.0
    %6325 = vmatpush1.msra.mxu0 %v6308
    %6326 = vmatprep.subr.mxu0 0.0
    %6327 = vmatpush1.msra.mxu0 %v6309
    %6328 = vmatprep.subr.mxu0 0.0
    %6329 = vmatpush1.msra.mxu0 %v6310
    %6330 = vmatprep.subr.mxu0 0.0
    %6331 = vmatpush1.msra.mxu0 %v6311
    %6332 = vmatprep.subr.mxu0 0.0
    %6333 = vmatpush1.msra.mxu0 0.0
    %6334 = vmatprep.subr.mxu0 0.0
    %6335 = vmatpush1.msra.mxu0 0.0
    %6336 = vmatprep.subr.mxu0 0.0
    %6337 = vmatpush1.msra.mxu0 0.0
    %6338 = vmatprep.subr.mxu0 0.0
    %6339 = vmatpush1.msra.mxu0 0.0
    %6340 = vmatprep.subr.mxu0 0.0
    %6341 = vmatpush1.msra.mxu0 0.0
    %6342 = vmatprep.subr.mxu0 0.0
    %6343 = vmatpush1.msra.mxu0 0.0
    %6344 = vmatprep.subr.mxu0 0.0
    %6345 = vmatpush1.msra.mxu0 0.0
    %6346 = vmatprep.subr.mxu0 0.0
    %6347 = vmatpush1.msra.mxu0 0.0
    %6348 = vmatprep.subr.mxu0 0.0
    %6349 = vmatpush1.msra.mxu0 0.0
    %6350 = vmatprep.subr.mxu0 0.0
    %6351 = vmatpush1.msra.mxu0 0.0
    %6352 = vmatprep.subr.mxu0 0.0
    %6353 = vmatpush1.msra.mxu0 0.0
    %6354 = vmatprep.subr.mxu0 0.0
    %6355 = vmatpush1.msra.mxu0 0.0
    %6356 = vmatprep.subr.mxu0 0.0
    %6357 = vmatpush1.msra.mxu0 0.0
    %6358 = vmatprep.subr.mxu0 0.0
    %6359 = vmatpush1.msra.mxu0 0.0
    %6360 = vmatprep.subr.mxu0 0.0
    %6361 = vmatpush1.msra.mxu0 0.0
    %6362 = vmatprep.subr.mxu0 0.0
    %6363 = vmatpush1.msra.mxu0 0.0
    %6364 = vmatprep.subr.mxu0 0.0
    %6365 = vmatpush1.msra.mxu0 0.0
    %6366 = vmatprep.subr.mxu0 0.0
    %6367 = vmatpush1.msra.mxu0 0.0
    %6368 = vmatprep.subr.mxu0 0.0
    %6369 = vmatpush1.msra.mxu0 0.0
    %6370 = vmatprep.subr.mxu0 0.0
    %6371 = vmatpush1.msra.mxu0 0.0
    %6372 = vmatprep.subr.mxu0 0.0
    %6373 = vmatpush1.msra.mxu0 0.0
    %6374 = vmatprep.subr.mxu0 0.0
    %6375 = vmatpush1.msra.mxu0 0.0
    %6376 = vmatprep.subr.mxu0 0.0
    %6377 = vmatpush1.msra.mxu0 0.0
    %6378 = vmatprep.subr.mxu0 0.0
    %6379 = vmatpush1.msra.mxu0 0.0
    %6380 = vmatprep.subr.mxu0 0.0
    %6381 = vmatpush1.msra.mxu0 0.0
    %6382 = vmatprep.subr.mxu0 0.0
    %6383 = vmatpush1.msra.mxu0 0.0
    %6384 = vmatprep.subr.mxu0 0.0
    %6385 = vmatpush1.msra.mxu0 0.0
    %6386 = vmatprep.subr.mxu0 0.0
    %6387 = vmatpush1.msra.mxu0 0.0
    %6388 = vmatprep.mubr.f32.mxu0 0.0
    %6389 = vmatmul.mubr.f32.gmra.mrb[0].mxu0 %v6313
    %v6390 = vpop.f32.mrb[0].mxu0
    %v6391 = vadd.f32 0.0, %v6390
    %v6392 = vpop.f32.mrb[0].mxu0
    %6393 = vmatprep.mubr.f32.mxu0 0.0
    %6394 = vmatmul.mubr.f32.gmra.mrb[0].mxu0 %v6316
    %v6395 = vpop.f32.mrb[0].mxu0
    %v6396 = vadd.f32 0.0, %v6395
    %v6397 = vpop.f32.mrb[0].mxu0
    %6398 = vmatprep.mubr.f32.mxu0 0.0
    %6399 = vmatmul.mubr.f32.gmra.mrb[0].mxu0 %v6319
    %v6400 = vpop.f32.mrb[0].mxu0
    %v6401 = vadd.f32 0.0, %v6400
    %v6402 = vpop.f32.mrb[0].mxu0
    %6403 = vmatprep.mubr.f32.mxu0 0.0
    %6404 = vmatmul.mubr.f32.gmra.mrb[0].mxu0 %v6322
    %v6405 = vpop.f32.mrb[0].mxu0
    %v6406 = vadd.f32 0.0, %v6405
    %v6407 = vpop.f32.mrb[0].mxu0
    %6408 = vdwg.mxu0
    %v6409 = vld [vmem:[#allocation5 + $0x8e8] sm:$0xff]
    %v6410 = vld [vmem:[#allocation5 + $0x8d8] sm:$0xff]
    %6412 = vset.pattern.permute.xlu0 0
    %6413 = vperm.xlu0 %6412, %v6409
    %v6414 = vpop.permute.xlu0 %6413
    %v6417 = vsel %vm1298, %v6410, 0
    %6419 = vmatprep.subr.mxu0 0.0
    %6420 = vmatpush1.msra.mxu0 %v6304
    %6421 = vmatprep.subr.mxu0 0.0
    %6422 = vmatpush1.msra.mxu0 %v6305
    %6423 = vmatprep.subr.mxu0 0.0
    %6424 = vmatpush1.msra.mxu0 %v6306
    %6425 = vmatprep.subr.mxu0 0.0
    %6426 = vmatpush1.msra.mxu0 %v6307
    %6427 = vmatprep.subr.mxu0 0.0
    %6428 = vmatpush1.msra.mxu0 0.0
    %6429 = vmatprep.subr.mxu0 0.0
    %6430 = vmatpush1.msra.mxu0 0.0
    %6431 = vmatprep.subr.mxu0 0.0
    %6432 = vmatpush1.msra.mxu0 0.0
    %6433 = vmatprep.subr.mxu0 0.0
    %6434 = vmatpush1.msra.mxu0 0.0
    %6435 = vmatprep.subr.mxu0 0.0
    %6436 = vmatpush1.msra.mxu0 0.0
    %6437 = vmatprep.subr.mxu0 0.0
    %6438 = vmatpush1.msra.mxu0 0.0
    %6439 = vmatprep.subr.mxu0 0.0
    %6440 = vmatpush1.msra.mxu0 0.0
    %6441 = vmatprep.subr.mxu0 0.0
    %6442 = vmatpush1.msra.mxu0 0.0
    %6443 = vmatprep.subr.mxu0 0.0
    %6444 = vmatpush1.msra.mxu0 0.0
    %6445 = vmatprep.subr.mxu0 0.0
    %6446 = vmatpush1.msra.mxu0 0.0
    %6447 = vmatprep.subr.mxu0 0.0
    %6448 = vmatpush1.msra.mxu0 0.0
    %6449 = vmatprep.subr.mxu0 0.0
    %6450 = vmatpush1.msra.mxu0 0.0
    %6451 = vmatprep.subr.mxu0 0.0
    %6452 = vmatpush1.msra.mxu0 0.0
    %6453 = vmatprep.subr.mxu0 0.0
    %6454 = vmatpush1.msra.mxu0 0.0
    %6455 = vmatprep.subr.mxu0 0.0
    %6456 = vmatpush1.msra.mxu0 0.0
    %6457 = vmatprep.subr.mxu0 0.0
    %6458 = vmatpush1.msra.mxu0 0.0
    %6459 = vmatprep.subr.mxu0 0.0
    %6460 = vmatpush1.msra.mxu0 0.0
    %6461 = vmatprep.subr.mxu0 0.0
    %6462 = vmatpush1.msra.mxu0 0.0
    %6463 = vmatprep.subr.mxu0 0.0
    %6464 = vmatpush1.msra.mxu0 0.0
    %6465 = vmatprep.subr.mxu0 0.0
    %6466 = vmatpush1.msra.mxu0 0.0
    %6467 = vmatprep.subr.mxu0 0.0
    %6468 = vmatpush1.msra.mxu0 0.0
    %6469 = vmatprep.subr.mxu0 0.0
    %6470 = vmatpush1.msra.mxu0 0.0
    %6471 = vmatprep.subr.mxu0 0.0
    %6472 = vmatpush1.msra.mxu0 0.0
    %6473 = vmatprep.subr.mxu0 0.0
    %6474 = vmatpush1.msra.mxu0 0.0
    %6475 = vmatprep.subr.mxu0 0.0
    %6476 = vmatpush1.msra.mxu0 0.0
    %6477 = vmatprep.subr.mxu0 0.0
    %6478 = vmatpush1.msra.mxu0 0.0
    %6479 = vmatprep.subr.mxu0 0.0
    %6480 = vmatpush1.msra.mxu0 0.0
    %6481 = vmatprep.subr.mxu0 0.0
    %6482 = vmatpush1.msra.mxu0 0.0
    %6483 = vmatprep.mubr.f32.mxu0 0.0
    %6484 = vmatmul.mubr.f32.gmra.mrb[0].mxu0 %v6417
    %v6485 = vpop.f32.mrb[0].mxu0
    %v6486 = vadd.f32 %v6414, %v6485
    %v6487 = vpop.f32.mrb[0].mxu0
    %6488 = vdwg.mxu0
    %v6489 = vmax.f32 %v6486, 0.0
    %v6490 = vld [vmem:[#allocation5 + $0x8e0] sm:$0xff]
    %v6491 = vld [vmem:[#allocation5 + $0x8d0] sm:$0xff]
    %v6493 = vsel %vm1298, %v6491, 0
    %6495 = vmatprep.subr.mxu0 0.0
    %6496 = vmatpush1.msra.mxu0 %v6391
    %6497 = vmatprep.subr.mxu0 0.0
    %6498 = vmatpush1.msra.mxu0 %v6396
    %6499 = vmatprep.subr.mxu0 0.0
    %6500 = vmatpush1.msra.mxu0 %v6401
    %6501 = vmatprep.subr.mxu0 0.0
    %6502 = vmatpush1.msra.mxu0 %v6406
    %6503 = vmatprep.subr.mxu0 0.0
    %6504 = vmatpush1.msra.mxu0 0.0
    %6505 = vmatprep.subr.mxu0 0.0
    %6506 = vmatpush1.msra.mxu0 0.0
    %6507 = vmatprep.subr.mxu0 0.0
    %6508 = vmatpush1.msra.mxu0 0.0
    %6509 = vmatprep.subr.mxu0 0.0
    %6510 = vmatpush1.msra.mxu0 0.0
    %6511 = vmatprep.subr.mxu0 0.0
    %6512 = vmatpush1.msra.mxu0 0.0
    %6513 = vmatprep.subr.mxu0 0.0
    %6514 = vmatpush1.msra.mxu0 0.0
    %6515 = vmatprep.subr.mxu0 0.0
    %6516 = vmatpush1.msra.mxu0 0.0
    %6517 = vmatprep.subr.mxu0 0.0
    %6518 = vmatpush1.msra.mxu0 0.0
    %6519 = vmatprep.subr.mxu0 0.0
    %6520 = vmatpush1.msra.mxu0 0.0
    %6521 = vmatprep.subr.mxu0 0.0
    %6522 = vmatpush1.msra.mxu0 0.0
    %6523 = vmatprep.subr.mxu0 0.0
    %6524 = vmatpush1.msra.mxu0 0.0
    %6525 = vmatprep.subr.mxu0 0.0
    %6526 = vmatpush1.msra.mxu0 0.0
    %6527 = vmatprep.subr.mxu0 0.0
    %6528 = vmatpush1.msra.mxu0 0.0
    %6529 = vmatprep.subr.mxu0 0.0
    %6530 = vmatpush1.msra.mxu0 0.0
    %6531 = vmatprep.subr.mxu0 0.0
    %6532 = vmatpush1.msra.mxu0 0.0
    %6533 = vmatprep.subr.mxu0 0.0
    %6534 = vmatpush1.msra.mxu0 0.0
    %6535 = vmatprep.subr.mxu0 0.0
    %6536 = vmatpush1.msra.mxu0 0.0
    %6537 = vmatprep.subr.mxu0 0.0
    %6538 = vmatpush1.msra.mxu0 0.0
    %6539 = vmatprep.subr.mxu0 0.0
    %6540 = vmatpush1.msra.mxu0 0.0
    %6541 = vmatprep.subr.mxu0 0.0
    %6542 = vmatpush1.msra.mxu0 0.0
    %6543 = vmatprep.subr.mxu0 0.0
    %6544 = vmatpush1.msra.mxu0 0.0
    %6545 = vmatprep.subr.mxu0 0.0
    %6546 = vmatpush1.msra.mxu0 0.0
    %6547 = vmatprep.subr.mxu0 0.0
    %6548 = vmatpush1.msra.mxu0 0.0
    %6549 = vmatprep.subr.mxu0 0.0
    %6550 = vmatpush1.msra.mxu0 0.0
    %6551 = vmatprep.subr.mxu0 0.0
    %6552 = vmatpush1.msra.mxu0 0.0
    %6553 = vmatprep.subr.mxu0 0.0
    %6554 = vmatpush1.msra.mxu0 0.0
    %6555 = vmatprep.subr.mxu0 0.0
    %6556 = vmatpush1.msra.mxu0 0.0
    %6557 = vmatprep.subr.mxu0 0.0
    %6558 = vmatpush1.msra.mxu0 0.0
    %6559 = vmatprep.mubr.f32.mxu0 0.0
    %6560 = vmatmul.mubr.f32.gmra.mrb[0].mxu0 %v6493
    %v6561 = vpop.f32.mrb[0].mxu0
    %v6562 = vadd.f32 0.0, %v6561
    %v6563 = vpop.f32.mrb[0].mxu0
    %6564 = vdwg.mxu0
    %v6566 = vsel %vm1298, %v6490, 0
    %6568 = vmatprep.subr.mxu0 0.0
    %6569 = vmatpush1.msra.mxu0 %v6304
    %6570 = vmatprep.subr.mxu0 0.0
    %6571 = vmatpush1.msra.mxu0 %v6305
    %6572 = vmatprep.subr.mxu0 0.0
    %6573 = vmatpush1.msra.mxu0 %v6306
    %6574 = vmatprep.subr.mxu0 0.0
    %6575 = vmatpush1.msra.mxu0 %v6307
    %6576 = vmatprep.subr.mxu0 0.0
    %6577 = vmatpush1.msra.mxu0 0.0
    %6578 = vmatprep.subr.mxu0 0.0
    %6579 = vmatpush1.msra.mxu0 0.0
    %6580 = vmatprep.subr.mxu0 0.0
    %6581 = vmatpush1.msra.mxu0 0.0
    %6582 = vmatprep.subr.mxu0 0.0
    %6583 = vmatpush1.msra.mxu0 0.0
    %6584 = vmatprep.subr.mxu0 0.0
    %6585 = vmatpush1.msra.mxu0 0.0
    %6586 = vmatprep.subr.mxu0 0.0
    %6587 = vmatpush1.msra.mxu0 0.0
    %6588 = vmatprep.subr.mxu0 0.0
    %6589 = vmatpush1.msra.mxu0 0.0
    %6590 = vmatprep.subr.mxu0 0.0
    %6591 = vmatpush1.msra.mxu0 0.0
    %6592 = vmatprep.subr.mxu0 0.0
    %6593 = vmatpush1.msra.mxu0 0.0
    %6594 = vmatprep.subr.mxu0 0.0
    %6595 = vmatpush1.msra.mxu0 0.0
    %6596 = vmatprep.subr.mxu0 0.0
    %6597 = vmatpush1.msra.mxu0 0.0
    %6598 = vmatprep.subr.mxu0 0.0
    %6599 = vmatpush1.msra.mxu0 0.0
    %6600 = vmatprep.subr.mxu0 0.0
    %6601 = vmatpush1.msra.mxu0 0.0
    %6602 = vmatprep.subr.mxu0 0.0
    %6603 = vmatpush1.msra.mxu0 0.0
    %6604 = vmatprep.subr.mxu0 0.0
    %6605 = vmatpush1.msra.mxu0 0.0
    %6606 = vmatprep.subr.mxu0 0.0
    %6607 = vmatpush1.msra.mxu0 0.0
    %6608 = vmatprep.subr.mxu0 0.0
    %6609 = vmatpush1.msra.mxu0 0.0
    %6610 = vmatprep.subr.mxu0 0.0
    %6611 = vmatpush1.msra.mxu0 0.0
    %6612 = vmatprep.subr.mxu0 0.0
    %6613 = vmatpush1.msra.mxu0 0.0
    %6614 = vmatprep.subr.mxu0 0.0
    %6615 = vmatpush1.msra.mxu0 0.0
    %6616 = vmatprep.subr.mxu0 0.0
    %6617 = vmatpush1.msra.mxu0 0.0
    %6618 = vmatprep.subr.mxu0 0.0
    %6619 = vmatpush1.msra.mxu0 0.0
    %6620 = vmatprep.subr.mxu0 0.0
    %6621 = vmatpush1.msra.mxu0 0.0
    %6622 = vmatprep.subr.mxu0 0.0
    %6623 = vmatpush1.msra.mxu0 0.0
    %6624 = vmatprep.subr.mxu0 0.0
    %6625 = vmatpush1.msra.mxu0 0.0
    %6626 = vmatprep.subr.mxu0 0.0
    %6627 = vmatpush1.msra.mxu0 0.0
    %6628 = vmatprep.subr.mxu0 0.0
    %6629 = vmatpush1.msra.mxu0 0.0
    %6630 = vmatprep.subr.mxu0 0.0
    %6631 = vmatpush1.msra.mxu0 0.0
    %6632 = vmatprep.mubr.f32.mxu0 0.0
    %6633 = vmatmul.mubr.f32.gmra.mrb[0].mxu0 %v6566
    %v6634 = vpop.f32.mrb[0].mxu0
    %v6635 = vadd.f32 %v6562, %v6634
    %v6636 = vpop.f32.mrb[0].mxu0
    %6637 = vdwg.mxu0
    %v6638 = vadd.f32 %v6635, %v6414
    %v6639 = vmax.f32 %v6638, 0.0
    %v6640 = vld [vmem:[#allocation5 + $0x910] sm:$0xff]
    %v6641 = vld [vmem:[#allocation5 + $0x918] sm:$0xff]
    %v6642 = vld [vmem:[#allocation5 + $0x920] sm:$0xff]
    %v6643 = vld [vmem:[#allocation5 + $0x928] sm:$0xff]
    %v6644 = vld [vmem:[#allocation5 + $0x930] sm:$0xff]
    %v6645 = vld [vmem:[#allocation5 + $0x938] sm:$0xff]
    %v6646 = vld [vmem:[#allocation5 + $0x940] sm:$0xff]
    %v6647 = vld [vmem:[#allocation5 + $0x948] sm:$0xff]
    %v6649 = vsel %vm1298, %v6639, 0
    %6651 = vmatprep.subr.mxu0 0.0
    %6652 = vmatpush1.msra.mxu0 %v6644
    %6653 = vmatprep.subr.mxu0 0.0
    %6654 = vmatpush1.msra.mxu0 %v6645
    %6655 = vmatprep.subr.mxu0 0.0
    %6656 = vmatpush1.msra.mxu0 %v6646
    %6657 = vmatprep.subr.mxu0 0.0
    %6658 = vmatpush1.msra.mxu0 %v6647
    %6659 = vmatprep.subr.mxu0 0.0
    %6660 = vmatpush1.msra.mxu0 0.0
    %6661 = vmatprep.subr.mxu0 0.0
    %6662 = vmatpush1.msra.mxu0 0.0
    %6663 = vmatprep.subr.mxu0 0.0
    %6664 = vmatpush1.msra.mxu0 0.0
    %6665 = vmatprep.subr.mxu0 0.0
    %6666 = vmatpush1.msra.mxu0 0.0
    %6667 = vmatprep.subr.mxu0 0.0
    %6668 = vmatpush1.msra.mxu0 0.0
    %6669 = vmatprep.subr.mxu0 0.0
    %6670 = vmatpush1.msra.mxu0 0.0
    %6671 = vmatprep.subr.mxu0 0.0
    %6672 = vmatpush1.msra.mxu0 0.0
    %6673 = vmatprep.subr.mxu0 0.0
    %6674 = vmatpush1.msra.mxu0 0.0
    %6675 = vmatprep.subr.mxu0 0.0
    %6676 = vmatpush1.msra.mxu0 0.0
    %6677 = vmatprep.subr.mxu0 0.0
    %6678 = vmatpush1.msra.mxu0 0.0
    %6679 = vmatprep.subr.mxu0 0.0
    %6680 = vmatpush1.msra.mxu0 0.0
    %6681 = vmatprep.subr.mxu0 0.0
    %6682 = vmatpush1.msra.mxu0 0.0
    %6683 = vmatprep.subr.mxu0 0.0
    %6684 = vmatpush1.msra.mxu0 0.0
    %6685 = vmatprep.subr.mxu0 0.0
    %6686 = vmatpush1.msra.mxu0 0.0
    %6687 = vmatprep.subr.mxu0 0.0
    %6688 = vmatpush1.msra.mxu0 0.0
    %6689 = vmatprep.subr.mxu0 0.0
    %6690 = vmatpush1.msra.mxu0 0.0
    %6691 = vmatprep.subr.mxu0 0.0
    %6692 = vmatpush1.msra.mxu0 0.0
    %6693 = vmatprep.subr.mxu0 0.0
    %6694 = vmatpush1.msra.mxu0 0.0
    %6695 = vmatprep.subr.mxu0 0.0
    %6696 = vmatpush1.msra.mxu0 0.0
    %6697 = vmatprep.subr.mxu0 0.0
    %6698 = vmatpush1.msra.mxu0 0.0
    %6699 = vmatprep.subr.mxu0 0.0
    %6700 = vmatpush1.msra.mxu0 0.0
    %6701 = vmatprep.subr.mxu0 0.0
    %6702 = vmatpush1.msra.mxu0 0.0
    %6703 = vmatprep.subr.mxu0 0.0
    %6704 = vmatpush1.msra.mxu0 0.0
    %6705 = vmatprep.subr.mxu0 0.0
    %6706 = vmatpush1.msra.mxu0 0.0
    %6707 = vmatprep.subr.mxu0 0.0
    %6708 = vmatpush1.msra.mxu0 0.0
    %6709 = vmatprep.subr.mxu0 0.0
    %6710 = vmatpush1.msra.mxu0 0.0
    %6711 = vmatprep.subr.mxu0 0.0
    %6712 = vmatpush1.msra.mxu0 0.0
    %6713 = vmatprep.subr.mxu0 0.0
    %6714 = vmatpush1.msra.mxu0 0.0
    %6715 = vmatprep.mubr.f32.mxu0 0.0
    %6716 = vmatmul.mubr.f32.gmra.mrb[0].mxu0 %v6649
    %v6717 = vpop.f32.mrb[0].mxu0
    %v6718 = vadd.f32 0.0, %v6717
    %v6719 = vpop.f32.mrb[0].mxu0
    %6720 = vdwg.mxu0
    %v6722 = vsel %vm1298, %v6489, 0
    %6724 = vmatprep.subr.mxu0 0.0
    %6725 = vmatpush1.msra.mxu0 %v6640
    %6726 = vmatprep.subr.mxu0 0.0
    %6727 = vmatpush1.msra.mxu0 %v6641
    %6728 = vmatprep.subr.mxu0 0.0
    %6729 = vmatpush1.msra.mxu0 %v6642
    %6730 = vmatprep.subr.mxu0 0.0
    %6731 = vmatpush1.msra.mxu0 %v6643
    %6732 = vmatprep.subr.mxu0 0.0
    %6733 = vmatpush1.msra.mxu0 0.0
    %6734 = vmatprep.subr.mxu0 0.0
    %6735 = vmatpush1.msra.mxu0 0.0
    %6736 = vmatprep.subr.mxu0 0.0
    %6737 = vmatpush1.msra.mxu0 0.0
    %6738 = vmatprep.subr.mxu0 0.0
    %6739 = vmatpush1.msra.mxu0 0.0
    %6740 = vmatprep.subr.mxu0 0.0
    %6741 = vmatpush1.msra.mxu0 0.0
    %6742 = vmatprep.subr.mxu0 0.0
    %6743 = vmatpush1.msra.mxu0 0.0
    %6744 = vmatprep.subr.mxu0 0.0
    %6745 = vmatpush1.msra.mxu0 0.0
    %6746 = vmatprep.subr.mxu0 0.0
    %6747 = vmatpush1.msra.mxu0 0.0
    %6748 = vmatprep.subr.mxu0 0.0
    %6749 = vmatpush1.msra.mxu0 0.0
    %6750 = vmatprep.subr.mxu0 0.0
    %6751 = vmatpush1.msra.mxu0 0.0
    %6752 = vmatprep.subr.mxu0 0.0
    %6753 = vmatpush1.msra.mxu0 0.0
    %6754 = vmatprep.subr.mxu0 0.0
    %6755 = vmatpush1.msra.mxu0 0.0
    %6756 = vmatprep.subr.mxu0 0.0
    %6757 = vmatpush1.msra.mxu0 0.0
    %6758 = vmatprep.subr.mxu0 0.0
    %6759 = vmatpush1.msra.mxu0 0.0
    %6760 = vmatprep.subr.mxu0 0.0
    %6761 = vmatpush1.msra.mxu0 0.0
    %6762 = vmatprep.subr.mxu0 0.0
    %6763 = vmatpush1.msra.mxu0 0.0
    %6764 = vmatprep.subr.mxu0 0.0
    %6765 = vmatpush1.msra.mxu0 0.0
    %6766 = vmatprep.subr.mxu0 0.0
    %6767 = vmatpush1.msra.mxu0 0.0
    %6768 = vmatprep.subr.mxu0 0.0
    %6769 = vmatpush1.msra.mxu0 0.0
    %6770 = vmatprep.subr.mxu0 0.0
    %6771 = vmatpush1.msra.mxu0 0.0
    %6772 = vmatprep.subr.mxu0 0.0
    %6773 = vmatpush1.msra.mxu0 0.0
    %6774 = vmatprep.subr.mxu0 0.0
    %6775 = vmatpush1.msra.mxu0 0.0
    %6776 = vmatprep.subr.mxu0 0.0
    %6777 = vmatpush1.msra.mxu0 0.0
    %6778 = vmatprep.subr.mxu0 0.0
    %6779 = vmatpush1.msra.mxu0 0.0
    %6780 = vmatprep.subr.mxu0 0.0
    %6781 = vmatpush1.msra.mxu0 0.0
    %6782 = vmatprep.subr.mxu0 0.0
    %6783 = vmatpush1.msra.mxu0 0.0
    %6784 = vmatprep.subr.mxu0 0.0
    %6785 = vmatpush1.msra.mxu0 0.0
    %6786 = vmatprep.subr.mxu0 0.0
    %6787 = vmatpush1.msra.mxu0 0.0
    %6788 = vmatprep.mubr.f32.mxu0 0.0
    %6789 = vmatmul.mubr.f32.gmra.mrb[0].mxu0 %v6722
    %v6790 = vpop.f32.mrb[0].mxu0
    %v6791 = vadd.f32 %v6718, %v6790
    %v6792 = vpop.f32.mrb[0].mxu0
    %6793 = vdwg.mxu0
    %v6794 = vld [vmem:[#allocation5 + $0x950] sm:$0xff]
    %v6795 = vld [vmem:[#allocation5 + $0x958] sm:$0xff]
    %v6796 = vld [vmem:[#allocation5 + $0x960] sm:$0xff]
    %v6797 = vld [vmem:[#allocation5 + $0x968] sm:$0xff]
    %v6798 = vld [vmem:[#allocation5 + $0x970] sm:$0xff]
    %v6799 = vld [vmem:[#allocation5 + $0x978] sm:$0xff]
    %v6800 = vld [vmem:[#allocation5 + $0x980] sm:$0xff]
    %v6801 = vld [vmem:[#allocation5 + $0x988] sm:$0xff]
    %v6803 = vsel %vm554, %v6798, 0
    %v6806 = vsel %vm554, %v6799, 0
    %v6809 = vsel %vm554, %v6800, 0
    %v6812 = vsel %vm554, %v6801, 0
    %6814 = vmatprep.subr.mxu0 0.0
    %6815 = vmatpush1.msra.mxu0 %v6791
    %6816 = vmatprep.subr.mxu0 0.0
    %6817 = vmatpush1.msra.mxu0 0.0
    %6818 = vmatprep.subr.mxu0 0.0
    %6819 = vmatpush1.msra.mxu0 0.0
    %6820 = vmatprep.subr.mxu0 0.0
    %6821 = vmatpush1.msra.mxu0 0.0
    %6822 = vmatprep.subr.mxu0 0.0
    %6823 = vmatpush1.msra.mxu0 0.0
    %6824 = vmatprep.subr.mxu0 0.0
    %6825 = vmatpush1.msra.mxu0 0.0
    %6826 = vmatprep.subr.mxu0 0.0
    %6827 = vmatpush1.msra.mxu0 0.0
    %6828 = vmatprep.subr.mxu0 0.0
    %6829 = vmatpush1.msra.mxu0 0.0
    %6830 = vmatprep.subr.mxu0 0.0
    %6831 = vmatpush1.msra.mxu0 0.0
    %6832 = vmatprep.subr.mxu0 0.0
    %6833 = vmatpush1.msra.mxu0 0.0
    %6834 = vmatprep.subr.mxu0 0.0
    %6835 = vmatpush1.msra.mxu0 0.0
    %6836 = vmatprep.subr.mxu0 0.0
    %6837 = vmatpush1.msra.mxu0 0.0
    %6838 = vmatprep.subr.mxu0 0.0
    %6839 = vmatpush1.msra.mxu0 0.0
    %6840 = vmatprep.subr.mxu0 0.0
    %6841 = vmatpush1.msra.mxu0 0.0
    %6842 = vmatprep.subr.mxu0 0.0
    %6843 = vmatpush1.msra.mxu0 0.0
    %6844 = vmatprep.subr.mxu0 0.0
    %6845 = vmatpush1.msra.mxu0 0.0
    %6846 = vmatprep.subr.mxu0 0.0
    %6847 = vmatpush1.msra.mxu0 0.0
    %6848 = vmatprep.subr.mxu0 0.0
    %6849 = vmatpush1.msra.mxu0 0.0
    %6850 = vmatprep.subr.mxu0 0.0
    %6851 = vmatpush1.msra.mxu0 0.0
    %6852 = vmatprep.subr.mxu0 0.0
    %6853 = vmatpush1.msra.mxu0 0.0
    %6854 = vmatprep.subr.mxu0 0.0
    %6855 = vmatpush1.msra.mxu0 0.0
    %6856 = vmatprep.subr.mxu0 0.0
    %6857 = vmatpush1.msra.mxu0 0.0
    %6858 = vmatprep.subr.mxu0 0.0
    %6859 = vmatpush1.msra.mxu0 0.0
    %6860 = vmatprep.subr.mxu0 0.0
    %6861 = vmatpush1.msra.mxu0 0.0
    %6862 = vmatprep.subr.mxu0 0.0
    %6863 = vmatpush1.msra.mxu0 0.0
    %6864 = vmatprep.subr.mxu0 0.0
    %6865 = vmatpush1.msra.mxu0 0.0
    %6866 = vmatprep.subr.mxu0 0.0
    %6867 = vmatpush1.msra.mxu0 0.0
    %6868 = vmatprep.subr.mxu0 0.0
    %6869 = vmatpush1.msra.mxu0 0.0
    %6870 = vmatprep.subr.mxu0 0.0
    %6871 = vmatpush1.msra.mxu0 0.0
    %6872 = vmatprep.subr.mxu0 0.0
    %6873 = vmatpush1.msra.mxu0 0.0
    %6874 = vmatprep.subr.mxu0 0.0
    %6875 = vmatpush1.msra.mxu0 0.0
    %6876 = vmatprep.subr.mxu0 0.0
    %6877 = vmatpush1.msra.mxu0 0.0
    %6878 = vmatprep.mubr.f32.mxu0 0.0
    %6879 = vmatmul.mubr.f32.gmra.mrb[0].mxu0 %v6803
    %v6880 = vpop.f32.mrb[0].mxu0
    %v6881 = vadd.f32 0.0, %v6880
    %v6882 = vpop.f32.mrb[0].mxu0
    %6883 = vmatprep.mubr.f32.mxu0 0.0
    %6884 = vmatmul.mubr.f32.gmra.mrb[0].mxu0 %v6806
    %v6885 = vpop.f32.mrb[0].mxu0
    %v6886 = vadd.f32 0.0, %v6885
    %v6887 = vpop.f32.mrb[0].mxu0
    %6888 = vmatprep.mubr.f32.mxu0 0.0
    %6889 = vmatmul.mubr.f32.gmra.mrb[0].mxu0 %v6809
    %v6890 = vpop.f32.mrb[0].mxu0
    %v6891 = vadd.f32 0.0, %v6890
    %v6892 = vpop.f32.mrb[0].mxu0
    %6893 = vmatprep.mubr.f32.mxu0 0.0
    %6894 = vmatmul.mubr.f32.gmra.mrb[0].mxu0 %v6812
    %v6895 = vpop.f32.mrb[0].mxu0
    %v6896 = vadd.f32 0.0, %v6895
    %v6897 = vpop.f32.mrb[0].mxu0
    %6898 = vdwg.mxu0
    %v6900 = vsel %vm554, %v6794, 0
    %v6903 = vsel %vm554, %v6795, 0
    %v6906 = vsel %vm554, %v6796, 0
    %v6909 = vsel %vm554, %v6797, 0
    %6911 = vmatprep.subr.mxu0 0.0
    %6912 = vmatpush1.msra.mxu0 %v642
    %6913 = vmatprep.subr.mxu0 0.0
    %6914 = vmatpush1.msra.mxu0 0.0
    %6915 = vmatprep.subr.mxu0 0.0
    %6916 = vmatpush1.msra.mxu0 0.0
    %6917 = vmatprep.subr.mxu0 0.0
    %6918 = vmatpush1.msra.mxu0 0.0
    %6919 = vmatprep.subr.mxu0 0.0
    %6920 = vmatpush1.msra.mxu0 0.0
    %6921 = vmatprep.subr.mxu0 0.0
    %6922 = vmatpush1.msra.mxu0 0.0
    %6923 = vmatprep.subr.mxu0 0.0
    %6924 = vmatpush1.msra.mxu0 0.0
    %6925 = vmatprep.subr.mxu0 0.0
    %6926 = vmatpush1.msra.mxu0 0.0
    %6927 = vmatprep.subr.mxu0 0.0
    %6928 = vmatpush1.msra.mxu0 0.0
    %6929 = vmatprep.subr.mxu0 0.0
    %6930 = vmatpush1.msra.mxu0 0.0
    %6931 = vmatprep.subr.mxu0 0.0
    %6932 = vmatpush1.msra.mxu0 0.0
    %6933 = vmatprep.subr.mxu0 0.0
    %6934 = vmatpush1.msra.mxu0 0.0
    %6935 = vmatprep.subr.mxu0 0.0
    %6936 = vmatpush1.msra.mxu0 0.0
    %6937 = vmatprep.subr.mxu0 0.0
    %6938 = vmatpush1.msra.mxu0 0.0
    %6939 = vmatprep.subr.mxu0 0.0
    %6940 = vmatpush1.msra.mxu0 0.0
    %6941 = vmatprep.subr.mxu0 0.0
    %6942 = vmatpush1.msra.mxu0 0.0
    %6943 = vmatprep.subr.mxu0 0.0
    %6944 = vmatpush1.msra.mxu0 0.0
    %6945 = vmatprep.subr.mxu0 0.0
    %6946 = vmatpush1.msra.mxu0 0.0
    %6947 = vmatprep.subr.mxu0 0.0
    %6948 = vmatpush1.msra.mxu0 0.0
    %6949 = vmatprep.subr.mxu0 0.0
    %6950 = vmatpush1.msra.mxu0 0.0
    %6951 = vmatprep.subr.mxu0 0.0
    %6952 = vmatpush1.msra.mxu0 0.0
    %6953 = vmatprep.subr.mxu0 0.0
    %6954 = vmatpush1.msra.mxu0 0.0
    %6955 = vmatprep.subr.mxu0 0.0
    %6956 = vmatpush1.msra.mxu0 0.0
    %6957 = vmatprep.subr.mxu0 0.0
    %6958 = vmatpush1.msra.mxu0 0.0
    %6959 = vmatprep.subr.mxu0 0.0
    %6960 = vmatpush1.msra.mxu0 0.0
    %6961 = vmatprep.subr.mxu0 0.0
    %6962 = vmatpush1.msra.mxu0 0.0
    %6963 = vmatprep.subr.mxu0 0.0
    %6964 = vmatpush1.msra.mxu0 0.0
    %6965 = vmatprep.subr.mxu0 0.0
    %6966 = vmatpush1.msra.mxu0 0.0
    %6967 = vmatprep.subr.mxu0 0.0
    %6968 = vmatpush1.msra.mxu0 0.0
    %6969 = vmatprep.subr.mxu0 0.0
    %6970 = vmatpush1.msra.mxu0 0.0
    %6971 = vmatprep.subr.mxu0 0.0
    %6972 = vmatpush1.msra.mxu0 0.0
    %6973 = vmatprep.subr.mxu0 0.0
    %6974 = vmatpush1.msra.mxu0 0.0
    %6975 = vmatprep.mubr.f32.mxu0 0.0
    %6976 = vmatmul.mubr.f32.gmra.mrb[0].mxu0 %v6900
    %v6977 = vpop.f32.mrb[0].mxu0
    %v6978 = vadd.f32 %v6881, %v6977
    %v6979 = vpop.f32.mrb[0].mxu0
    %6980 = vmatprep.mubr.f32.mxu0 0.0
    %6981 = vmatmul.mubr.f32.gmra.mrb[0].mxu0 %v6903
    %v6982 = vpop.f32.mrb[0].mxu0
    %v6983 = vadd.f32 %v6886, %v6982
    %v6984 = vpop.f32.mrb[0].mxu0
    %6985 = vmatprep.mubr.f32.mxu0 0.0
    %6986 = vmatmul.mubr.f32.gmra.mrb[0].mxu0 %v6906
    %v6987 = vpop.f32.mrb[0].mxu0
    %v6988 = vadd.f32 %v6891, %v6987
    %v6989 = vpop.f32.mrb[0].mxu0
    %6990 = vmatprep.mubr.f32.mxu0 0.0
    %6991 = vmatmul.mubr.f32.gmra.mrb[0].mxu0 %v6909
    %v6992 = vpop.f32.mrb[0].mxu0
    %v6993 = vadd.f32 %v6896, %v6992
    %v6994 = vpop.f32.mrb[0].mxu0
    %6995 = vdwg.mxu0
    %v6996 = vld [vmem:[#allocation5 + $0x990] sm:$0xff]
    %v6997 = vld [vmem:[#allocation5 + $0x998] sm:$0xff]
    %v6998 = vld [vmem:[#allocation5 + $0x9a0] sm:$0xff]
    %v6999 = vld [vmem:[#allocation5 + $0x9a8] sm:$0xff]
    %7001 = vset.pattern.permute.xlu0 0
    %7002 = vperm.xlu0 %7001, %v6996
    %v7003 = vpop.permute.xlu0 %7002
    %7006 = vset.pattern.permute.xlu0 0
    %7007 = vperm.xlu0 %7006, %v6997
    %v7008 = vpop.permute.xlu0 %7007
    %7011 = vset.pattern.permute.xlu0 0
    %7012 = vperm.xlu0 %7011, %v6998
    %v7013 = vpop.permute.xlu0 %7012
    %7016 = vset.pattern.permute.xlu0 0
    %7017 = vperm.xlu0 %7016, %v6999
    %v7018 = vpop.permute.xlu0 %7017
    %v7020 = vadd.f32 %v6978, %v7003
    %v7021 = vadd.f32 %v6983, %v7008
    %v7022 = vadd.f32 %v6988, %v7013
    %v7023 = vadd.f32 %v6993, %v7018
    %v7024 = vxor.u32 %v7022, 2147483648
    %v7025 = vxor.u32 %v7023, 2147483648
    %v7026 = vmul.f32 %v7024, 1.442695
    %v7027 = vpow.pop %v7026
    %v7028 = vmul.f32 %v7025, 1.442695
    %v7029 = vpow.pop %v7028
    %v7030 = vadd.f32 %v7027, 1.0
    %v7031 = vadd.f32 %v7029, 1.0
    %v7032 = vrcp.pop %v7030
    %v7033 = vmul.f32 1.0, %v7032
    %v7034 = vrcp.pop %v7031
    %v7035 = vmul.f32 1.0, %v7034
    %v7036 = vmul.f32 %v7020, %v7033
    %v7037 = vmul.f32 %v7021, %v7035
    %v7038 = vld [vmem:[#allocation5 + $0x9d0] sm:$0xff]
    %v7039 = vld [vmem:[#allocation5 + $0x9d8] sm:$0xff]
    %v7040 = vld [vmem:[#allocation5 + $0x9e0] sm:$0xff]
    %v7041 = vld [vmem:[#allocation5 + $0x9e8] sm:$0xff]
    %v7042 = vld [vmem:[#allocation5 + $0x9f0] sm:$0xff]
    %v7043 = vld [vmem:[#allocation5 + $0x9f8] sm:$0xff]
    %v7044 = vld [vmem:[#allocation5 + $0xa00] sm:$0xff]
    %v7045 = vld [vmem:[#allocation5 + $0xa08] sm:$0xff]
    %v7047 = vsel %vm653, %v7036, 0
    %v7050 = vsel %vm653, %v7037, 0
    %7052 = vmatprep.subr.mxu0 0.0
    %7053 = vmatpush1.msra.mxu0 %v7038
    %7054 = vmatprep.subr.mxu0 0.0
    %7055 = vmatpush1.msra.mxu0 %v7039
    %7056 = vmatprep.subr.mxu0 0.0
    %7057 = vmatpush1.msra.mxu0 %v7040
    %7058 = vmatprep.subr.mxu0 0.0
    %7059 = vmatpush1.msra.mxu0 %v7041
    %7060 = vmatprep.subr.mxu0 0.0
    %7061 = vmatpush1.msra.mxu0 %v7042
    %7062 = vmatprep.subr.mxu0 0.0
    %7063 = vmatpush1.msra.mxu0 %v7043
    %7064 = vmatprep.subr.mxu0 0.0
    %7065 = vmatpush1.msra.mxu0 %v7044
    %7066 = vmatprep.subr.mxu0 0.0
    %7067 = vmatpush1.msra.mxu0 %v7045
    %7068 = vmatprep.subr.mxu0 0.0
    %7069 = vmatpush1.msra.mxu0 0.0
    %7070 = vmatprep.subr.mxu0 0.0
    %7071 = vmatpush1.msra.mxu0 0.0
    %7072 = vmatprep.subr.mxu0 0.0
    %7073 = vmatpush1.msra.mxu0 0.0
    %7074 = vmatprep.subr.mxu0 0.0
    %7075 = vmatpush1.msra.mxu0 0.0
    %7076 = vmatprep.subr.mxu0 0.0
    %7077 = vmatpush1.msra.mxu0 0.0
    %7078 = vmatprep.subr.mxu0 0.0
    %7079 = vmatpush1.msra.mxu0 0.0
    %7080 = vmatprep.subr.mxu0 0.0
    %7081 = vmatpush1.msra.mxu0 0.0
    %7082 = vmatprep.subr.mxu0 0.0
    %7083 = vmatpush1.msra.mxu0 0.0
    %7084 = vmatprep.subr.mxu0 0.0
    %7085 = vmatpush1.msra.mxu0 0.0
    %7086 = vmatprep.subr.mxu0 0.0
    %7087 = vmatpush1.msra.mxu0 0.0
    %7088 = vmatprep.subr.mxu0 0.0
    %7089 = vmatpush1.msra.mxu0 0.0
    %7090 = vmatprep.subr.mxu0 0.0
    %7091 = vmatpush1.msra.mxu0 0.0
    %7092 = vmatprep.subr.mxu0 0.0
    %7093 = vmatpush1.msra.mxu0 0.0
    %7094 = vmatprep.subr.mxu0 0.0
    %7095 = vmatpush1.msra.mxu0 0.0
    %7096 = vmatprep.subr.mxu0 0.0
    %7097 = vmatpush1.msra.mxu0 0.0
    %7098 = vmatprep.subr.mxu0 0.0
    %7099 = vmatpush1.msra.mxu0 0.0
    %7100 = vmatprep.subr.mxu0 0.0
    %7101 = vmatpush1.msra.mxu0 0.0
    %7102 = vmatprep.subr.mxu0 0.0
    %7103 = vmatpush1.msra.mxu0 0.0
    %7104 = vmatprep.subr.mxu0 0.0
    %7105 = vmatpush1.msra.mxu0 0.0
    %7106 = vmatprep.subr.mxu0 0.0
    %7107 = vmatpush1.msra.mxu0 0.0
    %7108 = vmatprep.subr.mxu0 0.0
    %7109 = vmatpush1.msra.mxu0 0.0
    %7110 = vmatprep.subr.mxu0 0.0
    %7111 = vmatpush1.msra.mxu0 0.0
    %7112 = vmatprep.subr.mxu0 0.0
    %7113 = vmatpush1.msra.mxu0 0.0
    %7114 = vmatprep.subr.mxu0 0.0
    %7115 = vmatpush1.msra.mxu0 0.0
    %7116 = vmatprep.mubr.f32.mxu0 0.0
    %7117 = vmatmul.mubr.f32.gmra.mrb[0].mxu0 %v7047
    %v7118 = vpop.f32.mrb[0].mxu0
    %v7119 = vadd.f32 0.0, %v7118
    %v7120 = vpop.f32.mrb[0].mxu0
    %7121 = vmatprep.mubr.f32.mxu0 0.0
    %7122 = vmatmul.mubr.f32.gmra.mrb[0].mxu0 %v7050
    %v7123 = vpop.f32.mrb[0].mxu0
    %v7124 = vadd.f32 0.0, %v7123
    %v7125 = vpop.f32.mrb[0].mxu0
    %7126 = vdwg.mxu0
    %v7127 = vld [vmem:[#allocation5 + $0x9c8] sm:$0x3]
    %v7128 = vld [vmem:[#allocation5 + $0x9b8] sm:$0x3]
    %7130 = vset.pattern.permute.xlu0 0
    %7131 = vperm.xlu0 %7130, %v7127
    %v7132 = vpop.permute.xlu0 %7131
    %v7135 = vsel %vm1178, %v7128, 0
    %7137 = vmatprep.subr.mxu0 0.0
    %7138 = vmatpush1.msra.mxu0 %v7036
    %7139 = vmatprep.subr.mxu0 0.0
    %7140 = vmatpush1.msra.mxu0 %v7037
    %7141 = vmatprep.subr.mxu0 0.0
    %7142 = vmatpush1.msra.mxu0 0.0
    %7143 = vmatprep.subr.mxu0 0.0
    %7144 = vmatpush1.msra.mxu0 0.0
    %7145 = vmatprep.subr.mxu0 0.0
    %7146 = vmatpush1.msra.mxu0 0.0
    %7147 = vmatprep.subr.mxu0 0.0
    %7148 = vmatpush1.msra.mxu0 0.0
    %7149 = vmatprep.subr.mxu0 0.0
    %7150 = vmatpush1.msra.mxu0 0.0
    %7151 = vmatprep.subr.mxu0 0.0
    %7152 = vmatpush1.msra.mxu0 0.0
    %7153 = vmatprep.subr.mxu0 0.0
    %7154 = vmatpush1.msra.mxu0 0.0
    %7155 = vmatprep.subr.mxu0 0.0
    %7156 = vmatpush1.msra.mxu0 0.0
    %7157 = vmatprep.subr.mxu0 0.0
    %7158 = vmatpush1.msra.mxu0 0.0
    %7159 = vmatprep.subr.mxu0 0.0
    %7160 = vmatpush1.msra.mxu0 0.0
    %7161 = vmatprep.subr.mxu0 0.0
    %7162 = vmatpush1.msra.mxu0 0.0
    %7163 = vmatprep.subr.mxu0 0.0
    %7164 = vmatpush1.msra.mxu0 0.0
    %7165 = vmatprep.subr.mxu0 0.0
    %7166 = vmatpush1.msra.mxu0 0.0
    %7167 = vmatprep.subr.mxu0 0.0
    %7168 = vmatpush1.msra.mxu0 0.0
    %7169 = vmatprep.subr.mxu0 0.0
    %7170 = vmatpush1.msra.mxu0 0.0
    %7171 = vmatprep.subr.mxu0 0.0
    %7172 = vmatpush1.msra.mxu0 0.0
    %7173 = vmatprep.subr.mxu0 0.0
    %7174 = vmatpush1.msra.mxu0 0.0
    %7175 = vmatprep.subr.mxu0 0.0
    %7176 = vmatpush1.msra.mxu0 0.0
    %7177 = vmatprep.subr.mxu0 0.0
    %7178 = vmatpush1.msra.mxu0 0.0
    %7179 = vmatprep.subr.mxu0 0.0
    %7180 = vmatpush1.msra.mxu0 0.0
    %7181 = vmatprep.subr.mxu0 0.0
    %7182 = vmatpush1.msra.mxu0 0.0
    %7183 = vmatprep.subr.mxu0 0.0
    %7184 = vmatpush1.msra.mxu0 0.0
    %7185 = vmatprep.subr.mxu0 0.0
    %7186 = vmatpush1.msra.mxu0 0.0
    %7187 = vmatprep.subr.mxu0 0.0
    %7188 = vmatpush1.msra.mxu0 0.0
    %7189 = vmatprep.subr.mxu0 0.0
    %7190 = vmatpush1.msra.mxu0 0.0
    %7191 = vmatprep.subr.mxu0 0.0
    %7192 = vmatpush1.msra.mxu0 0.0
    %7193 = vmatprep.subr.mxu0 0.0
    %7194 = vmatpush1.msra.mxu0 0.0
    %7195 = vmatprep.subr.mxu0 0.0
    %7196 = vmatpush1.msra.mxu0 0.0
    %7197 = vmatprep.subr.mxu0 0.0
    %7198 = vmatpush1.msra.mxu0 0.0
    %7199 = vmatprep.subr.mxu0 0.0
    %7200 = vmatpush1.msra.mxu0 0.0
    %7201 = vmatprep.mubr.f32.mxu0 0.0
    %7202 = vmatmul.mubr.f32.gmra.mrb[0].mxu0 %v7135
    %v7203 = vpop.f32.mrb[0].mxu0
    %v7204 = vadd.f32 %v7132, %v7203
    %v7205 = vpop.f32.mrb[0].mxu0
    %7206 = vdwg.mxu0
    %v7207 = vmax.f32 %v7204, 0.0
    %v7208 = vld [vmem:[#allocation5 + $0x9c0] sm:$0x3]
    %v7209 = vld [vmem:[#allocation5 + $0x9b0] sm:$0x3]
    %v7211 = vsel %vm1178, %v7209, 0
    %7213 = vmatprep.subr.mxu0 0.0
    %7214 = vmatpush1.msra.mxu0 %v7119
    %7215 = vmatprep.subr.mxu0 0.0
    %7216 = vmatpush1.msra.mxu0 %v7124
    %7217 = vmatprep.subr.mxu0 0.0
    %7218 = vmatpush1.msra.mxu0 0.0
    %7219 = vmatprep.subr.mxu0 0.0
    %7220 = vmatpush1.msra.mxu0 0.0
    %7221 = vmatprep.subr.mxu0 0.0
    %7222 = vmatpush1.msra.mxu0 0.0
    %7223 = vmatprep.subr.mxu0 0.0
    %7224 = vmatpush1.msra.mxu0 0.0
    %7225 = vmatprep.subr.mxu0 0.0
    %7226 = vmatpush1.msra.mxu0 0.0
    %7227 = vmatprep.subr.mxu0 0.0
    %7228 = vmatpush1.msra.mxu0 0.0
    %7229 = vmatprep.subr.mxu0 0.0
    %7230 = vmatpush1.msra.mxu0 0.0
    %7231 = vmatprep.subr.mxu0 0.0
    %7232 = vmatpush1.msra.mxu0 0.0
    %7233 = vmatprep.subr.mxu0 0.0
    %7234 = vmatpush1.msra.mxu0 0.0
    %7235 = vmatprep.subr.mxu0 0.0
    %7236 = vmatpush1.msra.mxu0 0.0
    %7237 = vmatprep.subr.mxu0 0.0
    %7238 = vmatpush1.msra.mxu0 0.0
    %7239 = vmatprep.subr.mxu0 0.0
    %7240 = vmatpush1.msra.mxu0 0.0
    %7241 = vmatprep.subr.mxu0 0.0
    %7242 = vmatpush1.msra.mxu0 0.0
    %7243 = vmatprep.subr.mxu0 0.0
    %7244 = vmatpush1.msra.mxu0 0.0
    %7245 = vmatprep.subr.mxu0 0.0
    %7246 = vmatpush1.msra.mxu0 0.0
    %7247 = vmatprep.subr.mxu0 0.0
    %7248 = vmatpush1.msra.mxu0 0.0
    %7249 = vmatprep.subr.mxu0 0.0
    %7250 = vmatpush1.msra.mxu0 0.0
    %7251 = vmatprep.subr.mxu0 0.0
    %7252 = vmatpush1.msra.mxu0 0.0
    %7253 = vmatprep.subr.mxu0 0.0
    %7254 = vmatpush1.msra.mxu0 0.0
    %7255 = vmatprep.subr.mxu0 0.0
    %7256 = vmatpush1.msra.mxu0 0.0
    %7257 = vmatprep.subr.mxu0 0.0
    %7258 = vmatpush1.msra.mxu0 0.0
    %7259 = vmatprep.subr.mxu0 0.0
    %7260 = vmatpush1.msra.mxu0 0.0
    %7261 = vmatprep.subr.mxu0 0.0
    %7262 = vmatpush1.msra.mxu0 0.0
    %7263 = vmatprep.subr.mxu0 0.0
    %7264 = vmatpush1.msra.mxu0 0.0
    %7265 = vmatprep.subr.mxu0 0.0
    %7266 = vmatpush1.msra.mxu0 0.0
    %7267 = vmatprep.subr.mxu0 0.0
    %7268 = vmatpush1.msra.mxu0 0.0
    %7269 = vmatprep.subr.mxu0 0.0
    %7270 = vmatpush1.msra.mxu0 0.0
    %7271 = vmatprep.subr.mxu0 0.0
    %7272 = vmatpush1.msra.mxu0 0.0
    %7273 = vmatprep.subr.mxu0 0.0
    %7274 = vmatpush1.msra.mxu0 0.0
    %7275 = vmatprep.subr.mxu0 0.0
    %7276 = vmatpush1.msra.mxu0 0.0
    %7277 = vmatprep.mubr.f32.mxu0 0.0
    %7278 = vmatmul.mubr.f32.gmra.mrb[0].mxu0 %v7211
    %v7279 = vpop.f32.mrb[0].mxu0
    %v7280 = vadd.f32 0.0, %v7279
    %v7281 = vpop.f32.mrb[0].mxu0
    %7282 = vdwg.mxu0
    %v7284 = vsel %vm1178, %v7208, 0
    %7286 = vmatprep.subr.mxu0 0.0
    %7287 = vmatpush1.msra.mxu0 %v7036
    %7288 = vmatprep.subr.mxu0 0.0
    %7289 = vmatpush1.msra.mxu0 %v7037
    %7290 = vmatprep.subr.mxu0 0.0
    %7291 = vmatpush1.msra.mxu0 0.0
    %7292 = vmatprep.subr.mxu0 0.0
    %7293 = vmatpush1.msra.mxu0 0.0
    %7294 = vmatprep.subr.mxu0 0.0
    %7295 = vmatpush1.msra.mxu0 0.0
    %7296 = vmatprep.subr.mxu0 0.0
    %7297 = vmatpush1.msra.mxu0 0.0
    %7298 = vmatprep.subr.mxu0 0.0
    %7299 = vmatpush1.msra.mxu0 0.0
    %7300 = vmatprep.subr.mxu0 0.0
    %7301 = vmatpush1.msra.mxu0 0.0
    %7302 = vmatprep.subr.mxu0 0.0
    %7303 = vmatpush1.msra.mxu0 0.0
    %7304 = vmatprep.subr.mxu0 0.0
    %7305 = vmatpush1.msra.mxu0 0.0
    %7306 = vmatprep.subr.mxu0 0.0
    %7307 = vmatpush1.msra.mxu0 0.0
    %7308 = vmatprep.subr.mxu0 0.0
    %7309 = vmatpush1.msra.mxu0 0.0
    %7310 = vmatprep.subr.mxu0 0.0
    %7311 = vmatpush1.msra.mxu0 0.0
    %7312 = vmatprep.subr.mxu0 0.0
    %7313 = vmatpush1.msra.mxu0 0.0
    %7314 = vmatprep.subr.mxu0 0.0
    %7315 = vmatpush1.msra.mxu0 0.0
    %7316 = vmatprep.subr.mxu0 0.0
    %7317 = vmatpush1.msra.mxu0 0.0
    %7318 = vmatprep.subr.mxu0 0.0
    %7319 = vmatpush1.msra.mxu0 0.0
    %7320 = vmatprep.subr.mxu0 0.0
    %7321 = vmatpush1.msra.mxu0 0.0
    %7322 = vmatprep.subr.mxu0 0.0
    %7323 = vmatpush1.msra.mxu0 0.0
    %7324 = vmatprep.subr.mxu0 0.0
    %7325 = vmatpush1.msra.mxu0 0.0
    %7326 = vmatprep.subr.mxu0 0.0
    %7327 = vmatpush1.msra.mxu0 0.0
    %7328 = vmatprep.subr.mxu0 0.0
    %7329 = vmatpush1.msra.mxu0 0.0
    %7330 = vmatprep.subr.mxu0 0.0
    %7331 = vmatpush1.msra.mxu0 0.0
    %7332 = vmatprep.subr.mxu0 0.0
    %7333 = vmatpush1.msra.mxu0 0.0
    %7334 = vmatprep.subr.mxu0 0.0
    %7335 = vmatpush1.msra.mxu0 0.0
    %7336 = vmatprep.subr.mxu0 0.0
    %7337 = vmatpush1.msra.mxu0 0.0
    %7338 = vmatprep.subr.mxu0 0.0
    %7339 = vmatpush1.msra.mxu0 0.0
    %7340 = vmatprep.subr.mxu0 0.0
    %7341 = vmatpush1.msra.mxu0 0.0
    %7342 = vmatprep.subr.mxu0 0.0
    %7343 = vmatpush1.msra.mxu0 0.0
    %7344 = vmatprep.subr.mxu0 0.0
    %7345 = vmatpush1.msra.mxu0 0.0
    %7346 = vmatprep.subr.mxu0 0.0
    %7347 = vmatpush1.msra.mxu0 0.0
    %7348 = vmatprep.subr.mxu0 0.0
    %7349 = vmatpush1.msra.mxu0 0.0
    %7350 = vmatprep.mubr.f32.mxu0 0.0
    %7351 = vmatmul.mubr.f32.gmra.mrb[0].mxu0 %v7284
    %v7352 = vpop.f32.mrb[0].mxu0
    %v7353 = vadd.f32 %v7280, %v7352
    %v7354 = vpop.f32.mrb[0].mxu0
    %7355 = vdwg.mxu0
    %v7356 = vadd.f32 %v7353, %v7132
    %v7357 = vmax.f32 %v7356, 0.0
    %v7358 = vld [vmem:[#allocation5 + $0xa10] sm:$0xff]
    %v7359 = vld [vmem:[#allocation5 + $0xa18] sm:$0xff]
    %v7360 = vld [vmem:[#allocation5 + $0xa20] sm:$0xff]
    %v7361 = vld [vmem:[#allocation5 + $0xa28] sm:$0xff]
    %v7362 = vld [vmem:[#allocation5 + $0xa30] sm:$0xff]
    %v7363 = vld [vmem:[#allocation5 + $0xa38] sm:$0xff]
    %v7364 = vld [vmem:[#allocation5 + $0xa40] sm:$0xff]
    %v7365 = vld [vmem:[#allocation5 + $0xa48] sm:$0xff]
    %v7366 = vld [vmem:[#allocation5 + $0xa50] sm:$0xff]
    %v7367 = vld [vmem:[#allocation5 + $0xa58] sm:$0xff]
    %v7368 = vld [vmem:[#allocation5 + $0xa60] sm:$0xff]
    %v7369 = vld [vmem:[#allocation5 + $0xa68] sm:$0xff]
    %v7370 = vld [vmem:[#allocation5 + $0xa70] sm:$0xff]
    %v7371 = vld [vmem:[#allocation5 + $0xa78] sm:$0xff]
    %v7372 = vld [vmem:[#allocation5 + $0xa80] sm:$0xff]
    %v7373 = vld [vmem:[#allocation5 + $0xa88] sm:$0xff]
    %v7375 = vsel %vm653, %v7357, 0
    %7377 = vmatprep.subr.mxu0 0.0
    %7378 = vmatpush1.msra.mxu0 %v7366
    %7379 = vmatprep.subr.mxu0 0.0
    %7380 = vmatpush1.msra.mxu0 %v7367
    %7381 = vmatprep.subr.mxu0 0.0
    %7382 = vmatpush1.msra.mxu0 %v7368
    %7383 = vmatprep.subr.mxu0 0.0
    %7384 = vmatpush1.msra.mxu0 %v7369
    %7385 = vmatprep.subr.mxu0 0.0
    %7386 = vmatpush1.msra.mxu0 %v7370
    %7387 = vmatprep.subr.mxu0 0.0
    %7388 = vmatpush1.msra.mxu0 %v7371
    %7389 = vmatprep.subr.mxu0 0.0
    %7390 = vmatpush1.msra.mxu0 %v7372
    %7391 = vmatprep.subr.mxu0 0.0
    %7392 = vmatpush1.msra.mxu0 %v7373
    %7393 = vmatprep.subr.mxu0 0.0
    %7394 = vmatpush1.msra.mxu0 0.0
    %7395 = vmatprep.subr.mxu0 0.0
    %7396 = vmatpush1.msra.mxu0 0.0
    %7397 = vmatprep.subr.mxu0 0.0
    %7398 = vmatpush1.msra.mxu0 0.0
    %7399 = vmatprep.subr.mxu0 0.0
    %7400 = vmatpush1.msra.mxu0 0.0
    %7401 = vmatprep.subr.mxu0 0.0
    %7402 = vmatpush1.msra.mxu0 0.0
    %7403 = vmatprep.subr.mxu0 0.0
    %7404 = vmatpush1.msra.mxu0 0.0
    %7405 = vmatprep.subr.mxu0 0.0
    %7406 = vmatpush1.msra.mxu0 0.0
    %7407 = vmatprep.subr.mxu0 0.0
    %7408 = vmatpush1.msra.mxu0 0.0
    %7409 = vmatprep.subr.mxu0 0.0
    %7410 = vmatpush1.msra.mxu0 0.0
    %7411 = vmatprep.subr.mxu0 0.0
    %7412 = vmatpush1.msra.mxu0 0.0
    %7413 = vmatprep.subr.mxu0 0.0
    %7414 = vmatpush1.msra.mxu0 0.0
    %7415 = vmatprep.subr.mxu0 0.0
    %7416 = vmatpush1.msra.mxu0 0.0
    %7417 = vmatprep.subr.mxu0 0.0
    %7418 = vmatpush1.msra.mxu0 0.0
    %7419 = vmatprep.subr.mxu0 0.0
    %7420 = vmatpush1.msra.mxu0 0.0
    %7421 = vmatprep.subr.mxu0 0.0
    %7422 = vmatpush1.msra.mxu0 0.0
    %7423 = vmatprep.subr.mxu0 0.0
    %7424 = vmatpush1.msra.mxu0 0.0
    %7425 = vmatprep.subr.mxu0 0.0
    %7426 = vmatpush1.msra.mxu0 0.0
    %7427 = vmatprep.subr.mxu0 0.0
    %7428 = vmatpush1.msra.mxu0 0.0
    %7429 = vmatprep.subr.mxu0 0.0
    %7430 = vmatpush1.msra.mxu0 0.0
    %7431 = vmatprep.subr.mxu0 0.0
    %7432 = vmatpush1.msra.mxu0 0.0
    %7433 = vmatprep.subr.mxu0 0.0
    %7434 = vmatpush1.msra.mxu0 0.0
    %7435 = vmatprep.subr.mxu0 0.0
    %7436 = vmatpush1.msra.mxu0 0.0
    %7437 = vmatprep.subr.mxu0 0.0
    %7438 = vmatpush1.msra.mxu0 0.0
    %7439 = vmatprep.subr.mxu0 0.0
    %7440 = vmatpush1.msra.mxu0 0.0
    %7441 = vmatprep.mubr.f32.mxu0 0.0
    %7442 = vmatmul.mubr.f32.gmra.mrb[0].mxu0 %v7375
    %v7443 = vpop.f32.mrb[0].mxu0
    %v7444 = vadd.f32 0.0, %v7443
    %v7445 = vpop.f32.mrb[0].mxu0
    %7446 = vdwg.mxu0
    %v7448 = vsel %vm653, %v7207, 0
    %7450 = vmatprep.subr.mxu0 0.0
    %7451 = vmatpush1.msra.mxu0 %v7358
    %7452 = vmatprep.subr.mxu0 0.0
    %7453 = vmatpush1.msra.mxu0 %v7359
    %7454 = vmatprep.subr.mxu0 0.0
    %7455 = vmatpush1.msra.mxu0 %v7360
    %7456 = vmatprep.subr.mxu0 0.0
    %7457 = vmatpush1.msra.mxu0 %v7361
    %7458 = vmatprep.subr.mxu0 0.0
    %7459 = vmatpush1.msra.mxu0 %v7362
    %7460 = vmatprep.subr.mxu0 0.0
    %7461 = vmatpush1.msra.mxu0 %v7363
    %7462 = vmatprep.subr.mxu0 0.0
    %7463 = vmatpush1.msra.mxu0 %v7364
    %7464 = vmatprep.subr.mxu0 0.0
    %7465 = vmatpush1.msra.mxu0 %v7365
    %7466 = vmatprep.subr.mxu0 0.0
    %7467 = vmatpush1.msra.mxu0 0.0
    %7468 = vmatprep.subr.mxu0 0.0
    %7469 = vmatpush1.msra.mxu0 0.0
    %7470 = vmatprep.subr.mxu0 0.0
    %7471 = vmatpush1.msra.mxu0 0.0
    %7472 = vmatprep.subr.mxu0 0.0
    %7473 = vmatpush1.msra.mxu0 0.0
    %7474 = vmatprep.subr.mxu0 0.0
    %7475 = vmatpush1.msra.mxu0 0.0
    %7476 = vmatprep.subr.mxu0 0.0
    %7477 = vmatpush1.msra.mxu0 0.0
    %7478 = vmatprep.subr.mxu0 0.0
    %7479 = vmatpush1.msra.mxu0 0.0
    %7480 = vmatprep.subr.mxu0 0.0
    %7481 = vmatpush1.msra.mxu0 0.0
    %7482 = vmatprep.subr.mxu0 0.0
    %7483 = vmatpush1.msra.mxu0 0.0
    %7484 = vmatprep.subr.mxu0 0.0
    %7485 = vmatpush1.msra.mxu0 0.0
    %7486 = vmatprep.subr.mxu0 0.0
    %7487 = vmatpush1.msra.mxu0 0.0
    %7488 = vmatprep.subr.mxu0 0.0
    %7489 = vmatpush1.msra.mxu0 0.0
    %7490 = vmatprep.subr.mxu0 0.0
    %7491 = vmatpush1.msra.mxu0 0.0
    %7492 = vmatprep.subr.mxu0 0.0
    %7493 = vmatpush1.msra.mxu0 0.0
    %7494 = vmatprep.subr.mxu0 0.0
    %7495 = vmatpush1.msra.mxu0 0.0
    %7496 = vmatprep.subr.mxu0 0.0
    %7497 = vmatpush1.msra.mxu0 0.0
    %7498 = vmatprep.subr.mxu0 0.0
    %7499 = vmatpush1.msra.mxu0 0.0
    %7500 = vmatprep.subr.mxu0 0.0
    %7501 = vmatpush1.msra.mxu0 0.0
    %7502 = vmatprep.subr.mxu0 0.0
    %7503 = vmatpush1.msra.mxu0 0.0
    %7504 = vmatprep.subr.mxu0 0.0
    %7505 = vmatpush1.msra.mxu0 0.0
    %7506 = vmatprep.subr.mxu0 0.0
    %7507 = vmatpush1.msra.mxu0 0.0
    %7508 = vmatprep.subr.mxu0 0.0
    %7509 = vmatpush1.msra.mxu0 0.0
    %7510 = vmatprep.subr.mxu0 0.0
    %7511 = vmatpush1.msra.mxu0 0.0
    %7512 = vmatprep.subr.mxu0 0.0
    %7513 = vmatpush1.msra.mxu0 0.0
    %7514 = vmatprep.mubr.f32.mxu0 0.0
    %7515 = vmatmul.mubr.f32.gmra.mrb[0].mxu0 %v7448
    %v7516 = vpop.f32.mrb[0].mxu0
    %v7517 = vadd.f32 %v7444, %v7516
    %v7518 = vpop.f32.mrb[0].mxu0
    %7519 = vdwg.mxu0
    %v7520 = vld [vmem:[#allocation5 + $0xa90] sm:$0xf]
    %v7521 = vld [vmem:[#allocation5 + $0xa98] sm:$0xf]
    %v7523 = vsel %vm127, %v7521, 0
    %v7526 = vsel %vm131, %v7517, 0
    %7528 = vmatprep.subr.mxu0 0.0
    %7529 = vmatpush1.msra.mxu0 %v7526
    %7530 = vmatprep.subr.mxu0 0.0
    %7531 = vmatpush1.msra.mxu0 0.0
    %7532 = vmatprep.subr.mxu0 0.0
    %7533 = vmatpush1.msra.mxu0 0.0
    %7534 = vmatprep.subr.mxu0 0.0
    %7535 = vmatpush1.msra.mxu0 0.0
    %7536 = vmatprep.subr.mxu0 0.0
    %7537 = vmatpush1.msra.mxu0 0.0
    %7538 = vmatprep.subr.mxu0 0.0
    %7539 = vmatpush1.msra.mxu0 0.0
    %7540 = vmatprep.subr.mxu0 0.0
    %7541 = vmatpush1.msra.mxu0 0.0
    %7542 = vmatprep.subr.mxu0 0.0
    %7543 = vmatpush1.msra.mxu0 0.0
    %7544 = vmatprep.subr.mxu0 0.0
    %7545 = vmatpush1.msra.mxu0 0.0
    %7546 = vmatprep.subr.mxu0 0.0
    %7547 = vmatpush1.msra.mxu0 0.0
    %7548 = vmatprep.subr.mxu0 0.0
    %7549 = vmatpush1.msra.mxu0 0.0
    %7550 = vmatprep.subr.mxu0 0.0
    %7551 = vmatpush1.msra.mxu0 0.0
    %7552 = vmatprep.subr.mxu0 0.0
    %7553 = vmatpush1.msra.mxu0 0.0
    %7554 = vmatprep.subr.mxu0 0.0
    %7555 = vmatpush1.msra.mxu0 0.0
    %7556 = vmatprep.subr.mxu0 0.0
    %7557 = vmatpush1.msra.mxu0 0.0
    %7558 = vmatprep.subr.mxu0 0.0
    %7559 = vmatpush1.msra.mxu0 0.0
    %7560 = vmatprep.subr.mxu0 0.0
    %7561 = vmatpush1.msra.mxu0 0.0
    %7562 = vmatprep.subr.mxu0 0.0
    %7563 = vmatpush1.msra.mxu0 0.0
    %7564 = vmatprep.subr.mxu0 0.0
    %7565 = vmatpush1.msra.mxu0 0.0
    %7566 = vmatprep.subr.mxu0 0.0
    %7567 = vmatpush1.msra.mxu0 0.0
    %7568 = vmatprep.subr.mxu0 0.0
    %7569 = vmatpush1.msra.mxu0 0.0
    %7570 = vmatprep.subr.mxu0 0.0
    %7571 = vmatpush1.msra.mxu0 0.0
    %7572 = vmatprep.subr.mxu0 0.0
    %7573 = vmatpush1.msra.mxu0 0.0
    %7574 = vmatprep.subr.mxu0 0.0
    %7575 = vmatpush1.msra.mxu0 0.0
    %7576 = vmatprep.subr.mxu0 0.0
    %7577 = vmatpush1.msra.mxu0 0.0
    %7578 = vmatprep.subr.mxu0 0.0
    %7579 = vmatpush1.msra.mxu0 0.0
    %7580 = vmatprep.subr.mxu0 0.0
    %7581 = vmatpush1.msra.mxu0 0.0
    %7582 = vmatprep.subr.mxu0 0.0
    %7583 = vmatpush1.msra.mxu0 0.0
    %7584 = vmatprep.subr.mxu0 0.0
    %7585 = vmatpush1.msra.mxu0 0.0
    %7586 = vmatprep.subr.mxu0 0.0
    %7587 = vmatpush1.msra.mxu0 0.0
    %7588 = vmatprep.subr.mxu0 0.0
    %7589 = vmatpush1.msra.mxu0 0.0
    %7590 = vmatprep.subr.mxu0 0.0
    %7591 = vmatpush1.msra.mxu0 0.0
    %7592 = vmatprep.mubr.f32.mxu0 0.0
    %7593 = vmatmul.mubr.f32.gmra.mrb[0].mxu0 %v7523
    %v7594 = vpop.f32.mrb[0].mxu0
    %v7595 = vadd.f32 0.0, %v7594
    %v7596 = vpop.f32.mrb[0].mxu0
    %7597 = vdwg.mxu0
    %v7599 = vsel %vm127, %v7520, 0
    %v7602 = vsel %vm131, %v38, 0
    %7604 = vmatprep.subr.mxu0 0.0
    %7605 = vmatpush1.msra.mxu0 %v7602
    %7606 = vmatprep.subr.mxu0 0.0
    %7607 = vmatpush1.msra.mxu0 0.0
    %7608 = vmatprep.subr.mxu0 0.0
    %7609 = vmatpush1.msra.mxu0 0.0
    %7610 = vmatprep.subr.mxu0 0.0
    %7611 = vmatpush1.msra.mxu0 0.0
    %7612 = vmatprep.subr.mxu0 0.0
    %7613 = vmatpush1.msra.mxu0 0.0
    %7614 = vmatprep.subr.mxu0 0.0
    %7615 = vmatpush1.msra.mxu0 0.0
    %7616 = vmatprep.subr.mxu0 0.0
    %7617 = vmatpush1.msra.mxu0 0.0
    %7618 = vmatprep.subr.mxu0 0.0
    %7619 = vmatpush1.msra.mxu0 0.0
    %7620 = vmatprep.subr.mxu0 0.0
    %7621 = vmatpush1.msra.mxu0 0.0
    %7622 = vmatprep.subr.mxu0 0.0
    %7623 = vmatpush1.msra.mxu0 0.0
    %7624 = vmatprep.subr.mxu0 0.0
    %7625 = vmatpush1.msra.mxu0 0.0
    %7626 = vmatprep.subr.mxu0 0.0
    %7627 = vmatpush1.msra.mxu0 0.0
    %7628 = vmatprep.subr.mxu0 0.0
    %7629 = vmatpush1.msra.mxu0 0.0
    %7630 = vmatprep.subr.mxu0 0.0
    %7631 = vmatpush1.msra.mxu0 0.0
    %7632 = vmatprep.subr.mxu0 0.0
    %7633 = vmatpush1.msra.mxu0 0.0
    %7634 = vmatprep.subr.mxu0 0.0
    %7635 = vmatpush1.msra.mxu0 0.0
    %7636 = vmatprep.subr.mxu0 0.0
    %7637 = vmatpush1.msra.mxu0 0.0
    %7638 = vmatprep.subr.mxu0 0.0
    %7639 = vmatpush1.msra.mxu0 0.0
    %7640 = vmatprep.subr.mxu0 0.0
    %7641 = vmatpush1.msra.mxu0 0.0
    %7642 = vmatprep.subr.mxu0 0.0
    %7643 = vmatpush1.msra.mxu0 0.0
    %7644 = vmatprep.subr.mxu0 0.0
    %7645 = vmatpush1.msra.mxu0 0.0
    %7646 = vmatprep.subr.mxu0 0.0
    %7647 = vmatpush1.msra.mxu0 0.0
    %7648 = vmatprep.subr.mxu0 0.0
    %7649 = vmatpush1.msra.mxu0 0.0
    %7650 = vmatprep.subr.mxu0 0.0
    %7651 = vmatpush1.msra.mxu0 0.0
    %7652 = vmatprep.subr.mxu0 0.0
    %7653 = vmatpush1.msra.mxu0 0.0
    %7654 = vmatprep.subr.mxu0 0.0
    %7655 = vmatpush1.msra.mxu0 0.0
    %7656 = vmatprep.subr.mxu0 0.0
    %7657 = vmatpush1.msra.mxu0 0.0
    %7658 = vmatprep.subr.mxu0 0.0
    %7659 = vmatpush1.msra.mxu0 0.0
    %7660 = vmatprep.subr.mxu0 0.0
    %7661 = vmatpush1.msra.mxu0 0.0
    %7662 = vmatprep.subr.mxu0 0.0
    %7663 = vmatpush1.msra.mxu0 0.0
    %7664 = vmatprep.subr.mxu0 0.0
    %7665 = vmatpush1.msra.mxu0 0.0
    %7666 = vmatprep.subr.mxu0 0.0
    %7667 = vmatpush1.msra.mxu0 0.0
    %7668 = vmatprep.mubr.f32.mxu0 0.0
    %7669 = vmatmul.mubr.f32.gmra.mrb[0].mxu0 %v7599
    %v7670 = vpop.f32.mrb[0].mxu0
    %v7671 = vadd.f32 %v7595, %v7670
    %v7672 = vpop.f32.mrb[0].mxu0
    %7673 = vdwg.mxu0
    %v7674 = vld [vmem:[#allocation5 + $0xaa0] sm:$0xf]
    %7676 = vset.pattern.permute.xlu0 0
    %7677 = vperm.xlu0 %7676, %v7674
    %v7678 = vpop.permute.xlu0 %7677
    %v7680 = vadd.f32 %v7671, %v7678
    %v7681 = vld [vmem:[#allocation5 + $0xaa8] sm:$0xf]
    %v7682 = vld [vmem:[#allocation5 + $0xab0] sm:$0xf]
    %v7684 = vsel %vm127, %v7682, 0
    %7686 = vmatprep.subr.mxu0 0.0
    %7687 = vmatpush1.msra.mxu0 %v7526
    %7688 = vmatprep.subr.mxu0 0.0
    %7689 = vmatpush1.msra.mxu0 0.0
    %7690 = vmatprep.subr.mxu0 0.0
    %7691 = vmatpush1.msra.mxu0 0.0
    %7692 = vmatprep.subr.mxu0 0.0
    %7693 = vmatpush1.msra.mxu0 0.0
    %7694 = vmatprep.subr.mxu0 0.0
    %7695 = vmatpush1.msra.mxu0 0.0
    %7696 = vmatprep.subr.mxu0 0.0
    %7697 = vmatpush1.msra.mxu0 0.0
    %7698 = vmatprep.subr.mxu0 0.0
    %7699 = vmatpush1.msra.mxu0 0.0
    %7700 = vmatprep.subr.mxu0 0.0
    %7701 = vmatpush1.msra.mxu0 0.0
    %7702 = vmatprep.subr.mxu0 0.0
    %7703 = vmatpush1.msra.mxu0 0.0
    %7704 = vmatprep.subr.mxu0 0.0
    %7705 = vmatpush1.msra.mxu0 0.0
    %7706 = vmatprep.subr.mxu0 0.0
    %7707 = vmatpush1.msra.mxu0 0.0
    %7708 = vmatprep.subr.mxu0 0.0
    %7709 = vmatpush1.msra.mxu0 0.0
    %7710 = vmatprep.subr.mxu0 0.0
    %7711 = vmatpush1.msra.mxu0 0.0
    %7712 = vmatprep.subr.mxu0 0.0
    %7713 = vmatpush1.msra.mxu0 0.0
    %7714 = vmatprep.subr.mxu0 0.0
    %7715 = vmatpush1.msra.mxu0 0.0
    %7716 = vmatprep.subr.mxu0 0.0
    %7717 = vmatpush1.msra.mxu0 0.0
    %7718 = vmatprep.subr.mxu0 0.0
    %7719 = vmatpush1.msra.mxu0 0.0
    %7720 = vmatprep.subr.mxu0 0.0
    %7721 = vmatpush1.msra.mxu0 0.0
    %7722 = vmatprep.subr.mxu0 0.0
    %7723 = vmatpush1.msra.mxu0 0.0
    %7724 = vmatprep.subr.mxu0 0.0
    %7725 = vmatpush1.msra.mxu0 0.0
    %7726 = vmatprep.subr.mxu0 0.0
    %7727 = vmatpush1.msra.mxu0 0.0
    %7728 = vmatprep.subr.mxu0 0.0
    %7729 = vmatpush1.msra.mxu0 0.0
    %7730 = vmatprep.subr.mxu0 0.0
    %7731 = vmatpush1.msra.mxu0 0.0
    %7732 = vmatprep.subr.mxu0 0.0
    %7733 = vmatpush1.msra.mxu0 0.0
    %7734 = vmatprep.subr.mxu0 0.0
    %7735 = vmatpush1.msra.mxu0 0.0
    %7736 = vmatprep.subr.mxu0 0.0
    %7737 = vmatpush1.msra.mxu0 0.0
    %7738 = vmatprep.subr.mxu0 0.0
    %7739 = vmatpush1.msra.mxu0 0.0
    %7740 = vmatprep.subr.mxu0 0.0
    %7741 = vmatpush1.msra.mxu0 0.0
    %7742 = vmatprep.subr.mxu0 0.0
    %7743 = vmatpush1.msra.mxu0 0.0
    %7744 = vmatprep.subr.mxu0 0.0
    %7745 = vmatpush1.msra.mxu0 0.0
    %7746 = vmatprep.subr.mxu0 0.0
    %7747 = vmatpush1.msra.mxu0 0.0
    %7748 = vmatprep.subr.mxu0 0.0
    %7749 = vmatpush1.msra.mxu0 0.0
    %7750 = vmatprep.mubr.f32.mxu0 0.0
    %7751 = vmatmul.mubr.f32.gmra.mrb[0].mxu0 %v7684
    %v7752 = vpop.f32.mrb[0].mxu0
    %v7753 = vadd.f32 0.0, %v7752
    %v7754 = vpop.f32.mrb[0].mxu0
    %7755 = vdwg.mxu0
    %v7757 = vsel %vm127, %v7681, 0
    %7759 = vmatprep.subr.mxu0 0.0
    %7760 = vmatpush1.msra.mxu0 %v7602
    %7761 = vmatprep.subr.mxu0 0.0
    %7762 = vmatpush1.msra.mxu0 0.0
    %7763 = vmatprep.subr.mxu0 0.0
    %7764 = vmatpush1.msra.mxu0 0.0
    %7765 = vmatprep.subr.mxu0 0.0
    %7766 = vmatpush1.msra.mxu0 0.0
    %7767 = vmatprep.subr.mxu0 0.0
    %7768 = vmatpush1.msra.mxu0 0.0
    %7769 = vmatprep.subr.mxu0 0.0
    %7770 = vmatpush1.msra.mxu0 0.0
    %7771 = vmatprep.subr.mxu0 0.0
    %7772 = vmatpush1.msra.mxu0 0.0
    %7773 = vmatprep.subr.mxu0 0.0
    %7774 = vmatpush1.msra.mxu0 0.0
    %7775 = vmatprep.subr.mxu0 0.0
    %7776 = vmatpush1.msra.mxu0 0.0
    %7777 = vmatprep.subr.mxu0 0.0
    %7778 = vmatpush1.msra.mxu0 0.0
    %7779 = vmatprep.subr.mxu0 0.0
    %7780 = vmatpush1.msra.mxu0 0.0
    %7781 = vmatprep.subr.mxu0 0.0
    %7782 = vmatpush1.msra.mxu0 0.0
    %7783 = vmatprep.subr.mxu0 0.0
    %7784 = vmatpush1.msra.mxu0 0.0
    %7785 = vmatprep.subr.mxu0 0.0
    %7786 = vmatpush1.msra.mxu0 0.0
    %7787 = vmatprep.subr.mxu0 0.0
    %7788 = vmatpush1.msra.mxu0 0.0
    %7789 = vmatprep.subr.mxu0 0.0
    %7790 = vmatpush1.msra.mxu0 0.0
    %7791 = vmatprep.subr.mxu0 0.0
    %7792 = vmatpush1.msra.mxu0 0.0
    %7793 = vmatprep.subr.mxu0 0.0
    %7794 = vmatpush1.msra.mxu0 0.0
    %7795 = vmatprep.subr.mxu0 0.0
    %7796 = vmatpush1.msra.mxu0 0.0
    %7797 = vmatprep.subr.mxu0 0.0
    %7798 = vmatpush1.msra.mxu0 0.0
    %7799 = vmatprep.subr.mxu0 0.0
    %7800 = vmatpush1.msra.mxu0 0.0
    %7801 = vmatprep.subr.mxu0 0.0
    %7802 = vmatpush1.msra.mxu0 0.0
    %7803 = vmatprep.subr.mxu0 0.0
    %7804 = vmatpush1.msra.mxu0 0.0
    %7805 = vmatprep.subr.mxu0 0.0
    %7806 = vmatpush1.msra.mxu0 0.0
    %7807 = vmatprep.subr.mxu0 0.0
    %7808 = vmatpush1.msra.mxu0 0.0
    %7809 = vmatprep.subr.mxu0 0.0
    %7810 = vmatpush1.msra.mxu0 0.0
    %7811 = vmatprep.subr.mxu0 0.0
    %7812 = vmatpush1.msra.mxu0 0.0
    %7813 = vmatprep.subr.mxu0 0.0
    %7814 = vmatpush1.msra.mxu0 0.0
    %7815 = vmatprep.subr.mxu0 0.0
    %7816 = vmatpush1.msra.mxu0 0.0
    %7817 = vmatprep.subr.mxu0 0.0
    %7818 = vmatpush1.msra.mxu0 0.0
    %7819 = vmatprep.subr.mxu0 0.0
    %7820 = vmatpush1.msra.mxu0 0.0
    %7821 = vmatprep.subr.mxu0 0.0
    %7822 = vmatpush1.msra.mxu0 0.0
    %7823 = vmatprep.mubr.f32.mxu0 0.0
    %7824 = vmatmul.mubr.f32.gmra.mrb[0].mxu0 %v7757
    %v7825 = vpop.f32.mrb[0].mxu0
    %v7826 = vadd.f32 %v7753, %v7825
    %v7827 = vpop.f32.mrb[0].mxu0
    %7828 = vdwg.mxu0
    %v7829 = vld [vmem:[#allocation5 + $0xab8] sm:$0xf]
    %7831 = vset.pattern.permute.xlu0 0
    %7832 = vperm.xlu0 %7831, %v7829
    %v7833 = vpop.permute.xlu0 %7832
    %v7835 = vadd.f32 %v7826, %v7833
    %v7836 = vxor.u32 %v7835, 2147483648
    %v7837 = vmul.f32 %v7836, 1.442695
    %v7838 = vpow.pop %v7837
    %v7839 = vadd.f32 %v7838, 1.0
    %v7840 = vrcp.pop %v7839
    %v7841 = vmul.f32 1.0, %v7840
    %v7842 = vmul.f32 %v7680, %v7841
    %7844 = vrot.lane.b32.xlu0 %v7842, 127
    %v7845 = vpop.permute.xlu0 %7844
    %vm7847 = vcmask 1039360
    %v7848 = vsel %vm7847, %v7845, 0.0
    %7849 = vrot.lane.b32.xlu0 %v7842, 1
    %v7850 = vpop.permute.xlu0 %7849
    %vm7852 = vcmask 7168
    %v7853 = vsel %vm7852, 0.0, %v7850
    %v7854 = vld [vmem:[#allocation5 + $0xac0] sm:$0x3]
    %v7855 = vld [vmem:[#allocation5 + $0xac8] sm:$0x3]
    %v7857 = vsel %vm2487, %v7855, 0
    %vm7859 = vcmask 1043456
    %v7860 = vsel %vm7859, %v7842, 0
    %7862 = vmatprep.subr.mxu0 0.0
    %7863 = vmatpush1.msra.mxu0 %v7860
    %7864 = vmatprep.subr.mxu0 0.0
    %7865 = vmatpush1.msra.mxu0 0.0
    %7866 = vmatprep.subr.mxu0 0.0
    %7867 = vmatpush1.msra.mxu0 0.0
    %7868 = vmatprep.subr.mxu0 0.0
    %7869 = vmatpush1.msra.mxu0 0.0
    %7870 = vmatprep.subr.mxu0 0.0
    %7871 = vmatpush1.msra.mxu0 0.0
    %7872 = vmatprep.subr.mxu0 0.0
    %7873 = vmatpush1.msra.mxu0 0.0
    %7874 = vmatprep.subr.mxu0 0.0
    %7875 = vmatpush1.msra.mxu0 0.0
    %7876 = vmatprep.subr.mxu0 0.0
    %7877 = vmatpush1.msra.mxu0 0.0
    %7878 = vmatprep.subr.mxu0 0.0
    %7879 = vmatpush1.msra.mxu0 0.0
    %7880 = vmatprep.subr.mxu0 0.0
    %7881 = vmatpush1.msra.mxu0 0.0
    %7882 = vmatprep.subr.mxu0 0.0
    %7883 = vmatpush1.msra.mxu0 0.0
    %7884 = vmatprep.subr.mxu0 0.0
    %7885 = vmatpush1.msra.mxu0 0.0
    %7886 = vmatprep.subr.mxu0 0.0
    %7887 = vmatpush1.msra.mxu0 0.0
    %7888 = vmatprep.subr.mxu0 0.0
    %7889 = vmatpush1.msra.mxu0 0.0
    %7890 = vmatprep.subr.mxu0 0.0
    %7891 = vmatpush1.msra.mxu0 0.0
    %7892 = vmatprep.subr.mxu0 0.0
    %7893 = vmatpush1.msra.mxu0 0.0
    %7894 = vmatprep.subr.mxu0 0.0
    %7895 = vmatpush1.msra.mxu0 0.0
    %7896 = vmatprep.subr.mxu0 0.0
    %7897 = vmatpush1.msra.mxu0 0.0
    %7898 = vmatprep.subr.mxu0 0.0
    %7899 = vmatpush1.msra.mxu0 0.0
    %7900 = vmatprep.subr.mxu0 0.0
    %7901 = vmatpush1.msra.mxu0 0.0
    %7902 = vmatprep.subr.mxu0 0.0
    %7903 = vmatpush1.msra.mxu0 0.0
    %7904 = vmatprep.subr.mxu0 0.0
    %7905 = vmatpush1.msra.mxu0 0.0
    %7906 = vmatprep.subr.mxu0 0.0
    %7907 = vmatpush1.msra.mxu0 0.0
    %7908 = vmatprep.subr.mxu0 0.0
    %7909 = vmatpush1.msra.mxu0 0.0
    %7910 = vmatprep.subr.mxu0 0.0
    %7911 = vmatpush1.msra.mxu0 0.0
    %7912 = vmatprep.subr.mxu0 0.0
    %7913 = vmatpush1.msra.mxu0 0.0
    %7914 = vmatprep.subr.mxu0 0.0
    %7915 = vmatpush1.msra.mxu0 0.0
    %7916 = vmatprep.subr.mxu0 0.0
    %7917 = vmatpush1.msra.mxu0 0.0
    %7918 = vmatprep.subr.mxu0 0.0
    %7919 = vmatpush1.msra.mxu0 0.0
    %7920 = vmatprep.subr.mxu0 0.0
    %7921 = vmatpush1.msra.mxu0 0.0
    %7922 = vmatprep.subr.mxu0 0.0
    %7923 = vmatpush1.msra.mxu0 0.0
    %7924 = vmatprep.subr.mxu0 0.0
    %7925 = vmatpush1.msra.mxu0 0.0
    %7926 = vmatprep.mubr.f32.mxu0 0.0
    %7927 = vmatmul.mubr.f32.gmra.mrb[0].mxu0 %v7857
    %v7928 = vpop.f32.mrb[0].mxu0
    %v7929 = vadd.f32 0.0, %v7928
    %v7930 = vpop.f32.mrb[0].mxu0
    %7931 = vdwg.mxu0
    %v7933 = vsel %vm2487, %v7854, 0
    %v7936 = vsel %vm7859, %v7848, 0
    %7938 = vmatprep.subr.mxu0 0.0
    %7939 = vmatpush1.msra.mxu0 %v7936
    %7940 = vmatprep.subr.mxu0 0.0
    %7941 = vmatpush1.msra.mxu0 0.0
    %7942 = vmatprep.subr.mxu0 0.0
    %7943 = vmatpush1.msra.mxu0 0.0
    %7944 = vmatprep.subr.mxu0 0.0
    %7945 = vmatpush1.msra.mxu0 0.0
    %7946 = vmatprep.subr.mxu0 0.0
    %7947 = vmatpush1.msra.mxu0 0.0
    %7948 = vmatprep.subr.mxu0 0.0
    %7949 = vmatpush1.msra.mxu0 0.0
    %7950 = vmatprep.subr.mxu0 0.0
    %7951 = vmatpush1.msra.mxu0 0.0
    %7952 = vmatprep.subr.mxu0 0.0
    %7953 = vmatpush1.msra.mxu0 0.0
    %7954 = vmatprep.subr.mxu0 0.0
    %7955 = vmatpush1.msra.mxu0 0.0
    %7956 = vmatprep.subr.mxu0 0.0
    %7957 = vmatpush1.msra.mxu0 0.0
    %7958 = vmatprep.subr.mxu0 0.0
    %7959 = vmatpush1.msra.mxu0 0.0
    %7960 = vmatprep.subr.mxu0 0.0
    %7961 = vmatpush1.msra.mxu0 0.0
    %7962 = vmatprep.subr.mxu0 0.0
    %7963 = vmatpush1.msra.mxu0 0.0
    %7964 = vmatprep.subr.mxu0 0.0
    %7965 = vmatpush1.msra.mxu0 0.0
    %7966 = vmatprep.subr.mxu0 0.0
    %7967 = vmatpush1.msra.mxu0 0.0
    %7968 = vmatprep.subr.mxu0 0.0
    %7969 = vmatpush1.msra.mxu0 0.0
    %7970 = vmatprep.subr.mxu0 0.0
    %7971 = vmatpush1.msra.mxu0 0.0
    %7972 = vmatprep.subr.mxu0 0.0
    %7973 = vmatpush1.msra.mxu0 0.0
    %7974 = vmatprep.subr.mxu0 0.0
    %7975 = vmatpush1.msra.mxu0 0.0
    %7976 = vmatprep.subr.mxu0 0.0
    %7977 = vmatpush1.msra.mxu0 0.0
    %7978 = vmatprep.subr.mxu0 0.0
    %7979 = vmatpush1.msra.mxu0 0.0
    %7980 = vmatprep.subr.mxu0 0.0
    %7981 = vmatpush1.msra.mxu0 0.0
    %7982 = vmatprep.subr.mxu0 0.0
    %7983 = vmatpush1.msra.mxu0 0.0
    %7984 = vmatprep.subr.mxu0 0.0
    %7985 = vmatpush1.msra.mxu0 0.0
    %7986 = vmatprep.subr.mxu0 0.0
    %7987 = vmatpush1.msra.mxu0 0.0
    %7988 = vmatprep.subr.mxu0 0.0
    %7989 = vmatpush1.msra.mxu0 0.0
    %7990 = vmatprep.subr.mxu0 0.0
    %7991 = vmatpush1.msra.mxu0 0.0
    %7992 = vmatprep.subr.mxu0 0.0
    %7993 = vmatpush1.msra.mxu0 0.0
    %7994 = vmatprep.subr.mxu0 0.0
    %7995 = vmatpush1.msra.mxu0 0.0
    %7996 = vmatprep.subr.mxu0 0.0
    %7997 = vmatpush1.msra.mxu0 0.0
    %7998 = vmatprep.subr.mxu0 0.0
    %7999 = vmatpush1.msra.mxu0 0.0
    %8000 = vmatprep.subr.mxu0 0.0
    %8001 = vmatpush1.msra.mxu0 0.0
    %8002 = vmatprep.mubr.f32.mxu0 0.0
    %8003 = vmatmul.mubr.f32.gmra.mrb[0].mxu0 %v7933
    %v8004 = vpop.f32.mrb[0].mxu0
    %v8005 = vadd.f32 %v7929, %v8004
    %v8006 = vpop.f32.mrb[0].mxu0
    %8007 = vdwg.mxu0
    %v8008 = vld [vmem:[#allocation5 + $0xad0] sm:$0x3]
    %v8010 = vsel %vm2487, %v8008, 0
    %v8013 = vsel %vm7859, %v7853, 0
    %8015 = vmatprep.subr.mxu0 0.0
    %8016 = vmatpush1.msra.mxu0 %v8013
    %8017 = vmatprep.subr.mxu0 0.0
    %8018 = vmatpush1.msra.mxu0 0.0
    %8019 = vmatprep.subr.mxu0 0.0
    %8020 = vmatpush1.msra.mxu0 0.0
    %8021 = vmatprep.subr.mxu0 0.0
    %8022 = vmatpush1.msra.mxu0 0.0
    %8023 = vmatprep.subr.mxu0 0.0
    %8024 = vmatpush1.msra.mxu0 0.0
    %8025 = vmatprep.subr.mxu0 0.0
    %8026 = vmatpush1.msra.mxu0 0.0
    %8027 = vmatprep.subr.mxu0 0.0
    %8028 = vmatpush1.msra.mxu0 0.0
    %8029 = vmatprep.subr.mxu0 0.0
    %8030 = vmatpush1.msra.mxu0 0.0
    %8031 = vmatprep.subr.mxu0 0.0
    %8032 = vmatpush1.msra.mxu0 0.0
    %8033 = vmatprep.subr.mxu0 0.0
    %8034 = vmatpush1.msra.mxu0 0.0
    %8035 = vmatprep.subr.mxu0 0.0
    %8036 = vmatpush1.msra.mxu0 0.0
    %8037 = vmatprep.subr.mxu0 0.0
    %8038 = vmatpush1.msra.mxu0 0.0
    %8039 = vmatprep.subr.mxu0 0.0
    %8040 = vmatpush1.msra.mxu0 0.0
    %8041 = vmatprep.subr.mxu0 0.0
    %8042 = vmatpush1.msra.mxu0 0.0
    %8043 = vmatprep.subr.mxu0 0.0
    %8044 = vmatpush1.msra.mxu0 0.0
    %8045 = vmatprep.subr.mxu0 0.0
    %8046 = vmatpush1.msra.mxu0 0.0
    %8047 = vmatprep.subr.mxu0 0.0
    %8048 = vmatpush1.msra.mxu0 0.0
    %8049 = vmatprep.subr.mxu0 0.0
    %8050 = vmatpush1.msra.mxu0 0.0
    %8051 = vmatprep.subr.mxu0 0.0
    %8052 = vmatpush1.msra.mxu0 0.0
    %8053 = vmatprep.subr.mxu0 0.0
    %8054 = vmatpush1.msra.mxu0 0.0
    %8055 = vmatprep.subr.mxu0 0.0
    %8056 = vmatpush1.msra.mxu0 0.0
    %8057 = vmatprep.subr.mxu0 0.0
    %8058 = vmatpush1.msra.mxu0 0.0
    %8059 = vmatprep.subr.mxu0 0.0
    %8060 = vmatpush1.msra.mxu0 0.0
    %8061 = vmatprep.subr.mxu0 0.0
    %8062 = vmatpush1.msra.mxu0 0.0
    %8063 = vmatprep.subr.mxu0 0.0
    %8064 = vmatpush1.msra.mxu0 0.0
    %8065 = vmatprep.subr.mxu0 0.0
    %8066 = vmatpush1.msra.mxu0 0.0
    %8067 = vmatprep.subr.mxu0 0.0
    %8068 = vmatpush1.msra.mxu0 0.0
    %8069 = vmatprep.subr.mxu0 0.0
    %8070 = vmatpush1.msra.mxu0 0.0
    %8071 = vmatprep.subr.mxu0 0.0
    %8072 = vmatpush1.msra.mxu0 0.0
    %8073 = vmatprep.subr.mxu0 0.0
    %8074 = vmatpush1.msra.mxu0 0.0
    %8075 = vmatprep.subr.mxu0 0.0
    %8076 = vmatpush1.msra.mxu0 0.0
    %8077 = vmatprep.subr.mxu0 0.0
    %8078 = vmatpush1.msra.mxu0 0.0
    %8079 = vmatprep.mubr.f32.mxu0 0.0
    %8080 = vmatmul.mubr.f32.gmra.mrb[0].mxu0 %v8010
    %v8081 = vpop.f32.mrb[0].mxu0
    %v8082 = vadd.f32 0.0, %v8081
    %v8083 = vpop.f32.mrb[0].mxu0
    %8084 = vdwg.mxu0
    %v8085 = vadd.f32 %v8005, %v8082
    %v8086 = vld [vmem:[#allocation5 + $0xad8] sm:$0x3]
    %8088 = vset.pattern.permute.xlu0 0
    %8089 = vperm.xlu0 %8088, %v8086
    %v8090 = vpop.permute.xlu0 %8089
    %v8092 = vadd.f32 %v8085, %v8090
    %8093 = vst [vmem:[#allocation7] sm:$0x3] %v8092
    // Predicated region
    $region18: #{_lambda_.1} parent=1 // pred_check
      _
    $region19: #{_lambda_.1} parent=1 // pred_check_branch
      %8095 = sbr.rel (0) target = $region21
    $region20: #{_lambda_.1} parent=1 // pred_region
      %s8097 = ssub.s32 32, 32
      %8098 = vsyncadd [#allocation4], %s8097
      %s8100 = sshll.u32 [#allocation7], 4
      %s8101 = int_to_ptr.vmem [resolvable:$true] %s8100
      %8103 = dma.vmem_to_hbm [thread:$0]  %s8101, 32, %s2, [#allocation4]
    $region21: #{_lambda_.1} parent=1 // pred_fallthru
      _
    // Predicated region
    $region22: #{_lambda_.1} parent=1 // pred_check
      _
    $region23: #{_lambda_.1} parent=1 // pred_check_branch
      %8105 = sbr.rel (0) target = $region25
    $region24: #{_lambda_.1} parent=1 // pred_region
      %8106 = dma.done [#allocation4], 32
    $region25: #{_lambda_.1} parent=1 // pred_fallthru
      _
    %8107 = vsyncpa [#allocation3], 1
    %8108 = vsyncpa [#allocation6], 1
    %8109 = vsyncpa [#allocation4], 1

</llo_original>
